<compile_context>
chip_gen: v5e
topology: v5e:2x2
jax: 0.10.0
libtpu: 0.0.40
codegen_flags: <defaults>
</compile_context>

<pallas_src>
import functools

import jax
import jax.numpy as jnp
from jax import lax
from jax.experimental import pallas as pl
from jax.experimental.pallas import tpu as pltpu

EPS = 1e-5


def _reflect_pad(xp_ref, src, H, W):
    """Write reflection-padded `src` (H, W, C) into xp_ref (H+2, W+2, C)."""
    xp_ref[1:H + 1, 1:W + 1, :] = src            # interior
    xp_ref[0, 1:W + 1, :] = src[1]               # top row    (row -1 -> row 1)
    xp_ref[H + 1, 1:W + 1, :] = src[H - 2]       # bottom row (row H  -> row H-2)
    xp_ref[:, 0, :] = xp_ref[:, 2, :]            # left col  (incl. corners)
    xp_ref[:, W + 1, :] = xp_ref[:, W - 1, :]    # right col (incl. corners)


def _conv3x3_in(col_ref, xp_ref, w_ref, H, W, C):
    """3x3 VALID conv (im2col + one MXU matmul) + instance norm; returns f32."""
    # Build im2col: 9 taps laid out along the lane axis -> contraction K = 9C.
    # xp_ref is already bf16, so these are pure strided copies (no casts).
    for kh in range(3):
        for kw in range(3):
            t = kh * 3 + kw
            col_ref[:, :, t * C:(t + 1) * C] = xp_ref[kh:kh + H, kw:kw + W, :]
    y = lax.dot_general(
        col_ref[...], w_ref[...],
        dimension_numbers=(((2,), (0,)), ((), ())),
        preferred_element_type=jnp.float32)       # (H, W, C) f32 accumulation
    # Instance norm (per channel over H*W), single-pass stats in f32.
    mean = jnp.mean(y, axis=(0, 1), keepdims=True)
    msq = jnp.mean(y * y, axis=(0, 1), keepdims=True)
    var = jnp.maximum(msq - mean * mean, 0.0)
    return (y - mean) * lax.rsqrt(var + EPS)


def _resblock_kernel(x_ref, w1_ref, w2_ref, o_ref, xp_ref, col_ref, *, H, W, C):
    x32 = x_ref[0].astype(jnp.float32)                          # (H, W, C)

    # Stage 1: reflect-pad -> conv3x3 -> instance norm -> ReLU  (all in VMEM)
    _reflect_pad(xp_ref, x_ref[0].astype(jnp.bfloat16), H, W)
    h = jnp.maximum(_conv3x3_in(col_ref, xp_ref, w1_ref, H, W, C), 0.0)

    # Stage 2: reflect-pad h (reusing the same pad scratch) -> conv3x3 -> IN
    _reflect_pad(xp_ref, h.astype(jnp.bfloat16), H, W)
    y = _conv3x3_in(col_ref, xp_ref, w2_ref, H, W, C)

    # Residual add in f32, store in the native output dtype.
    o_ref[0] = (x32 + y).astype(o_ref.dtype)


def _call_resblock(x, w1m, w2m, H, W, C, B):
    itemsize = x.dtype.itemsize
    need = (
        2 * 2 * H * W * C * itemsize          # double-buffered x + out blocks
        + 2 * 2 * 9 * C * C * 2               # bf16 weight mats (x2 buffers)
        + (H + 2) * (W + 2) * C * 2           # bf16 padded scratch
        + H * W * 9 * C * 2                   # bf16 im2col scratch
    )
    vmem_limit = int(min(max(2 * need, 32 << 20), 48 << 20))
    return pl.pallas_call(
        functools.partial(_resblock_kernel, H=H, W=W, C=C),
        out_shape=jax.ShapeDtypeStruct((B, H, W, C), x.dtype),
        grid_spec=pltpu.PrefetchScalarGridSpec(
            num_scalar_prefetch=0,
            grid=(B,),
            in_specs=[
                pl.BlockSpec((1, H, W, C), lambda b: (b, 0, 0, 0)),
                pl.BlockSpec((9 * C, C), lambda b: (0, 0)),
                pl.BlockSpec((9 * C, C), lambda b: (0, 0)),
            ],
            out_specs=pl.BlockSpec((1, H, W, C), lambda b: (b, 0, 0, 0)),
            scratch_shapes=[
                pltpu.VMEM((H + 2, W + 2, C), jnp.bfloat16),  # reflection-pad buf
                pltpu.VMEM((H, W, 9 * C), jnp.bfloat16),      # im2col buf
            ],
        ),
        compiler_params=pltpu.CompilerParams(
            dimension_semantics=("parallel",),
            vmem_limit_bytes=vmem_limit,
        ),
    )(x, w1m, w2m)


def residual_block(x_nchw, w1, b1, w2, b2):
    """x_nchw: (B, C, H, W); w*: (Cout, Cin, 3, 3) PyTorch OIHW; b*: (C,).

    b1/b2 are accepted for API parity with the PyTorch module but are not
    sent to the kernel: a conv bias feeding an affine-free InstanceNorm is
    exactly cancelled by the per-channel mean subtraction.
    """
    del b1, b2
    x = jnp.transpose(x_nchw, (0, 2, 3, 1))                     # NHWC, native dtype
    B, H, W, C = x.shape

    # OIHW -> row index (kh*3+kw)*Cin + cin, col index Cout; bf16 for the MXU.
    def to_mat(w):
        return (jnp.transpose(w, (2, 3, 1, 0))
                .reshape(9 * C, C).astype(jnp.bfloat16))

    y = _call_resblock(x, to_mat(w1), to_mat(w2), H, W, C, B)
    return jnp.transpose(y, (0, 3, 1, 2))                       # back to NCHW


def residual_block_ref(x, w1, b1, w2, b2, conv_dtype=jnp.float32):
    """Pure-JAX reference (NCHW). conv_dtype=bf16 reproduces kernel numerics."""
    def conv(xi, w, b):
        y = lax.conv_general_dilated(
            xi.astype(conv_dtype), w.astype(conv_dtype),
            window_strides=(1, 1), padding="VALID",
            dimension_numbers=("NCHW", "OIHW", "NCHW"),
            preferred_element_type=jnp.float32)
        return y + b[None, :, None, None].astype(jnp.float32)

    def inorm(xi):
        m = xi.mean(axis=(2, 3), keepdims=True)
        v = ((xi - m) ** 2).mean(axis=(2, 3), keepdims=True)
        return (xi - m) / jnp.sqrt(v + EPS)

    xp = jnp.pad(x, ((0, 0), (0, 0), (1, 1), (1, 1)), mode="reflect")
    h = jnp.maximum(inorm(conv(xp, w1, b1)), 0.0)
    hp = jnp.pad(h, ((0, 0), (0, 0), (1, 1), (1, 1)), mode="reflect")
    return x + inorm(conv(hp, w2, b2))


if __name__ == "__main__":
    B, C, H, W = 2, 4, 16, 16
    key = jax.random.PRNGKey(0)
    kx, k1, k2, k3, k4 = jax.random.split(key, 5)

    x = jax.random.normal(kx, (B, C, H, W), dtype=jnp.float32)
    w1 = 0.1 * jax.random.normal(k1, (C, C, 3, 3), dtype=jnp.float32)
    b1 = 0.1 * jax.random.normal(k2, (C,), dtype=jnp.float32)
    w2 = 0.1 * jax.random.normal(k3, (C, C, 3, 3), dtype=jnp.float32)
    b2 = 0.1 * jax.random.normal(k4, (C,), dtype=jnp.float32)

    out = jax.block_until_ready(residual_block(x, w1, b1, w2, b2))
    ref_bf16 = jax.block_until_ready(
        residual_block_ref(x, w1, b1, w2, b2, conv_dtype=jnp.bfloat16))
    ref_f32 = jax.block_until_ready(residual_block_ref(x, w1, b1, w2, b2))

    assert out.shape == (B, C, H, W)
    # Tight check against a reference matching the kernel's bf16-MXU numerics.
    assert jnp.allclose(out, ref_bf16, rtol=3e-2, atol=3e-2), (
        float(jnp.max(jnp.abs(out - ref_bf16))))
    # Semantic check against the pure-f32 module math (bf16 operands -> looser tol).
    assert jnp.allclose(out, ref_f32, rtol=1e-1, atol=1e-1), (
        float(jnp.max(jnp.abs(out - ref_f32))))
    print("KERNEL_OK")
</pallas_src>

<mosaic_0001>
module attributes {stable_mosaic.version = 11 : i64} {
  func.func @_resblock_kernel(%arg0: i32, %arg1: memref<1x16x16x4xf32, #tpu.memory_space<vmem>>, %arg2: memref<36x4xbf16, #tpu.memory_space<vmem>>, %arg3: memref<36x4xbf16, #tpu.memory_space<vmem>>, %arg4: memref<1x16x16x4xf32, #tpu.memory_space<vmem>>, %arg5: memref<18x18x4xbf16, #tpu.memory_space<vmem>>, %arg6: memref<16x16x36xbf16, #tpu.memory_space<vmem>>) attributes {dimension_semantics = [#tpu.dimension_semantics<parallel>], iteration_bounds = array<i64: 2>, scalar_prefetch = 0 : i64, scratch_operands = 2 : i64, tpu.core_type = #tpu.core_type<tc>, window_params = [{transform_indices = @transform_0, window_bounds = array<i64: 1, 16, 16, 4>}, {pipeline_mode = #tpu.pipeline_mode<synchronous>, transform_indices = @transform_1, window_bounds = array<i64: 36, 4>}, {pipeline_mode = #tpu.pipeline_mode<synchronous>, transform_indices = @transform_2, window_bounds = array<i64: 36, 4>}, {transform_indices = @transform_3, window_bounds = array<i64: 1, 16, 16, 4>}]} {
    %c0 = arith.constant 0 : index
    %c0_0 = arith.constant 0 : index
    %c0_1 = arith.constant 0 : index
    %c0_2 = arith.constant 0 : index
    %0 = vector.load %arg1[%c0, %c0_0, %c0_1, %c0_2] : memref<1x16x16x4xf32, #tpu.memory_space<vmem>>, vector<1x16x16x4xf32>
    %1 = vector.shape_cast %0 : vector<1x16x16x4xf32> to vector<16x16x4xf32>
    %c0_3 = arith.constant 0 : index
    %c0_4 = arith.constant 0 : index
    %c0_5 = arith.constant 0 : index
    %c0_6 = arith.constant 0 : index
    %2 = vector.load %arg1[%c0_3, %c0_4, %c0_5, %c0_6] : memref<1x16x16x4xf32, #tpu.memory_space<vmem>>, vector<1x16x16x4xf32>
    %3 = vector.shape_cast %2 : vector<1x16x16x4xf32> to vector<16x16x4xf32>
    %4 = arith.truncf %3 : vector<16x16x4xf32> to vector<16x16x4xbf16>
    %c1 = arith.constant 1 : index
    %c1_7 = arith.constant 1 : index
    %c0_8 = arith.constant 0 : index
    %5 = vector.load %arg5[%c1, %c1_7, %c0_8] : memref<18x18x4xbf16, #tpu.memory_space<vmem>>, vector<16x16x4xbf16>
    tpu.vector_store %arg5[%c1, %c1_7, %c0_8], %4 {strides = array<i32>} : memref<18x18x4xbf16, #tpu.memory_space<vmem>>, vector<16x16x4xbf16>,
    %6 = vector.extract_strided_slice %4 {offsets = [1, 0, 0], sizes = [1, 16, 4], strides = [1, 1, 1]} : vector<16x16x4xbf16> to vector<1x16x4xbf16>
    %7 = vector.shape_cast %6 : vector<1x16x4xbf16> to vector<16x4xbf16>
    %c0_9 = arith.constant 0 : index
    %c1_10 = arith.constant 1 : index
    %c0_11 = arith.constant 0 : index
    %8 = vector.load %arg5[%c0_9, %c1_10, %c0_11] : memref<18x18x4xbf16, #tpu.memory_space<vmem>>, vector<1x16x4xbf16>
    %9 = vector.shape_cast %8 : vector<1x16x4xbf16> to vector<16x4xbf16>
    %10 = vector.shape_cast %7 : vector<16x4xbf16> to vector<1x16x4xbf16>
    tpu.vector_store %arg5[%c0_9, %c1_10, %c0_11], %10 {strides = array<i32>} : memref<18x18x4xbf16, #tpu.memory_space<vmem>>, vector<1x16x4xbf16>,
    %11 = vector.extract_strided_slice %4 {offsets = [14, 0, 0], sizes = [1, 16, 4], strides = [1, 1, 1]} : vector<16x16x4xbf16> to vector<1x16x4xbf16>
    %12 = vector.shape_cast %11 : vector<1x16x4xbf16> to vector<16x4xbf16>
    %c17 = arith.constant 17 : index
    %c1_12 = arith.constant 1 : index
    %c0_13 = arith.constant 0 : index
    %13 = vector.load %arg5[%c17, %c1_12, %c0_13] : memref<18x18x4xbf16, #tpu.memory_space<vmem>>, vector<1x16x4xbf16>
    %14 = vector.shape_cast %13 : vector<1x16x4xbf16> to vector<16x4xbf16>
    %15 = vector.shape_cast %12 : vector<16x4xbf16> to vector<1x16x4xbf16>
    tpu.vector_store %arg5[%c17, %c1_12, %c0_13], %15 {strides = array<i32>} : memref<18x18x4xbf16, #tpu.memory_space<vmem>>, vector<1x16x4xbf16>,
    %c0_14 = arith.constant 0 : index
    %c2 = arith.constant 2 : index
    %c0_15 = arith.constant 0 : index
    %16 = vector.load %arg5[%c0_14, %c2, %c0_15] : memref<18x18x4xbf16, #tpu.memory_space<vmem>>, vector<18x1x4xbf16>
    %17 = vector.shape_cast %16 : vector<18x1x4xbf16> to vector<18x4xbf16>
    %c0_16 = arith.constant 0 : index
    %c0_17 = arith.constant 0 : index
    %c0_18 = arith.constant 0 : index
    %18 = vector.load %arg5[%c0_16, %c0_17, %c0_18] : memref<18x18x4xbf16, #tpu.memory_space<vmem>>, vector<18x1x4xbf16>
    %19 = vector.shape_cast %18 : vector<18x1x4xbf16> to vector<18x4xbf16>
    %20 = vector.shape_cast %17 : vector<18x4xbf16> to vector<18x1x4xbf16>
    tpu.vector_store %arg5[%c0_16, %c0_17, %c0_18], %20 {strides = array<i32>} : memref<18x18x4xbf16, #tpu.memory_space<vmem>>, vector<18x1x4xbf16>,
    %c0_19 = arith.constant 0 : index
    %c15 = arith.constant 15 : index
    %c0_20 = arith.constant 0 : index
    %21 = vector.load %arg5[%c0_19, %c15, %c0_20] : memref<18x18x4xbf16, #tpu.memory_space<vmem>>, vector<18x1x4xbf16>
    %22 = vector.shape_cast %21 : vector<18x1x4xbf16> to vector<18x4xbf16>
    %c0_21 = arith.constant 0 : index
    %c17_22 = arith.constant 17 : index
    %c0_23 = arith.constant 0 : index
    %23 = vector.load %arg5[%c0_21, %c17_22, %c0_23] : memref<18x18x4xbf16, #tpu.memory_space<vmem>>, vector<18x1x4xbf16>
    %24 = vector.shape_cast %23 : vector<18x1x4xbf16> to vector<18x4xbf16>
    %25 = vector.shape_cast %22 : vector<18x4xbf16> to vector<18x1x4xbf16>
    tpu.vector_store %arg5[%c0_21, %c17_22, %c0_23], %25 {strides = array<i32>} : memref<18x18x4xbf16, #tpu.memory_space<vmem>>, vector<18x1x4xbf16>,
    %c0_24 = arith.constant 0 : index
    %c0_25 = arith.constant 0 : index
    %c0_26 = arith.constant 0 : index
    %26 = vector.load %arg5[%c0_24, %c0_25, %c0_26] : memref<18x18x4xbf16, #tpu.memory_space<vmem>>, vector<16x16x4xbf16>
    %c0_27 = arith.constant 0 : index
    %c0_28 = arith.constant 0 : index
    %c0_29 = arith.constant 0 : index
    %27 = vector.load %arg6[%c0_27, %c0_28, %c0_29] : memref<16x16x36xbf16, #tpu.memory_space<vmem>>, vector<16x16x4xbf16>
    tpu.vector_store %arg6[%c0_27, %c0_28, %c0_29], %26 {strides = array<i32>} : memref<16x16x36xbf16, #tpu.memory_space<vmem>>, vector<16x16x4xbf16>,
    %c0_30 = arith.constant 0 : index
    %c1_31 = arith.constant 1 : index
    %c0_32 = arith.constant 0 : index
    %28 = vector.load %arg5[%c0_30, %c1_31, %c0_32] : memref<18x18x4xbf16, #tpu.memory_space<vmem>>, vector<16x16x4xbf16>
    %c0_33 = arith.constant 0 : index
    %c0_34 = arith.constant 0 : index
    %c4 = arith.constant 4 : index
    %29 = vector.load %arg6[%c0_33, %c0_34, %c4] : memref<16x16x36xbf16, #tpu.memory_space<vmem>>, vector<16x16x4xbf16>
    tpu.vector_store %arg6[%c0_33, %c0_34, %c4], %28 {strides = array<i32>} : memref<16x16x36xbf16, #tpu.memory_space<vmem>>, vector<16x16x4xbf16>,
    %c0_35 = arith.constant 0 : index
    %c2_36 = arith.constant 2 : index
    %c0_37 = arith.constant 0 : index
    %30 = vector.load %arg5[%c0_35, %c2_36, %c0_37] : memref<18x18x4xbf16, #tpu.memory_space<vmem>>, vector<16x16x4xbf16>
    %c0_38 = arith.constant 0 : index
    %c0_39 = arith.constant 0 : index
    %c8 = arith.constant 8 : index
    %31 = vector.load %arg6[%c0_38, %c0_39, %c8] : memref<16x16x36xbf16, #tpu.memory_space<vmem>>, vector<16x16x4xbf16>
    tpu.vector_store %arg6[%c0_38, %c0_39, %c8], %30 {strides = array<i32>} : memref<16x16x36xbf16, #tpu.memory_space<vmem>>, vector<16x16x4xbf16>,
    %c1_40 = arith.constant 1 : index
    %c0_41 = arith.constant 0 : index
    %c0_42 = arith.constant 0 : index
    %32 = vector.load %arg5[%c1_40, %c0_41, %c0_42] : memref<18x18x4xbf16, #tpu.memory_space<vmem>>, vector<16x16x4xbf16>
    %c0_43 = arith.constant 0 : index
    %c0_44 = arith.constant 0 : index
    %c12 = arith.constant 12 : index
    %33 = vector.load %arg6[%c0_43, %c0_44, %c12] : memref<16x16x36xbf16, #tpu.memory_space<vmem>>, vector<16x16x4xbf16>
    tpu.vector_store %arg6[%c0_43, %c0_44, %c12], %32 {strides = array<i32>} : memref<16x16x36xbf16, #tpu.memory_space<vmem>>, vector<16x16x4xbf16>,
    %c1_45 = arith.constant 1 : index
    %c1_46 = arith.constant 1 : index
    %c0_47 = arith.constant 0 : index
    %34 = vector.load %arg5[%c1_45, %c1_46, %c0_47] : memref<18x18x4xbf16, #tpu.memory_space<vmem>>, vector<16x16x4xbf16>
    %c0_48 = arith.constant 0 : index
    %c0_49 = arith.constant 0 : index
    %c16 = arith.constant 16 : index
    %35 = vector.load %arg6[%c0_48, %c0_49, %c16] : memref<16x16x36xbf16, #tpu.memory_space<vmem>>, vector<16x16x4xbf16>
    tpu.vector_store %arg6[%c0_48, %c0_49, %c16], %34 {strides = array<i32>} : memref<16x16x36xbf16, #tpu.memory_space<vmem>>, vector<16x16x4xbf16>,
    %c1_50 = arith.constant 1 : index
    %c2_51 = arith.constant 2 : index
    %c0_52 = arith.constant 0 : index
    %36 = vector.load %arg5[%c1_50, %c2_51, %c0_52] : memref<18x18x4xbf16, #tpu.memory_space<vmem>>, vector<16x16x4xbf16>
    %c0_53 = arith.constant 0 : index
    %c0_54 = arith.constant 0 : index
    %c20 = arith.constant 20 : index
    %37 = vector.load %arg6[%c0_53, %c0_54, %c20] : memref<16x16x36xbf16, #tpu.memory_space<vmem>>, vector<16x16x4xbf16>
    tpu.vector_store %arg6[%c0_53, %c0_54, %c20], %36 {strides = array<i32>} : memref<16x16x36xbf16, #tpu.memory_space<vmem>>, vector<16x16x4xbf16>,
    %c2_55 = arith.constant 2 : index
    %c0_56 = arith.constant 0 : index
    %c0_57 = arith.constant 0 : index
    %38 = vector.load %arg5[%c2_55, %c0_56, %c0_57] : memref<18x18x4xbf16, #tpu.memory_space<vmem>>, vector<16x16x4xbf16>
    %c0_58 = arith.constant 0 : index
    %c0_59 = arith.constant 0 : index
    %c24 = arith.constant 24 : index
    %39 = vector.load %arg6[%c0_58, %c0_59, %c24] : memref<16x16x36xbf16, #tpu.memory_space<vmem>>, vector<16x16x4xbf16>
    tpu.vector_store %arg6[%c0_58, %c0_59, %c24], %38 {strides = array<i32>} : memref<16x16x36xbf16, #tpu.memory_space<vmem>>, vector<16x16x4xbf16>,
    %c2_60 = arith.constant 2 : index
    %c1_61 = arith.constant 1 : index
    %c0_62 = arith.constant 0 : index
    %40 = vector.load %arg5[%c2_60, %c1_61, %c0_62] : memref<18x18x4xbf16, #tpu.memory_space<vmem>>, vector<16x16x4xbf16>
    %c0_63 = arith.constant 0 : index
    %c0_64 = arith.constant 0 : index
    %c28 = arith.constant 28 : index
    %41 = vector.load %arg6[%c0_63, %c0_64, %c28] : memref<16x16x36xbf16, #tpu.memory_space<vmem>>, vector<16x16x4xbf16>
    tpu.vector_store %arg6[%c0_63, %c0_64, %c28], %40 {strides = array<i32>} : memref<16x16x36xbf16, #tpu.memory_space<vmem>>, vector<16x16x4xbf16>,
    %c2_65 = arith.constant 2 : index
    %c2_66 = arith.constant 2 : index
    %c0_67 = arith.constant 0 : index
    %42 = vector.load %arg5[%c2_65, %c2_66, %c0_67] : memref<18x18x4xbf16, #tpu.memory_space<vmem>>, vector<16x16x4xbf16>
    %c0_68 = arith.constant 0 : index
    %c0_69 = arith.constant 0 : index
    %c32 = arith.constant 32 : index
    %43 = vector.load %arg6[%c0_68, %c0_69, %c32] : memref<16x16x36xbf16, #tpu.memory_space<vmem>>, vector<16x16x4xbf16>
    tpu.vector_store %arg6[%c0_68, %c0_69, %c32], %42 {strides = array<i32>} : memref<16x16x36xbf16, #tpu.memory_space<vmem>>, vector<16x16x4xbf16>,
    %c0_70 = arith.constant 0 : index
    %c0_71 = arith.constant 0 : index
    %c0_72 = arith.constant 0 : index
    %44 = vector.load %arg6[%c0_70, %c0_71, %c0_72] : memref<16x16x36xbf16, #tpu.memory_space<vmem>>, vector<16x16x36xbf16>
    %c0_73 = arith.constant 0 : index
    %c0_74 = arith.constant 0 : index
    %45 = vector.load %arg2[%c0_73, %c0_74] : memref<36x4xbf16, #tpu.memory_space<vmem>>, vector<36x4xbf16>
    %cst = arith.constant dense<0.000000e+00> : vector<16x16x4xf32>
    %46 = tpu.matmul %44, %45, %cst {dimension_numbers = #tpu.dot_dimension_numbers<[2], [0], [0, 1], [1], [0, 0, 0, 1, 1, 1], [], []>} : vector<16x16x36xbf16>, vector<36x4xbf16>, vector<16x16x4xf32> -> vector<16x16x4xf32>
    %cst_75 = arith.constant dense<0.000000e+00> : vector<4xf32>
    %47 = vector.multi_reduction <add>, %46, %cst_75 [0, 1] : vector<16x16x4xf32> to vector<4xf32>
    %48 = vector.shape_cast %47 : vector<4xf32> to vector<1x1x4xf32>
    %cst_76 = arith.constant 2.560000e+02 : f32
    %49 = vector.broadcast %cst_76 : f32 to vector<1x1x4xf32>
    %50 = arith.divf %48, %49 : vector<1x1x4xf32>
    %51 = arith.mulf %46, %46 : vector<16x16x4xf32>
    %cst_77 = arith.constant dense<0.000000e+00> : vector<4xf32>
    %52 = vector.multi_reduction <add>, %51, %cst_77 [0, 1] : vector<16x16x4xf32> to vector<4xf32>
    %53 = vector.shape_cast %52 : vector<4xf32> to vector<1x1x4xf32>
    %cst_78 = arith.constant 2.560000e+02 : f32
    %54 = vector.broadcast %cst_78 : f32 to vector<1x1x4xf32>
    %55 = arith.divf %53, %54 : vector<1x1x4xf32>
    %56 = arith.mulf %50, %50 : vector<1x1x4xf32>
    %57 = arith.subf %55, %56 : vector<1x1x4xf32>
    %cst_79 = arith.constant 0.000000e+00 : f32
    %58 = vector.broadcast %cst_79 : f32 to vector<1x1x4xf32>
    %59 = arith.maximumf %57, %58 : vector<1x1x4xf32>
    %60 = vector.broadcast %50 : vector<1x1x4xf32> to vector<16x16x4xf32>
    %61 = arith.subf %46, %60 : vector<16x16x4xf32>
    %cst_80 = arith.constant 9.99999974E-6 : f32
    %62 = vector.broadcast %cst_80 : f32 to vector<1x1x4xf32>
    %63 = arith.addf %59, %62 : vector<1x1x4xf32>
    %64 = math.rsqrt %63 : vector<1x1x4xf32>
    %65 = vector.broadcast %64 : vector<1x1x4xf32> to vector<16x16x4xf32>
    %66 = arith.mulf %61, %65 : vector<16x16x4xf32>
    %cst_81 = arith.constant 0.000000e+00 : f32
    %67 = vector.broadcast %cst_81 : f32 to vector<16x16x4xf32>
    %68 = arith.maximumf %66, %67 : vector<16x16x4xf32>
    %69 = arith.truncf %68 : vector<16x16x4xf32> to vector<16x16x4xbf16>
    %c1_82 = arith.constant 1 : index
    %c1_83 = arith.constant 1 : index
    %c0_84 = arith.constant 0 : index
    %70 = vector.load %arg5[%c1_82, %c1_83, %c0_84] : memref<18x18x4xbf16, #tpu.memory_space<vmem>>, vector<16x16x4xbf16>
    tpu.vector_store %arg5[%c1_82, %c1_83, %c0_84], %69 {strides = array<i32>} : memref<18x18x4xbf16, #tpu.memory_space<vmem>>, vector<16x16x4xbf16>,
    %71 = vector.extract_strided_slice %69 {offsets = [1, 0, 0], sizes = [1, 16, 4], strides = [1, 1, 1]} : vector<16x16x4xbf16> to vector<1x16x4xbf16>
    %72 = vector.shape_cast %71 : vector<1x16x4xbf16> to vector<16x4xbf16>
    %c0_85 = arith.constant 0 : index
    %c1_86 = arith.constant 1 : index
    %c0_87 = arith.constant 0 : index
    %73 = vector.load %arg5[%c0_85, %c1_86, %c0_87] : memref<18x18x4xbf16, #tpu.memory_space<vmem>>, vector<1x16x4xbf16>
    %74 = vector.shape_cast %73 : vector<1x16x4xbf16> to vector<16x4xbf16>
    %75 = vector.shape_cast %72 : vector<16x4xbf16> to vector<1x16x4xbf16>
    tpu.vector_store %arg5[%c0_85, %c1_86, %c0_87], %75 {strides = array<i32>} : memref<18x18x4xbf16, #tpu.memory_space<vmem>>, vector<1x16x4xbf16>,
    %76 = vector.extract_strided_slice %69 {offsets = [14, 0, 0], sizes = [1, 16, 4], strides = [1, 1, 1]} : vector<16x16x4xbf16> to vector<1x16x4xbf16>
    %77 = vector.shape_cast %76 : vector<1x16x4xbf16> to vector<16x4xbf16>
    %c17_88 = arith.constant 17 : index
    %c1_89 = arith.constant 1 : index
    %c0_90 = arith.constant 0 : index
    %78 = vector.load %arg5[%c17_88, %c1_89, %c0_90] : memref<18x18x4xbf16, #tpu.memory_space<vmem>>, vector<1x16x4xbf16>
    %79 = vector.shape_cast %78 : vector<1x16x4xbf16> to vector<16x4xbf16>
    %80 = vector.shape_cast %77 : vector<16x4xbf16> to vector<1x16x4xbf16>
    tpu.vector_store %arg5[%c17_88, %c1_89, %c0_90], %80 {strides = array<i32>} : memref<18x18x4xbf16, #tpu.memory_space<vmem>>, vector<1x16x4xbf16>,
    %c0_91 = arith.constant 0 : index
    %c2_92 = arith.constant 2 : index
    %c0_93 = arith.constant 0 : index
    %81 = vector.load %arg5[%c0_91, %c2_92, %c0_93] : memref<18x18x4xbf16, #tpu.memory_space<vmem>>, vector<18x1x4xbf16>
    %82 = vector.shape_cast %81 : vector<18x1x4xbf16> to vector<18x4xbf16>
    %c0_94 = arith.constant 0 : index
    %c0_95 = arith.constant 0 : index
    %c0_96 = arith.constant 0 : index
    %83 = vector.load %arg5[%c0_94, %c0_95, %c0_96] : memref<18x18x4xbf16, #tpu.memory_space<vmem>>, vector<18x1x4xbf16>
    %84 = vector.shape_cast %83 : vector<18x1x4xbf16> to vector<18x4xbf16>
    %85 = vector.shape_cast %82 : vector<18x4xbf16> to vector<18x1x4xbf16>
    tpu.vector_store %arg5[%c0_94, %c0_95, %c0_96], %85 {strides = array<i32>} : memref<18x18x4xbf16, #tpu.memory_space<vmem>>, vector<18x1x4xbf16>,
    %c0_97 = arith.constant 0 : index
    %c15_98 = arith.constant 15 : index
    %c0_99 = arith.constant 0 : index
    %86 = vector.load %arg5[%c0_97, %c15_98, %c0_99] : memref<18x18x4xbf16, #tpu.memory_space<vmem>>, vector<18x1x4xbf16>
    %87 = vector.shape_cast %86 : vector<18x1x4xbf16> to vector<18x4xbf16>
    %c0_100 = arith.constant 0 : index
    %c17_101 = arith.constant 17 : index
    %c0_102 = arith.constant 0 : index
    %88 = vector.load %arg5[%c0_100, %c17_101, %c0_102] : memref<18x18x4xbf16, #tpu.memory_space<vmem>>, vector<18x1x4xbf16>
    %89 = vector.shape_cast %88 : vector<18x1x4xbf16> to vector<18x4xbf16>
    %90 = vector.shape_cast %87 : vector<18x4xbf16> to vector<18x1x4xbf16>
    tpu.vector_store %arg5[%c0_100, %c17_101, %c0_102], %90 {strides = array<i32>} : memref<18x18x4xbf16, #tpu.memory_space<vmem>>, vector<18x1x4xbf16>,
    %c0_103 = arith.constant 0 : index
    %c0_104 = arith.constant 0 : index
    %c0_105 = arith.constant 0 : index
    %91 = vector.load %arg5[%c0_103, %c0_104, %c0_105] : memref<18x18x4xbf16, #tpu.memory_space<vmem>>, vector<16x16x4xbf16>
    %c0_106 = arith.constant 0 : index
    %c0_107 = arith.constant 0 : index
    %c0_108 = arith.constant 0 : index
    %92 = vector.load %arg6[%c0_106, %c0_107, %c0_108] : memref<16x16x36xbf16, #tpu.memory_space<vmem>>, vector<16x16x4xbf16>
    tpu.vector_store %arg6[%c0_106, %c0_107, %c0_108], %91 {strides = array<i32>} : memref<16x16x36xbf16, #tpu.memory_space<vmem>>, vector<16x16x4xbf16>,
    %c0_109 = arith.constant 0 : index
    %c1_110 = arith.constant 1 : index
    %c0_111 = arith.constant 0 : index
    %93 = vector.load %arg5[%c0_109, %c1_110, %c0_111] : memref<18x18x4xbf16, #tpu.memory_space<vmem>>, vector<16x16x4xbf16>
    %c0_112 = arith.constant 0 : index
    %c0_113 = arith.constant 0 : index
    %c4_114 = arith.constant 4 : index
    %94 = vector.load %arg6[%c0_112, %c0_113, %c4_114] : memref<16x16x36xbf16, #tpu.memory_space<vmem>>, vector<16x16x4xbf16>
    tpu.vector_store %arg6[%c0_112, %c0_113, %c4_114], %93 {strides = array<i32>} : memref<16x16x36xbf16, #tpu.memory_space<vmem>>, vector<16x16x4xbf16>,
    %c0_115 = arith.constant 0 : index
    %c2_116 = arith.constant 2 : index
    %c0_117 = arith.constant 0 : index
    %95 = vector.load %arg5[%c0_115, %c2_116, %c0_117] : memref<18x18x4xbf16, #tpu.memory_space<vmem>>, vector<16x16x4xbf16>
    %c0_118 = arith.constant 0 : index
    %c0_119 = arith.constant 0 : index
    %c8_120 = arith.constant 8 : index
    %96 = vector.load %arg6[%c0_118, %c0_119, %c8_120] : memref<16x16x36xbf16, #tpu.memory_space<vmem>>, vector<16x16x4xbf16>
    tpu.vector_store %arg6[%c0_118, %c0_119, %c8_120], %95 {strides = array<i32>} : memref<16x16x36xbf16, #tpu.memory_space<vmem>>, vector<16x16x4xbf16>,
    %c1_121 = arith.constant 1 : index
    %c0_122 = arith.constant 0 : index
    %c0_123 = arith.constant 0 : index
    %97 = vector.load %arg5[%c1_121, %c0_122, %c0_123] : memref<18x18x4xbf16, #tpu.memory_space<vmem>>, vector<16x16x4xbf16>
    %c0_124 = arith.constant 0 : index
    %c0_125 = arith.constant 0 : index
    %c12_126 = arith.constant 12 : index
    %98 = vector.load %arg6[%c0_124, %c0_125, %c12_126] : memref<16x16x36xbf16, #tpu.memory_space<vmem>>, vector<16x16x4xbf16>
    tpu.vector_store %arg6[%c0_124, %c0_125, %c12_126], %97 {strides = array<i32>} : memref<16x16x36xbf16, #tpu.memory_space<vmem>>, vector<16x16x4xbf16>,
    %c1_127 = arith.constant 1 : index
    %c1_128 = arith.constant 1 : index
    %c0_129 = arith.constant 0 : index
    %99 = vector.load %arg5[%c1_127, %c1_128, %c0_129] : memref<18x18x4xbf16, #tpu.memory_space<vmem>>, vector<16x16x4xbf16>
    %c0_130 = arith.constant 0 : index
    %c0_131 = arith.constant 0 : index
    %c16_132 = arith.constant 16 : index
    %100 = vector.load %arg6[%c0_130, %c0_131, %c16_132] : memref<16x16x36xbf16, #tpu.memory_space<vmem>>, vector<16x16x4xbf16>
    tpu.vector_store %arg6[%c0_130, %c0_131, %c16_132], %99 {strides = array<i32>} : memref<16x16x36xbf16, #tpu.memory_space<vmem>>, vector<16x16x4xbf16>,
    %c1_133 = arith.constant 1 : index
    %c2_134 = arith.constant 2 : index
    %c0_135 = arith.constant 0 : index
    %101 = vector.load %arg5[%c1_133, %c2_134, %c0_135] : memref<18x18x4xbf16, #tpu.memory_space<vmem>>, vector<16x16x4xbf16>
    %c0_136 = arith.constant 0 : index
    %c0_137 = arith.constant 0 : index
    %c20_138 = arith.constant 20 : index
    %102 = vector.load %arg6[%c0_136, %c0_137, %c20_138] : memref<16x16x36xbf16, #tpu.memory_space<vmem>>, vector<16x16x4xbf16>
    tpu.vector_store %arg6[%c0_136, %c0_137, %c20_138], %101 {strides = array<i32>} : memref<16x16x36xbf16, #tpu.memory_space<vmem>>, vector<16x16x4xbf16>,
    %c2_139 = arith.constant 2 : index
    %c0_140 = arith.constant 0 : index
    %c0_141 = arith.constant 0 : index
    %103 = vector.load %arg5[%c2_139, %c0_140, %c0_141] : memref<18x18x4xbf16, #tpu.memory_space<vmem>>, vector<16x16x4xbf16>
    %c0_142 = arith.constant 0 : index
    %c0_143 = arith.constant 0 : index
    %c24_144 = arith.constant 24 : index
    %104 = vector.load %arg6[%c0_142, %c0_143, %c24_144] : memref<16x16x36xbf16, #tpu.memory_space<vmem>>, vector<16x16x4xbf16>
    tpu.vector_store %arg6[%c0_142, %c0_143, %c24_144], %103 {strides = array<i32>} : memref<16x16x36xbf16, #tpu.memory_space<vmem>>, vector<16x16x4xbf16>,
    %c2_145 = arith.constant 2 : index
    %c1_146 = arith.constant 1 : index
    %c0_147 = arith.constant 0 : index
    %105 = vector.load %arg5[%c2_145, %c1_146, %c0_147] : memref<18x18x4xbf16, #tpu.memory_space<vmem>>, vector<16x16x4xbf16>
    %c0_148 = arith.constant 0 : index
    %c0_149 = arith.constant 0 : index
    %c28_150 = arith.constant 28 : index
    %106 = vector.load %arg6[%c0_148, %c0_149, %c28_150] : memref<16x16x36xbf16, #tpu.memory_space<vmem>>, vector<16x16x4xbf16>
    tpu.vector_store %arg6[%c0_148, %c0_149, %c28_150], %105 {strides = array<i32>} : memref<16x16x36xbf16, #tpu.memory_space<vmem>>, vector<16x16x4xbf16>,
    %c2_151 = arith.constant 2 : index
    %c2_152 = arith.constant 2 : index
    %c0_153 = arith.constant 0 : index
    %107 = vector.load %arg5[%c2_151, %c2_152, %c0_153] : memref<18x18x4xbf16, #tpu.memory_space<vmem>>, vector<16x16x4xbf16>
    %c0_154 = arith.constant 0 : index
    %c0_155 = arith.constant 0 : index
    %c32_156 = arith.constant 32 : index
    %108 = vector.load %arg6[%c0_154, %c0_155, %c32_156] : memref<16x16x36xbf16, #tpu.memory_space<vmem>>, vector<16x16x4xbf16>
    tpu.vector_store %arg6[%c0_154, %c0_155, %c32_156], %107 {strides = array<i32>} : memref<16x16x36xbf16, #tpu.memory_space<vmem>>, vector<16x16x4xbf16>,
    %c0_157 = arith.constant 0 : index
    %c0_158 = arith.constant 0 : index
    %c0_159 = arith.constant 0 : index
    %109 = vector.load %arg6[%c0_157, %c0_158, %c0_159] : memref<16x16x36xbf16, #tpu.memory_space<vmem>>, vector<16x16x36xbf16>
    %c0_160 = arith.constant 0 : index
    %c0_161 = arith.constant 0 : index
    %110 = vector.load %arg3[%c0_160, %c0_161] : memref<36x4xbf16, #tpu.memory_space<vmem>>, vector<36x4xbf16>
    %cst_162 = arith.constant dense<0.000000e+00> : vector<16x16x4xf32>
    %111 = tpu.matmul %109, %110, %cst_162 {dimension_numbers = #tpu.dot_dimension_numbers<[2], [0], [0, 1], [1], [0, 0, 0, 1, 1, 1], [], []>} : vector<16x16x36xbf16>, vector<36x4xbf16>, vector<16x16x4xf32> -> vector<16x16x4xf32>
    %cst_163 = arith.constant dense<0.000000e+00> : vector<4xf32>
    %112 = vector.multi_reduction <add>, %111, %cst_163 [0, 1] : vector<16x16x4xf32> to vector<4xf32>
    %113 = vector.shape_cast %112 : vector<4xf32> to vector<1x1x4xf32>
    %cst_164 = arith.constant 2.560000e+02 : f32
    %114 = vector.broadcast %cst_164 : f32 to vector<1x1x4xf32>
    %115 = arith.divf %113, %114 : vector<1x1x4xf32>
    %116 = arith.mulf %111, %111 : vector<16x16x4xf32>
    %cst_165 = arith.constant dense<0.000000e+00> : vector<4xf32>
    %117 = vector.multi_reduction <add>, %116, %cst_165 [0, 1] : vector<16x16x4xf32> to vector<4xf32>
    %118 = vector.shape_cast %117 : vector<4xf32> to vector<1x1x4xf32>
    %cst_166 = arith.constant 2.560000e+02 : f32
    %119 = vector.broadcast %cst_166 : f32 to vector<1x1x4xf32>
    %120 = arith.divf %118, %119 : vector<1x1x4xf32>
    %121 = arith.mulf %115, %115 : vector<1x1x4xf32>
    %122 = arith.subf %120, %121 : vector<1x1x4xf32>
    %cst_167 = arith.constant 0.000000e+00 : f32
    %123 = vector.broadcast %cst_167 : f32 to vector<1x1x4xf32>
    %124 = arith.maximumf %122, %123 : vector<1x1x4xf32>
    %125 = vector.broadcast %115 : vector<1x1x4xf32> to vector<16x16x4xf32>
    %126 = arith.subf %111, %125 : vector<16x16x4xf32>
    %cst_168 = arith.constant 9.99999974E-6 : f32
    %127 = vector.broadcast %cst_168 : f32 to vector<1x1x4xf32>
    %128 = arith.addf %124, %127 : vector<1x1x4xf32>
    %129 = math.rsqrt %128 : vector<1x1x4xf32>
    %130 = vector.broadcast %129 : vector<1x1x4xf32> to vector<16x16x4xf32>
    %131 = arith.mulf %126, %130 : vector<16x16x4xf32>
    %132 = arith.addf %1, %131 : vector<16x16x4xf32>
    %c0_169 = arith.constant 0 : index
    %c0_170 = arith.constant 0 : index
    %c0_171 = arith.constant 0 : index
    %c0_172 = arith.constant 0 : index
    %133 = vector.load %arg4[%c0_169, %c0_170, %c0_171, %c0_172] : memref<1x16x16x4xf32, #tpu.memory_space<vmem>>, vector<1x16x16x4xf32>
    %134 = vector.shape_cast %133 : vector<1x16x16x4xf32> to vector<16x16x4xf32>
    %135 = vector.shape_cast %132 : vector<16x16x4xf32> to vector<1x16x16x4xf32>
    tpu.vector_store %arg4[%c0_169, %c0_170, %c0_171, %c0_172], %135 {strides = array<i32>} : memref<1x16x16x4xf32, #tpu.memory_space<vmem>>, vector<1x16x16x4xf32>,
    return
  }
  func.func @transform_0(%arg0: i32) -> (i32, i32, i32, i32) {
    %c0_i32 = arith.constant 0 : i32
    %c0_i32_0 = arith.constant 0 : i32
    %c0_i32_1 = arith.constant 0 : i32
    %c0_i32_2 = arith.constant 0 : i32
    return %arg0, %c0_i32, %c0_i32_0, %c0_i32_1 : i32, i32, i32, i32
  }
  func.func @transform_1(%arg0: i32) -> (i32, i32) {
    %c0_i32 = arith.constant 0 : i32
    %c0_i32_0 = arith.constant 0 : i32
    %c0_i32_1 = arith.constant 0 : i32
    return %c0_i32, %c0_i32_0 : i32, i32
  }
  func.func @transform_2(%arg0: i32) -> (i32, i32) {
    %c0_i32 = arith.constant 0 : i32
    %c0_i32_0 = arith.constant 0 : i32
    %c0_i32_1 = arith.constant 0 : i32
    return %c0_i32, %c0_i32_0 : i32, i32
  }
  func.func @transform_3(%arg0: i32) -> (i32, i32, i32, i32) {
    %c0_i32 = arith.constant 0 : i32
    %c0_i32_0 = arith.constant 0 : i32
    %c0_i32_1 = arith.constant 0 : i32
    %c0_i32_2 = arith.constant 0 : i32
    return %arg0, %c0_i32, %c0_i32_0, %c0_i32_1 : i32, i32, i32, i32
  }
}

</mosaic_0001>

<llo_original>
// kernel: tpu_custom_call.1
$region0: #{tpu_custom_call.1}
  #allocation0 [shape = 'u32[]', space=smem, size = 0x4, offset = 0x4, fixed_abs, tag = 'smem constant byte address 0x4 - core index']
  #allocation1 [shape = 'u32[72,128]{1,0:T(1,128)}', space=vmem, size = 0x9000, scoped, tag = 'internal scratch']
  #allocation2 [shape = 'bf16[18,18,4]{2,1,0:T(8,128)(2,1)}', space=vmem, size = 0x1b000, scoped, tag = 'scratch operand']
  #allocation3 [shape = 'bf16[16,16,36]{2,1,0:T(8,128)(2,1)}', space=vmem, size = 0x10000, scoped, tag = 'scratch operand']
  %s0 = inlined_call_operand.vmem [shape: f32[2,16,16,4], index: 0, kind: input, shape index: {}]
  %s1 = inlined_call_operand.vmem [shape: bf16[36,4], index: 1, kind: input, shape index: {}]
  %s2 = inlined_call_operand.vmem [shape: bf16[36,4], index: 2, kind: input, shape index: {}]
  %s3 = inlined_call_operand.vmem [shape: f32[2,16,16,4], index: 3, kind: output, shape index: {}]
  %s4 = sld [smem:[#allocation0]]
  $region45: #{tpu_custom_call.1} parent=0
    _
  %s6 = ssub.s32 1, %s4
  %s7 = scalar_select 0, %s6, %s4
  loop: start=0, step=1, limit=4
  $region2: #{tpu_custom_call.1} parent=0 // loop_pre_header
    _
  $region3: #{tpu_custom_call.1} parent=0 // loop_header
    %s9 = sphi 0, %s13
    %p10 = scmp.ge.s32.totalorder %s9, 4
    %s19 = sphi 0, %s21
    %s22 = sphi 0, %s19
    %s23 = sphi 0, %s22
    %s39 = sphi 0, %s23
    %s43 = sphi 0, %s43
    %s45 = sphi 0, %s43
    %s46 = sphi 0, %s45
    %s60 = sphi 0, %s46
    %s64 = sphi 0, %s64
    %s66 = sphi 0, %s64
    %s67 = sphi 0, %s66
    %s81 = sphi 0, %s67
    %s87 = sphi 0, %s89
    %s90 = sphi 0, %s87
    %s91 = sphi 0, %s90
    %s107 = sphi 0, %s91
  $region4: #{tpu_custom_call.1} parent=0 // loop_header_branch
    %12 = sbr.rel (%p10) target = $region8
  $region5: #{tpu_custom_call.1} parent=0 // loop_body
    %s14 = ssub.s32 %s9, 1
    %s15 = ssub.s32 %s9, 2
    %s16 = sadd.s32 %s9, 1
    %s17 = ssub.s32 %s9, %s16
    %p18 = scmp.eq.s32.totalorder %s17, 0
    %s20 = sadd.s32 %s19, 1
    %s21 = scalar_select %p18, %s19, %s20
    %p24 = pneg %p18
    %p25 = scmp.eq.s32.totalorder %s9, 1
    %p26 = por %p24, %p25
    %p27 = scmp.ne.s32.totalorder %s19, %s22
    %p28 = scmp.eq.s32.totalorder %s9, 0
    %p29 = por %p27, %p28
    %p30 = scmp.ne.s32.totalorder %s19, %s22
    %p31 = scmp.eq.s32.totalorder %s14, 1
    %p32 = por %p30, %p31
    %p33 = scmp.ne.s32.totalorder %s22, %s23
    %p34 = scmp.eq.s32.totalorder %s14, 0
    %p35 = por %p33, %p34
    %p36 = scmp.ne.s32.totalorder %s22, %s23
    %p37 = scmp.eq.s32.totalorder %s15, 1
    %p38 = por %p36, %p37
    %p40 = scmp.ne.s32.totalorder %s23, %s39
    %p41 = scmp.eq.s32.totalorder %s15, 0
    %p42 = por %p40, %p41
    %s44 = sadd.s32 %s43, 1
    %p47 = scmp.eq.s32.totalorder %s9, 1
    %p48 = scmp.ne.s32.totalorder %s43, %s45
    %p49 = scmp.eq.s32.totalorder %s9, 0
    %p50 = por %p48, %p49
    %p51 = scmp.ne.s32.totalorder %s43, %s45
    %p52 = scmp.eq.s32.totalorder %s14, 1
    %p53 = por %p51, %p52
    %p54 = scmp.ne.s32.totalorder %s45, %s46
    %p55 = scmp.eq.s32.totalorder %s14, 0
    %p56 = por %p54, %p55
    %p57 = scmp.ne.s32.totalorder %s45, %s46
    %p58 = scmp.eq.s32.totalorder %s15, 1
    %p59 = por %p57, %p58
    %p61 = scmp.ne.s32.totalorder %s46, %s60
    %p62 = scmp.eq.s32.totalorder %s15, 0
    %p63 = por %p61, %p62
    %s65 = sadd.s32 %s64, 1
    %p68 = scmp.eq.s32.totalorder %s9, 1
    %p69 = scmp.ne.s32.totalorder %s64, %s66
    %p70 = scmp.eq.s32.totalorder %s9, 0
    %p71 = por %p69, %p70
    %p72 = scmp.ne.s32.totalorder %s64, %s66
    %p73 = scmp.eq.s32.totalorder %s14, 1
    %p74 = por %p72, %p73
    %p75 = scmp.ne.s32.totalorder %s66, %s67
    %p76 = scmp.eq.s32.totalorder %s14, 0
    %p77 = por %p75, %p76
    %p78 = scmp.ne.s32.totalorder %s66, %s67
    %p79 = scmp.eq.s32.totalorder %s15, 1
    %p80 = por %p78, %p79
    %p82 = scmp.ne.s32.totalorder %s67, %s81
    %p83 = scmp.eq.s32.totalorder %s15, 0
    %p84 = por %p82, %p83
    %s85 = ssub.s32 %s9, %s16
    %p86 = scmp.eq.s32.totalorder %s85, 0
    %s88 = sadd.s32 %s87, 1
    %s89 = scalar_select %p86, %s87, %s88
    %p92 = pneg %p86
    %p93 = scmp.eq.s32.totalorder %s9, 1
    %p94 = por %p92, %p93
    %p95 = scmp.ne.s32.totalorder %s87, %s90
    %p96 = scmp.eq.s32.totalorder %s9, 0
    %p97 = por %p95, %p96
    %p98 = scmp.ne.s32.totalorder %s87, %s90
    %p99 = scmp.eq.s32.totalorder %s14, 1
    %p100 = por %p98, %p99
    %p101 = scmp.ne.s32.totalorder %s90, %s91
    %p102 = scmp.eq.s32.totalorder %s14, 0
    %p103 = por %p101, %p102
    %p104 = scmp.ne.s32.totalorder %s90, %s91
    %p105 = scmp.eq.s32.totalorder %s15, 1
    %p106 = por %p104, %p105
    %p108 = scmp.ne.s32.totalorder %s91, %s107
    %p109 = scmp.eq.s32.totalorder %s15, 0
    %p110 = por %p108, %p109
    %p111 = scmp.le.s32.totalorder 1, %s9
    %p112 = scmp.lt.s32.totalorder %s9, 3
    %p113 = pnand %p111, %p112
    %p114 = pneg %p113
    // Predicated region
    $region9: #{tpu_custom_call.1} parent=5 // pred_check
      _
    $region10: #{tpu_custom_call.1} parent=5 // pred_check_branch
      %116 = sbr.rel (%p113) target = $region12
    $region11: #{tpu_custom_call.1} parent=5 // pred_region
      %s117 = ssub.s32 %s9, 1
      // Predicated region
      $region13: #{tpu_custom_call.1} parent=11 // pred_check
        %p118 = pneg %p56
      $region14: #{tpu_custom_call.1} parent=11 // pred_check_branch
        %120 = sbr.rel (%p118) target = $region16
      $region15: #{tpu_custom_call.1} parent=11 // pred_region
        _
      $region16: #{tpu_custom_call.1} parent=11 // pred_fallthru
        _
      // Predicated region
      $region17: #{tpu_custom_call.1} parent=11 // pred_check
        %p121 = pneg %p77
      $region18: #{tpu_custom_call.1} parent=11 // pred_check_branch
        %123 = sbr.rel (%p121) target = $region20
      $region19: #{tpu_custom_call.1} parent=11 // pred_region
        _
      $region20: #{tpu_custom_call.1} parent=11 // pred_fallthru
        _
    $region12: #{tpu_custom_call.1} parent=5 // pred_fallthru
      _
    %p124 = scmp.lt.s32.totalorder %s9, 2
    // Predicated region
    $region21: #{tpu_custom_call.1} parent=5 // pred_check
      %p125 = pneg %p124
    $region22: #{tpu_custom_call.1} parent=5 // pred_check_branch
      %127 = sbr.rel (%p125) target = $region24
    $region23: #{tpu_custom_call.1} parent=5 // pred_region
      // Predicated region
      $region25: #{tpu_custom_call.1} parent=23 // pred_check
        %p128 = pneg %p29
      $region26: #{tpu_custom_call.1} parent=23 // pred_check_branch
        %130 = sbr.rel (%p128) target = $region28
      $region27: #{tpu_custom_call.1} parent=23 // pred_region
        %p131 = scmp.lt.s32.totalorder %s9, 1
        %s132 = scalar_select %p131, %s9, 1
        %s133 = smul.addr %s132, 32
        %s134 = smul.addr %s133, 8
        %s135 = scalar_lea.vmem %s0, %s134
      $region28: #{tpu_custom_call.1} parent=23 // pred_fallthru
        _
    $region24: #{tpu_custom_call.1} parent=5 // pred_fallthru
      _
    %p136 = scmp.le.s32.totalorder 1, %s9
    %p137 = scmp.lt.s32.totalorder %s9, 3
    %p138 = pnand %p136, %p137
    %p139 = pneg %p138
    // Predicated region
    $region29: #{tpu_custom_call.1} parent=5 // pred_check
      _
    $region30: #{tpu_custom_call.1} parent=5 // pred_check_branch
      %141 = sbr.rel (%p138) target = $region32
    $region31: #{tpu_custom_call.1} parent=5 // pred_region
      %s142 = ssub.s32 %s9, 1
      %p143 = scmp.lt.s32.totalorder %s14, 1
      %s144 = scalar_select %p143, %s14, 1
      %s145 = smul.addr %s144, 32
      %s146 = smul.addr %s145, 8
      %s147 = scalar_lea.vmem %s0, %s146
      %p148 = pneg %p35
      %p149 = pneg %p32
      %p150 = pneg %p56
      %p151 = pneg %p53
      %p152 = pneg %p77
      %p153 = pneg %p74
      %p154 = pneg %p103
      %p155 = pneg %p100
      %p156 = scmp.lt.s32.totalorder %s14, 1
      %s157 = scalar_select %p156, %s14, 1
      %s158 = smul.addr %s157, 32
      %s159 = smul.addr %s158, 8
      %s160 = scalar_lea.vmem %s3, %s159
      %p161 = scmp.lt.s32.totalorder %s14, 1
      %s162 = scalar_select %p161, %s14, 1
      %s163 = smul.addr %s162, 32
      %s164 = smul.addr %s163, 8
      %s165 = scalar_lea.vmem %s0, %s164
      %p166 = scmp.lt.s32.totalorder %s14, 1
      %s167 = scalar_select %p166, %s14, 1
      %s168 = smul.addr %s167, 32
      %s169 = smul.addr %s168, 8
      %s170 = scalar_lea.vmem %s3, %s169
      %v172 = vld [vmem:[%s165] sm:$0xff]
      %v173 = vld [vmem:[%s165 + $0x8] sm:$0xff]
      %v174 = vld [vmem:[%s165 + $0x10] sm:$0xff]
      %v175 = vld [vmem:[%s165 + $0x18] sm:$0xff]
      %v176 = vld [vmem:[%s165 + $0x20] sm:$0xff]
      %v177 = vld [vmem:[%s165 + $0x28] sm:$0xff]
      %v178 = vld [vmem:[%s165 + $0x30] sm:$0xff]
      %v179 = vld [vmem:[%s165 + $0x38] sm:$0xff]
      %v180 = vld [vmem:[%s165 + $0x40] sm:$0xff]
      %v181 = vld [vmem:[%s165 + $0x48] sm:$0xff]
      %v182 = vld [vmem:[%s165 + $0x50] sm:$0xff]
      %v183 = vld [vmem:[%s165 + $0x58] sm:$0xff]
      %v184 = vld [vmem:[%s165 + $0x60] sm:$0xff]
      %v185 = vld [vmem:[%s165 + $0x68] sm:$0xff]
      %v186 = vld [vmem:[%s165 + $0x70] sm:$0xff]
      %v187 = vld [vmem:[%s165 + $0x78] sm:$0xff]
      %v188 = vld [vmem:[%s165 + $0x80] sm:$0xff]
      %v189 = vld [vmem:[%s165 + $0x88] sm:$0xff]
      %v190 = vld [vmem:[%s165 + $0x90] sm:$0xff]
      %v191 = vld [vmem:[%s165 + $0x98] sm:$0xff]
      %v192 = vld [vmem:[%s165 + $0xa0] sm:$0xff]
      %v193 = vld [vmem:[%s165 + $0xa8] sm:$0xff]
      %v194 = vld [vmem:[%s165 + $0xb0] sm:$0xff]
      %v195 = vld [vmem:[%s165 + $0xb8] sm:$0xff]
      %v196 = vld [vmem:[%s165 + $0xc0] sm:$0xff]
      %v197 = vld [vmem:[%s165 + $0xc8] sm:$0xff]
      %v198 = vld [vmem:[%s165 + $0xd0] sm:$0xff]
      %v199 = vld [vmem:[%s165 + $0xd8] sm:$0xff]
      %v200 = vld [vmem:[%s165 + $0xe0] sm:$0xff]
      %v201 = vld [vmem:[%s165 + $0xe8] sm:$0xff]
      %v202 = vld [vmem:[%s165 + $0xf0] sm:$0xff]
      %v203 = vld [vmem:[%s165 + $0xf8] sm:$0xff]
      %v204 = vpack.c.bf16 %v172, %v172
      %v205 = vpack.c.bf16 %v173, %v173
      %v206 = vpack.c.bf16 %v174, %v174
      %v207 = vpack.c.bf16 %v175, %v175
      %v208 = vpack.c.bf16 %v176, %v176
      %v209 = vpack.c.bf16 %v177, %v177
      %v210 = vpack.c.bf16 %v178, %v178
      %v211 = vpack.c.bf16 %v179, %v179
      %v212 = vpack.c.bf16 %v180, %v180
      %v213 = vpack.c.bf16 %v181, %v181
      %v214 = vpack.c.bf16 %v182, %v182
      %v215 = vpack.c.bf16 %v183, %v183
      %v216 = vpack.c.bf16 %v184, %v184
      %v217 = vpack.c.bf16 %v185, %v185
      %v218 = vpack.c.bf16 %v186, %v186
      %v219 = vpack.c.bf16 %v187, %v187
      %v220 = vpack.c.bf16 %v188, %v188
      %v221 = vpack.c.bf16 %v189, %v189
      %v222 = vpack.c.bf16 %v190, %v190
      %v223 = vpack.c.bf16 %v191, %v191
      %v224 = vpack.c.bf16 %v192, %v192
      %v225 = vpack.c.bf16 %v193, %v193
      %v226 = vpack.c.bf16 %v194, %v194
      %v227 = vpack.c.bf16 %v195, %v195
      %v228 = vpack.c.bf16 %v196, %v196
      %v229 = vpack.c.bf16 %v197, %v197
      %v230 = vpack.c.bf16 %v198, %v198
      %v231 = vpack.c.bf16 %v199, %v199
      %v232 = vpack.c.bf16 %v200, %v200
      %v233 = vpack.c.bf16 %v201, %v201
      %v234 = vpack.c.bf16 %v202, %v202
      %v235 = vpack.c.bf16 %v203, %v203
      %vm236 = vsmask.f32 256
      %vm237 = vsmask.f32 4368
      %vm238 = vmor %vm236, %vm237
      %v240 = vshrl.u32 %v204, 16
      %v242 = vrot.slane %v240, 7
      %v243 = vshll.u32 %v204, 16
      %v245 = vor.u32 %v242, %v243
      %v246 = vrot.slane %v242, 4
      %v248 = vshrl.u32 %v205, 16
      %v250 = vrot.slane %v248, 7
      %v251 = vshll.u32 %v205, 16
      %v253 = vor.u32 %v250, %v251
      %v254 = vsel %vm238, %v246, %v253
      %v255 = vrot.slane %v250, 4
      %v257 = vshrl.u32 %v206, 16
      %v259 = vrot.slane %v257, 7
      %v260 = vshll.u32 %v206, 16
      %v262 = vor.u32 %v259, %v260
      %v263 = vrot.slane %v259, 4
      %v265 = vshrl.u32 %v207, 16
      %v267 = vrot.slane %v265, 7
      %v268 = vshll.u32 %v207, 16
      %v270 = vor.u32 %v267, %v268
      %v271 = vsel %vm238, %v263, %v270
      %v272 = vrot.slane %v267, 4
      %v274 = vshrl.u32 %v208, 16
      %v276 = vrot.slane %v274, 7
      %v277 = vshll.u32 %v208, 16
      %v279 = vor.u32 %v276, %v277
      %v280 = vrot.slane %v276, 4
      %v282 = vshrl.u32 %v209, 16
      %v284 = vrot.slane %v282, 7
      %v285 = vshll.u32 %v209, 16
      %v287 = vor.u32 %v284, %v285
      %v288 = vsel %vm238, %v280, %v287
      %v289 = vrot.slane %v284, 4
      %v291 = vshrl.u32 %v210, 16
      %v293 = vrot.slane %v291, 7
      %v294 = vshll.u32 %v210, 16
      %v296 = vor.u32 %v293, %v294
      %v297 = vrot.slane %v293, 4
      %v299 = vshrl.u32 %v211, 16
      %v301 = vrot.slane %v299, 7
      %v302 = vshll.u32 %v211, 16
      %v304 = vor.u32 %v301, %v302
      %v305 = vsel %vm238, %v297, %v304
      %v306 = vrot.slane %v301, 4
      %v308 = vshrl.u32 %v212, 16
      %v310 = vrot.slane %v308, 7
      %v311 = vshll.u32 %v212, 16
      %v313 = vor.u32 %v310, %v311
      %v314 = vrot.slane %v310, 4
      %v316 = vshrl.u32 %v213, 16
      %v318 = vrot.slane %v316, 7
      %v319 = vshll.u32 %v213, 16
      %v321 = vor.u32 %v318, %v319
      %v322 = vsel %vm238, %v314, %v321
      %v323 = vrot.slane %v318, 4
      %v325 = vshrl.u32 %v214, 16
      %v327 = vrot.slane %v325, 7
      %v328 = vshll.u32 %v214, 16
      %v330 = vor.u32 %v327, %v328
      %v331 = vrot.slane %v327, 4
      %v333 = vshrl.u32 %v215, 16
      %v335 = vrot.slane %v333, 7
      %v336 = vshll.u32 %v215, 16
      %v338 = vor.u32 %v335, %v336
      %v339 = vsel %vm238, %v331, %v338
      %v340 = vrot.slane %v335, 4
      %v342 = vshrl.u32 %v216, 16
      %v344 = vrot.slane %v342, 7
      %v345 = vshll.u32 %v216, 16
      %v347 = vor.u32 %v344, %v345
      %v348 = vrot.slane %v344, 4
      %v350 = vshrl.u32 %v217, 16
      %v352 = vrot.slane %v350, 7
      %v353 = vshll.u32 %v217, 16
      %v355 = vor.u32 %v352, %v353
      %v356 = vsel %vm238, %v348, %v355
      %v357 = vrot.slane %v352, 4
      %v359 = vshrl.u32 %v218, 16
      %v361 = vrot.slane %v359, 7
      %v362 = vshll.u32 %v218, 16
      %v364 = vor.u32 %v361, %v362
      %v365 = vrot.slane %v361, 4
      %v367 = vshrl.u32 %v219, 16
      %v369 = vrot.slane %v367, 7
      %v370 = vshll.u32 %v219, 16
      %v372 = vor.u32 %v369, %v370
      %v373 = vsel %vm238, %v365, %v372
      %v374 = vrot.slane %v369, 4
      %v376 = vshrl.u32 %v220, 16
      %v378 = vrot.slane %v376, 7
      %v379 = vshll.u32 %v220, 16
      %v381 = vor.u32 %v378, %v379
      %v382 = vrot.slane %v378, 4
      %v384 = vshrl.u32 %v221, 16
      %v386 = vrot.slane %v384, 7
      %v387 = vshll.u32 %v221, 16
      %v389 = vor.u32 %v386, %v387
      %v390 = vsel %vm238, %v382, %v389
      %v391 = vrot.slane %v386, 4
      %v393 = vshrl.u32 %v222, 16
      %v395 = vrot.slane %v393, 7
      %v396 = vshll.u32 %v222, 16
      %v398 = vor.u32 %v395, %v396
      %v399 = vrot.slane %v395, 4
      %v401 = vshrl.u32 %v223, 16
      %v403 = vrot.slane %v401, 7
      %v404 = vshll.u32 %v223, 16
      %v406 = vor.u32 %v403, %v404
      %v407 = vsel %vm238, %v399, %v406
      %v408 = vrot.slane %v403, 4
      %v410 = vshrl.u32 %v224, 16
      %v412 = vrot.slane %v410, 7
      %v413 = vshll.u32 %v224, 16
      %v415 = vor.u32 %v412, %v413
      %v416 = vrot.slane %v412, 4
      %v418 = vshrl.u32 %v225, 16
      %v420 = vrot.slane %v418, 7
      %v421 = vshll.u32 %v225, 16
      %v423 = vor.u32 %v420, %v421
      %v424 = vsel %vm238, %v416, %v423
      %v425 = vrot.slane %v420, 4
      %v427 = vshrl.u32 %v226, 16
      %v429 = vrot.slane %v427, 7
      %v430 = vshll.u32 %v226, 16
      %v432 = vor.u32 %v429, %v430
      %v433 = vrot.slane %v429, 4
      %v435 = vshrl.u32 %v227, 16
      %v437 = vrot.slane %v435, 7
      %v438 = vshll.u32 %v227, 16
      %v440 = vor.u32 %v437, %v438
      %v441 = vsel %vm238, %v433, %v440
      %v442 = vrot.slane %v437, 4
      %v444 = vshrl.u32 %v228, 16
      %v446 = vrot.slane %v444, 7
      %v447 = vshll.u32 %v228, 16
      %v449 = vor.u32 %v446, %v447
      %v450 = vrot.slane %v446, 4
      %v452 = vshrl.u32 %v229, 16
      %v454 = vrot.slane %v452, 7
      %v455 = vshll.u32 %v229, 16
      %v457 = vor.u32 %v454, %v455
      %v458 = vsel %vm238, %v450, %v457
      %v459 = vrot.slane %v454, 4
      %v461 = vshrl.u32 %v230, 16
      %v463 = vrot.slane %v461, 7
      %v464 = vshll.u32 %v230, 16
      %v466 = vor.u32 %v463, %v464
      %v467 = vrot.slane %v463, 4
      %v469 = vshrl.u32 %v231, 16
      %v471 = vrot.slane %v469, 7
      %v472 = vshll.u32 %v231, 16
      %v474 = vor.u32 %v471, %v472
      %v475 = vsel %vm238, %v467, %v474
      %v476 = vrot.slane %v471, 4
      %v478 = vshrl.u32 %v232, 16
      %v480 = vrot.slane %v478, 7
      %v481 = vshll.u32 %v232, 16
      %v483 = vor.u32 %v480, %v481
      %v484 = vrot.slane %v480, 4
      %v486 = vshrl.u32 %v233, 16
      %v488 = vrot.slane %v486, 7
      %v489 = vshll.u32 %v233, 16
      %v491 = vor.u32 %v488, %v489
      %v492 = vsel %vm238, %v484, %v491
      %v493 = vrot.slane %v488, 4
      %v495 = vshrl.u32 %v234, 16
      %v497 = vrot.slane %v495, 7
      %v498 = vshll.u32 %v234, 16
      %v500 = vor.u32 %v497, %v498
      %v501 = vrot.slane %v497, 4
      %v503 = vshrl.u32 %v235, 16
      %v505 = vrot.slane %v503, 7
      %v506 = vshll.u32 %v235, 16
      %v508 = vor.u32 %v505, %v506
      %v509 = vsel %vm238, %v501, %v508
      %v510 = vrot.slane %v505, 4
      %s559 = scalar_lea.vmem [#allocation2], 12
      %vm560 = vcmask 27648
      %vm561 = vsmask.f32 7938
      %vm562 = vmand %vm560, %vm561
      %v563 = vld [vmem:[%s559] sm:$0xf]
      %v564 = vsel %vm562, %v245, %v563
      %565 = vst [vmem:[%s559] sm:$0xf] %v564
      %vm566 = vcmask 27648
      %567 = vst.msk [vmem:[%s559 + $0x4] sm:$0xf] %vm566, %v254
      %vm568 = vcmask 24576
      %vm569 = vmand %vm568, %vm236
      %v570 = vld [vmem:[%s559 + $0x8] sm:$0x1]
      %v571 = vsel %vm569, %v255, %v570
      %572 = vst [vmem:[%s559 + $0x8] sm:$0x1] %v571
      %v573 = vld [vmem:[%s559 + $0xc] sm:$0xf]
      %v574 = vsel %vm562, %v262, %v573
      %575 = vst [vmem:[%s559 + $0xc] sm:$0xf] %v574
      %576 = vst.msk [vmem:[%s559 + $0x10] sm:$0xf] %vm566, %v271
      %v577 = vld [vmem:[%s559 + $0x14] sm:$0x1]
      %v578 = vsel %vm569, %v272, %v577
      %579 = vst [vmem:[%s559 + $0x14] sm:$0x1] %v578
      %v580 = vld [vmem:[%s559 + $0x18] sm:$0xf]
      %v581 = vsel %vm562, %v279, %v580
      %582 = vst [vmem:[%s559 + $0x18] sm:$0xf] %v581
      %583 = vst.msk [vmem:[%s559 + $0x1c] sm:$0xf] %vm566, %v288
      %v584 = vld [vmem:[%s559 + $0x20] sm:$0x1]
      %v585 = vsel %vm569, %v289, %v584
      %586 = vst [vmem:[%s559 + $0x20] sm:$0x1] %v585
      %v587 = vld [vmem:[%s559 + $0x24] sm:$0xf]
      %v588 = vsel %vm562, %v296, %v587
      %589 = vst [vmem:[%s559 + $0x24] sm:$0xf] %v588
      %590 = vst.msk [vmem:[%s559 + $0x28] sm:$0xf] %vm566, %v305
      %v591 = vld [vmem:[%s559 + $0x2c] sm:$0x1]
      %v592 = vsel %vm569, %v306, %v591
      %593 = vst [vmem:[%s559 + $0x2c] sm:$0x1] %v592
      %v594 = vld [vmem:[%s559 + $0x30] sm:$0xf]
      %v595 = vsel %vm562, %v313, %v594
      %596 = vst [vmem:[%s559 + $0x30] sm:$0xf] %v595
      %597 = vst.msk [vmem:[%s559 + $0x34] sm:$0xf] %vm566, %v322
      %v598 = vld [vmem:[%s559 + $0x38] sm:$0x1]
      %v599 = vsel %vm569, %v323, %v598
      %600 = vst [vmem:[%s559 + $0x38] sm:$0x1] %v599
      %v601 = vld [vmem:[%s559 + $0x3c] sm:$0xf]
      %v602 = vsel %vm562, %v330, %v601
      %603 = vst [vmem:[%s559 + $0x3c] sm:$0xf] %v602
      %604 = vst.msk [vmem:[%s559 + $0x40] sm:$0xf] %vm566, %v339
      %v605 = vld [vmem:[%s559 + $0x44] sm:$0x1]
      %v606 = vsel %vm569, %v340, %v605
      %607 = vst [vmem:[%s559 + $0x44] sm:$0x1] %v606
      %v608 = vld [vmem:[%s559 + $0x48] sm:$0xf]
      %v609 = vsel %vm562, %v347, %v608
      %610 = vst [vmem:[%s559 + $0x48] sm:$0xf] %v609
      %611 = vst.msk [vmem:[%s559 + $0x4c] sm:$0xf] %vm566, %v356
      %v612 = vld [vmem:[%s559 + $0x50] sm:$0x1]
      %v613 = vsel %vm569, %v357, %v612
      %614 = vst [vmem:[%s559 + $0x50] sm:$0x1] %v613
      %v615 = vld [vmem:[%s559 + $0x54] sm:$0xf]
      %v616 = vsel %vm562, %v364, %v615
      %617 = vst [vmem:[%s559 + $0x54] sm:$0xf] %v616
      %618 = vst.msk [vmem:[%s559 + $0x58] sm:$0xf] %vm566, %v373
      %v619 = vld [vmem:[%s559 + $0x5c] sm:$0x1]
      %v620 = vsel %vm569, %v374, %v619
      %621 = vst [vmem:[%s559 + $0x5c] sm:$0x1] %v620
      %v622 = vld [vmem:[%s559 + $0x60] sm:$0xf]
      %v623 = vsel %vm562, %v381, %v622
      %624 = vst [vmem:[%s559 + $0x60] sm:$0xf] %v623
      %625 = vst.msk [vmem:[%s559 + $0x64] sm:$0xf] %vm566, %v390
      %v626 = vld [vmem:[%s559 + $0x68] sm:$0x1]
      %v627 = vsel %vm569, %v391, %v626
      %628 = vst [vmem:[%s559 + $0x68] sm:$0x1] %v627
      %v629 = vld [vmem:[%s559 + $0x6c] sm:$0xf]
      %v630 = vsel %vm562, %v398, %v629
      %631 = vst [vmem:[%s559 + $0x6c] sm:$0xf] %v630
      %632 = vst.msk [vmem:[%s559 + $0x70] sm:$0xf] %vm566, %v407
      %v633 = vld [vmem:[%s559 + $0x74] sm:$0x1]
      %v634 = vsel %vm569, %v408, %v633
      %635 = vst [vmem:[%s559 + $0x74] sm:$0x1] %v634
      %v636 = vld [vmem:[%s559 + $0x78] sm:$0xf]
      %v637 = vsel %vm562, %v415, %v636
      %638 = vst [vmem:[%s559 + $0x78] sm:$0xf] %v637
      %639 = vst.msk [vmem:[%s559 + $0x7c] sm:$0xf] %vm566, %v424
      %v640 = vld [vmem:[%s559 + $0x80] sm:$0x1]
      %v641 = vsel %vm569, %v425, %v640
      %642 = vst [vmem:[%s559 + $0x80] sm:$0x1] %v641
      %v643 = vld [vmem:[%s559 + $0x84] sm:$0xf]
      %v644 = vsel %vm562, %v432, %v643
      %645 = vst [vmem:[%s559 + $0x84] sm:$0xf] %v644
      %646 = vst.msk [vmem:[%s559 + $0x88] sm:$0xf] %vm566, %v441
      %v647 = vld [vmem:[%s559 + $0x8c] sm:$0x1]
      %v648 = vsel %vm569, %v442, %v647
      %649 = vst [vmem:[%s559 + $0x8c] sm:$0x1] %v648
      %v650 = vld [vmem:[%s559 + $0x90] sm:$0xf]
      %v651 = vsel %vm562, %v449, %v650
      %652 = vst [vmem:[%s559 + $0x90] sm:$0xf] %v651
      %653 = vst.msk [vmem:[%s559 + $0x94] sm:$0xf] %vm566, %v458
      %v654 = vld [vmem:[%s559 + $0x98] sm:$0x1]
      %v655 = vsel %vm569, %v459, %v654
      %656 = vst [vmem:[%s559 + $0x98] sm:$0x1] %v655
      %v657 = vld [vmem:[%s559 + $0x9c] sm:$0xf]
      %v658 = vsel %vm562, %v466, %v657
      %659 = vst [vmem:[%s559 + $0x9c] sm:$0xf] %v658
      %660 = vst.msk [vmem:[%s559 + $0xa0] sm:$0xf] %vm566, %v475
      %v661 = vld [vmem:[%s559 + $0xa4] sm:$0x1]
      %v662 = vsel %vm569, %v476, %v661
      %663 = vst [vmem:[%s559 + $0xa4] sm:$0x1] %v662
      %v664 = vld [vmem:[%s559 + $0xa8] sm:$0xf]
      %v665 = vsel %vm562, %v483, %v664
      %666 = vst [vmem:[%s559 + $0xa8] sm:$0xf] %v665
      %667 = vst.msk [vmem:[%s559 + $0xac] sm:$0xf] %vm566, %v492
      %v668 = vld [vmem:[%s559 + $0xb0] sm:$0x1]
      %v669 = vsel %vm569, %v493, %v668
      %670 = vst [vmem:[%s559 + $0xb0] sm:$0x1] %v669
      %v671 = vld [vmem:[%s559 + $0xb4] sm:$0xf]
      %v672 = vsel %vm562, %v500, %v671
      %673 = vst [vmem:[%s559 + $0xb4] sm:$0xf] %v672
      %674 = vst.msk [vmem:[%s559 + $0xb8] sm:$0xf] %vm566, %v509
      %v675 = vld [vmem:[%s559 + $0xbc] sm:$0x1]
      %v676 = vsel %vm569, %v510, %v675
      %677 = vst [vmem:[%s559 + $0xbc] sm:$0x1] %v676
      %v678 = vld [vmem:[#allocation2] sm:$0xf]
      %v679 = vsel %vm562, %v262, %v678
      %680 = vst [vmem:[#allocation2] sm:$0xf] %v679
      %681 = vst.msk [vmem:[#allocation2 + $0x4] sm:$0xf] %vm566, %v271
      %v682 = vld [vmem:[#allocation2 + $0x8] sm:$0x1]
      %v683 = vsel %vm569, %v272, %v682
      %684 = vst [vmem:[#allocation2 + $0x8] sm:$0x1] %v683
      %s685 = scalar_lea.vmem [#allocation2], 204
      %v686 = vld [vmem:[%s685] sm:$0xf]
      %v687 = vsel %vm562, %v483, %v686
      %688 = vst [vmem:[%s685] sm:$0xf] %v687
      %689 = vst.msk [vmem:[%s685 + $0x4] sm:$0xf] %vm566, %v492
      %v690 = vld [vmem:[%s685 + $0x8] sm:$0x1]
      %v691 = vsel %vm569, %v493, %v690
      %692 = vst [vmem:[%s685 + $0x8] sm:$0x1] %v691
      %v693 = vld [vmem:[#allocation2] sm:$0x2]
      %v694 = vld [vmem:[#allocation2 + $0xc] sm:$0x2]
      %v695 = vld [vmem:[#allocation2 + $0x18] sm:$0x2]
      %v696 = vld [vmem:[#allocation2 + $0x24] sm:$0x2]
      %v697 = vld [vmem:[#allocation2 + $0x30] sm:$0x2]
      %v698 = vld [vmem:[#allocation2 + $0x3c] sm:$0x2]
      %v699 = vld [vmem:[#allocation2 + $0x48] sm:$0x2]
      %v700 = vld [vmem:[#allocation2 + $0x54] sm:$0x2]
      %v701 = vld [vmem:[#allocation2 + $0x60] sm:$0x2]
      %v702 = vld [vmem:[#allocation2 + $0x6c] sm:$0x2]
      %v703 = vld [vmem:[#allocation2 + $0x78] sm:$0x2]
      %v704 = vld [vmem:[#allocation2 + $0x84] sm:$0x2]
      %v705 = vld [vmem:[#allocation2 + $0x90] sm:$0x2]
      %v706 = vld [vmem:[#allocation2 + $0x9c] sm:$0x2]
      %v707 = vld [vmem:[#allocation2 + $0xa8] sm:$0x2]
      %v708 = vld [vmem:[#allocation2 + $0xb4] sm:$0x2]
      %v709 = vld [vmem:[#allocation2 + $0xc0] sm:$0x2]
      %v710 = vld [vmem:[#allocation2 + $0xcc] sm:$0x2]
      %v729 = vrot.slane %v693, 5
      %v730 = vrot.slane %v729, 4
      %v731 = vrot.slane %v694, 5
      %v732 = vrot.slane %v731, 4
      %v733 = vrot.slane %v695, 5
      %v734 = vrot.slane %v733, 4
      %v735 = vrot.slane %v696, 5
      %v736 = vrot.slane %v735, 4
      %v737 = vrot.slane %v697, 5
      %v738 = vrot.slane %v737, 4
      %v739 = vrot.slane %v698, 5
      %v740 = vrot.slane %v739, 4
      %v741 = vrot.slane %v699, 5
      %v742 = vrot.slane %v741, 4
      %v743 = vrot.slane %v700, 5
      %v744 = vrot.slane %v743, 4
      %v745 = vrot.slane %v701, 5
      %v746 = vrot.slane %v745, 4
      %v747 = vrot.slane %v702, 5
      %v748 = vrot.slane %v747, 4
      %v749 = vrot.slane %v703, 5
      %v750 = vrot.slane %v749, 4
      %v751 = vrot.slane %v704, 5
      %v752 = vrot.slane %v751, 4
      %v753 = vrot.slane %v705, 5
      %v754 = vrot.slane %v753, 4
      %v755 = vrot.slane %v706, 5
      %v756 = vrot.slane %v755, 4
      %v757 = vrot.slane %v707, 5
      %v758 = vrot.slane %v757, 4
      %v759 = vrot.slane %v708, 5
      %v760 = vrot.slane %v759, 4
      %v761 = vrot.slane %v709, 5
      %v762 = vrot.slane %v761, 4
      %v763 = vrot.slane %v710, 5
      %v764 = vrot.slane %v763, 4
      %v783 = vld [vmem:[#allocation2] sm:$0x1]
      %v784 = vsel %vm569, %v730, %v783
      %785 = vst [vmem:[#allocation2] sm:$0x1] %v784
      %v786 = vld [vmem:[#allocation2 + $0xc] sm:$0x1]
      %v787 = vsel %vm569, %v732, %v786
      %788 = vst [vmem:[#allocation2 + $0xc] sm:$0x1] %v787
      %v789 = vld [vmem:[#allocation2 + $0x18] sm:$0x1]
      %v790 = vsel %vm569, %v734, %v789
      %791 = vst [vmem:[#allocation2 + $0x18] sm:$0x1] %v790
      %v792 = vld [vmem:[#allocation2 + $0x24] sm:$0x1]
      %v793 = vsel %vm569, %v736, %v792
      %794 = vst [vmem:[#allocation2 + $0x24] sm:$0x1] %v793
      %v795 = vld [vmem:[#allocation2 + $0x30] sm:$0x1]
      %v796 = vsel %vm569, %v738, %v795
      %797 = vst [vmem:[#allocation2 + $0x30] sm:$0x1] %v796
      %v798 = vld [vmem:[#allocation2 + $0x3c] sm:$0x1]
      %v799 = vsel %vm569, %v740, %v798
      %800 = vst [vmem:[#allocation2 + $0x3c] sm:$0x1] %v799
      %v801 = vld [vmem:[#allocation2 + $0x48] sm:$0x1]
      %v802 = vsel %vm569, %v742, %v801
      %803 = vst [vmem:[#allocation2 + $0x48] sm:$0x1] %v802
      %v804 = vld [vmem:[#allocation2 + $0x54] sm:$0x1]
      %v805 = vsel %vm569, %v744, %v804
      %806 = vst [vmem:[#allocation2 + $0x54] sm:$0x1] %v805
      %v807 = vld [vmem:[#allocation2 + $0x60] sm:$0x1]
      %v808 = vsel %vm569, %v746, %v807
      %809 = vst [vmem:[#allocation2 + $0x60] sm:$0x1] %v808
      %v810 = vld [vmem:[#allocation2 + $0x6c] sm:$0x1]
      %v811 = vsel %vm569, %v748, %v810
      %812 = vst [vmem:[#allocation2 + $0x6c] sm:$0x1] %v811
      %v813 = vld [vmem:[#allocation2 + $0x78] sm:$0x1]
      %v814 = vsel %vm569, %v750, %v813
      %815 = vst [vmem:[#allocation2 + $0x78] sm:$0x1] %v814
      %v816 = vld [vmem:[#allocation2 + $0x84] sm:$0x1]
      %v817 = vsel %vm569, %v752, %v816
      %818 = vst [vmem:[#allocation2 + $0x84] sm:$0x1] %v817
      %v819 = vld [vmem:[#allocation2 + $0x90] sm:$0x1]
      %v820 = vsel %vm569, %v754, %v819
      %821 = vst [vmem:[#allocation2 + $0x90] sm:$0x1] %v820
      %v822 = vld [vmem:[#allocation2 + $0x9c] sm:$0x1]
      %v823 = vsel %vm569, %v756, %v822
      %824 = vst [vmem:[#allocation2 + $0x9c] sm:$0x1] %v823
      %v825 = vld [vmem:[#allocation2 + $0xa8] sm:$0x1]
      %v826 = vsel %vm569, %v758, %v825
      %827 = vst [vmem:[#allocation2 + $0xa8] sm:$0x1] %v826
      %v828 = vld [vmem:[#allocation2 + $0xb4] sm:$0x1]
      %v829 = vsel %vm569, %v760, %v828
      %830 = vst [vmem:[#allocation2 + $0xb4] sm:$0x1] %v829
      %v831 = vld [vmem:[#allocation2 + $0xc0] sm:$0x1]
      %v832 = vsel %vm569, %v762, %v831
      %833 = vst [vmem:[#allocation2 + $0xc0] sm:$0x1] %v832
      %v834 = vld [vmem:[#allocation2 + $0xcc] sm:$0x1]
      %v835 = vsel %vm569, %v764, %v834
      %836 = vst [vmem:[#allocation2 + $0xcc] sm:$0x1] %v835
      %v837 = vld [vmem:[#allocation2 + $0x4] sm:$0x8]
      %v838 = vld [vmem:[#allocation2 + $0x10] sm:$0x8]
      %v839 = vld [vmem:[#allocation2 + $0x1c] sm:$0x8]
      %v840 = vld [vmem:[#allocation2 + $0x28] sm:$0x8]
      %v841 = vld [vmem:[#allocation2 + $0x34] sm:$0x8]
      %v842 = vld [vmem:[#allocation2 + $0x40] sm:$0x8]
      %v843 = vld [vmem:[#allocation2 + $0x4c] sm:$0x8]
      %v844 = vld [vmem:[#allocation2 + $0x58] sm:$0x8]
      %v845 = vld [vmem:[#allocation2 + $0x64] sm:$0x8]
      %v846 = vld [vmem:[#allocation2 + $0x70] sm:$0x8]
      %v847 = vld [vmem:[#allocation2 + $0x7c] sm:$0x8]
      %v848 = vld [vmem:[#allocation2 + $0x88] sm:$0x8]
      %v849 = vld [vmem:[#allocation2 + $0x94] sm:$0x8]
      %v850 = vld [vmem:[#allocation2 + $0xa0] sm:$0x8]
      %v851 = vld [vmem:[#allocation2 + $0xac] sm:$0x8]
      %v852 = vld [vmem:[#allocation2 + $0xb8] sm:$0x8]
      %v853 = vld [vmem:[#allocation2 + $0xc4] sm:$0x8]
      %v854 = vld [vmem:[#allocation2 + $0xd0] sm:$0x8]
      %v873 = vrot.slane %v837, 7
      %v874 = vrot.slane %v873, 4
      %v875 = vrot.slane %v838, 7
      %v876 = vrot.slane %v875, 4
      %v877 = vrot.slane %v839, 7
      %v878 = vrot.slane %v877, 4
      %v879 = vrot.slane %v840, 7
      %v880 = vrot.slane %v879, 4
      %v881 = vrot.slane %v841, 7
      %v882 = vrot.slane %v881, 4
      %v883 = vrot.slane %v842, 7
      %v884 = vrot.slane %v883, 4
      %v885 = vrot.slane %v843, 7
      %v886 = vrot.slane %v885, 4
      %v887 = vrot.slane %v844, 7
      %v888 = vrot.slane %v887, 4
      %v889 = vrot.slane %v845, 7
      %v890 = vrot.slane %v889, 4
      %v891 = vrot.slane %v846, 7
      %v892 = vrot.slane %v891, 4
      %v893 = vrot.slane %v847, 7
      %v894 = vrot.slane %v893, 4
      %v895 = vrot.slane %v848, 7
      %v896 = vrot.slane %v895, 4
      %v897 = vrot.slane %v849, 7
      %v898 = vrot.slane %v897, 4
      %v899 = vrot.slane %v850, 7
      %v900 = vrot.slane %v899, 4
      %v901 = vrot.slane %v851, 7
      %v902 = vrot.slane %v901, 4
      %v903 = vrot.slane %v852, 7
      %v904 = vrot.slane %v903, 4
      %v905 = vrot.slane %v853, 7
      %v906 = vrot.slane %v905, 4
      %v907 = vrot.slane %v854, 7
      %v908 = vrot.slane %v907, 4
      %vm927 = vmand %vm568, %vm561
      %v928 = vld [vmem:[#allocation2 + $0x8] sm:$0x1]
      %v929 = vsel %vm927, %v874, %v928
      %930 = vst [vmem:[#allocation2 + $0x8] sm:$0x1] %v929
      %v931 = vld [vmem:[#allocation2 + $0x14] sm:$0x1]
      %v932 = vsel %vm927, %v876, %v931
      %933 = vst [vmem:[#allocation2 + $0x14] sm:$0x1] %v932
      %v934 = vld [vmem:[#allocation2 + $0x20] sm:$0x1]
      %v935 = vsel %vm927, %v878, %v934
      %936 = vst [vmem:[#allocation2 + $0x20] sm:$0x1] %v935
      %v937 = vld [vmem:[#allocation2 + $0x2c] sm:$0x1]
      %v938 = vsel %vm927, %v880, %v937
      %939 = vst [vmem:[#allocation2 + $0x2c] sm:$0x1] %v938
      %v940 = vld [vmem:[#allocation2 + $0x38] sm:$0x1]
      %v941 = vsel %vm927, %v882, %v940
      %942 = vst [vmem:[#allocation2 + $0x38] sm:$0x1] %v941
      %v943 = vld [vmem:[#allocation2 + $0x44] sm:$0x1]
      %v944 = vsel %vm927, %v884, %v943
      %945 = vst [vmem:[#allocation2 + $0x44] sm:$0x1] %v944
      %v946 = vld [vmem:[#allocation2 + $0x50] sm:$0x1]
      %v947 = vsel %vm927, %v886, %v946
      %948 = vst [vmem:[#allocation2 + $0x50] sm:$0x1] %v947
      %v949 = vld [vmem:[#allocation2 + $0x5c] sm:$0x1]
      %v950 = vsel %vm927, %v888, %v949
      %951 = vst [vmem:[#allocation2 + $0x5c] sm:$0x1] %v950
      %v952 = vld [vmem:[#allocation2 + $0x68] sm:$0x1]
      %v953 = vsel %vm927, %v890, %v952
      %954 = vst [vmem:[#allocation2 + $0x68] sm:$0x1] %v953
      %v955 = vld [vmem:[#allocation2 + $0x74] sm:$0x1]
      %v956 = vsel %vm927, %v892, %v955
      %957 = vst [vmem:[#allocation2 + $0x74] sm:$0x1] %v956
      %v958 = vld [vmem:[#allocation2 + $0x80] sm:$0x1]
      %v959 = vsel %vm927, %v894, %v958
      %960 = vst [vmem:[#allocation2 + $0x80] sm:$0x1] %v959
      %v961 = vld [vmem:[#allocation2 + $0x8c] sm:$0x1]
      %v962 = vsel %vm927, %v896, %v961
      %963 = vst [vmem:[#allocation2 + $0x8c] sm:$0x1] %v962
      %v964 = vld [vmem:[#allocation2 + $0x98] sm:$0x1]
      %v965 = vsel %vm927, %v898, %v964
      %966 = vst [vmem:[#allocation2 + $0x98] sm:$0x1] %v965
      %v967 = vld [vmem:[#allocation2 + $0xa4] sm:$0x1]
      %v968 = vsel %vm927, %v900, %v967
      %969 = vst [vmem:[#allocation2 + $0xa4] sm:$0x1] %v968
      %v970 = vld [vmem:[#allocation2 + $0xb0] sm:$0x1]
      %v971 = vsel %vm927, %v902, %v970
      %972 = vst [vmem:[#allocation2 + $0xb0] sm:$0x1] %v971
      %v973 = vld [vmem:[#allocation2 + $0xbc] sm:$0x1]
      %v974 = vsel %vm927, %v904, %v973
      %975 = vst [vmem:[#allocation2 + $0xbc] sm:$0x1] %v974
      %v976 = vld [vmem:[#allocation2 + $0xc8] sm:$0x1]
      %v977 = vsel %vm927, %v906, %v976
      %978 = vst [vmem:[#allocation2 + $0xc8] sm:$0x1] %v977
      %v979 = vld [vmem:[#allocation2 + $0xd4] sm:$0x1]
      %v980 = vsel %vm927, %v908, %v979
      %981 = vst [vmem:[#allocation2 + $0xd4] sm:$0x1] %v980
      %v982 = vld [vmem:[#allocation2] sm:$0xf]
      %v983 = vld [vmem:[#allocation2 + $0x4] sm:$0xf]
      %v984 = vld [vmem:[#allocation2 + $0xc] sm:$0xf]
      %v985 = vld [vmem:[#allocation2 + $0x10] sm:$0xf]
      %v986 = vld [vmem:[#allocation2 + $0x18] sm:$0xf]
      %v987 = vld [vmem:[#allocation2 + $0x1c] sm:$0xf]
      %v988 = vld [vmem:[#allocation2 + $0x24] sm:$0xf]
      %v989 = vld [vmem:[#allocation2 + $0x28] sm:$0xf]
      %v990 = vld [vmem:[#allocation2 + $0x30] sm:$0xf]
      %v991 = vld [vmem:[#allocation2 + $0x34] sm:$0xf]
      %v992 = vld [vmem:[#allocation2 + $0x3c] sm:$0xf]
      %v993 = vld [vmem:[#allocation2 + $0x40] sm:$0xf]
      %v994 = vld [vmem:[#allocation2 + $0x48] sm:$0xf]
      %v995 = vld [vmem:[#allocation2 + $0x4c] sm:$0xf]
      %v996 = vld [vmem:[#allocation2 + $0x54] sm:$0xf]
      %v997 = vld [vmem:[#allocation2 + $0x58] sm:$0xf]
      %v998 = vld [vmem:[#allocation2 + $0x60] sm:$0xf]
      %v999 = vld [vmem:[#allocation2 + $0x64] sm:$0xf]
      %v1000 = vld [vmem:[#allocation2 + $0x6c] sm:$0xf]
      %v1001 = vld [vmem:[#allocation2 + $0x70] sm:$0xf]
      %v1002 = vld [vmem:[#allocation2 + $0x78] sm:$0xf]
      %v1003 = vld [vmem:[#allocation2 + $0x7c] sm:$0xf]
      %v1004 = vld [vmem:[#allocation2 + $0x84] sm:$0xf]
      %v1005 = vld [vmem:[#allocation2 + $0x88] sm:$0xf]
      %v1006 = vld [vmem:[#allocation2 + $0x90] sm:$0xf]
      %v1007 = vld [vmem:[#allocation2 + $0x94] sm:$0xf]
      %v1008 = vld [vmem:[#allocation2 + $0x9c] sm:$0xf]
      %v1009 = vld [vmem:[#allocation2 + $0xa0] sm:$0xf]
      %v1010 = vld [vmem:[#allocation2 + $0xa8] sm:$0xf]
      %v1011 = vld [vmem:[#allocation2 + $0xac] sm:$0xf]
      %v1012 = vld [vmem:[#allocation2 + $0xb4] sm:$0xf]
      %v1013 = vld [vmem:[#allocation2 + $0xb8] sm:$0xf]
      %1014 = vst.msk [vmem:[#allocation3] sm:$0xf] %vm566, %v982
      %1015 = vst.msk [vmem:[#allocation3 + $0x4] sm:$0xf] %vm566, %v983
      %1016 = vst.msk [vmem:[#allocation3 + $0x8] sm:$0xf] %vm566, %v984
      %1017 = vst.msk [vmem:[#allocation3 + $0xc] sm:$0xf] %vm566, %v985
      %1018 = vst.msk [vmem:[#allocation3 + $0x10] sm:$0xf] %vm566, %v986
      %1019 = vst.msk [vmem:[#allocation3 + $0x14] sm:$0xf] %vm566, %v987
      %1020 = vst.msk [vmem:[#allocation3 + $0x18] sm:$0xf] %vm566, %v988
      %1021 = vst.msk [vmem:[#allocation3 + $0x1c] sm:$0xf] %vm566, %v989
      %1022 = vst.msk [vmem:[#allocation3 + $0x20] sm:$0xf] %vm566, %v990
      %1023 = vst.msk [vmem:[#allocation3 + $0x24] sm:$0xf] %vm566, %v991
      %1024 = vst.msk [vmem:[#allocation3 + $0x28] sm:$0xf] %vm566, %v992
      %1025 = vst.msk [vmem:[#allocation3 + $0x2c] sm:$0xf] %vm566, %v993
      %1026 = vst.msk [vmem:[#allocation3 + $0x30] sm:$0xf] %vm566, %v994
      %1027 = vst.msk [vmem:[#allocation3 + $0x34] sm:$0xf] %vm566, %v995
      %1028 = vst.msk [vmem:[#allocation3 + $0x38] sm:$0xf] %vm566, %v996
      %1029 = vst.msk [vmem:[#allocation3 + $0x3c] sm:$0xf] %vm566, %v997
      %1030 = vst.msk [vmem:[#allocation3 + $0x40] sm:$0xf] %vm566, %v998
      %1031 = vst.msk [vmem:[#allocation3 + $0x44] sm:$0xf] %vm566, %v999
      %1032 = vst.msk [vmem:[#allocation3 + $0x48] sm:$0xf] %vm566, %v1000
      %1033 = vst.msk [vmem:[#allocation3 + $0x4c] sm:$0xf] %vm566, %v1001
      %1034 = vst.msk [vmem:[#allocation3 + $0x50] sm:$0xf] %vm566, %v1002
      %1035 = vst.msk [vmem:[#allocation3 + $0x54] sm:$0xf] %vm566, %v1003
      %1036 = vst.msk [vmem:[#allocation3 + $0x58] sm:$0xf] %vm566, %v1004
      %1037 = vst.msk [vmem:[#allocation3 + $0x5c] sm:$0xf] %vm566, %v1005
      %1038 = vst.msk [vmem:[#allocation3 + $0x60] sm:$0xf] %vm566, %v1006
      %1039 = vst.msk [vmem:[#allocation3 + $0x64] sm:$0xf] %vm566, %v1007
      %1040 = vst.msk [vmem:[#allocation3 + $0x68] sm:$0xf] %vm566, %v1008
      %1041 = vst.msk [vmem:[#allocation3 + $0x6c] sm:$0xf] %vm566, %v1009
      %1042 = vst.msk [vmem:[#allocation3 + $0x70] sm:$0xf] %vm566, %v1010
      %1043 = vst.msk [vmem:[#allocation3 + $0x74] sm:$0xf] %vm566, %v1011
      %1044 = vst.msk [vmem:[#allocation3 + $0x78] sm:$0xf] %vm566, %v1012
      %1045 = vst.msk [vmem:[#allocation3 + $0x7c] sm:$0xf] %vm566, %v1013
      %v1046 = vld [vmem:[#allocation2] sm:$0xf]
      %v1047 = vld [vmem:[#allocation2 + $0x4] sm:$0xf]
      %v1048 = vld [vmem:[#allocation2 + $0x8] sm:$0x1]
      %v1049 = vld [vmem:[#allocation2 + $0xc] sm:$0xf]
      %v1050 = vld [vmem:[#allocation2 + $0x10] sm:$0xf]
      %v1051 = vld [vmem:[#allocation2 + $0x14] sm:$0x1]
      %v1052 = vld [vmem:[#allocation2 + $0x18] sm:$0xf]
      %v1053 = vld [vmem:[#allocation2 + $0x1c] sm:$0xf]
      %v1054 = vld [vmem:[#allocation2 + $0x20] sm:$0x1]
      %v1055 = vld [vmem:[#allocation2 + $0x24] sm:$0xf]
      %v1056 = vld [vmem:[#allocation2 + $0x28] sm:$0xf]
      %v1057 = vld [vmem:[#allocation2 + $0x2c] sm:$0x1]
      %v1058 = vld [vmem:[#allocation2 + $0x30] sm:$0xf]
      %v1059 = vld [vmem:[#allocation2 + $0x34] sm:$0xf]
      %v1060 = vld [vmem:[#allocation2 + $0x38] sm:$0x1]
      %v1061 = vld [vmem:[#allocation2 + $0x3c] sm:$0xf]
      %v1062 = vld [vmem:[#allocation2 + $0x40] sm:$0xf]
      %v1063 = vld [vmem:[#allocation2 + $0x44] sm:$0x1]
      %v1064 = vld [vmem:[#allocation2 + $0x48] sm:$0xf]
      %v1065 = vld [vmem:[#allocation2 + $0x4c] sm:$0xf]
      %v1066 = vld [vmem:[#allocation2 + $0x50] sm:$0x1]
      %v1067 = vld [vmem:[#allocation2 + $0x54] sm:$0xf]
      %v1068 = vld [vmem:[#allocation2 + $0x58] sm:$0xf]
      %v1069 = vld [vmem:[#allocation2 + $0x5c] sm:$0x1]
      %v1070 = vld [vmem:[#allocation2 + $0x60] sm:$0xf]
      %v1071 = vld [vmem:[#allocation2 + $0x64] sm:$0xf]
      %v1072 = vld [vmem:[#allocation2 + $0x68] sm:$0x1]
      %v1073 = vld [vmem:[#allocation2 + $0x6c] sm:$0xf]
      %v1074 = vld [vmem:[#allocation2 + $0x70] sm:$0xf]
      %v1075 = vld [vmem:[#allocation2 + $0x74] sm:$0x1]
      %v1076 = vld [vmem:[#allocation2 + $0x78] sm:$0xf]
      %v1077 = vld [vmem:[#allocation2 + $0x7c] sm:$0xf]
      %v1078 = vld [vmem:[#allocation2 + $0x80] sm:$0x1]
      %v1079 = vld [vmem:[#allocation2 + $0x84] sm:$0xf]
      %v1080 = vld [vmem:[#allocation2 + $0x88] sm:$0xf]
      %v1081 = vld [vmem:[#allocation2 + $0x8c] sm:$0x1]
      %v1082 = vld [vmem:[#allocation2 + $0x90] sm:$0xf]
      %v1083 = vld [vmem:[#allocation2 + $0x94] sm:$0xf]
      %v1084 = vld [vmem:[#allocation2 + $0x98] sm:$0x1]
      %v1085 = vld [vmem:[#allocation2 + $0x9c] sm:$0xf]
      %v1086 = vld [vmem:[#allocation2 + $0xa0] sm:$0xf]
      %v1087 = vld [vmem:[#allocation2 + $0xa4] sm:$0x1]
      %v1088 = vld [vmem:[#allocation2 + $0xa8] sm:$0xf]
      %v1089 = vld [vmem:[#allocation2 + $0xac] sm:$0xf]
      %v1090 = vld [vmem:[#allocation2 + $0xb0] sm:$0x1]
      %v1091 = vld [vmem:[#allocation2 + $0xb4] sm:$0xf]
      %v1092 = vld [vmem:[#allocation2 + $0xb8] sm:$0xf]
      %v1093 = vld [vmem:[#allocation2 + $0xbc] sm:$0x1]
      %vm1094 = vsmask.f32 3328
      %vm1095 = vsmask.f32 7440
      %vm1096 = vmor %vm1094, %vm1095
      %v1098 = vshrl.u32 %v1046, 16
      %v1100 = vrot.slane %v1098, 4
      %v1101 = vshll.u32 %v1046, 16
      %v1103 = vrot.slane %v1101, 5
      %v1104 = vor.u32 %v1100, %v1103
      %v1105 = vrot.slane %v1104, 4
      %v1107 = vshll.u32 %v1047, 16
      %v1109 = vrot.slane %v1107, 5
      %v1110 = vsel %vm1096, %v1105, %v1109
      %v1111 = vshrl.u32 %v1047, 16
      %v1113 = vrot.slane %v1111, 4
      %v1114 = vor.u32 %v1113, %v1109
      %v1115 = vrot.slane %v1114, 4
      %v1117 = vshll.u32 %v1048, 16
      %v1119 = vrot.slane %v1117, 5
      %v1120 = vsel %vm1096, %v1115, %v1119
      %v1122 = vshrl.u32 %v1049, 16
      %v1124 = vrot.slane %v1122, 4
      %v1125 = vshll.u32 %v1049, 16
      %v1127 = vrot.slane %v1125, 5
      %v1128 = vor.u32 %v1124, %v1127
      %v1129 = vrot.slane %v1128, 4
      %v1131 = vshll.u32 %v1050, 16
      %v1133 = vrot.slane %v1131, 5
      %v1134 = vsel %vm1096, %v1129, %v1133
      %v1135 = vshrl.u32 %v1050, 16
      %v1137 = vrot.slane %v1135, 4
      %v1138 = vor.u32 %v1137, %v1133
      %v1139 = vrot.slane %v1138, 4
      %v1141 = vshll.u32 %v1051, 16
      %v1143 = vrot.slane %v1141, 5
      %v1144 = vsel %vm1096, %v1139, %v1143
      %v1146 = vshrl.u32 %v1052, 16
      %v1148 = vrot.slane %v1146, 4
      %v1149 = vshll.u32 %v1052, 16
      %v1151 = vrot.slane %v1149, 5
      %v1152 = vor.u32 %v1148, %v1151
      %v1153 = vrot.slane %v1152, 4
      %v1155 = vshll.u32 %v1053, 16
      %v1157 = vrot.slane %v1155, 5
      %v1158 = vsel %vm1096, %v1153, %v1157
      %v1159 = vshrl.u32 %v1053, 16
      %v1161 = vrot.slane %v1159, 4
      %v1162 = vor.u32 %v1161, %v1157
      %v1163 = vrot.slane %v1162, 4
      %v1165 = vshll.u32 %v1054, 16
      %v1167 = vrot.slane %v1165, 5
      %v1168 = vsel %vm1096, %v1163, %v1167
      %v1170 = vshrl.u32 %v1055, 16
      %v1172 = vrot.slane %v1170, 4
      %v1173 = vshll.u32 %v1055, 16
      %v1175 = vrot.slane %v1173, 5
      %v1176 = vor.u32 %v1172, %v1175
      %v1177 = vrot.slane %v1176, 4
      %v1179 = vshll.u32 %v1056, 16
      %v1181 = vrot.slane %v1179, 5
      %v1182 = vsel %vm1096, %v1177, %v1181
      %v1183 = vshrl.u32 %v1056, 16
      %v1185 = vrot.slane %v1183, 4
      %v1186 = vor.u32 %v1185, %v1181
      %v1187 = vrot.slane %v1186, 4
      %v1189 = vshll.u32 %v1057, 16
      %v1191 = vrot.slane %v1189, 5
      %v1192 = vsel %vm1096, %v1187, %v1191
      %v1194 = vshrl.u32 %v1058, 16
      %v1196 = vrot.slane %v1194, 4
      %v1197 = vshll.u32 %v1058, 16
      %v1199 = vrot.slane %v1197, 5
      %v1200 = vor.u32 %v1196, %v1199
      %v1201 = vrot.slane %v1200, 4
      %v1203 = vshll.u32 %v1059, 16
      %v1205 = vrot.slane %v1203, 5
      %v1206 = vsel %vm1096, %v1201, %v1205
      %v1207 = vshrl.u32 %v1059, 16
      %v1209 = vrot.slane %v1207, 4
      %v1210 = vor.u32 %v1209, %v1205
      %v1211 = vrot.slane %v1210, 4
      %v1213 = vshll.u32 %v1060, 16
      %v1215 = vrot.slane %v1213, 5
      %v1216 = vsel %vm1096, %v1211, %v1215
      %v1218 = vshrl.u32 %v1061, 16
      %v1220 = vrot.slane %v1218, 4
      %v1221 = vshll.u32 %v1061, 16
      %v1223 = vrot.slane %v1221, 5
      %v1224 = vor.u32 %v1220, %v1223
      %v1225 = vrot.slane %v1224, 4
      %v1227 = vshll.u32 %v1062, 16
      %v1229 = vrot.slane %v1227, 5
      %v1230 = vsel %vm1096, %v1225, %v1229
      %v1231 = vshrl.u32 %v1062, 16
      %v1233 = vrot.slane %v1231, 4
      %v1234 = vor.u32 %v1233, %v1229
      %v1235 = vrot.slane %v1234, 4
      %v1237 = vshll.u32 %v1063, 16
      %v1239 = vrot.slane %v1237, 5
      %v1240 = vsel %vm1096, %v1235, %v1239
      %v1242 = vshrl.u32 %v1064, 16
      %v1244 = vrot.slane %v1242, 4
      %v1245 = vshll.u32 %v1064, 16
      %v1247 = vrot.slane %v1245, 5
      %v1248 = vor.u32 %v1244, %v1247
      %v1249 = vrot.slane %v1248, 4
      %v1251 = vshll.u32 %v1065, 16
      %v1253 = vrot.slane %v1251, 5
      %v1254 = vsel %vm1096, %v1249, %v1253
      %v1255 = vshrl.u32 %v1065, 16
      %v1257 = vrot.slane %v1255, 4
      %v1258 = vor.u32 %v1257, %v1253
      %v1259 = vrot.slane %v1258, 4
      %v1261 = vshll.u32 %v1066, 16
      %v1263 = vrot.slane %v1261, 5
      %v1264 = vsel %vm1096, %v1259, %v1263
      %v1266 = vshrl.u32 %v1067, 16
      %v1268 = vrot.slane %v1266, 4
      %v1269 = vshll.u32 %v1067, 16
      %v1271 = vrot.slane %v1269, 5
      %v1272 = vor.u32 %v1268, %v1271
      %v1273 = vrot.slane %v1272, 4
      %v1275 = vshll.u32 %v1068, 16
      %v1277 = vrot.slane %v1275, 5
      %v1278 = vsel %vm1096, %v1273, %v1277
      %v1279 = vshrl.u32 %v1068, 16
      %v1281 = vrot.slane %v1279, 4
      %v1282 = vor.u32 %v1281, %v1277
      %v1283 = vrot.slane %v1282, 4
      %v1285 = vshll.u32 %v1069, 16
      %v1287 = vrot.slane %v1285, 5
      %v1288 = vsel %vm1096, %v1283, %v1287
      %v1290 = vshrl.u32 %v1070, 16
      %v1292 = vrot.slane %v1290, 4
      %v1293 = vshll.u32 %v1070, 16
      %v1295 = vrot.slane %v1293, 5
      %v1296 = vor.u32 %v1292, %v1295
      %v1297 = vrot.slane %v1296, 4
      %v1299 = vshll.u32 %v1071, 16
      %v1301 = vrot.slane %v1299, 5
      %v1302 = vsel %vm1096, %v1297, %v1301
      %v1303 = vshrl.u32 %v1071, 16
      %v1305 = vrot.slane %v1303, 4
      %v1306 = vor.u32 %v1305, %v1301
      %v1307 = vrot.slane %v1306, 4
      %v1309 = vshll.u32 %v1072, 16
      %v1311 = vrot.slane %v1309, 5
      %v1312 = vsel %vm1096, %v1307, %v1311
      %v1314 = vshrl.u32 %v1073, 16
      %v1316 = vrot.slane %v1314, 4
      %v1317 = vshll.u32 %v1073, 16
      %v1319 = vrot.slane %v1317, 5
      %v1320 = vor.u32 %v1316, %v1319
      %v1321 = vrot.slane %v1320, 4
      %v1323 = vshll.u32 %v1074, 16
      %v1325 = vrot.slane %v1323, 5
      %v1326 = vsel %vm1096, %v1321, %v1325
      %v1327 = vshrl.u32 %v1074, 16
      %v1329 = vrot.slane %v1327, 4
      %v1330 = vor.u32 %v1329, %v1325
      %v1331 = vrot.slane %v1330, 4
      %v1333 = vshll.u32 %v1075, 16
      %v1335 = vrot.slane %v1333, 5
      %v1336 = vsel %vm1096, %v1331, %v1335
      %v1338 = vshrl.u32 %v1076, 16
      %v1340 = vrot.slane %v1338, 4
      %v1341 = vshll.u32 %v1076, 16
      %v1343 = vrot.slane %v1341, 5
      %v1344 = vor.u32 %v1340, %v1343
      %v1345 = vrot.slane %v1344, 4
      %v1347 = vshll.u32 %v1077, 16
      %v1349 = vrot.slane %v1347, 5
      %v1350 = vsel %vm1096, %v1345, %v1349
      %v1351 = vshrl.u32 %v1077, 16
      %v1353 = vrot.slane %v1351, 4
      %v1354 = vor.u32 %v1353, %v1349
      %v1355 = vrot.slane %v1354, 4
      %v1357 = vshll.u32 %v1078, 16
      %v1359 = vrot.slane %v1357, 5
      %v1360 = vsel %vm1096, %v1355, %v1359
      %v1362 = vshrl.u32 %v1079, 16
      %v1364 = vrot.slane %v1362, 4
      %v1365 = vshll.u32 %v1079, 16
      %v1367 = vrot.slane %v1365, 5
      %v1368 = vor.u32 %v1364, %v1367
      %v1369 = vrot.slane %v1368, 4
      %v1371 = vshll.u32 %v1080, 16
      %v1373 = vrot.slane %v1371, 5
      %v1374 = vsel %vm1096, %v1369, %v1373
      %v1375 = vshrl.u32 %v1080, 16
      %v1377 = vrot.slane %v1375, 4
      %v1378 = vor.u32 %v1377, %v1373
      %v1379 = vrot.slane %v1378, 4
      %v1381 = vshll.u32 %v1081, 16
      %v1383 = vrot.slane %v1381, 5
      %v1384 = vsel %vm1096, %v1379, %v1383
      %v1386 = vshrl.u32 %v1082, 16
      %v1388 = vrot.slane %v1386, 4
      %v1389 = vshll.u32 %v1082, 16
      %v1391 = vrot.slane %v1389, 5
      %v1392 = vor.u32 %v1388, %v1391
      %v1393 = vrot.slane %v1392, 4
      %v1395 = vshll.u32 %v1083, 16
      %v1397 = vrot.slane %v1395, 5
      %v1398 = vsel %vm1096, %v1393, %v1397
      %v1399 = vshrl.u32 %v1083, 16
      %v1401 = vrot.slane %v1399, 4
      %v1402 = vor.u32 %v1401, %v1397
      %v1403 = vrot.slane %v1402, 4
      %v1405 = vshll.u32 %v1084, 16
      %v1407 = vrot.slane %v1405, 5
      %v1408 = vsel %vm1096, %v1403, %v1407
      %v1410 = vshrl.u32 %v1085, 16
      %v1412 = vrot.slane %v1410, 4
      %v1413 = vshll.u32 %v1085, 16
      %v1415 = vrot.slane %v1413, 5
      %v1416 = vor.u32 %v1412, %v1415
      %v1417 = vrot.slane %v1416, 4
      %v1419 = vshll.u32 %v1086, 16
      %v1421 = vrot.slane %v1419, 5
      %v1422 = vsel %vm1096, %v1417, %v1421
      %v1423 = vshrl.u32 %v1086, 16
      %v1425 = vrot.slane %v1423, 4
      %v1426 = vor.u32 %v1425, %v1421
      %v1427 = vrot.slane %v1426, 4
      %v1429 = vshll.u32 %v1087, 16
      %v1431 = vrot.slane %v1429, 5
      %v1432 = vsel %vm1096, %v1427, %v1431
      %v1434 = vshrl.u32 %v1088, 16
      %v1436 = vrot.slane %v1434, 4
      %v1437 = vshll.u32 %v1088, 16
      %v1439 = vrot.slane %v1437, 5
      %v1440 = vor.u32 %v1436, %v1439
      %v1441 = vrot.slane %v1440, 4
      %v1443 = vshll.u32 %v1089, 16
      %v1445 = vrot.slane %v1443, 5
      %v1446 = vsel %vm1096, %v1441, %v1445
      %v1447 = vshrl.u32 %v1089, 16
      %v1449 = vrot.slane %v1447, 4
      %v1450 = vor.u32 %v1449, %v1445
      %v1451 = vrot.slane %v1450, 4
      %v1453 = vshll.u32 %v1090, 16
      %v1455 = vrot.slane %v1453, 5
      %v1456 = vsel %vm1096, %v1451, %v1455
      %v1458 = vshrl.u32 %v1091, 16
      %v1460 = vrot.slane %v1458, 4
      %v1461 = vshll.u32 %v1091, 16
      %v1463 = vrot.slane %v1461, 5
      %v1464 = vor.u32 %v1460, %v1463
      %v1465 = vrot.slane %v1464, 4
      %v1467 = vshll.u32 %v1092, 16
      %v1469 = vrot.slane %v1467, 5
      %v1470 = vsel %vm1096, %v1465, %v1469
      %v1471 = vshrl.u32 %v1092, 16
      %v1473 = vrot.slane %v1471, 4
      %v1474 = vor.u32 %v1473, %v1469
      %v1475 = vrot.slane %v1474, 4
      %v1477 = vshll.u32 %v1093, 16
      %v1479 = vrot.slane %v1477, 5
      %v1480 = vsel %vm1096, %v1475, %v1479
      %1481 = vrot.lane.b32.xlu0 %v1110, 4
      %v1482 = vpop.permute.xlu0 %1481
      %1483 = vrot.lane.b32.xlu0 %v1120, 4
      %v1484 = vpop.permute.xlu0 %1483
      %1485 = vrot.lane.b32.xlu0 %v1134, 4
      %v1486 = vpop.permute.xlu0 %1485
      %1487 = vrot.lane.b32.xlu0 %v1144, 4
      %v1488 = vpop.permute.xlu0 %1487
      %1489 = vrot.lane.b32.xlu0 %v1158, 4
      %v1490 = vpop.permute.xlu0 %1489
      %1491 = vrot.lane.b32.xlu0 %v1168, 4
      %v1492 = vpop.permute.xlu0 %1491
      %1493 = vrot.lane.b32.xlu0 %v1182, 4
      %v1494 = vpop.permute.xlu0 %1493
      %1495 = vrot.lane.b32.xlu0 %v1192, 4
      %v1496 = vpop.permute.xlu0 %1495
      %1497 = vrot.lane.b32.xlu0 %v1206, 4
      %v1498 = vpop.permute.xlu0 %1497
      %1499 = vrot.lane.b32.xlu0 %v1216, 4
      %v1500 = vpop.permute.xlu0 %1499
      %1501 = vrot.lane.b32.xlu0 %v1230, 4
      %v1502 = vpop.permute.xlu0 %1501
      %1503 = vrot.lane.b32.xlu0 %v1240, 4
      %v1504 = vpop.permute.xlu0 %1503
      %1505 = vrot.lane.b32.xlu0 %v1254, 4
      %v1506 = vpop.permute.xlu0 %1505
      %1507 = vrot.lane.b32.xlu0 %v1264, 4
      %v1508 = vpop.permute.xlu0 %1507
      %1509 = vrot.lane.b32.xlu0 %v1278, 4
      %v1510 = vpop.permute.xlu0 %1509
      %1511 = vrot.lane.b32.xlu0 %v1288, 4
      %v1512 = vpop.permute.xlu0 %1511
      %1513 = vrot.lane.b32.xlu0 %v1302, 4
      %v1514 = vpop.permute.xlu0 %1513
      %1515 = vrot.lane.b32.xlu0 %v1312, 4
      %v1516 = vpop.permute.xlu0 %1515
      %1517 = vrot.lane.b32.xlu0 %v1326, 4
      %v1518 = vpop.permute.xlu0 %1517
      %1519 = vrot.lane.b32.xlu0 %v1336, 4
      %v1520 = vpop.permute.xlu0 %1519
      %1521 = vrot.lane.b32.xlu0 %v1350, 4
      %v1522 = vpop.permute.xlu0 %1521
      %1523 = vrot.lane.b32.xlu0 %v1360, 4
      %v1524 = vpop.permute.xlu0 %1523
      %1525 = vrot.lane.b32.xlu0 %v1374, 4
      %v1526 = vpop.permute.xlu0 %1525
      %1527 = vrot.lane.b32.xlu0 %v1384, 4
      %v1528 = vpop.permute.xlu0 %1527
      %1529 = vrot.lane.b32.xlu0 %v1398, 4
      %v1530 = vpop.permute.xlu0 %1529
      %1531 = vrot.lane.b32.xlu0 %v1408, 4
      %v1532 = vpop.permute.xlu0 %1531
      %1533 = vrot.lane.b32.xlu0 %v1422, 4
      %v1534 = vpop.permute.xlu0 %1533
      %1535 = vrot.lane.b32.xlu0 %v1432, 4
      %v1536 = vpop.permute.xlu0 %1535
      %1537 = vrot.lane.b32.xlu0 %v1446, 4
      %v1538 = vpop.permute.xlu0 %1537
      %1539 = vrot.lane.b32.xlu0 %v1456, 4
      %v1540 = vpop.permute.xlu0 %1539
      %1541 = vrot.lane.b32.xlu0 %v1470, 4
      %v1542 = vpop.permute.xlu0 %1541
      %1543 = vrot.lane.b32.xlu0 %v1480, 4
      %v1544 = vpop.permute.xlu0 %1543
      %vm1577 = vcmask 60448
      %1578 = vst.msk [vmem:[#allocation3] sm:$0xf] %vm1577, %v1482
      %1579 = vst.msk [vmem:[#allocation3 + $0x4] sm:$0xf] %vm1577, %v1484
      %1580 = vst.msk [vmem:[#allocation3 + $0x8] sm:$0xf] %vm1577, %v1486
      %1581 = vst.msk [vmem:[#allocation3 + $0xc] sm:$0xf] %vm1577, %v1488
      %1582 = vst.msk [vmem:[#allocation3 + $0x10] sm:$0xf] %vm1577, %v1490
      %1583 = vst.msk [vmem:[#allocation3 + $0x14] sm:$0xf] %vm1577, %v1492
      %1584 = vst.msk [vmem:[#allocation3 + $0x18] sm:$0xf] %vm1577, %v1494
      %1585 = vst.msk [vmem:[#allocation3 + $0x1c] sm:$0xf] %vm1577, %v1496
      %1586 = vst.msk [vmem:[#allocation3 + $0x20] sm:$0xf] %vm1577, %v1498
      %1587 = vst.msk [vmem:[#allocation3 + $0x24] sm:$0xf] %vm1577, %v1500
      %1588 = vst.msk [vmem:[#allocation3 + $0x28] sm:$0xf] %vm1577, %v1502
      %1589 = vst.msk [vmem:[#allocation3 + $0x2c] sm:$0xf] %vm1577, %v1504
      %1590 = vst.msk [vmem:[#allocation3 + $0x30] sm:$0xf] %vm1577, %v1506
      %1591 = vst.msk [vmem:[#allocation3 + $0x34] sm:$0xf] %vm1577, %v1508
      %1592 = vst.msk [vmem:[#allocation3 + $0x38] sm:$0xf] %vm1577, %v1510
      %1593 = vst.msk [vmem:[#allocation3 + $0x3c] sm:$0xf] %vm1577, %v1512
      %1594 = vst.msk [vmem:[#allocation3 + $0x40] sm:$0xf] %vm1577, %v1514
      %1595 = vst.msk [vmem:[#allocation3 + $0x44] sm:$0xf] %vm1577, %v1516
      %1596 = vst.msk [vmem:[#allocation3 + $0x48] sm:$0xf] %vm1577, %v1518
      %1597 = vst.msk [vmem:[#allocation3 + $0x4c] sm:$0xf] %vm1577, %v1520
      %1598 = vst.msk [vmem:[#allocation3 + $0x50] sm:$0xf] %vm1577, %v1522
      %1599 = vst.msk [vmem:[#allocation3 + $0x54] sm:$0xf] %vm1577, %v1524
      %1600 = vst.msk [vmem:[#allocation3 + $0x58] sm:$0xf] %vm1577, %v1526
      %1601 = vst.msk [vmem:[#allocation3 + $0x5c] sm:$0xf] %vm1577, %v1528
      %1602 = vst.msk [vmem:[#allocation3 + $0x60] sm:$0xf] %vm1577, %v1530
      %1603 = vst.msk [vmem:[#allocation3 + $0x64] sm:$0xf] %vm1577, %v1532
      %1604 = vst.msk [vmem:[#allocation3 + $0x68] sm:$0xf] %vm1577, %v1534
      %1605 = vst.msk [vmem:[#allocation3 + $0x6c] sm:$0xf] %vm1577, %v1536
      %1606 = vst.msk [vmem:[#allocation3 + $0x70] sm:$0xf] %vm1577, %v1538
      %1607 = vst.msk [vmem:[#allocation3 + $0x74] sm:$0xf] %vm1577, %v1540
      %1608 = vst.msk [vmem:[#allocation3 + $0x78] sm:$0xf] %vm1577, %v1542
      %1609 = vst.msk [vmem:[#allocation3 + $0x7c] sm:$0xf] %vm1577, %v1544
      %v1610 = vld [vmem:[#allocation2] sm:$0xe]
      %v1611 = vld [vmem:[#allocation2 + $0x4] sm:$0xf]
      %v1612 = vld [vmem:[#allocation2 + $0x8] sm:$0x1]
      %v1613 = vld [vmem:[#allocation2 + $0xc] sm:$0xe]
      %v1614 = vld [vmem:[#allocation2 + $0x10] sm:$0xf]
      %v1615 = vld [vmem:[#allocation2 + $0x14] sm:$0x1]
      %v1616 = vld [vmem:[#allocation2 + $0x18] sm:$0xe]
      %v1617 = vld [vmem:[#allocation2 + $0x1c] sm:$0xf]
      %v1618 = vld [vmem:[#allocation2 + $0x20] sm:$0x1]
      %v1619 = vld [vmem:[#allocation2 + $0x24] sm:$0xe]
      %v1620 = vld [vmem:[#allocation2 + $0x28] sm:$0xf]
      %v1621 = vld [vmem:[#allocation2 + $0x2c] sm:$0x1]
      %v1622 = vld [vmem:[#allocation2 + $0x30] sm:$0xe]
      %v1623 = vld [vmem:[#allocation2 + $0x34] sm:$0xf]
      %v1624 = vld [vmem:[#allocation2 + $0x38] sm:$0x1]
      %v1625 = vld [vmem:[#allocation2 + $0x3c] sm:$0xe]
      %v1626 = vld [vmem:[#allocation2 + $0x40] sm:$0xf]
      %v1627 = vld [vmem:[#allocation2 + $0x44] sm:$0x1]
      %v1628 = vld [vmem:[#allocation2 + $0x48] sm:$0xe]
      %v1629 = vld [vmem:[#allocation2 + $0x4c] sm:$0xf]
      %v1630 = vld [vmem:[#allocation2 + $0x50] sm:$0x1]
      %v1631 = vld [vmem:[#allocation2 + $0x54] sm:$0xe]
      %v1632 = vld [vmem:[#allocation2 + $0x58] sm:$0xf]
      %v1633 = vld [vmem:[#allocation2 + $0x5c] sm:$0x1]
      %v1634 = vld [vmem:[#allocation2 + $0x60] sm:$0xe]
      %v1635 = vld [vmem:[#allocation2 + $0x64] sm:$0xf]
      %v1636 = vld [vmem:[#allocation2 + $0x68] sm:$0x1]
      %v1637 = vld [vmem:[#allocation2 + $0x6c] sm:$0xe]
      %v1638 = vld [vmem:[#allocation2 + $0x70] sm:$0xf]
      %v1639 = vld [vmem:[#allocation2 + $0x74] sm:$0x1]
      %v1640 = vld [vmem:[#allocation2 + $0x78] sm:$0xe]
      %v1641 = vld [vmem:[#allocation2 + $0x7c] sm:$0xf]
      %v1642 = vld [vmem:[#allocation2 + $0x80] sm:$0x1]
      %v1643 = vld [vmem:[#allocation2 + $0x84] sm:$0xe]
      %v1644 = vld [vmem:[#allocation2 + $0x88] sm:$0xf]
      %v1645 = vld [vmem:[#allocation2 + $0x8c] sm:$0x1]
      %v1646 = vld [vmem:[#allocation2 + $0x90] sm:$0xe]
      %v1647 = vld [vmem:[#allocation2 + $0x94] sm:$0xf]
      %v1648 = vld [vmem:[#allocation2 + $0x98] sm:$0x1]
      %v1649 = vld [vmem:[#allocation2 + $0x9c] sm:$0xe]
      %v1650 = vld [vmem:[#allocation2 + $0xa0] sm:$0xf]
      %v1651 = vld [vmem:[#allocation2 + $0xa4] sm:$0x1]
      %v1652 = vld [vmem:[#allocation2 + $0xa8] sm:$0xe]
      %v1653 = vld [vmem:[#allocation2 + $0xac] sm:$0xf]
      %v1654 = vld [vmem:[#allocation2 + $0xb0] sm:$0x1]
      %v1655 = vld [vmem:[#allocation2 + $0xb4] sm:$0xe]
      %v1656 = vld [vmem:[#allocation2 + $0xb8] sm:$0xf]
      %v1657 = vld [vmem:[#allocation2 + $0xbc] sm:$0x1]
      %vm1706 = vcmask 1042432
      %vm1707 = vcmask 1046532
      %vm1708 = vmor %vm1706, %vm1707
      %v1709 = vrot.slane %v1610, 5
      %v1710 = vrot.slane %v1709, 4
      %v1711 = vrot.slane %v1611, 5
      %v1712 = vsel %vm1708, %v1710, %v1711
      %v1713 = vrot.slane %v1711, 4
      %v1714 = vrot.slane %v1612, 5
      %v1715 = vsel %vm1708, %v1713, %v1714
      %v1716 = vrot.slane %v1613, 5
      %v1717 = vrot.slane %v1716, 4
      %v1718 = vrot.slane %v1614, 5
      %v1719 = vsel %vm1708, %v1717, %v1718
      %v1720 = vrot.slane %v1718, 4
      %v1721 = vrot.slane %v1615, 5
      %v1722 = vsel %vm1708, %v1720, %v1721
      %v1723 = vrot.slane %v1616, 5
      %v1724 = vrot.slane %v1723, 4
      %v1725 = vrot.slane %v1617, 5
      %v1726 = vsel %vm1708, %v1724, %v1725
      %v1727 = vrot.slane %v1725, 4
      %v1728 = vrot.slane %v1618, 5
      %v1729 = vsel %vm1708, %v1727, %v1728
      %v1730 = vrot.slane %v1619, 5
      %v1731 = vrot.slane %v1730, 4
      %v1732 = vrot.slane %v1620, 5
      %v1733 = vsel %vm1708, %v1731, %v1732
      %v1734 = vrot.slane %v1732, 4
      %v1735 = vrot.slane %v1621, 5
      %v1736 = vsel %vm1708, %v1734, %v1735
      %v1737 = vrot.slane %v1622, 5
      %v1738 = vrot.slane %v1737, 4
      %v1739 = vrot.slane %v1623, 5
      %v1740 = vsel %vm1708, %v1738, %v1739
      %v1741 = vrot.slane %v1739, 4
      %v1742 = vrot.slane %v1624, 5
      %v1743 = vsel %vm1708, %v1741, %v1742
      %v1744 = vrot.slane %v1625, 5
      %v1745 = vrot.slane %v1744, 4
      %v1746 = vrot.slane %v1626, 5
      %v1747 = vsel %vm1708, %v1745, %v1746
      %v1748 = vrot.slane %v1746, 4
      %v1749 = vrot.slane %v1627, 5
      %v1750 = vsel %vm1708, %v1748, %v1749
      %v1751 = vrot.slane %v1628, 5
      %v1752 = vrot.slane %v1751, 4
      %v1753 = vrot.slane %v1629, 5
      %v1754 = vsel %vm1708, %v1752, %v1753
      %v1755 = vrot.slane %v1753, 4
      %v1756 = vrot.slane %v1630, 5
      %v1757 = vsel %vm1708, %v1755, %v1756
      %v1758 = vrot.slane %v1631, 5
      %v1759 = vrot.slane %v1758, 4
      %v1760 = vrot.slane %v1632, 5
      %v1761 = vsel %vm1708, %v1759, %v1760
      %v1762 = vrot.slane %v1760, 4
      %v1763 = vrot.slane %v1633, 5
      %v1764 = vsel %vm1708, %v1762, %v1763
      %v1765 = vrot.slane %v1634, 5
      %v1766 = vrot.slane %v1765, 4
      %v1767 = vrot.slane %v1635, 5
      %v1768 = vsel %vm1708, %v1766, %v1767
      %v1769 = vrot.slane %v1767, 4
      %v1770 = vrot.slane %v1636, 5
      %v1771 = vsel %vm1708, %v1769, %v1770
      %v1772 = vrot.slane %v1637, 5
      %v1773 = vrot.slane %v1772, 4
      %v1774 = vrot.slane %v1638, 5
      %v1775 = vsel %vm1708, %v1773, %v1774
      %v1776 = vrot.slane %v1774, 4
      %v1777 = vrot.slane %v1639, 5
      %v1778 = vsel %vm1708, %v1776, %v1777
      %v1779 = vrot.slane %v1640, 5
      %v1780 = vrot.slane %v1779, 4
      %v1781 = vrot.slane %v1641, 5
      %v1782 = vsel %vm1708, %v1780, %v1781
      %v1783 = vrot.slane %v1781, 4
      %v1784 = vrot.slane %v1642, 5
      %v1785 = vsel %vm1708, %v1783, %v1784
      %v1786 = vrot.slane %v1643, 5
      %v1787 = vrot.slane %v1786, 4
      %v1788 = vrot.slane %v1644, 5
      %v1789 = vsel %vm1708, %v1787, %v1788
      %v1790 = vrot.slane %v1788, 4
      %v1791 = vrot.slane %v1645, 5
      %v1792 = vsel %vm1708, %v1790, %v1791
      %v1793 = vrot.slane %v1646, 5
      %v1794 = vrot.slane %v1793, 4
      %v1795 = vrot.slane %v1647, 5
      %v1796 = vsel %vm1708, %v1794, %v1795
      %v1797 = vrot.slane %v1795, 4
      %v1798 = vrot.slane %v1648, 5
      %v1799 = vsel %vm1708, %v1797, %v1798
      %v1800 = vrot.slane %v1649, 5
      %v1801 = vrot.slane %v1800, 4
      %v1802 = vrot.slane %v1650, 5
      %v1803 = vsel %vm1708, %v1801, %v1802
      %v1804 = vrot.slane %v1802, 4
      %v1805 = vrot.slane %v1651, 5
      %v1806 = vsel %vm1708, %v1804, %v1805
      %v1807 = vrot.slane %v1652, 5
      %v1808 = vrot.slane %v1807, 4
      %v1809 = vrot.slane %v1653, 5
      %v1810 = vsel %vm1708, %v1808, %v1809
      %v1811 = vrot.slane %v1809, 4
      %v1812 = vrot.slane %v1654, 5
      %v1813 = vsel %vm1708, %v1811, %v1812
      %v1814 = vrot.slane %v1655, 5
      %v1815 = vrot.slane %v1814, 4
      %v1816 = vrot.slane %v1656, 5
      %v1817 = vsel %vm1708, %v1815, %v1816
      %v1818 = vrot.slane %v1816, 4
      %v1819 = vrot.slane %v1657, 5
      %v1820 = vsel %vm1708, %v1818, %v1819
      %1821 = vrot.lane.b32.xlu0 %v1712, 8
      %v1822 = vpop.permute.xlu0 %1821
      %1823 = vrot.lane.b32.xlu0 %v1715, 8
      %v1824 = vpop.permute.xlu0 %1823
      %1825 = vrot.lane.b32.xlu0 %v1719, 8
      %v1826 = vpop.permute.xlu0 %1825
      %1827 = vrot.lane.b32.xlu0 %v1722, 8
      %v1828 = vpop.permute.xlu0 %1827
      %1829 = vrot.lane.b32.xlu0 %v1726, 8
      %v1830 = vpop.permute.xlu0 %1829
      %1831 = vrot.lane.b32.xlu0 %v1729, 8
      %v1832 = vpop.permute.xlu0 %1831
      %1833 = vrot.lane.b32.xlu0 %v1733, 8
      %v1834 = vpop.permute.xlu0 %1833
      %1835 = vrot.lane.b32.xlu0 %v1736, 8
      %v1836 = vpop.permute.xlu0 %1835
      %1837 = vrot.lane.b32.xlu0 %v1740, 8
      %v1838 = vpop.permute.xlu0 %1837
      %1839 = vrot.lane.b32.xlu0 %v1743, 8
      %v1840 = vpop.permute.xlu0 %1839
      %1841 = vrot.lane.b32.xlu0 %v1747, 8
      %v1842 = vpop.permute.xlu0 %1841
      %1843 = vrot.lane.b32.xlu0 %v1750, 8
      %v1844 = vpop.permute.xlu0 %1843
      %1845 = vrot.lane.b32.xlu0 %v1754, 8
      %v1846 = vpop.permute.xlu0 %1845
      %1847 = vrot.lane.b32.xlu0 %v1757, 8
      %v1848 = vpop.permute.xlu0 %1847
      %1849 = vrot.lane.b32.xlu0 %v1761, 8
      %v1850 = vpop.permute.xlu0 %1849
      %1851 = vrot.lane.b32.xlu0 %v1764, 8
      %v1852 = vpop.permute.xlu0 %1851
      %1853 = vrot.lane.b32.xlu0 %v1768, 8
      %v1854 = vpop.permute.xlu0 %1853
      %1855 = vrot.lane.b32.xlu0 %v1771, 8
      %v1856 = vpop.permute.xlu0 %1855
      %1857 = vrot.lane.b32.xlu0 %v1775, 8
      %v1858 = vpop.permute.xlu0 %1857
      %1859 = vrot.lane.b32.xlu0 %v1778, 8
      %v1860 = vpop.permute.xlu0 %1859
      %1861 = vrot.lane.b32.xlu0 %v1782, 8
      %v1862 = vpop.permute.xlu0 %1861
      %1863 = vrot.lane.b32.xlu0 %v1785, 8
      %v1864 = vpop.permute.xlu0 %1863
      %1865 = vrot.lane.b32.xlu0 %v1789, 8
      %v1866 = vpop.permute.xlu0 %1865
      %1867 = vrot.lane.b32.xlu0 %v1792, 8
      %v1868 = vpop.permute.xlu0 %1867
      %1869 = vrot.lane.b32.xlu0 %v1796, 8
      %v1870 = vpop.permute.xlu0 %1869
      %1871 = vrot.lane.b32.xlu0 %v1799, 8
      %v1872 = vpop.permute.xlu0 %1871
      %1873 = vrot.lane.b32.xlu0 %v1803, 8
      %v1874 = vpop.permute.xlu0 %1873
      %1875 = vrot.lane.b32.xlu0 %v1806, 8
      %v1876 = vpop.permute.xlu0 %1875
      %1877 = vrot.lane.b32.xlu0 %v1810, 8
      %v1878 = vpop.permute.xlu0 %1877
      %1879 = vrot.lane.b32.xlu0 %v1813, 8
      %v1880 = vpop.permute.xlu0 %1879
      %1881 = vrot.lane.b32.xlu0 %v1817, 8
      %v1882 = vpop.permute.xlu0 %1881
      %1883 = vrot.lane.b32.xlu0 %v1820, 8
      %v1884 = vpop.permute.xlu0 %1883
      %vm1917 = vcmask 93248
      %1918 = vst.msk [vmem:[#allocation3] sm:$0xf] %vm1917, %v1822
      %1919 = vst.msk [vmem:[#allocation3 + $0x4] sm:$0xf] %vm1917, %v1824
      %1920 = vst.msk [vmem:[#allocation3 + $0x8] sm:$0xf] %vm1917, %v1826
      %1921 = vst.msk [vmem:[#allocation3 + $0xc] sm:$0xf] %vm1917, %v1828
      %1922 = vst.msk [vmem:[#allocation3 + $0x10] sm:$0xf] %vm1917, %v1830
      %1923 = vst.msk [vmem:[#allocation3 + $0x14] sm:$0xf] %vm1917, %v1832
      %1924 = vst.msk [vmem:[#allocation3 + $0x18] sm:$0xf] %vm1917, %v1834
      %1925 = vst.msk [vmem:[#allocation3 + $0x1c] sm:$0xf] %vm1917, %v1836
      %1926 = vst.msk [vmem:[#allocation3 + $0x20] sm:$0xf] %vm1917, %v1838
      %1927 = vst.msk [vmem:[#allocation3 + $0x24] sm:$0xf] %vm1917, %v1840
      %1928 = vst.msk [vmem:[#allocation3 + $0x28] sm:$0xf] %vm1917, %v1842
      %1929 = vst.msk [vmem:[#allocation3 + $0x2c] sm:$0xf] %vm1917, %v1844
      %1930 = vst.msk [vmem:[#allocation3 + $0x30] sm:$0xf] %vm1917, %v1846
      %1931 = vst.msk [vmem:[#allocation3 + $0x34] sm:$0xf] %vm1917, %v1848
      %1932 = vst.msk [vmem:[#allocation3 + $0x38] sm:$0xf] %vm1917, %v1850
      %1933 = vst.msk [vmem:[#allocation3 + $0x3c] sm:$0xf] %vm1917, %v1852
      %1934 = vst.msk [vmem:[#allocation3 + $0x40] sm:$0xf] %vm1917, %v1854
      %1935 = vst.msk [vmem:[#allocation3 + $0x44] sm:$0xf] %vm1917, %v1856
      %1936 = vst.msk [vmem:[#allocation3 + $0x48] sm:$0xf] %vm1917, %v1858
      %1937 = vst.msk [vmem:[#allocation3 + $0x4c] sm:$0xf] %vm1917, %v1860
      %1938 = vst.msk [vmem:[#allocation3 + $0x50] sm:$0xf] %vm1917, %v1862
      %1939 = vst.msk [vmem:[#allocation3 + $0x54] sm:$0xf] %vm1917, %v1864
      %1940 = vst.msk [vmem:[#allocation3 + $0x58] sm:$0xf] %vm1917, %v1866
      %1941 = vst.msk [vmem:[#allocation3 + $0x5c] sm:$0xf] %vm1917, %v1868
      %1942 = vst.msk [vmem:[#allocation3 + $0x60] sm:$0xf] %vm1917, %v1870
      %1943 = vst.msk [vmem:[#allocation3 + $0x64] sm:$0xf] %vm1917, %v1872
      %1944 = vst.msk [vmem:[#allocation3 + $0x68] sm:$0xf] %vm1917, %v1874
      %1945 = vst.msk [vmem:[#allocation3 + $0x6c] sm:$0xf] %vm1917, %v1876
      %1946 = vst.msk [vmem:[#allocation3 + $0x70] sm:$0xf] %vm1917, %v1878
      %1947 = vst.msk [vmem:[#allocation3 + $0x74] sm:$0xf] %vm1917, %v1880
      %1948 = vst.msk [vmem:[#allocation3 + $0x78] sm:$0xf] %vm1917, %v1882
      %1949 = vst.msk [vmem:[#allocation3 + $0x7c] sm:$0xf] %vm1917, %v1884
      %v1950 = vld [vmem:[%s559] sm:$0xf]
      %v1951 = vld [vmem:[%s559 + $0x4] sm:$0xf]
      %v1952 = vld [vmem:[%s559 + $0xc] sm:$0xf]
      %v1953 = vld [vmem:[%s559 + $0x10] sm:$0xf]
      %v1954 = vld [vmem:[%s559 + $0x18] sm:$0xf]
      %v1955 = vld [vmem:[%s559 + $0x1c] sm:$0xf]
      %v1956 = vld [vmem:[%s559 + $0x24] sm:$0xf]
      %v1957 = vld [vmem:[%s559 + $0x28] sm:$0xf]
      %v1958 = vld [vmem:[%s559 + $0x30] sm:$0xf]
      %v1959 = vld [vmem:[%s559 + $0x34] sm:$0xf]
      %v1960 = vld [vmem:[%s559 + $0x3c] sm:$0xf]
      %v1961 = vld [vmem:[%s559 + $0x40] sm:$0xf]
      %v1962 = vld [vmem:[%s559 + $0x48] sm:$0xf]
      %v1963 = vld [vmem:[%s559 + $0x4c] sm:$0xf]
      %v1964 = vld [vmem:[%s559 + $0x54] sm:$0xf]
      %v1965 = vld [vmem:[%s559 + $0x58] sm:$0xf]
      %v1966 = vld [vmem:[%s559 + $0x60] sm:$0xf]
      %v1967 = vld [vmem:[%s559 + $0x64] sm:$0xf]
      %v1968 = vld [vmem:[%s559 + $0x6c] sm:$0xf]
      %v1969 = vld [vmem:[%s559 + $0x70] sm:$0xf]
      %v1970 = vld [vmem:[%s559 + $0x78] sm:$0xf]
      %v1971 = vld [vmem:[%s559 + $0x7c] sm:$0xf]
      %v1972 = vld [vmem:[%s559 + $0x84] sm:$0xf]
      %v1973 = vld [vmem:[%s559 + $0x88] sm:$0xf]
      %v1974 = vld [vmem:[%s559 + $0x90] sm:$0xf]
      %v1975 = vld [vmem:[%s559 + $0x94] sm:$0xf]
      %v1976 = vld [vmem:[%s559 + $0x9c] sm:$0xf]
      %v1977 = vld [vmem:[%s559 + $0xa0] sm:$0xf]
      %v1978 = vld [vmem:[%s559 + $0xa8] sm:$0xf]
      %v1979 = vld [vmem:[%s559 + $0xac] sm:$0xf]
      %v1980 = vld [vmem:[%s559 + $0xb4] sm:$0xf]
      %v1981 = vld [vmem:[%s559 + $0xb8] sm:$0xf]
      %2014 = vrot.lane.b32.xlu0 %v1950, 12
      %v2015 = vpop.permute.xlu0 %2014
      %2016 = vrot.lane.b32.xlu0 %v1951, 12
      %v2017 = vpop.permute.xlu0 %2016
      %2018 = vrot.lane.b32.xlu0 %v1952, 12
      %v2019 = vpop.permute.xlu0 %2018
      %2020 = vrot.lane.b32.xlu0 %v1953, 12
      %v2021 = vpop.permute.xlu0 %2020
      %2022 = vrot.lane.b32.xlu0 %v1954, 12
      %v2023 = vpop.permute.xlu0 %2022
      %2024 = vrot.lane.b32.xlu0 %v1955, 12
      %v2025 = vpop.permute.xlu0 %2024
      %2026 = vrot.lane.b32.xlu0 %v1956, 12
      %v2027 = vpop.permute.xlu0 %2026
      %2028 = vrot.lane.b32.xlu0 %v1957, 12
      %v2029 = vpop.permute.xlu0 %2028
      %2030 = vrot.lane.b32.xlu0 %v1958, 12
      %v2031 = vpop.permute.xlu0 %2030
      %2032 = vrot.lane.b32.xlu0 %v1959, 12
      %v2033 = vpop.permute.xlu0 %2032
      %2034 = vrot.lane.b32.xlu0 %v1960, 12
      %v2035 = vpop.permute.xlu0 %2034
      %2036 = vrot.lane.b32.xlu0 %v1961, 12
      %v2037 = vpop.permute.xlu0 %2036
      %2038 = vrot.lane.b32.xlu0 %v1962, 12
      %v2039 = vpop.permute.xlu0 %2038
      %2040 = vrot.lane.b32.xlu0 %v1963, 12
      %v2041 = vpop.permute.xlu0 %2040
      %2042 = vrot.lane.b32.xlu0 %v1964, 12
      %v2043 = vpop.permute.xlu0 %2042
      %2044 = vrot.lane.b32.xlu0 %v1965, 12
      %v2045 = vpop.permute.xlu0 %2044
      %2046 = vrot.lane.b32.xlu0 %v1966, 12
      %v2047 = vpop.permute.xlu0 %2046
      %2048 = vrot.lane.b32.xlu0 %v1967, 12
      %v2049 = vpop.permute.xlu0 %2048
      %2050 = vrot.lane.b32.xlu0 %v1968, 12
      %v2051 = vpop.permute.xlu0 %2050
      %2052 = vrot.lane.b32.xlu0 %v1969, 12
      %v2053 = vpop.permute.xlu0 %2052
      %2054 = vrot.lane.b32.xlu0 %v1970, 12
      %v2055 = vpop.permute.xlu0 %2054
      %2056 = vrot.lane.b32.xlu0 %v1971, 12
      %v2057 = vpop.permute.xlu0 %2056
      %2058 = vrot.lane.b32.xlu0 %v1972, 12
      %v2059 = vpop.permute.xlu0 %2058
      %2060 = vrot.lane.b32.xlu0 %v1973, 12
      %v2061 = vpop.permute.xlu0 %2060
      %2062 = vrot.lane.b32.xlu0 %v1974, 12
      %v2063 = vpop.permute.xlu0 %2062
      %2064 = vrot.lane.b32.xlu0 %v1975, 12
      %v2065 = vpop.permute.xlu0 %2064
      %2066 = vrot.lane.b32.xlu0 %v1976, 12
      %v2067 = vpop.permute.xlu0 %2066
      %2068 = vrot.lane.b32.xlu0 %v1977, 12
      %v2069 = vpop.permute.xlu0 %2068
      %2070 = vrot.lane.b32.xlu0 %v1978, 12
      %v2071 = vpop.permute.xlu0 %2070
      %2072 = vrot.lane.b32.xlu0 %v1979, 12
      %v2073 = vpop.permute.xlu0 %2072
      %2074 = vrot.lane.b32.xlu0 %v1980, 12
      %v2075 = vpop.permute.xlu0 %2074
      %2076 = vrot.lane.b32.xlu0 %v1981, 12
      %v2077 = vpop.permute.xlu0 %2076
      %vm2110 = vcmask 126048
      %2111 = vst.msk [vmem:[#allocation3] sm:$0xf] %vm2110, %v2015
      %2112 = vst.msk [vmem:[#allocation3 + $0x4] sm:$0xf] %vm2110, %v2017
      %2113 = vst.msk [vmem:[#allocation3 + $0x8] sm:$0xf] %vm2110, %v2019
      %2114 = vst.msk [vmem:[#allocation3 + $0xc] sm:$0xf] %vm2110, %v2021
      %2115 = vst.msk [vmem:[#allocation3 + $0x10] sm:$0xf] %vm2110, %v2023
      %2116 = vst.msk [vmem:[#allocation3 + $0x14] sm:$0xf] %vm2110, %v2025
      %2117 = vst.msk [vmem:[#allocation3 + $0x18] sm:$0xf] %vm2110, %v2027
      %2118 = vst.msk [vmem:[#allocation3 + $0x1c] sm:$0xf] %vm2110, %v2029
      %2119 = vst.msk [vmem:[#allocation3 + $0x20] sm:$0xf] %vm2110, %v2031
      %2120 = vst.msk [vmem:[#allocation3 + $0x24] sm:$0xf] %vm2110, %v2033
      %2121 = vst.msk [vmem:[#allocation3 + $0x28] sm:$0xf] %vm2110, %v2035
      %2122 = vst.msk [vmem:[#allocation3 + $0x2c] sm:$0xf] %vm2110, %v2037
      %2123 = vst.msk [vmem:[#allocation3 + $0x30] sm:$0xf] %vm2110, %v2039
      %2124 = vst.msk [vmem:[#allocation3 + $0x34] sm:$0xf] %vm2110, %v2041
      %2125 = vst.msk [vmem:[#allocation3 + $0x38] sm:$0xf] %vm2110, %v2043
      %2126 = vst.msk [vmem:[#allocation3 + $0x3c] sm:$0xf] %vm2110, %v2045
      %2127 = vst.msk [vmem:[#allocation3 + $0x40] sm:$0xf] %vm2110, %v2047
      %2128 = vst.msk [vmem:[#allocation3 + $0x44] sm:$0xf] %vm2110, %v2049
      %2129 = vst.msk [vmem:[#allocation3 + $0x48] sm:$0xf] %vm2110, %v2051
      %2130 = vst.msk [vmem:[#allocation3 + $0x4c] sm:$0xf] %vm2110, %v2053
      %2131 = vst.msk [vmem:[#allocation3 + $0x50] sm:$0xf] %vm2110, %v2055
      %2132 = vst.msk [vmem:[#allocation3 + $0x54] sm:$0xf] %vm2110, %v2057
      %2133 = vst.msk [vmem:[#allocation3 + $0x58] sm:$0xf] %vm2110, %v2059
      %2134 = vst.msk [vmem:[#allocation3 + $0x5c] sm:$0xf] %vm2110, %v2061
      %2135 = vst.msk [vmem:[#allocation3 + $0x60] sm:$0xf] %vm2110, %v2063
      %2136 = vst.msk [vmem:[#allocation3 + $0x64] sm:$0xf] %vm2110, %v2065
      %2137 = vst.msk [vmem:[#allocation3 + $0x68] sm:$0xf] %vm2110, %v2067
      %2138 = vst.msk [vmem:[#allocation3 + $0x6c] sm:$0xf] %vm2110, %v2069
      %2139 = vst.msk [vmem:[#allocation3 + $0x70] sm:$0xf] %vm2110, %v2071
      %2140 = vst.msk [vmem:[#allocation3 + $0x74] sm:$0xf] %vm2110, %v2073
      %2141 = vst.msk [vmem:[#allocation3 + $0x78] sm:$0xf] %vm2110, %v2075
      %2142 = vst.msk [vmem:[#allocation3 + $0x7c] sm:$0xf] %vm2110, %v2077
      %v2143 = vld [vmem:[%s559] sm:$0xf]
      %v2144 = vld [vmem:[%s559 + $0x4] sm:$0xf]
      %v2145 = vld [vmem:[%s559 + $0x8] sm:$0x1]
      %v2146 = vld [vmem:[%s559 + $0xc] sm:$0xf]
      %v2147 = vld [vmem:[%s559 + $0x10] sm:$0xf]
      %v2148 = vld [vmem:[%s559 + $0x14] sm:$0x1]
      %v2149 = vld [vmem:[%s559 + $0x18] sm:$0xf]
      %v2150 = vld [vmem:[%s559 + $0x1c] sm:$0xf]
      %v2151 = vld [vmem:[%s559 + $0x20] sm:$0x1]
      %v2152 = vld [vmem:[%s559 + $0x24] sm:$0xf]
      %v2153 = vld [vmem:[%s559 + $0x28] sm:$0xf]
      %v2154 = vld [vmem:[%s559 + $0x2c] sm:$0x1]
      %v2155 = vld [vmem:[%s559 + $0x30] sm:$0xf]
      %v2156 = vld [vmem:[%s559 + $0x34] sm:$0xf]
      %v2157 = vld [vmem:[%s559 + $0x38] sm:$0x1]
      %v2158 = vld [vmem:[%s559 + $0x3c] sm:$0xf]
      %v2159 = vld [vmem:[%s559 + $0x40] sm:$0xf]
      %v2160 = vld [vmem:[%s559 + $0x44] sm:$0x1]
      %v2161 = vld [vmem:[%s559 + $0x48] sm:$0xf]
      %v2162 = vld [vmem:[%s559 + $0x4c] sm:$0xf]
      %v2163 = vld [vmem:[%s559 + $0x50] sm:$0x1]
      %v2164 = vld [vmem:[%s559 + $0x54] sm:$0xf]
      %v2165 = vld [vmem:[%s559 + $0x58] sm:$0xf]
      %v2166 = vld [vmem:[%s559 + $0x5c] sm:$0x1]
      %v2167 = vld [vmem:[%s559 + $0x60] sm:$0xf]
      %v2168 = vld [vmem:[%s559 + $0x64] sm:$0xf]
      %v2169 = vld [vmem:[%s559 + $0x68] sm:$0x1]
      %v2170 = vld [vmem:[%s559 + $0x6c] sm:$0xf]
      %v2171 = vld [vmem:[%s559 + $0x70] sm:$0xf]
      %v2172 = vld [vmem:[%s559 + $0x74] sm:$0x1]
      %v2173 = vld [vmem:[%s559 + $0x78] sm:$0xf]
      %v2174 = vld [vmem:[%s559 + $0x7c] sm:$0xf]
      %v2175 = vld [vmem:[%s559 + $0x80] sm:$0x1]
      %v2176 = vld [vmem:[%s559 + $0x84] sm:$0xf]
      %v2177 = vld [vmem:[%s559 + $0x88] sm:$0xf]
      %v2178 = vld [vmem:[%s559 + $0x8c] sm:$0x1]
      %v2179 = vld [vmem:[%s559 + $0x90] sm:$0xf]
      %v2180 = vld [vmem:[%s559 + $0x94] sm:$0xf]
      %v2181 = vld [vmem:[%s559 + $0x98] sm:$0x1]
      %v2182 = vld [vmem:[%s559 + $0x9c] sm:$0xf]
      %v2183 = vld [vmem:[%s559 + $0xa0] sm:$0xf]
      %v2184 = vld [vmem:[%s559 + $0xa4] sm:$0x1]
      %v2185 = vld [vmem:[%s559 + $0xa8] sm:$0xf]
      %v2186 = vld [vmem:[%s559 + $0xac] sm:$0xf]
      %v2187 = vld [vmem:[%s559 + $0xb0] sm:$0x1]
      %v2188 = vld [vmem:[%s559 + $0xb4] sm:$0xf]
      %v2189 = vld [vmem:[%s559 + $0xb8] sm:$0xf]
      %v2190 = vld [vmem:[%s559 + $0xbc] sm:$0x1]
      %v2192 = vshrl.u32 %v2143, 16
      %v2194 = vrot.slane %v2192, 4
      %v2195 = vshll.u32 %v2143, 16
      %v2197 = vrot.slane %v2195, 5
      %v2198 = vor.u32 %v2194, %v2197
      %v2199 = vrot.slane %v2198, 4
      %v2201 = vshll.u32 %v2144, 16
      %v2203 = vrot.slane %v2201, 5
      %v2204 = vsel %vm1096, %v2199, %v2203
      %v2205 = vshrl.u32 %v2144, 16
      %v2207 = vrot.slane %v2205, 4
      %v2208 = vor.u32 %v2207, %v2203
      %v2209 = vrot.slane %v2208, 4
      %v2211 = vshll.u32 %v2145, 16
      %v2213 = vrot.slane %v2211, 5
      %v2214 = vsel %vm1096, %v2209, %v2213
      %v2216 = vshrl.u32 %v2146, 16
      %v2218 = vrot.slane %v2216, 4
      %v2219 = vshll.u32 %v2146, 16
      %v2221 = vrot.slane %v2219, 5
      %v2222 = vor.u32 %v2218, %v2221
      %v2223 = vrot.slane %v2222, 4
      %v2225 = vshll.u32 %v2147, 16
      %v2227 = vrot.slane %v2225, 5
      %v2228 = vsel %vm1096, %v2223, %v2227
      %v2229 = vshrl.u32 %v2147, 16
      %v2231 = vrot.slane %v2229, 4
      %v2232 = vor.u32 %v2231, %v2227
      %v2233 = vrot.slane %v2232, 4
      %v2235 = vshll.u32 %v2148, 16
      %v2237 = vrot.slane %v2235, 5
      %v2238 = vsel %vm1096, %v2233, %v2237
      %v2240 = vshrl.u32 %v2149, 16
      %v2242 = vrot.slane %v2240, 4
      %v2243 = vshll.u32 %v2149, 16
      %v2245 = vrot.slane %v2243, 5
      %v2246 = vor.u32 %v2242, %v2245
      %v2247 = vrot.slane %v2246, 4
      %v2249 = vshll.u32 %v2150, 16
      %v2251 = vrot.slane %v2249, 5
      %v2252 = vsel %vm1096, %v2247, %v2251
      %v2253 = vshrl.u32 %v2150, 16
      %v2255 = vrot.slane %v2253, 4
      %v2256 = vor.u32 %v2255, %v2251
      %v2257 = vrot.slane %v2256, 4
      %v2259 = vshll.u32 %v2151, 16
      %v2261 = vrot.slane %v2259, 5
      %v2262 = vsel %vm1096, %v2257, %v2261
      %v2264 = vshrl.u32 %v2152, 16
      %v2266 = vrot.slane %v2264, 4
      %v2267 = vshll.u32 %v2152, 16
      %v2269 = vrot.slane %v2267, 5
      %v2270 = vor.u32 %v2266, %v2269
      %v2271 = vrot.slane %v2270, 4
      %v2273 = vshll.u32 %v2153, 16
      %v2275 = vrot.slane %v2273, 5
      %v2276 = vsel %vm1096, %v2271, %v2275
      %v2277 = vshrl.u32 %v2153, 16
      %v2279 = vrot.slane %v2277, 4
      %v2280 = vor.u32 %v2279, %v2275
      %v2281 = vrot.slane %v2280, 4
      %v2283 = vshll.u32 %v2154, 16
      %v2285 = vrot.slane %v2283, 5
      %v2286 = vsel %vm1096, %v2281, %v2285
      %v2288 = vshrl.u32 %v2155, 16
      %v2290 = vrot.slane %v2288, 4
      %v2291 = vshll.u32 %v2155, 16
      %v2293 = vrot.slane %v2291, 5
      %v2294 = vor.u32 %v2290, %v2293
      %v2295 = vrot.slane %v2294, 4
      %v2297 = vshll.u32 %v2156, 16
      %v2299 = vrot.slane %v2297, 5
      %v2300 = vsel %vm1096, %v2295, %v2299
      %v2301 = vshrl.u32 %v2156, 16
      %v2303 = vrot.slane %v2301, 4
      %v2304 = vor.u32 %v2303, %v2299
      %v2305 = vrot.slane %v2304, 4
      %v2307 = vshll.u32 %v2157, 16
      %v2309 = vrot.slane %v2307, 5
      %v2310 = vsel %vm1096, %v2305, %v2309
      %v2312 = vshrl.u32 %v2158, 16
      %v2314 = vrot.slane %v2312, 4
      %v2315 = vshll.u32 %v2158, 16
      %v2317 = vrot.slane %v2315, 5
      %v2318 = vor.u32 %v2314, %v2317
      %v2319 = vrot.slane %v2318, 4
      %v2321 = vshll.u32 %v2159, 16
      %v2323 = vrot.slane %v2321, 5
      %v2324 = vsel %vm1096, %v2319, %v2323
      %v2325 = vshrl.u32 %v2159, 16
      %v2327 = vrot.slane %v2325, 4
      %v2328 = vor.u32 %v2327, %v2323
      %v2329 = vrot.slane %v2328, 4
      %v2331 = vshll.u32 %v2160, 16
      %v2333 = vrot.slane %v2331, 5
      %v2334 = vsel %vm1096, %v2329, %v2333
      %v2336 = vshrl.u32 %v2161, 16
      %v2338 = vrot.slane %v2336, 4
      %v2339 = vshll.u32 %v2161, 16
      %v2341 = vrot.slane %v2339, 5
      %v2342 = vor.u32 %v2338, %v2341
      %v2343 = vrot.slane %v2342, 4
      %v2345 = vshll.u32 %v2162, 16
      %v2347 = vrot.slane %v2345, 5
      %v2348 = vsel %vm1096, %v2343, %v2347
      %v2349 = vshrl.u32 %v2162, 16
      %v2351 = vrot.slane %v2349, 4
      %v2352 = vor.u32 %v2351, %v2347
      %v2353 = vrot.slane %v2352, 4
      %v2355 = vshll.u32 %v2163, 16
      %v2357 = vrot.slane %v2355, 5
      %v2358 = vsel %vm1096, %v2353, %v2357
      %v2360 = vshrl.u32 %v2164, 16
      %v2362 = vrot.slane %v2360, 4
      %v2363 = vshll.u32 %v2164, 16
      %v2365 = vrot.slane %v2363, 5
      %v2366 = vor.u32 %v2362, %v2365
      %v2367 = vrot.slane %v2366, 4
      %v2369 = vshll.u32 %v2165, 16
      %v2371 = vrot.slane %v2369, 5
      %v2372 = vsel %vm1096, %v2367, %v2371
      %v2373 = vshrl.u32 %v2165, 16
      %v2375 = vrot.slane %v2373, 4
      %v2376 = vor.u32 %v2375, %v2371
      %v2377 = vrot.slane %v2376, 4
      %v2379 = vshll.u32 %v2166, 16
      %v2381 = vrot.slane %v2379, 5
      %v2382 = vsel %vm1096, %v2377, %v2381
      %v2384 = vshrl.u32 %v2167, 16
      %v2386 = vrot.slane %v2384, 4
      %v2387 = vshll.u32 %v2167, 16
      %v2389 = vrot.slane %v2387, 5
      %v2390 = vor.u32 %v2386, %v2389
      %v2391 = vrot.slane %v2390, 4
      %v2393 = vshll.u32 %v2168, 16
      %v2395 = vrot.slane %v2393, 5
      %v2396 = vsel %vm1096, %v2391, %v2395
      %v2397 = vshrl.u32 %v2168, 16
      %v2399 = vrot.slane %v2397, 4
      %v2400 = vor.u32 %v2399, %v2395
      %v2401 = vrot.slane %v2400, 4
      %v2403 = vshll.u32 %v2169, 16
      %v2405 = vrot.slane %v2403, 5
      %v2406 = vsel %vm1096, %v2401, %v2405
      %v2408 = vshrl.u32 %v2170, 16
      %v2410 = vrot.slane %v2408, 4
      %v2411 = vshll.u32 %v2170, 16
      %v2413 = vrot.slane %v2411, 5
      %v2414 = vor.u32 %v2410, %v2413
      %v2415 = vrot.slane %v2414, 4
      %v2417 = vshll.u32 %v2171, 16
      %v2419 = vrot.slane %v2417, 5
      %v2420 = vsel %vm1096, %v2415, %v2419
      %v2421 = vshrl.u32 %v2171, 16
      %v2423 = vrot.slane %v2421, 4
      %v2424 = vor.u32 %v2423, %v2419
      %v2425 = vrot.slane %v2424, 4
      %v2427 = vshll.u32 %v2172, 16
      %v2429 = vrot.slane %v2427, 5
      %v2430 = vsel %vm1096, %v2425, %v2429
      %v2432 = vshrl.u32 %v2173, 16
      %v2434 = vrot.slane %v2432, 4
      %v2435 = vshll.u32 %v2173, 16
      %v2437 = vrot.slane %v2435, 5
      %v2438 = vor.u32 %v2434, %v2437
      %v2439 = vrot.slane %v2438, 4
      %v2441 = vshll.u32 %v2174, 16
      %v2443 = vrot.slane %v2441, 5
      %v2444 = vsel %vm1096, %v2439, %v2443
      %v2445 = vshrl.u32 %v2174, 16
      %v2447 = vrot.slane %v2445, 4
      %v2448 = vor.u32 %v2447, %v2443
      %v2449 = vrot.slane %v2448, 4
      %v2451 = vshll.u32 %v2175, 16
      %v2453 = vrot.slane %v2451, 5
      %v2454 = vsel %vm1096, %v2449, %v2453
      %v2456 = vshrl.u32 %v2176, 16
      %v2458 = vrot.slane %v2456, 4
      %v2459 = vshll.u32 %v2176, 16
      %v2461 = vrot.slane %v2459, 5
      %v2462 = vor.u32 %v2458, %v2461
      %v2463 = vrot.slane %v2462, 4
      %v2465 = vshll.u32 %v2177, 16
      %v2467 = vrot.slane %v2465, 5
      %v2468 = vsel %vm1096, %v2463, %v2467
      %v2469 = vshrl.u32 %v2177, 16
      %v2471 = vrot.slane %v2469, 4
      %v2472 = vor.u32 %v2471, %v2467
      %v2473 = vrot.slane %v2472, 4
      %v2475 = vshll.u32 %v2178, 16
      %v2477 = vrot.slane %v2475, 5
      %v2478 = vsel %vm1096, %v2473, %v2477
      %v2480 = vshrl.u32 %v2179, 16
      %v2482 = vrot.slane %v2480, 4
      %v2483 = vshll.u32 %v2179, 16
      %v2485 = vrot.slane %v2483, 5
      %v2486 = vor.u32 %v2482, %v2485
      %v2487 = vrot.slane %v2486, 4
      %v2489 = vshll.u32 %v2180, 16
      %v2491 = vrot.slane %v2489, 5
      %v2492 = vsel %vm1096, %v2487, %v2491
      %v2493 = vshrl.u32 %v2180, 16
      %v2495 = vrot.slane %v2493, 4
      %v2496 = vor.u32 %v2495, %v2491
      %v2497 = vrot.slane %v2496, 4
      %v2499 = vshll.u32 %v2181, 16
      %v2501 = vrot.slane %v2499, 5
      %v2502 = vsel %vm1096, %v2497, %v2501
      %v2504 = vshrl.u32 %v2182, 16
      %v2506 = vrot.slane %v2504, 4
      %v2507 = vshll.u32 %v2182, 16
      %v2509 = vrot.slane %v2507, 5
      %v2510 = vor.u32 %v2506, %v2509
      %v2511 = vrot.slane %v2510, 4
      %v2513 = vshll.u32 %v2183, 16
      %v2515 = vrot.slane %v2513, 5
      %v2516 = vsel %vm1096, %v2511, %v2515
      %v2517 = vshrl.u32 %v2183, 16
      %v2519 = vrot.slane %v2517, 4
      %v2520 = vor.u32 %v2519, %v2515
      %v2521 = vrot.slane %v2520, 4
      %v2523 = vshll.u32 %v2184, 16
      %v2525 = vrot.slane %v2523, 5
      %v2526 = vsel %vm1096, %v2521, %v2525
      %v2528 = vshrl.u32 %v2185, 16
      %v2530 = vrot.slane %v2528, 4
      %v2531 = vshll.u32 %v2185, 16
      %v2533 = vrot.slane %v2531, 5
      %v2534 = vor.u32 %v2530, %v2533
      %v2535 = vrot.slane %v2534, 4
      %v2537 = vshll.u32 %v2186, 16
      %v2539 = vrot.slane %v2537, 5
      %v2540 = vsel %vm1096, %v2535, %v2539
      %v2541 = vshrl.u32 %v2186, 16
      %v2543 = vrot.slane %v2541, 4
      %v2544 = vor.u32 %v2543, %v2539
      %v2545 = vrot.slane %v2544, 4
      %v2547 = vshll.u32 %v2187, 16
      %v2549 = vrot.slane %v2547, 5
      %v2550 = vsel %vm1096, %v2545, %v2549
      %v2552 = vshrl.u32 %v2188, 16
      %v2554 = vrot.slane %v2552, 4
      %v2555 = vshll.u32 %v2188, 16
      %v2557 = vrot.slane %v2555, 5
      %v2558 = vor.u32 %v2554, %v2557
      %v2559 = vrot.slane %v2558, 4
      %v2561 = vshll.u32 %v2189, 16
      %v2563 = vrot.slane %v2561, 5
      %v2564 = vsel %vm1096, %v2559, %v2563
      %v2565 = vshrl.u32 %v2189, 16
      %v2567 = vrot.slane %v2565, 4
      %v2568 = vor.u32 %v2567, %v2563
      %v2569 = vrot.slane %v2568, 4
      %v2571 = vshll.u32 %v2190, 16
      %v2573 = vrot.slane %v2571, 5
      %v2574 = vsel %vm1096, %v2569, %v2573
      %2575 = vrot.lane.b32.xlu0 %v2204, 16
      %v2576 = vpop.permute.xlu0 %2575
      %2577 = vrot.lane.b32.xlu0 %v2214, 16
      %v2578 = vpop.permute.xlu0 %2577
      %2579 = vrot.lane.b32.xlu0 %v2228, 16
      %v2580 = vpop.permute.xlu0 %2579
      %2581 = vrot.lane.b32.xlu0 %v2238, 16
      %v2582 = vpop.permute.xlu0 %2581
      %2583 = vrot.lane.b32.xlu0 %v2252, 16
      %v2584 = vpop.permute.xlu0 %2583
      %2585 = vrot.lane.b32.xlu0 %v2262, 16
      %v2586 = vpop.permute.xlu0 %2585
      %2587 = vrot.lane.b32.xlu0 %v2276, 16
      %v2588 = vpop.permute.xlu0 %2587
      %2589 = vrot.lane.b32.xlu0 %v2286, 16
      %v2590 = vpop.permute.xlu0 %2589
      %2591 = vrot.lane.b32.xlu0 %v2300, 16
      %v2592 = vpop.permute.xlu0 %2591
      %2593 = vrot.lane.b32.xlu0 %v2310, 16
      %v2594 = vpop.permute.xlu0 %2593
      %2595 = vrot.lane.b32.xlu0 %v2324, 16
      %v2596 = vpop.permute.xlu0 %2595
      %2597 = vrot.lane.b32.xlu0 %v2334, 16
      %v2598 = vpop.permute.xlu0 %2597
      %2599 = vrot.lane.b32.xlu0 %v2348, 16
      %v2600 = vpop.permute.xlu0 %2599
      %2601 = vrot.lane.b32.xlu0 %v2358, 16
      %v2602 = vpop.permute.xlu0 %2601
      %2603 = vrot.lane.b32.xlu0 %v2372, 16
      %v2604 = vpop.permute.xlu0 %2603
      %2605 = vrot.lane.b32.xlu0 %v2382, 16
      %v2606 = vpop.permute.xlu0 %2605
      %2607 = vrot.lane.b32.xlu0 %v2396, 16
      %v2608 = vpop.permute.xlu0 %2607
      %2609 = vrot.lane.b32.xlu0 %v2406, 16
      %v2610 = vpop.permute.xlu0 %2609
      %2611 = vrot.lane.b32.xlu0 %v2420, 16
      %v2612 = vpop.permute.xlu0 %2611
      %2613 = vrot.lane.b32.xlu0 %v2430, 16
      %v2614 = vpop.permute.xlu0 %2613
      %2615 = vrot.lane.b32.xlu0 %v2444, 16
      %v2616 = vpop.permute.xlu0 %2615
      %2617 = vrot.lane.b32.xlu0 %v2454, 16
      %v2618 = vpop.permute.xlu0 %2617
      %2619 = vrot.lane.b32.xlu0 %v2468, 16
      %v2620 = vpop.permute.xlu0 %2619
      %2621 = vrot.lane.b32.xlu0 %v2478, 16
      %v2622 = vpop.permute.xlu0 %2621
      %2623 = vrot.lane.b32.xlu0 %v2492, 16
      %v2624 = vpop.permute.xlu0 %2623
      %2625 = vrot.lane.b32.xlu0 %v2502, 16
      %v2626 = vpop.permute.xlu0 %2625
      %2627 = vrot.lane.b32.xlu0 %v2516, 16
      %v2628 = vpop.permute.xlu0 %2627
      %2629 = vrot.lane.b32.xlu0 %v2526, 16
      %v2630 = vpop.permute.xlu0 %2629
      %2631 = vrot.lane.b32.xlu0 %v2540, 16
      %v2632 = vpop.permute.xlu0 %2631
      %2633 = vrot.lane.b32.xlu0 %v2550, 16
      %v2634 = vpop.permute.xlu0 %2633
      %2635 = vrot.lane.b32.xlu0 %v2564, 16
      %v2636 = vpop.permute.xlu0 %2635
      %2637 = vrot.lane.b32.xlu0 %v2574, 16
      %v2638 = vpop.permute.xlu0 %2637
      %vm2671 = vcmask 158848
      %2672 = vst.msk [vmem:[#allocation3] sm:$0xf] %vm2671, %v2576
      %2673 = vst.msk [vmem:[#allocation3 + $0x4] sm:$0xf] %vm2671, %v2578
      %2674 = vst.msk [vmem:[#allocation3 + $0x8] sm:$0xf] %vm2671, %v2580
      %2675 = vst.msk [vmem:[#allocation3 + $0xc] sm:$0xf] %vm2671, %v2582
      %2676 = vst.msk [vmem:[#allocation3 + $0x10] sm:$0xf] %vm2671, %v2584
      %2677 = vst.msk [vmem:[#allocation3 + $0x14] sm:$0xf] %vm2671, %v2586
      %2678 = vst.msk [vmem:[#allocation3 + $0x18] sm:$0xf] %vm2671, %v2588
      %2679 = vst.msk [vmem:[#allocation3 + $0x1c] sm:$0xf] %vm2671, %v2590
      %2680 = vst.msk [vmem:[#allocation3 + $0x20] sm:$0xf] %vm2671, %v2592
      %2681 = vst.msk [vmem:[#allocation3 + $0x24] sm:$0xf] %vm2671, %v2594
      %2682 = vst.msk [vmem:[#allocation3 + $0x28] sm:$0xf] %vm2671, %v2596
      %2683 = vst.msk [vmem:[#allocation3 + $0x2c] sm:$0xf] %vm2671, %v2598
      %2684 = vst.msk [vmem:[#allocation3 + $0x30] sm:$0xf] %vm2671, %v2600
      %2685 = vst.msk [vmem:[#allocation3 + $0x34] sm:$0xf] %vm2671, %v2602
      %2686 = vst.msk [vmem:[#allocation3 + $0x38] sm:$0xf] %vm2671, %v2604
      %2687 = vst.msk [vmem:[#allocation3 + $0x3c] sm:$0xf] %vm2671, %v2606
      %2688 = vst.msk [vmem:[#allocation3 + $0x40] sm:$0xf] %vm2671, %v2608
      %2689 = vst.msk [vmem:[#allocation3 + $0x44] sm:$0xf] %vm2671, %v2610
      %2690 = vst.msk [vmem:[#allocation3 + $0x48] sm:$0xf] %vm2671, %v2612
      %2691 = vst.msk [vmem:[#allocation3 + $0x4c] sm:$0xf] %vm2671, %v2614
      %2692 = vst.msk [vmem:[#allocation3 + $0x50] sm:$0xf] %vm2671, %v2616
      %2693 = vst.msk [vmem:[#allocation3 + $0x54] sm:$0xf] %vm2671, %v2618
      %2694 = vst.msk [vmem:[#allocation3 + $0x58] sm:$0xf] %vm2671, %v2620
      %2695 = vst.msk [vmem:[#allocation3 + $0x5c] sm:$0xf] %vm2671, %v2622
      %2696 = vst.msk [vmem:[#allocation3 + $0x60] sm:$0xf] %vm2671, %v2624
      %2697 = vst.msk [vmem:[#allocation3 + $0x64] sm:$0xf] %vm2671, %v2626
      %2698 = vst.msk [vmem:[#allocation3 + $0x68] sm:$0xf] %vm2671, %v2628
      %2699 = vst.msk [vmem:[#allocation3 + $0x6c] sm:$0xf] %vm2671, %v2630
      %2700 = vst.msk [vmem:[#allocation3 + $0x70] sm:$0xf] %vm2671, %v2632
      %2701 = vst.msk [vmem:[#allocation3 + $0x74] sm:$0xf] %vm2671, %v2634
      %2702 = vst.msk [vmem:[#allocation3 + $0x78] sm:$0xf] %vm2671, %v2636
      %2703 = vst.msk [vmem:[#allocation3 + $0x7c] sm:$0xf] %vm2671, %v2638
      %v2704 = vld [vmem:[%s559] sm:$0xe]
      %v2705 = vld [vmem:[%s559 + $0x4] sm:$0xf]
      %v2706 = vld [vmem:[%s559 + $0x8] sm:$0x1]
      %v2707 = vld [vmem:[%s559 + $0xc] sm:$0xe]
      %v2708 = vld [vmem:[%s559 + $0x10] sm:$0xf]
      %v2709 = vld [vmem:[%s559 + $0x14] sm:$0x1]
      %v2710 = vld [vmem:[%s559 + $0x18] sm:$0xe]
      %v2711 = vld [vmem:[%s559 + $0x1c] sm:$0xf]
      %v2712 = vld [vmem:[%s559 + $0x20] sm:$0x1]
      %v2713 = vld [vmem:[%s559 + $0x24] sm:$0xe]
      %v2714 = vld [vmem:[%s559 + $0x28] sm:$0xf]
      %v2715 = vld [vmem:[%s559 + $0x2c] sm:$0x1]
      %v2716 = vld [vmem:[%s559 + $0x30] sm:$0xe]
      %v2717 = vld [vmem:[%s559 + $0x34] sm:$0xf]
      %v2718 = vld [vmem:[%s559 + $0x38] sm:$0x1]
      %v2719 = vld [vmem:[%s559 + $0x3c] sm:$0xe]
      %v2720 = vld [vmem:[%s559 + $0x40] sm:$0xf]
      %v2721 = vld [vmem:[%s559 + $0x44] sm:$0x1]
      %v2722 = vld [vmem:[%s559 + $0x48] sm:$0xe]
      %v2723 = vld [vmem:[%s559 + $0x4c] sm:$0xf]
      %v2724 = vld [vmem:[%s559 + $0x50] sm:$0x1]
      %v2725 = vld [vmem:[%s559 + $0x54] sm:$0xe]
      %v2726 = vld [vmem:[%s559 + $0x58] sm:$0xf]
      %v2727 = vld [vmem:[%s559 + $0x5c] sm:$0x1]
      %v2728 = vld [vmem:[%s559 + $0x60] sm:$0xe]
      %v2729 = vld [vmem:[%s559 + $0x64] sm:$0xf]
      %v2730 = vld [vmem:[%s559 + $0x68] sm:$0x1]
      %v2731 = vld [vmem:[%s559 + $0x6c] sm:$0xe]
      %v2732 = vld [vmem:[%s559 + $0x70] sm:$0xf]
      %v2733 = vld [vmem:[%s559 + $0x74] sm:$0x1]
      %v2734 = vld [vmem:[%s559 + $0x78] sm:$0xe]
      %v2735 = vld [vmem:[%s559 + $0x7c] sm:$0xf]
      %v2736 = vld [vmem:[%s559 + $0x80] sm:$0x1]
      %v2737 = vld [vmem:[%s559 + $0x84] sm:$0xe]
      %v2738 = vld [vmem:[%s559 + $0x88] sm:$0xf]
      %v2739 = vld [vmem:[%s559 + $0x8c] sm:$0x1]
      %v2740 = vld [vmem:[%s559 + $0x90] sm:$0xe]
      %v2741 = vld [vmem:[%s559 + $0x94] sm:$0xf]
      %v2742 = vld [vmem:[%s559 + $0x98] sm:$0x1]
      %v2743 = vld [vmem:[%s559 + $0x9c] sm:$0xe]
      %v2744 = vld [vmem:[%s559 + $0xa0] sm:$0xf]
      %v2745 = vld [vmem:[%s559 + $0xa4] sm:$0x1]
      %v2746 = vld [vmem:[%s559 + $0xa8] sm:$0xe]
      %v2747 = vld [vmem:[%s559 + $0xac] sm:$0xf]
      %v2748 = vld [vmem:[%s559 + $0xb0] sm:$0x1]
      %v2749 = vld [vmem:[%s559 + $0xb4] sm:$0xe]
      %v2750 = vld [vmem:[%s559 + $0xb8] sm:$0xf]
      %v2751 = vld [vmem:[%s559 + $0xbc] sm:$0x1]
      %v2800 = vrot.slane %v2704, 5
      %v2801 = vrot.slane %v2800, 4
      %v2802 = vrot.slane %v2705, 5
      %v2803 = vsel %vm1708, %v2801, %v2802
      %v2804 = vrot.slane %v2802, 4
      %v2805 = vrot.slane %v2706, 5
      %v2806 = vsel %vm1708, %v2804, %v2805
      %v2807 = vrot.slane %v2707, 5
      %v2808 = vrot.slane %v2807, 4
      %v2809 = vrot.slane %v2708, 5
      %v2810 = vsel %vm1708, %v2808, %v2809
      %v2811 = vrot.slane %v2809, 4
      %v2812 = vrot.slane %v2709, 5
      %v2813 = vsel %vm1708, %v2811, %v2812
      %v2814 = vrot.slane %v2710, 5
      %v2815 = vrot.slane %v2814, 4
      %v2816 = vrot.slane %v2711, 5
      %v2817 = vsel %vm1708, %v2815, %v2816
      %v2818 = vrot.slane %v2816, 4
      %v2819 = vrot.slane %v2712, 5
      %v2820 = vsel %vm1708, %v2818, %v2819
      %v2821 = vrot.slane %v2713, 5
      %v2822 = vrot.slane %v2821, 4
      %v2823 = vrot.slane %v2714, 5
      %v2824 = vsel %vm1708, %v2822, %v2823
      %v2825 = vrot.slane %v2823, 4
      %v2826 = vrot.slane %v2715, 5
      %v2827 = vsel %vm1708, %v2825, %v2826
      %v2828 = vrot.slane %v2716, 5
      %v2829 = vrot.slane %v2828, 4
      %v2830 = vrot.slane %v2717, 5
      %v2831 = vsel %vm1708, %v2829, %v2830
      %v2832 = vrot.slane %v2830, 4
      %v2833 = vrot.slane %v2718, 5
      %v2834 = vsel %vm1708, %v2832, %v2833
      %v2835 = vrot.slane %v2719, 5
      %v2836 = vrot.slane %v2835, 4
      %v2837 = vrot.slane %v2720, 5
      %v2838 = vsel %vm1708, %v2836, %v2837
      %v2839 = vrot.slane %v2837, 4
      %v2840 = vrot.slane %v2721, 5
      %v2841 = vsel %vm1708, %v2839, %v2840
      %v2842 = vrot.slane %v2722, 5
      %v2843 = vrot.slane %v2842, 4
      %v2844 = vrot.slane %v2723, 5
      %v2845 = vsel %vm1708, %v2843, %v2844
      %v2846 = vrot.slane %v2844, 4
      %v2847 = vrot.slane %v2724, 5
      %v2848 = vsel %vm1708, %v2846, %v2847
      %v2849 = vrot.slane %v2725, 5
      %v2850 = vrot.slane %v2849, 4
      %v2851 = vrot.slane %v2726, 5
      %v2852 = vsel %vm1708, %v2850, %v2851
      %v2853 = vrot.slane %v2851, 4
      %v2854 = vrot.slane %v2727, 5
      %v2855 = vsel %vm1708, %v2853, %v2854
      %v2856 = vrot.slane %v2728, 5
      %v2857 = vrot.slane %v2856, 4
      %v2858 = vrot.slane %v2729, 5
      %v2859 = vsel %vm1708, %v2857, %v2858
      %v2860 = vrot.slane %v2858, 4
      %v2861 = vrot.slane %v2730, 5
      %v2862 = vsel %vm1708, %v2860, %v2861
      %v2863 = vrot.slane %v2731, 5
      %v2864 = vrot.slane %v2863, 4
      %v2865 = vrot.slane %v2732, 5
      %v2866 = vsel %vm1708, %v2864, %v2865
      %v2867 = vrot.slane %v2865, 4
      %v2868 = vrot.slane %v2733, 5
      %v2869 = vsel %vm1708, %v2867, %v2868
      %v2870 = vrot.slane %v2734, 5
      %v2871 = vrot.slane %v2870, 4
      %v2872 = vrot.slane %v2735, 5
      %v2873 = vsel %vm1708, %v2871, %v2872
      %v2874 = vrot.slane %v2872, 4
      %v2875 = vrot.slane %v2736, 5
      %v2876 = vsel %vm1708, %v2874, %v2875
      %v2877 = vrot.slane %v2737, 5
      %v2878 = vrot.slane %v2877, 4
      %v2879 = vrot.slane %v2738, 5
      %v2880 = vsel %vm1708, %v2878, %v2879
      %v2881 = vrot.slane %v2879, 4
      %v2882 = vrot.slane %v2739, 5
      %v2883 = vsel %vm1708, %v2881, %v2882
      %v2884 = vrot.slane %v2740, 5
      %v2885 = vrot.slane %v2884, 4
      %v2886 = vrot.slane %v2741, 5
      %v2887 = vsel %vm1708, %v2885, %v2886
      %v2888 = vrot.slane %v2886, 4
      %v2889 = vrot.slane %v2742, 5
      %v2890 = vsel %vm1708, %v2888, %v2889
      %v2891 = vrot.slane %v2743, 5
      %v2892 = vrot.slane %v2891, 4
      %v2893 = vrot.slane %v2744, 5
      %v2894 = vsel %vm1708, %v2892, %v2893
      %v2895 = vrot.slane %v2893, 4
      %v2896 = vrot.slane %v2745, 5
      %v2897 = vsel %vm1708, %v2895, %v2896
      %v2898 = vrot.slane %v2746, 5
      %v2899 = vrot.slane %v2898, 4
      %v2900 = vrot.slane %v2747, 5
      %v2901 = vsel %vm1708, %v2899, %v2900
      %v2902 = vrot.slane %v2900, 4
      %v2903 = vrot.slane %v2748, 5
      %v2904 = vsel %vm1708, %v2902, %v2903
      %v2905 = vrot.slane %v2749, 5
      %v2906 = vrot.slane %v2905, 4
      %v2907 = vrot.slane %v2750, 5
      %v2908 = vsel %vm1708, %v2906, %v2907
      %v2909 = vrot.slane %v2907, 4
      %v2910 = vrot.slane %v2751, 5
      %v2911 = vsel %vm1708, %v2909, %v2910
      %2912 = vrot.lane.b32.xlu0 %v2803, 20
      %v2913 = vpop.permute.xlu0 %2912
      %2914 = vrot.lane.b32.xlu0 %v2806, 20
      %v2915 = vpop.permute.xlu0 %2914
      %2916 = vrot.lane.b32.xlu0 %v2810, 20
      %v2917 = vpop.permute.xlu0 %2916
      %2918 = vrot.lane.b32.xlu0 %v2813, 20
      %v2919 = vpop.permute.xlu0 %2918
      %2920 = vrot.lane.b32.xlu0 %v2817, 20
      %v2921 = vpop.permute.xlu0 %2920
      %2922 = vrot.lane.b32.xlu0 %v2820, 20
      %v2923 = vpop.permute.xlu0 %2922
      %2924 = vrot.lane.b32.xlu0 %v2824, 20
      %v2925 = vpop.permute.xlu0 %2924
      %2926 = vrot.lane.b32.xlu0 %v2827, 20
      %v2927 = vpop.permute.xlu0 %2926
      %2928 = vrot.lane.b32.xlu0 %v2831, 20
      %v2929 = vpop.permute.xlu0 %2928
      %2930 = vrot.lane.b32.xlu0 %v2834, 20
      %v2931 = vpop.permute.xlu0 %2930
      %2932 = vrot.lane.b32.xlu0 %v2838, 20
      %v2933 = vpop.permute.xlu0 %2932
      %2934 = vrot.lane.b32.xlu0 %v2841, 20
      %v2935 = vpop.permute.xlu0 %2934
      %2936 = vrot.lane.b32.xlu0 %v2845, 20
      %v2937 = vpop.permute.xlu0 %2936
      %2938 = vrot.lane.b32.xlu0 %v2848, 20
      %v2939 = vpop.permute.xlu0 %2938
      %2940 = vrot.lane.b32.xlu0 %v2852, 20
      %v2941 = vpop.permute.xlu0 %2940
      %2942 = vrot.lane.b32.xlu0 %v2855, 20
      %v2943 = vpop.permute.xlu0 %2942
      %2944 = vrot.lane.b32.xlu0 %v2859, 20
      %v2945 = vpop.permute.xlu0 %2944
      %2946 = vrot.lane.b32.xlu0 %v2862, 20
      %v2947 = vpop.permute.xlu0 %2946
      %2948 = vrot.lane.b32.xlu0 %v2866, 20
      %v2949 = vpop.permute.xlu0 %2948
      %2950 = vrot.lane.b32.xlu0 %v2869, 20
      %v2951 = vpop.permute.xlu0 %2950
      %2952 = vrot.lane.b32.xlu0 %v2873, 20
      %v2953 = vpop.permute.xlu0 %2952
      %2954 = vrot.lane.b32.xlu0 %v2876, 20
      %v2955 = vpop.permute.xlu0 %2954
      %2956 = vrot.lane.b32.xlu0 %v2880, 20
      %v2957 = vpop.permute.xlu0 %2956
      %2958 = vrot.lane.b32.xlu0 %v2883, 20
      %v2959 = vpop.permute.xlu0 %2958
      %2960 = vrot.lane.b32.xlu0 %v2887, 20
      %v2961 = vpop.permute.xlu0 %2960
      %2962 = vrot.lane.b32.xlu0 %v2890, 20
      %v2963 = vpop.permute.xlu0 %2962
      %2964 = vrot.lane.b32.xlu0 %v2894, 20
      %v2965 = vpop.permute.xlu0 %2964
      %2966 = vrot.lane.b32.xlu0 %v2897, 20
      %v2967 = vpop.permute.xlu0 %2966
      %2968 = vrot.lane.b32.xlu0 %v2901, 20
      %v2969 = vpop.permute.xlu0 %2968
      %2970 = vrot.lane.b32.xlu0 %v2904, 20
      %v2971 = vpop.permute.xlu0 %2970
      %2972 = vrot.lane.b32.xlu0 %v2908, 20
      %v2973 = vpop.permute.xlu0 %2972
      %2974 = vrot.lane.b32.xlu0 %v2911, 20
      %v2975 = vpop.permute.xlu0 %2974
      %vm3008 = vcmask 191648
      %3009 = vst.msk [vmem:[#allocation3] sm:$0xf] %vm3008, %v2913
      %3010 = vst.msk [vmem:[#allocation3 + $0x4] sm:$0xf] %vm3008, %v2915
      %3011 = vst.msk [vmem:[#allocation3 + $0x8] sm:$0xf] %vm3008, %v2917
      %3012 = vst.msk [vmem:[#allocation3 + $0xc] sm:$0xf] %vm3008, %v2919
      %3013 = vst.msk [vmem:[#allocation3 + $0x10] sm:$0xf] %vm3008, %v2921
      %3014 = vst.msk [vmem:[#allocation3 + $0x14] sm:$0xf] %vm3008, %v2923
      %3015 = vst.msk [vmem:[#allocation3 + $0x18] sm:$0xf] %vm3008, %v2925
      %3016 = vst.msk [vmem:[#allocation3 + $0x1c] sm:$0xf] %vm3008, %v2927
      %3017 = vst.msk [vmem:[#allocation3 + $0x20] sm:$0xf] %vm3008, %v2929
      %3018 = vst.msk [vmem:[#allocation3 + $0x24] sm:$0xf] %vm3008, %v2931
      %3019 = vst.msk [vmem:[#allocation3 + $0x28] sm:$0xf] %vm3008, %v2933
      %3020 = vst.msk [vmem:[#allocation3 + $0x2c] sm:$0xf] %vm3008, %v2935
      %3021 = vst.msk [vmem:[#allocation3 + $0x30] sm:$0xf] %vm3008, %v2937
      %3022 = vst.msk [vmem:[#allocation3 + $0x34] sm:$0xf] %vm3008, %v2939
      %3023 = vst.msk [vmem:[#allocation3 + $0x38] sm:$0xf] %vm3008, %v2941
      %3024 = vst.msk [vmem:[#allocation3 + $0x3c] sm:$0xf] %vm3008, %v2943
      %3025 = vst.msk [vmem:[#allocation3 + $0x40] sm:$0xf] %vm3008, %v2945
      %3026 = vst.msk [vmem:[#allocation3 + $0x44] sm:$0xf] %vm3008, %v2947
      %3027 = vst.msk [vmem:[#allocation3 + $0x48] sm:$0xf] %vm3008, %v2949
      %3028 = vst.msk [vmem:[#allocation3 + $0x4c] sm:$0xf] %vm3008, %v2951
      %3029 = vst.msk [vmem:[#allocation3 + $0x50] sm:$0xf] %vm3008, %v2953
      %3030 = vst.msk [vmem:[#allocation3 + $0x54] sm:$0xf] %vm3008, %v2955
      %3031 = vst.msk [vmem:[#allocation3 + $0x58] sm:$0xf] %vm3008, %v2957
      %3032 = vst.msk [vmem:[#allocation3 + $0x5c] sm:$0xf] %vm3008, %v2959
      %3033 = vst.msk [vmem:[#allocation3 + $0x60] sm:$0xf] %vm3008, %v2961
      %3034 = vst.msk [vmem:[#allocation3 + $0x64] sm:$0xf] %vm3008, %v2963
      %3035 = vst.msk [vmem:[#allocation3 + $0x68] sm:$0xf] %vm3008, %v2965
      %3036 = vst.msk [vmem:[#allocation3 + $0x6c] sm:$0xf] %vm3008, %v2967
      %3037 = vst.msk [vmem:[#allocation3 + $0x70] sm:$0xf] %vm3008, %v2969
      %3038 = vst.msk [vmem:[#allocation3 + $0x74] sm:$0xf] %vm3008, %v2971
      %3039 = vst.msk [vmem:[#allocation3 + $0x78] sm:$0xf] %vm3008, %v2973
      %3040 = vst.msk [vmem:[#allocation3 + $0x7c] sm:$0xf] %vm3008, %v2975
      %s3041 = scalar_lea.vmem [#allocation2], 24
      %v3042 = vld [vmem:[%s3041] sm:$0xf]
      %v3043 = vld [vmem:[%s3041 + $0x4] sm:$0xf]
      %v3044 = vld [vmem:[%s3041 + $0xc] sm:$0xf]
      %v3045 = vld [vmem:[%s3041 + $0x10] sm:$0xf]
      %v3046 = vld [vmem:[%s3041 + $0x18] sm:$0xf]
      %v3047 = vld [vmem:[%s3041 + $0x1c] sm:$0xf]
      %v3048 = vld [vmem:[%s3041 + $0x24] sm:$0xf]
      %v3049 = vld [vmem:[%s3041 + $0x28] sm:$0xf]
      %v3050 = vld [vmem:[%s3041 + $0x30] sm:$0xf]
      %v3051 = vld [vmem:[%s3041 + $0x34] sm:$0xf]
      %v3052 = vld [vmem:[%s3041 + $0x3c] sm:$0xf]
      %v3053 = vld [vmem:[%s3041 + $0x40] sm:$0xf]
      %v3054 = vld [vmem:[%s3041 + $0x48] sm:$0xf]
      %v3055 = vld [vmem:[%s3041 + $0x4c] sm:$0xf]
      %v3056 = vld [vmem:[%s3041 + $0x54] sm:$0xf]
      %v3057 = vld [vmem:[%s3041 + $0x58] sm:$0xf]
      %v3058 = vld [vmem:[%s3041 + $0x60] sm:$0xf]
      %v3059 = vld [vmem:[%s3041 + $0x64] sm:$0xf]
      %v3060 = vld [vmem:[%s3041 + $0x6c] sm:$0xf]
      %v3061 = vld [vmem:[%s3041 + $0x70] sm:$0xf]
      %v3062 = vld [vmem:[%s3041 + $0x78] sm:$0xf]
      %v3063 = vld [vmem:[%s3041 + $0x7c] sm:$0xf]
      %v3064 = vld [vmem:[%s3041 + $0x84] sm:$0xf]
      %v3065 = vld [vmem:[%s3041 + $0x88] sm:$0xf]
      %v3066 = vld [vmem:[%s3041 + $0x90] sm:$0xf]
      %v3067 = vld [vmem:[%s3041 + $0x94] sm:$0xf]
      %v3068 = vld [vmem:[%s3041 + $0x9c] sm:$0xf]
      %v3069 = vld [vmem:[%s3041 + $0xa0] sm:$0xf]
      %v3070 = vld [vmem:[%s3041 + $0xa8] sm:$0xf]
      %v3071 = vld [vmem:[%s3041 + $0xac] sm:$0xf]
      %v3072 = vld [vmem:[%s3041 + $0xb4] sm:$0xf]
      %v3073 = vld [vmem:[%s3041 + $0xb8] sm:$0xf]
      %3106 = vrot.lane.b32.xlu0 %v3042, 24
      %v3107 = vpop.permute.xlu0 %3106
      %3108 = vrot.lane.b32.xlu0 %v3043, 24
      %v3109 = vpop.permute.xlu0 %3108
      %3110 = vrot.lane.b32.xlu0 %v3044, 24
      %v3111 = vpop.permute.xlu0 %3110
      %3112 = vrot.lane.b32.xlu0 %v3045, 24
      %v3113 = vpop.permute.xlu0 %3112
      %3114 = vrot.lane.b32.xlu0 %v3046, 24
      %v3115 = vpop.permute.xlu0 %3114
      %3116 = vrot.lane.b32.xlu0 %v3047, 24
      %v3117 = vpop.permute.xlu0 %3116
      %3118 = vrot.lane.b32.xlu0 %v3048, 24
      %v3119 = vpop.permute.xlu0 %3118
      %3120 = vrot.lane.b32.xlu0 %v3049, 24
      %v3121 = vpop.permute.xlu0 %3120
      %3122 = vrot.lane.b32.xlu0 %v3050, 24
      %v3123 = vpop.permute.xlu0 %3122
      %3124 = vrot.lane.b32.xlu0 %v3051, 24
      %v3125 = vpop.permute.xlu0 %3124
      %3126 = vrot.lane.b32.xlu0 %v3052, 24
      %v3127 = vpop.permute.xlu0 %3126
      %3128 = vrot.lane.b32.xlu0 %v3053, 24
      %v3129 = vpop.permute.xlu0 %3128
      %3130 = vrot.lane.b32.xlu0 %v3054, 24
      %v3131 = vpop.permute.xlu0 %3130
      %3132 = vrot.lane.b32.xlu0 %v3055, 24
      %v3133 = vpop.permute.xlu0 %3132
      %3134 = vrot.lane.b32.xlu0 %v3056, 24
      %v3135 = vpop.permute.xlu0 %3134
      %3136 = vrot.lane.b32.xlu0 %v3057, 24
      %v3137 = vpop.permute.xlu0 %3136
      %3138 = vrot.lane.b32.xlu0 %v3058, 24
      %v3139 = vpop.permute.xlu0 %3138
      %3140 = vrot.lane.b32.xlu0 %v3059, 24
      %v3141 = vpop.permute.xlu0 %3140
      %3142 = vrot.lane.b32.xlu0 %v3060, 24
      %v3143 = vpop.permute.xlu0 %3142
      %3144 = vrot.lane.b32.xlu0 %v3061, 24
      %v3145 = vpop.permute.xlu0 %3144
      %3146 = vrot.lane.b32.xlu0 %v3062, 24
      %v3147 = vpop.permute.xlu0 %3146
      %3148 = vrot.lane.b32.xlu0 %v3063, 24
      %v3149 = vpop.permute.xlu0 %3148
      %3150 = vrot.lane.b32.xlu0 %v3064, 24
      %v3151 = vpop.permute.xlu0 %3150
      %3152 = vrot.lane.b32.xlu0 %v3065, 24
      %v3153 = vpop.permute.xlu0 %3152
      %3154 = vrot.lane.b32.xlu0 %v3066, 24
      %v3155 = vpop.permute.xlu0 %3154
      %3156 = vrot.lane.b32.xlu0 %v3067, 24
      %v3157 = vpop.permute.xlu0 %3156
      %3158 = vrot.lane.b32.xlu0 %v3068, 24
      %v3159 = vpop.permute.xlu0 %3158
      %3160 = vrot.lane.b32.xlu0 %v3069, 24
      %v3161 = vpop.permute.xlu0 %3160
      %3162 = vrot.lane.b32.xlu0 %v3070, 24
      %v3163 = vpop.permute.xlu0 %3162
      %3164 = vrot.lane.b32.xlu0 %v3071, 24
      %v3165 = vpop.permute.xlu0 %3164
      %3166 = vrot.lane.b32.xlu0 %v3072, 24
      %v3167 = vpop.permute.xlu0 %3166
      %3168 = vrot.lane.b32.xlu0 %v3073, 24
      %v3169 = vpop.permute.xlu0 %3168
      %vm3202 = vcmask 224448
      %3203 = vst.msk [vmem:[#allocation3] sm:$0xf] %vm3202, %v3107
      %3204 = vst.msk [vmem:[#allocation3 + $0x4] sm:$0xf] %vm3202, %v3109
      %3205 = vst.msk [vmem:[#allocation3 + $0x8] sm:$0xf] %vm3202, %v3111
      %3206 = vst.msk [vmem:[#allocation3 + $0xc] sm:$0xf] %vm3202, %v3113
      %3207 = vst.msk [vmem:[#allocation3 + $0x10] sm:$0xf] %vm3202, %v3115
      %3208 = vst.msk [vmem:[#allocation3 + $0x14] sm:$0xf] %vm3202, %v3117
      %3209 = vst.msk [vmem:[#allocation3 + $0x18] sm:$0xf] %vm3202, %v3119
      %3210 = vst.msk [vmem:[#allocation3 + $0x1c] sm:$0xf] %vm3202, %v3121
      %3211 = vst.msk [vmem:[#allocation3 + $0x20] sm:$0xf] %vm3202, %v3123
      %3212 = vst.msk [vmem:[#allocation3 + $0x24] sm:$0xf] %vm3202, %v3125
      %3213 = vst.msk [vmem:[#allocation3 + $0x28] sm:$0xf] %vm3202, %v3127
      %3214 = vst.msk [vmem:[#allocation3 + $0x2c] sm:$0xf] %vm3202, %v3129
      %3215 = vst.msk [vmem:[#allocation3 + $0x30] sm:$0xf] %vm3202, %v3131
      %3216 = vst.msk [vmem:[#allocation3 + $0x34] sm:$0xf] %vm3202, %v3133
      %3217 = vst.msk [vmem:[#allocation3 + $0x38] sm:$0xf] %vm3202, %v3135
      %3218 = vst.msk [vmem:[#allocation3 + $0x3c] sm:$0xf] %vm3202, %v3137
      %3219 = vst.msk [vmem:[#allocation3 + $0x40] sm:$0xf] %vm3202, %v3139
      %3220 = vst.msk [vmem:[#allocation3 + $0x44] sm:$0xf] %vm3202, %v3141
      %3221 = vst.msk [vmem:[#allocation3 + $0x48] sm:$0xf] %vm3202, %v3143
      %3222 = vst.msk [vmem:[#allocation3 + $0x4c] sm:$0xf] %vm3202, %v3145
      %3223 = vst.msk [vmem:[#allocation3 + $0x50] sm:$0xf] %vm3202, %v3147
      %3224 = vst.msk [vmem:[#allocation3 + $0x54] sm:$0xf] %vm3202, %v3149
      %3225 = vst.msk [vmem:[#allocation3 + $0x58] sm:$0xf] %vm3202, %v3151
      %3226 = vst.msk [vmem:[#allocation3 + $0x5c] sm:$0xf] %vm3202, %v3153
      %3227 = vst.msk [vmem:[#allocation3 + $0x60] sm:$0xf] %vm3202, %v3155
      %3228 = vst.msk [vmem:[#allocation3 + $0x64] sm:$0xf] %vm3202, %v3157
      %3229 = vst.msk [vmem:[#allocation3 + $0x68] sm:$0xf] %vm3202, %v3159
      %3230 = vst.msk [vmem:[#allocation3 + $0x6c] sm:$0xf] %vm3202, %v3161
      %3231 = vst.msk [vmem:[#allocation3 + $0x70] sm:$0xf] %vm3202, %v3163
      %3232 = vst.msk [vmem:[#allocation3 + $0x74] sm:$0xf] %vm3202, %v3165
      %3233 = vst.msk [vmem:[#allocation3 + $0x78] sm:$0xf] %vm3202, %v3167
      %3234 = vst.msk [vmem:[#allocation3 + $0x7c] sm:$0xf] %vm3202, %v3169
      %v3235 = vld [vmem:[%s3041] sm:$0xf]
      %v3236 = vld [vmem:[%s3041 + $0x4] sm:$0xf]
      %v3237 = vld [vmem:[%s3041 + $0x8] sm:$0x1]
      %v3238 = vld [vmem:[%s3041 + $0xc] sm:$0xf]
      %v3239 = vld [vmem:[%s3041 + $0x10] sm:$0xf]
      %v3240 = vld [vmem:[%s3041 + $0x14] sm:$0x1]
      %v3241 = vld [vmem:[%s3041 + $0x18] sm:$0xf]
      %v3242 = vld [vmem:[%s3041 + $0x1c] sm:$0xf]
      %v3243 = vld [vmem:[%s3041 + $0x20] sm:$0x1]
      %v3244 = vld [vmem:[%s3041 + $0x24] sm:$0xf]
      %v3245 = vld [vmem:[%s3041 + $0x28] sm:$0xf]
      %v3246 = vld [vmem:[%s3041 + $0x2c] sm:$0x1]
      %v3247 = vld [vmem:[%s3041 + $0x30] sm:$0xf]
      %v3248 = vld [vmem:[%s3041 + $0x34] sm:$0xf]
      %v3249 = vld [vmem:[%s3041 + $0x38] sm:$0x1]
      %v3250 = vld [vmem:[%s3041 + $0x3c] sm:$0xf]
      %v3251 = vld [vmem:[%s3041 + $0x40] sm:$0xf]
      %v3252 = vld [vmem:[%s3041 + $0x44] sm:$0x1]
      %v3253 = vld [vmem:[%s3041 + $0x48] sm:$0xf]
      %v3254 = vld [vmem:[%s3041 + $0x4c] sm:$0xf]
      %v3255 = vld [vmem:[%s3041 + $0x50] sm:$0x1]
      %v3256 = vld [vmem:[%s3041 + $0x54] sm:$0xf]
      %v3257 = vld [vmem:[%s3041 + $0x58] sm:$0xf]
      %v3258 = vld [vmem:[%s3041 + $0x5c] sm:$0x1]
      %v3259 = vld [vmem:[%s3041 + $0x60] sm:$0xf]
      %v3260 = vld [vmem:[%s3041 + $0x64] sm:$0xf]
      %v3261 = vld [vmem:[%s3041 + $0x68] sm:$0x1]
      %v3262 = vld [vmem:[%s3041 + $0x6c] sm:$0xf]
      %v3263 = vld [vmem:[%s3041 + $0x70] sm:$0xf]
      %v3264 = vld [vmem:[%s3041 + $0x74] sm:$0x1]
      %v3265 = vld [vmem:[%s3041 + $0x78] sm:$0xf]
      %v3266 = vld [vmem:[%s3041 + $0x7c] sm:$0xf]
      %v3267 = vld [vmem:[%s3041 + $0x80] sm:$0x1]
      %v3268 = vld [vmem:[%s3041 + $0x84] sm:$0xf]
      %v3269 = vld [vmem:[%s3041 + $0x88] sm:$0xf]
      %v3270 = vld [vmem:[%s3041 + $0x8c] sm:$0x1]
      %v3271 = vld [vmem:[%s3041 + $0x90] sm:$0xf]
      %v3272 = vld [vmem:[%s3041 + $0x94] sm:$0xf]
      %v3273 = vld [vmem:[%s3041 + $0x98] sm:$0x1]
      %v3274 = vld [vmem:[%s3041 + $0x9c] sm:$0xf]
      %v3275 = vld [vmem:[%s3041 + $0xa0] sm:$0xf]
      %v3276 = vld [vmem:[%s3041 + $0xa4] sm:$0x1]
      %v3277 = vld [vmem:[%s3041 + $0xa8] sm:$0xf]
      %v3278 = vld [vmem:[%s3041 + $0xac] sm:$0xf]
      %v3279 = vld [vmem:[%s3041 + $0xb0] sm:$0x1]
      %v3280 = vld [vmem:[%s3041 + $0xb4] sm:$0xf]
      %v3281 = vld [vmem:[%s3041 + $0xb8] sm:$0xf]
      %v3282 = vld [vmem:[%s3041 + $0xbc] sm:$0x1]
      %v3284 = vshrl.u32 %v3235, 16
      %v3286 = vrot.slane %v3284, 4
      %v3287 = vshll.u32 %v3235, 16
      %v3289 = vrot.slane %v3287, 5
      %v3290 = vor.u32 %v3286, %v3289
      %v3291 = vrot.slane %v3290, 4
      %v3293 = vshll.u32 %v3236, 16
      %v3295 = vrot.slane %v3293, 5
      %v3296 = vsel %vm1096, %v3291, %v3295
      %v3297 = vshrl.u32 %v3236, 16
      %v3299 = vrot.slane %v3297, 4
      %v3300 = vor.u32 %v3299, %v3295
      %v3301 = vrot.slane %v3300, 4
      %v3303 = vshll.u32 %v3237, 16
      %v3305 = vrot.slane %v3303, 5
      %v3306 = vsel %vm1096, %v3301, %v3305
      %v3308 = vshrl.u32 %v3238, 16
      %v3310 = vrot.slane %v3308, 4
      %v3311 = vshll.u32 %v3238, 16
      %v3313 = vrot.slane %v3311, 5
      %v3314 = vor.u32 %v3310, %v3313
      %v3315 = vrot.slane %v3314, 4
      %v3317 = vshll.u32 %v3239, 16
      %v3319 = vrot.slane %v3317, 5
      %v3320 = vsel %vm1096, %v3315, %v3319
      %v3321 = vshrl.u32 %v3239, 16
      %v3323 = vrot.slane %v3321, 4
      %v3324 = vor.u32 %v3323, %v3319
      %v3325 = vrot.slane %v3324, 4
      %v3327 = vshll.u32 %v3240, 16
      %v3329 = vrot.slane %v3327, 5
      %v3330 = vsel %vm1096, %v3325, %v3329
      %v3332 = vshrl.u32 %v3241, 16
      %v3334 = vrot.slane %v3332, 4
      %v3335 = vshll.u32 %v3241, 16
      %v3337 = vrot.slane %v3335, 5
      %v3338 = vor.u32 %v3334, %v3337
      %v3339 = vrot.slane %v3338, 4
      %v3341 = vshll.u32 %v3242, 16
      %v3343 = vrot.slane %v3341, 5
      %v3344 = vsel %vm1096, %v3339, %v3343
      %v3345 = vshrl.u32 %v3242, 16
      %v3347 = vrot.slane %v3345, 4
      %v3348 = vor.u32 %v3347, %v3343
      %v3349 = vrot.slane %v3348, 4
      %v3351 = vshll.u32 %v3243, 16
      %v3353 = vrot.slane %v3351, 5
      %v3354 = vsel %vm1096, %v3349, %v3353
      %v3356 = vshrl.u32 %v3244, 16
      %v3358 = vrot.slane %v3356, 4
      %v3359 = vshll.u32 %v3244, 16
      %v3361 = vrot.slane %v3359, 5
      %v3362 = vor.u32 %v3358, %v3361
      %v3363 = vrot.slane %v3362, 4
      %v3365 = vshll.u32 %v3245, 16
      %v3367 = vrot.slane %v3365, 5
      %v3368 = vsel %vm1096, %v3363, %v3367
      %v3369 = vshrl.u32 %v3245, 16
      %v3371 = vrot.slane %v3369, 4
      %v3372 = vor.u32 %v3371, %v3367
      %v3373 = vrot.slane %v3372, 4
      %v3375 = vshll.u32 %v3246, 16
      %v3377 = vrot.slane %v3375, 5
      %v3378 = vsel %vm1096, %v3373, %v3377
      %v3380 = vshrl.u32 %v3247, 16
      %v3382 = vrot.slane %v3380, 4
      %v3383 = vshll.u32 %v3247, 16
      %v3385 = vrot.slane %v3383, 5
      %v3386 = vor.u32 %v3382, %v3385
      %v3387 = vrot.slane %v3386, 4
      %v3389 = vshll.u32 %v3248, 16
      %v3391 = vrot.slane %v3389, 5
      %v3392 = vsel %vm1096, %v3387, %v3391
      %v3393 = vshrl.u32 %v3248, 16
      %v3395 = vrot.slane %v3393, 4
      %v3396 = vor.u32 %v3395, %v3391
      %v3397 = vrot.slane %v3396, 4
      %v3399 = vshll.u32 %v3249, 16
      %v3401 = vrot.slane %v3399, 5
      %v3402 = vsel %vm1096, %v3397, %v3401
      %v3404 = vshrl.u32 %v3250, 16
      %v3406 = vrot.slane %v3404, 4
      %v3407 = vshll.u32 %v3250, 16
      %v3409 = vrot.slane %v3407, 5
      %v3410 = vor.u32 %v3406, %v3409
      %v3411 = vrot.slane %v3410, 4
      %v3413 = vshll.u32 %v3251, 16
      %v3415 = vrot.slane %v3413, 5
      %v3416 = vsel %vm1096, %v3411, %v3415
      %v3417 = vshrl.u32 %v3251, 16
      %v3419 = vrot.slane %v3417, 4
      %v3420 = vor.u32 %v3419, %v3415
      %v3421 = vrot.slane %v3420, 4
      %v3423 = vshll.u32 %v3252, 16
      %v3425 = vrot.slane %v3423, 5
      %v3426 = vsel %vm1096, %v3421, %v3425
      %v3428 = vshrl.u32 %v3253, 16
      %v3430 = vrot.slane %v3428, 4
      %v3431 = vshll.u32 %v3253, 16
      %v3433 = vrot.slane %v3431, 5
      %v3434 = vor.u32 %v3430, %v3433
      %v3435 = vrot.slane %v3434, 4
      %v3437 = vshll.u32 %v3254, 16
      %v3439 = vrot.slane %v3437, 5
      %v3440 = vsel %vm1096, %v3435, %v3439
      %v3441 = vshrl.u32 %v3254, 16
      %v3443 = vrot.slane %v3441, 4
      %v3444 = vor.u32 %v3443, %v3439
      %v3445 = vrot.slane %v3444, 4
      %v3447 = vshll.u32 %v3255, 16
      %v3449 = vrot.slane %v3447, 5
      %v3450 = vsel %vm1096, %v3445, %v3449
      %v3452 = vshrl.u32 %v3256, 16
      %v3454 = vrot.slane %v3452, 4
      %v3455 = vshll.u32 %v3256, 16
      %v3457 = vrot.slane %v3455, 5
      %v3458 = vor.u32 %v3454, %v3457
      %v3459 = vrot.slane %v3458, 4
      %v3461 = vshll.u32 %v3257, 16
      %v3463 = vrot.slane %v3461, 5
      %v3464 = vsel %vm1096, %v3459, %v3463
      %v3465 = vshrl.u32 %v3257, 16
      %v3467 = vrot.slane %v3465, 4
      %v3468 = vor.u32 %v3467, %v3463
      %v3469 = vrot.slane %v3468, 4
      %v3471 = vshll.u32 %v3258, 16
      %v3473 = vrot.slane %v3471, 5
      %v3474 = vsel %vm1096, %v3469, %v3473
      %v3476 = vshrl.u32 %v3259, 16
      %v3478 = vrot.slane %v3476, 4
      %v3479 = vshll.u32 %v3259, 16
      %v3481 = vrot.slane %v3479, 5
      %v3482 = vor.u32 %v3478, %v3481
      %v3483 = vrot.slane %v3482, 4
      %v3485 = vshll.u32 %v3260, 16
      %v3487 = vrot.slane %v3485, 5
      %v3488 = vsel %vm1096, %v3483, %v3487
      %v3489 = vshrl.u32 %v3260, 16
      %v3491 = vrot.slane %v3489, 4
      %v3492 = vor.u32 %v3491, %v3487
      %v3493 = vrot.slane %v3492, 4
      %v3495 = vshll.u32 %v3261, 16
      %v3497 = vrot.slane %v3495, 5
      %v3498 = vsel %vm1096, %v3493, %v3497
      %v3500 = vshrl.u32 %v3262, 16
      %v3502 = vrot.slane %v3500, 4
      %v3503 = vshll.u32 %v3262, 16
      %v3505 = vrot.slane %v3503, 5
      %v3506 = vor.u32 %v3502, %v3505
      %v3507 = vrot.slane %v3506, 4
      %v3509 = vshll.u32 %v3263, 16
      %v3511 = vrot.slane %v3509, 5
      %v3512 = vsel %vm1096, %v3507, %v3511
      %v3513 = vshrl.u32 %v3263, 16
      %v3515 = vrot.slane %v3513, 4
      %v3516 = vor.u32 %v3515, %v3511
      %v3517 = vrot.slane %v3516, 4
      %v3519 = vshll.u32 %v3264, 16
      %v3521 = vrot.slane %v3519, 5
      %v3522 = vsel %vm1096, %v3517, %v3521
      %v3524 = vshrl.u32 %v3265, 16
      %v3526 = vrot.slane %v3524, 4
      %v3527 = vshll.u32 %v3265, 16
      %v3529 = vrot.slane %v3527, 5
      %v3530 = vor.u32 %v3526, %v3529
      %v3531 = vrot.slane %v3530, 4
      %v3533 = vshll.u32 %v3266, 16
      %v3535 = vrot.slane %v3533, 5
      %v3536 = vsel %vm1096, %v3531, %v3535
      %v3537 = vshrl.u32 %v3266, 16
      %v3539 = vrot.slane %v3537, 4
      %v3540 = vor.u32 %v3539, %v3535
      %v3541 = vrot.slane %v3540, 4
      %v3543 = vshll.u32 %v3267, 16
      %v3545 = vrot.slane %v3543, 5
      %v3546 = vsel %vm1096, %v3541, %v3545
      %v3548 = vshrl.u32 %v3268, 16
      %v3550 = vrot.slane %v3548, 4
      %v3551 = vshll.u32 %v3268, 16
      %v3553 = vrot.slane %v3551, 5
      %v3554 = vor.u32 %v3550, %v3553
      %v3555 = vrot.slane %v3554, 4
      %v3557 = vshll.u32 %v3269, 16
      %v3559 = vrot.slane %v3557, 5
      %v3560 = vsel %vm1096, %v3555, %v3559
      %v3561 = vshrl.u32 %v3269, 16
      %v3563 = vrot.slane %v3561, 4
      %v3564 = vor.u32 %v3563, %v3559
      %v3565 = vrot.slane %v3564, 4
      %v3567 = vshll.u32 %v3270, 16
      %v3569 = vrot.slane %v3567, 5
      %v3570 = vsel %vm1096, %v3565, %v3569
      %v3572 = vshrl.u32 %v3271, 16
      %v3574 = vrot.slane %v3572, 4
      %v3575 = vshll.u32 %v3271, 16
      %v3577 = vrot.slane %v3575, 5
      %v3578 = vor.u32 %v3574, %v3577
      %v3579 = vrot.slane %v3578, 4
      %v3581 = vshll.u32 %v3272, 16
      %v3583 = vrot.slane %v3581, 5
      %v3584 = vsel %vm1096, %v3579, %v3583
      %v3585 = vshrl.u32 %v3272, 16
      %v3587 = vrot.slane %v3585, 4
      %v3588 = vor.u32 %v3587, %v3583
      %v3589 = vrot.slane %v3588, 4
      %v3591 = vshll.u32 %v3273, 16
      %v3593 = vrot.slane %v3591, 5
      %v3594 = vsel %vm1096, %v3589, %v3593
      %v3596 = vshrl.u32 %v3274, 16
      %v3598 = vrot.slane %v3596, 4
      %v3599 = vshll.u32 %v3274, 16
      %v3601 = vrot.slane %v3599, 5
      %v3602 = vor.u32 %v3598, %v3601
      %v3603 = vrot.slane %v3602, 4
      %v3605 = vshll.u32 %v3275, 16
      %v3607 = vrot.slane %v3605, 5
      %v3608 = vsel %vm1096, %v3603, %v3607
      %v3609 = vshrl.u32 %v3275, 16
      %v3611 = vrot.slane %v3609, 4
      %v3612 = vor.u32 %v3611, %v3607
      %v3613 = vrot.slane %v3612, 4
      %v3615 = vshll.u32 %v3276, 16
      %v3617 = vrot.slane %v3615, 5
      %v3618 = vsel %vm1096, %v3613, %v3617
      %v3620 = vshrl.u32 %v3277, 16
      %v3622 = vrot.slane %v3620, 4
      %v3623 = vshll.u32 %v3277, 16
      %v3625 = vrot.slane %v3623, 5
      %v3626 = vor.u32 %v3622, %v3625
      %v3627 = vrot.slane %v3626, 4
      %v3629 = vshll.u32 %v3278, 16
      %v3631 = vrot.slane %v3629, 5
      %v3632 = vsel %vm1096, %v3627, %v3631
      %v3633 = vshrl.u32 %v3278, 16
      %v3635 = vrot.slane %v3633, 4
      %v3636 = vor.u32 %v3635, %v3631
      %v3637 = vrot.slane %v3636, 4
      %v3639 = vshll.u32 %v3279, 16
      %v3641 = vrot.slane %v3639, 5
      %v3642 = vsel %vm1096, %v3637, %v3641
      %v3644 = vshrl.u32 %v3280, 16
      %v3646 = vrot.slane %v3644, 4
      %v3647 = vshll.u32 %v3280, 16
      %v3649 = vrot.slane %v3647, 5
      %v3650 = vor.u32 %v3646, %v3649
      %v3651 = vrot.slane %v3650, 4
      %v3653 = vshll.u32 %v3281, 16
      %v3655 = vrot.slane %v3653, 5
      %v3656 = vsel %vm1096, %v3651, %v3655
      %v3657 = vshrl.u32 %v3281, 16
      %v3659 = vrot.slane %v3657, 4
      %v3660 = vor.u32 %v3659, %v3655
      %v3661 = vrot.slane %v3660, 4
      %v3663 = vshll.u32 %v3282, 16
      %v3665 = vrot.slane %v3663, 5
      %v3666 = vsel %vm1096, %v3661, %v3665
      %3667 = vrot.lane.b32.xlu0 %v3296, 28
      %v3668 = vpop.permute.xlu0 %3667
      %3669 = vrot.lane.b32.xlu0 %v3306, 28
      %v3670 = vpop.permute.xlu0 %3669
      %3671 = vrot.lane.b32.xlu0 %v3320, 28
      %v3672 = vpop.permute.xlu0 %3671
      %3673 = vrot.lane.b32.xlu0 %v3330, 28
      %v3674 = vpop.permute.xlu0 %3673
      %3675 = vrot.lane.b32.xlu0 %v3344, 28
      %v3676 = vpop.permute.xlu0 %3675
      %3677 = vrot.lane.b32.xlu0 %v3354, 28
      %v3678 = vpop.permute.xlu0 %3677
      %3679 = vrot.lane.b32.xlu0 %v3368, 28
      %v3680 = vpop.permute.xlu0 %3679
      %3681 = vrot.lane.b32.xlu0 %v3378, 28
      %v3682 = vpop.permute.xlu0 %3681
      %3683 = vrot.lane.b32.xlu0 %v3392, 28
      %v3684 = vpop.permute.xlu0 %3683
      %3685 = vrot.lane.b32.xlu0 %v3402, 28
      %v3686 = vpop.permute.xlu0 %3685
      %3687 = vrot.lane.b32.xlu0 %v3416, 28
      %v3688 = vpop.permute.xlu0 %3687
      %3689 = vrot.lane.b32.xlu0 %v3426, 28
      %v3690 = vpop.permute.xlu0 %3689
      %3691 = vrot.lane.b32.xlu0 %v3440, 28
      %v3692 = vpop.permute.xlu0 %3691
      %3693 = vrot.lane.b32.xlu0 %v3450, 28
      %v3694 = vpop.permute.xlu0 %3693
      %3695 = vrot.lane.b32.xlu0 %v3464, 28
      %v3696 = vpop.permute.xlu0 %3695
      %3697 = vrot.lane.b32.xlu0 %v3474, 28
      %v3698 = vpop.permute.xlu0 %3697
      %3699 = vrot.lane.b32.xlu0 %v3488, 28
      %v3700 = vpop.permute.xlu0 %3699
      %3701 = vrot.lane.b32.xlu0 %v3498, 28
      %v3702 = vpop.permute.xlu0 %3701
      %3703 = vrot.lane.b32.xlu0 %v3512, 28
      %v3704 = vpop.permute.xlu0 %3703
      %3705 = vrot.lane.b32.xlu0 %v3522, 28
      %v3706 = vpop.permute.xlu0 %3705
      %3707 = vrot.lane.b32.xlu0 %v3536, 28
      %v3708 = vpop.permute.xlu0 %3707
      %3709 = vrot.lane.b32.xlu0 %v3546, 28
      %v3710 = vpop.permute.xlu0 %3709
      %3711 = vrot.lane.b32.xlu0 %v3560, 28
      %v3712 = vpop.permute.xlu0 %3711
      %3713 = vrot.lane.b32.xlu0 %v3570, 28
      %v3714 = vpop.permute.xlu0 %3713
      %3715 = vrot.lane.b32.xlu0 %v3584, 28
      %v3716 = vpop.permute.xlu0 %3715
      %3717 = vrot.lane.b32.xlu0 %v3594, 28
      %v3718 = vpop.permute.xlu0 %3717
      %3719 = vrot.lane.b32.xlu0 %v3608, 28
      %v3720 = vpop.permute.xlu0 %3719
      %3721 = vrot.lane.b32.xlu0 %v3618, 28
      %v3722 = vpop.permute.xlu0 %3721
      %3723 = vrot.lane.b32.xlu0 %v3632, 28
      %v3724 = vpop.permute.xlu0 %3723
      %3725 = vrot.lane.b32.xlu0 %v3642, 28
      %v3726 = vpop.permute.xlu0 %3725
      %3727 = vrot.lane.b32.xlu0 %v3656, 28
      %v3728 = vpop.permute.xlu0 %3727
      %3729 = vrot.lane.b32.xlu0 %v3666, 28
      %v3730 = vpop.permute.xlu0 %3729
      %vm3763 = vcmask 257248
      %3764 = vst.msk [vmem:[#allocation3] sm:$0xf] %vm3763, %v3668
      %3765 = vst.msk [vmem:[#allocation3 + $0x4] sm:$0xf] %vm3763, %v3670
      %3766 = vst.msk [vmem:[#allocation3 + $0x8] sm:$0xf] %vm3763, %v3672
      %3767 = vst.msk [vmem:[#allocation3 + $0xc] sm:$0xf] %vm3763, %v3674
      %3768 = vst.msk [vmem:[#allocation3 + $0x10] sm:$0xf] %vm3763, %v3676
      %3769 = vst.msk [vmem:[#allocation3 + $0x14] sm:$0xf] %vm3763, %v3678
      %3770 = vst.msk [vmem:[#allocation3 + $0x18] sm:$0xf] %vm3763, %v3680
      %3771 = vst.msk [vmem:[#allocation3 + $0x1c] sm:$0xf] %vm3763, %v3682
      %3772 = vst.msk [vmem:[#allocation3 + $0x20] sm:$0xf] %vm3763, %v3684
      %3773 = vst.msk [vmem:[#allocation3 + $0x24] sm:$0xf] %vm3763, %v3686
      %3774 = vst.msk [vmem:[#allocation3 + $0x28] sm:$0xf] %vm3763, %v3688
      %3775 = vst.msk [vmem:[#allocation3 + $0x2c] sm:$0xf] %vm3763, %v3690
      %3776 = vst.msk [vmem:[#allocation3 + $0x30] sm:$0xf] %vm3763, %v3692
      %3777 = vst.msk [vmem:[#allocation3 + $0x34] sm:$0xf] %vm3763, %v3694
      %3778 = vst.msk [vmem:[#allocation3 + $0x38] sm:$0xf] %vm3763, %v3696
      %3779 = vst.msk [vmem:[#allocation3 + $0x3c] sm:$0xf] %vm3763, %v3698
      %3780 = vst.msk [vmem:[#allocation3 + $0x40] sm:$0xf] %vm3763, %v3700
      %3781 = vst.msk [vmem:[#allocation3 + $0x44] sm:$0xf] %vm3763, %v3702
      %3782 = vst.msk [vmem:[#allocation3 + $0x48] sm:$0xf] %vm3763, %v3704
      %3783 = vst.msk [vmem:[#allocation3 + $0x4c] sm:$0xf] %vm3763, %v3706
      %3784 = vst.msk [vmem:[#allocation3 + $0x50] sm:$0xf] %vm3763, %v3708
      %3785 = vst.msk [vmem:[#allocation3 + $0x54] sm:$0xf] %vm3763, %v3710
      %3786 = vst.msk [vmem:[#allocation3 + $0x58] sm:$0xf] %vm3763, %v3712
      %3787 = vst.msk [vmem:[#allocation3 + $0x5c] sm:$0xf] %vm3763, %v3714
      %3788 = vst.msk [vmem:[#allocation3 + $0x60] sm:$0xf] %vm3763, %v3716
      %3789 = vst.msk [vmem:[#allocation3 + $0x64] sm:$0xf] %vm3763, %v3718
      %3790 = vst.msk [vmem:[#allocation3 + $0x68] sm:$0xf] %vm3763, %v3720
      %3791 = vst.msk [vmem:[#allocation3 + $0x6c] sm:$0xf] %vm3763, %v3722
      %3792 = vst.msk [vmem:[#allocation3 + $0x70] sm:$0xf] %vm3763, %v3724
      %3793 = vst.msk [vmem:[#allocation3 + $0x74] sm:$0xf] %vm3763, %v3726
      %3794 = vst.msk [vmem:[#allocation3 + $0x78] sm:$0xf] %vm3763, %v3728
      %3795 = vst.msk [vmem:[#allocation3 + $0x7c] sm:$0xf] %vm3763, %v3730
      %v3796 = vld [vmem:[%s3041] sm:$0xe]
      %v3797 = vld [vmem:[%s3041 + $0x4] sm:$0xf]
      %v3798 = vld [vmem:[%s3041 + $0x8] sm:$0x1]
      %v3799 = vld [vmem:[%s3041 + $0xc] sm:$0xe]
      %v3800 = vld [vmem:[%s3041 + $0x10] sm:$0xf]
      %v3801 = vld [vmem:[%s3041 + $0x14] sm:$0x1]
      %v3802 = vld [vmem:[%s3041 + $0x18] sm:$0xe]
      %v3803 = vld [vmem:[%s3041 + $0x1c] sm:$0xf]
      %v3804 = vld [vmem:[%s3041 + $0x20] sm:$0x1]
      %v3805 = vld [vmem:[%s3041 + $0x24] sm:$0xe]
      %v3806 = vld [vmem:[%s3041 + $0x28] sm:$0xf]
      %v3807 = vld [vmem:[%s3041 + $0x2c] sm:$0x1]
      %v3808 = vld [vmem:[%s3041 + $0x30] sm:$0xe]
      %v3809 = vld [vmem:[%s3041 + $0x34] sm:$0xf]
      %v3810 = vld [vmem:[%s3041 + $0x38] sm:$0x1]
      %v3811 = vld [vmem:[%s3041 + $0x3c] sm:$0xe]
      %v3812 = vld [vmem:[%s3041 + $0x40] sm:$0xf]
      %v3813 = vld [vmem:[%s3041 + $0x44] sm:$0x1]
      %v3814 = vld [vmem:[%s3041 + $0x48] sm:$0xe]
      %v3815 = vld [vmem:[%s3041 + $0x4c] sm:$0xf]
      %v3816 = vld [vmem:[%s3041 + $0x50] sm:$0x1]
      %v3817 = vld [vmem:[%s3041 + $0x54] sm:$0xe]
      %v3818 = vld [vmem:[%s3041 + $0x58] sm:$0xf]
      %v3819 = vld [vmem:[%s3041 + $0x5c] sm:$0x1]
      %v3820 = vld [vmem:[%s3041 + $0x60] sm:$0xe]
      %v3821 = vld [vmem:[%s3041 + $0x64] sm:$0xf]
      %v3822 = vld [vmem:[%s3041 + $0x68] sm:$0x1]
      %v3823 = vld [vmem:[%s3041 + $0x6c] sm:$0xe]
      %v3824 = vld [vmem:[%s3041 + $0x70] sm:$0xf]
      %v3825 = vld [vmem:[%s3041 + $0x74] sm:$0x1]
      %v3826 = vld [vmem:[%s3041 + $0x78] sm:$0xe]
      %v3827 = vld [vmem:[%s3041 + $0x7c] sm:$0xf]
      %v3828 = vld [vmem:[%s3041 + $0x80] sm:$0x1]
      %v3829 = vld [vmem:[%s3041 + $0x84] sm:$0xe]
      %v3830 = vld [vmem:[%s3041 + $0x88] sm:$0xf]
      %v3831 = vld [vmem:[%s3041 + $0x8c] sm:$0x1]
      %v3832 = vld [vmem:[%s3041 + $0x90] sm:$0xe]
      %v3833 = vld [vmem:[%s3041 + $0x94] sm:$0xf]
      %v3834 = vld [vmem:[%s3041 + $0x98] sm:$0x1]
      %v3835 = vld [vmem:[%s3041 + $0x9c] sm:$0xe]
      %v3836 = vld [vmem:[%s3041 + $0xa0] sm:$0xf]
      %v3837 = vld [vmem:[%s3041 + $0xa4] sm:$0x1]
      %v3838 = vld [vmem:[%s3041 + $0xa8] sm:$0xe]
      %v3839 = vld [vmem:[%s3041 + $0xac] sm:$0xf]
      %v3840 = vld [vmem:[%s3041 + $0xb0] sm:$0x1]
      %v3841 = vld [vmem:[%s3041 + $0xb4] sm:$0xe]
      %v3842 = vld [vmem:[%s3041 + $0xb8] sm:$0xf]
      %v3843 = vld [vmem:[%s3041 + $0xbc] sm:$0x1]
      %v3892 = vrot.slane %v3796, 5
      %v3893 = vrot.slane %v3892, 4
      %v3894 = vrot.slane %v3797, 5
      %v3895 = vsel %vm1708, %v3893, %v3894
      %v3896 = vrot.slane %v3894, 4
      %v3897 = vrot.slane %v3798, 5
      %v3898 = vsel %vm1708, %v3896, %v3897
      %v3899 = vrot.slane %v3799, 5
      %v3900 = vrot.slane %v3899, 4
      %v3901 = vrot.slane %v3800, 5
      %v3902 = vsel %vm1708, %v3900, %v3901
      %v3903 = vrot.slane %v3901, 4
      %v3904 = vrot.slane %v3801, 5
      %v3905 = vsel %vm1708, %v3903, %v3904
      %v3906 = vrot.slane %v3802, 5
      %v3907 = vrot.slane %v3906, 4
      %v3908 = vrot.slane %v3803, 5
      %v3909 = vsel %vm1708, %v3907, %v3908
      %v3910 = vrot.slane %v3908, 4
      %v3911 = vrot.slane %v3804, 5
      %v3912 = vsel %vm1708, %v3910, %v3911
      %v3913 = vrot.slane %v3805, 5
      %v3914 = vrot.slane %v3913, 4
      %v3915 = vrot.slane %v3806, 5
      %v3916 = vsel %vm1708, %v3914, %v3915
      %v3917 = vrot.slane %v3915, 4
      %v3918 = vrot.slane %v3807, 5
      %v3919 = vsel %vm1708, %v3917, %v3918
      %v3920 = vrot.slane %v3808, 5
      %v3921 = vrot.slane %v3920, 4
      %v3922 = vrot.slane %v3809, 5
      %v3923 = vsel %vm1708, %v3921, %v3922
      %v3924 = vrot.slane %v3922, 4
      %v3925 = vrot.slane %v3810, 5
      %v3926 = vsel %vm1708, %v3924, %v3925
      %v3927 = vrot.slane %v3811, 5
      %v3928 = vrot.slane %v3927, 4
      %v3929 = vrot.slane %v3812, 5
      %v3930 = vsel %vm1708, %v3928, %v3929
      %v3931 = vrot.slane %v3929, 4
      %v3932 = vrot.slane %v3813, 5
      %v3933 = vsel %vm1708, %v3931, %v3932
      %v3934 = vrot.slane %v3814, 5
      %v3935 = vrot.slane %v3934, 4
      %v3936 = vrot.slane %v3815, 5
      %v3937 = vsel %vm1708, %v3935, %v3936
      %v3938 = vrot.slane %v3936, 4
      %v3939 = vrot.slane %v3816, 5
      %v3940 = vsel %vm1708, %v3938, %v3939
      %v3941 = vrot.slane %v3817, 5
      %v3942 = vrot.slane %v3941, 4
      %v3943 = vrot.slane %v3818, 5
      %v3944 = vsel %vm1708, %v3942, %v3943
      %v3945 = vrot.slane %v3943, 4
      %v3946 = vrot.slane %v3819, 5
      %v3947 = vsel %vm1708, %v3945, %v3946
      %v3948 = vrot.slane %v3820, 5
      %v3949 = vrot.slane %v3948, 4
      %v3950 = vrot.slane %v3821, 5
      %v3951 = vsel %vm1708, %v3949, %v3950
      %v3952 = vrot.slane %v3950, 4
      %v3953 = vrot.slane %v3822, 5
      %v3954 = vsel %vm1708, %v3952, %v3953
      %v3955 = vrot.slane %v3823, 5
      %v3956 = vrot.slane %v3955, 4
      %v3957 = vrot.slane %v3824, 5
      %v3958 = vsel %vm1708, %v3956, %v3957
      %v3959 = vrot.slane %v3957, 4
      %v3960 = vrot.slane %v3825, 5
      %v3961 = vsel %vm1708, %v3959, %v3960
      %v3962 = vrot.slane %v3826, 5
      %v3963 = vrot.slane %v3962, 4
      %v3964 = vrot.slane %v3827, 5
      %v3965 = vsel %vm1708, %v3963, %v3964
      %v3966 = vrot.slane %v3964, 4
      %v3967 = vrot.slane %v3828, 5
      %v3968 = vsel %vm1708, %v3966, %v3967
      %v3969 = vrot.slane %v3829, 5
      %v3970 = vrot.slane %v3969, 4
      %v3971 = vrot.slane %v3830, 5
      %v3972 = vsel %vm1708, %v3970, %v3971
      %v3973 = vrot.slane %v3971, 4
      %v3974 = vrot.slane %v3831, 5
      %v3975 = vsel %vm1708, %v3973, %v3974
      %v3976 = vrot.slane %v3832, 5
      %v3977 = vrot.slane %v3976, 4
      %v3978 = vrot.slane %v3833, 5
      %v3979 = vsel %vm1708, %v3977, %v3978
      %v3980 = vrot.slane %v3978, 4
      %v3981 = vrot.slane %v3834, 5
      %v3982 = vsel %vm1708, %v3980, %v3981
      %v3983 = vrot.slane %v3835, 5
      %v3984 = vrot.slane %v3983, 4
      %v3985 = vrot.slane %v3836, 5
      %v3986 = vsel %vm1708, %v3984, %v3985
      %v3987 = vrot.slane %v3985, 4
      %v3988 = vrot.slane %v3837, 5
      %v3989 = vsel %vm1708, %v3987, %v3988
      %v3990 = vrot.slane %v3838, 5
      %v3991 = vrot.slane %v3990, 4
      %v3992 = vrot.slane %v3839, 5
      %v3993 = vsel %vm1708, %v3991, %v3992
      %v3994 = vrot.slane %v3992, 4
      %v3995 = vrot.slane %v3840, 5
      %v3996 = vsel %vm1708, %v3994, %v3995
      %v3997 = vrot.slane %v3841, 5
      %v3998 = vrot.slane %v3997, 4
      %v3999 = vrot.slane %v3842, 5
      %v4000 = vsel %vm1708, %v3998, %v3999
      %v4001 = vrot.slane %v3999, 4
      %v4002 = vrot.slane %v3843, 5
      %v4003 = vsel %vm1708, %v4001, %v4002
      %4004 = vrot.lane.b32.xlu0 %v3895, 32
      %v4005 = vpop.permute.xlu0 %4004
      %4006 = vrot.lane.b32.xlu0 %v3898, 32
      %v4007 = vpop.permute.xlu0 %4006
      %4008 = vrot.lane.b32.xlu0 %v3902, 32
      %v4009 = vpop.permute.xlu0 %4008
      %4010 = vrot.lane.b32.xlu0 %v3905, 32
      %v4011 = vpop.permute.xlu0 %4010
      %4012 = vrot.lane.b32.xlu0 %v3909, 32
      %v4013 = vpop.permute.xlu0 %4012
      %4014 = vrot.lane.b32.xlu0 %v3912, 32
      %v4015 = vpop.permute.xlu0 %4014
      %4016 = vrot.lane.b32.xlu0 %v3916, 32
      %v4017 = vpop.permute.xlu0 %4016
      %4018 = vrot.lane.b32.xlu0 %v3919, 32
      %v4019 = vpop.permute.xlu0 %4018
      %4020 = vrot.lane.b32.xlu0 %v3923, 32
      %v4021 = vpop.permute.xlu0 %4020
      %4022 = vrot.lane.b32.xlu0 %v3926, 32
      %v4023 = vpop.permute.xlu0 %4022
      %4024 = vrot.lane.b32.xlu0 %v3930, 32
      %v4025 = vpop.permute.xlu0 %4024
      %4026 = vrot.lane.b32.xlu0 %v3933, 32
      %v4027 = vpop.permute.xlu0 %4026
      %4028 = vrot.lane.b32.xlu0 %v3937, 32
      %v4029 = vpop.permute.xlu0 %4028
      %4030 = vrot.lane.b32.xlu0 %v3940, 32
      %v4031 = vpop.permute.xlu0 %4030
      %4032 = vrot.lane.b32.xlu0 %v3944, 32
      %v4033 = vpop.permute.xlu0 %4032
      %4034 = vrot.lane.b32.xlu0 %v3947, 32
      %v4035 = vpop.permute.xlu0 %4034
      %4036 = vrot.lane.b32.xlu0 %v3951, 32
      %v4037 = vpop.permute.xlu0 %4036
      %4038 = vrot.lane.b32.xlu0 %v3954, 32
      %v4039 = vpop.permute.xlu0 %4038
      %4040 = vrot.lane.b32.xlu0 %v3958, 32
      %v4041 = vpop.permute.xlu0 %4040
      %4042 = vrot.lane.b32.xlu0 %v3961, 32
      %v4043 = vpop.permute.xlu0 %4042
      %4044 = vrot.lane.b32.xlu0 %v3965, 32
      %v4045 = vpop.permute.xlu0 %4044
      %4046 = vrot.lane.b32.xlu0 %v3968, 32
      %v4047 = vpop.permute.xlu0 %4046
      %4048 = vrot.lane.b32.xlu0 %v3972, 32
      %v4049 = vpop.permute.xlu0 %4048
      %4050 = vrot.lane.b32.xlu0 %v3975, 32
      %v4051 = vpop.permute.xlu0 %4050
      %4052 = vrot.lane.b32.xlu0 %v3979, 32
      %v4053 = vpop.permute.xlu0 %4052
      %4054 = vrot.lane.b32.xlu0 %v3982, 32
      %v4055 = vpop.permute.xlu0 %4054
      %4056 = vrot.lane.b32.xlu0 %v3986, 32
      %v4057 = vpop.permute.xlu0 %4056
      %4058 = vrot.lane.b32.xlu0 %v3989, 32
      %v4059 = vpop.permute.xlu0 %4058
      %4060 = vrot.lane.b32.xlu0 %v3993, 32
      %v4061 = vpop.permute.xlu0 %4060
      %4062 = vrot.lane.b32.xlu0 %v3996, 32
      %v4063 = vpop.permute.xlu0 %4062
      %4064 = vrot.lane.b32.xlu0 %v4000, 32
      %v4065 = vpop.permute.xlu0 %4064
      %4066 = vrot.lane.b32.xlu0 %v4003, 32
      %v4067 = vpop.permute.xlu0 %4066
      %vm4100 = vcmask 290048
      %4101 = vst.msk [vmem:[#allocation3] sm:$0xf] %vm4100, %v4005
      %4102 = vst.msk [vmem:[#allocation3 + $0x4] sm:$0xf] %vm4100, %v4007
      %4103 = vst.msk [vmem:[#allocation3 + $0x8] sm:$0xf] %vm4100, %v4009
      %4104 = vst.msk [vmem:[#allocation3 + $0xc] sm:$0xf] %vm4100, %v4011
      %4105 = vst.msk [vmem:[#allocation3 + $0x10] sm:$0xf] %vm4100, %v4013
      %4106 = vst.msk [vmem:[#allocation3 + $0x14] sm:$0xf] %vm4100, %v4015
      %4107 = vst.msk [vmem:[#allocation3 + $0x18] sm:$0xf] %vm4100, %v4017
      %4108 = vst.msk [vmem:[#allocation3 + $0x1c] sm:$0xf] %vm4100, %v4019
      %4109 = vst.msk [vmem:[#allocation3 + $0x20] sm:$0xf] %vm4100, %v4021
      %4110 = vst.msk [vmem:[#allocation3 + $0x24] sm:$0xf] %vm4100, %v4023
      %4111 = vst.msk [vmem:[#allocation3 + $0x28] sm:$0xf] %vm4100, %v4025
      %4112 = vst.msk [vmem:[#allocation3 + $0x2c] sm:$0xf] %vm4100, %v4027
      %4113 = vst.msk [vmem:[#allocation3 + $0x30] sm:$0xf] %vm4100, %v4029
      %4114 = vst.msk [vmem:[#allocation3 + $0x34] sm:$0xf] %vm4100, %v4031
      %4115 = vst.msk [vmem:[#allocation3 + $0x38] sm:$0xf] %vm4100, %v4033
      %4116 = vst.msk [vmem:[#allocation3 + $0x3c] sm:$0xf] %vm4100, %v4035
      %4117 = vst.msk [vmem:[#allocation3 + $0x40] sm:$0xf] %vm4100, %v4037
      %4118 = vst.msk [vmem:[#allocation3 + $0x44] sm:$0xf] %vm4100, %v4039
      %4119 = vst.msk [vmem:[#allocation3 + $0x48] sm:$0xf] %vm4100, %v4041
      %4120 = vst.msk [vmem:[#allocation3 + $0x4c] sm:$0xf] %vm4100, %v4043
      %4121 = vst.msk [vmem:[#allocation3 + $0x50] sm:$0xf] %vm4100, %v4045
      %4122 = vst.msk [vmem:[#allocation3 + $0x54] sm:$0xf] %vm4100, %v4047
      %4123 = vst.msk [vmem:[#allocation3 + $0x58] sm:$0xf] %vm4100, %v4049
      %4124 = vst.msk [vmem:[#allocation3 + $0x5c] sm:$0xf] %vm4100, %v4051
      %4125 = vst.msk [vmem:[#allocation3 + $0x60] sm:$0xf] %vm4100, %v4053
      %4126 = vst.msk [vmem:[#allocation3 + $0x64] sm:$0xf] %vm4100, %v4055
      %4127 = vst.msk [vmem:[#allocation3 + $0x68] sm:$0xf] %vm4100, %v4057
      %4128 = vst.msk [vmem:[#allocation3 + $0x6c] sm:$0xf] %vm4100, %v4059
      %4129 = vst.msk [vmem:[#allocation3 + $0x70] sm:$0xf] %vm4100, %v4061
      %4130 = vst.msk [vmem:[#allocation3 + $0x74] sm:$0xf] %vm4100, %v4063
      %4131 = vst.msk [vmem:[#allocation3 + $0x78] sm:$0xf] %vm4100, %v4065
      %4132 = vst.msk [vmem:[#allocation3 + $0x7c] sm:$0xf] %vm4100, %v4067
      %v4133 = vld [vmem:[#allocation3] sm:$0xf]
      %v4134 = vld [vmem:[#allocation3 + $0x4] sm:$0xf]
      %v4135 = vld [vmem:[#allocation3 + $0x8] sm:$0xf]
      %v4136 = vld [vmem:[#allocation3 + $0xc] sm:$0xf]
      %v4137 = vld [vmem:[#allocation3 + $0x10] sm:$0xf]
      %v4138 = vld [vmem:[#allocation3 + $0x14] sm:$0xf]
      %v4139 = vld [vmem:[#allocation3 + $0x18] sm:$0xf]
      %v4140 = vld [vmem:[#allocation3 + $0x1c] sm:$0xf]
      %v4141 = vld [vmem:[#allocation3 + $0x20] sm:$0xf]
      %v4142 = vld [vmem:[#allocation3 + $0x24] sm:$0xf]
      %v4143 = vld [vmem:[#allocation3 + $0x28] sm:$0xf]
      %v4144 = vld [vmem:[#allocation3 + $0x2c] sm:$0xf]
      %v4145 = vld [vmem:[#allocation3 + $0x30] sm:$0xf]
      %v4146 = vld [vmem:[#allocation3 + $0x34] sm:$0xf]
      %v4147 = vld [vmem:[#allocation3 + $0x38] sm:$0xf]
      %v4148 = vld [vmem:[#allocation3 + $0x3c] sm:$0xf]
      %v4149 = vld [vmem:[#allocation3 + $0x40] sm:$0xf]
      %v4150 = vld [vmem:[#allocation3 + $0x44] sm:$0xf]
      %v4151 = vld [vmem:[#allocation3 + $0x48] sm:$0xf]
      %v4152 = vld [vmem:[#allocation3 + $0x4c] sm:$0xf]
      %v4153 = vld [vmem:[#allocation3 + $0x50] sm:$0xf]
      %v4154 = vld [vmem:[#allocation3 + $0x54] sm:$0xf]
      %v4155 = vld [vmem:[#allocation3 + $0x58] sm:$0xf]
      %v4156 = vld [vmem:[#allocation3 + $0x5c] sm:$0xf]
      %v4157 = vld [vmem:[#allocation3 + $0x60] sm:$0xf]
      %v4158 = vld [vmem:[#allocation3 + $0x64] sm:$0xf]
      %v4159 = vld [vmem:[#allocation3 + $0x68] sm:$0xf]
      %v4160 = vld [vmem:[#allocation3 + $0x6c] sm:$0xf]
      %v4161 = vld [vmem:[#allocation3 + $0x70] sm:$0xf]
      %v4162 = vld [vmem:[#allocation3 + $0x74] sm:$0xf]
      %v4163 = vld [vmem:[#allocation3 + $0x78] sm:$0xf]
      %v4164 = vld [vmem:[#allocation3 + $0x7c] sm:$0xf]
      %v4165 = vld [vmem:[%s1] sm:$0xf]
      %v4166 = vld [vmem:[%s1 + $0x4] sm:$0xf]
      %v4167 = vld [vmem:[%s1 + $0x8] sm:$0xf]
      %v4168 = vld [vmem:[%s1 + $0xc] sm:$0xf]
      %v4169 = vld [vmem:[%s1 + $0x10] sm:$0x3]
      %v4202 = vunpack.c.l.b16 %v4133
      %v4203 = vunpack.c.l.b16 %v4134
      %v4204 = vunpack.c.l.b16 %v4135
      %v4205 = vunpack.c.l.b16 %v4136
      %v4206 = vunpack.c.l.b16 %v4137
      %v4207 = vunpack.c.l.b16 %v4138
      %v4208 = vunpack.c.l.b16 %v4139
      %v4209 = vunpack.c.l.b16 %v4140
      %v4210 = vunpack.c.l.b16 %v4141
      %v4211 = vunpack.c.l.b16 %v4142
      %v4212 = vunpack.c.l.b16 %v4143
      %v4213 = vunpack.c.l.b16 %v4144
      %v4214 = vunpack.c.l.b16 %v4145
      %v4215 = vunpack.c.l.b16 %v4146
      %v4216 = vunpack.c.l.b16 %v4147
      %v4217 = vunpack.c.l.b16 %v4148
      %v4218 = vunpack.c.l.b16 %v4149
      %v4219 = vunpack.c.l.b16 %v4150
      %v4220 = vunpack.c.l.b16 %v4151
      %v4221 = vunpack.c.l.b16 %v4152
      %v4222 = vunpack.c.l.b16 %v4153
      %v4223 = vunpack.c.l.b16 %v4154
      %v4224 = vunpack.c.l.b16 %v4155
      %v4225 = vunpack.c.l.b16 %v4156
      %v4226 = vunpack.c.l.b16 %v4157
      %v4227 = vunpack.c.l.b16 %v4158
      %v4228 = vunpack.c.l.b16 %v4159
      %v4229 = vunpack.c.l.b16 %v4160
      %v4230 = vunpack.c.l.b16 %v4161
      %v4231 = vunpack.c.l.b16 %v4162
      %v4232 = vunpack.c.l.b16 %v4163
      %v4233 = vunpack.c.l.b16 %v4164
      %v4234 = vpack.c.b16 %v4203, %v4202
      %v4235 = vpack.c.b16 %v4205, %v4204
      %v4236 = vpack.c.b16 %v4207, %v4206
      %v4237 = vpack.c.b16 %v4209, %v4208
      %v4238 = vpack.c.b16 %v4211, %v4210
      %v4239 = vpack.c.b16 %v4213, %v4212
      %v4240 = vpack.c.b16 %v4215, %v4214
      %v4241 = vpack.c.b16 %v4217, %v4216
      %v4242 = vpack.c.b16 %v4219, %v4218
      %v4243 = vpack.c.b16 %v4221, %v4220
      %v4244 = vpack.c.b16 %v4223, %v4222
      %v4245 = vpack.c.b16 %v4225, %v4224
      %v4246 = vpack.c.b16 %v4227, %v4226
      %v4247 = vpack.c.b16 %v4229, %v4228
      %v4248 = vpack.c.b16 %v4231, %v4230
      %v4249 = vpack.c.b16 %v4233, %v4232
      %v4255 = vunpack.c.l.b16 %v4165
      %v4256 = vunpack.c.l.b16 %v4166
      %v4257 = vunpack.c.l.b16 %v4167
      %v4258 = vunpack.c.l.b16 %v4168
      %v4259 = vunpack.c.l.b16 %v4169
      %v4260 = vpack.c.b16 %v4256, %v4255
      %v4261 = vpack.c.b16 %v4258, %v4257
      %v4262 = vpack.c.b16 %v4259, %v4259
      %vm4265 = vcmask 293888
      %v4267 = vsel %vm4265, %v4234, 0
      %v4270 = vsel %vm4265, %v4235, 0
      %v4273 = vsel %vm4265, %v4236, 0
      %v4276 = vsel %vm4265, %v4237, 0
      %v4279 = vsel %vm4265, %v4238, 0
      %v4282 = vsel %vm4265, %v4239, 0
      %v4285 = vsel %vm4265, %v4240, 0
      %v4288 = vsel %vm4265, %v4241, 0
      %v4291 = vsel %vm4265, %v4242, 0
      %v4294 = vsel %vm4265, %v4243, 0
      %v4297 = vsel %vm4265, %v4244, 0
      %v4300 = vsel %vm4265, %v4245, 0
      %v4303 = vsel %vm4265, %v4246, 0
      %v4306 = vsel %vm4265, %v4247, 0
      %v4309 = vsel %vm4265, %v4248, 0
      %v4312 = vsel %vm4265, %v4249, 0
      %vm4314 = vcmask 1041408
      %v4316 = vsel %vm4314, %v4262, 0
      %4318 = vmatpush.bf16.msra.mxu0 0
      %4319 = vmatpush.bf16.msra.mxu0 0
      %4320 = vmatpush.bf16.msra.mxu0 0
      %4321 = vmatpush.bf16.msra.mxu0 0
      %4322 = vmatpush.bf16.msra.mxu0 0
      %4323 = vmatpush.bf16.msra.mxu0 %v4316
      %4324 = vmatpush.bf16.msra.mxu0 %v4261
      %4325 = vmatpush.bf16.msra.mxu0 %v4260
      %4326 = vmatmul.bf16.gmra.mxu0 %v4267
      %v4327 = vpop.f32.mrf.mxu0
      %v4328 = vadd.f32 0.0, %v4327
      %v4329 = vpop.f32.mrf.mxu0
      %v4330 = vadd.f32 0.0, %v4329
      %4331 = vmatmul.bf16.gmra.mxu0 %v4270
      %v4332 = vpop.f32.mrf.mxu0
      %v4333 = vadd.f32 0.0, %v4332
      %v4334 = vpop.f32.mrf.mxu0
      %v4335 = vadd.f32 0.0, %v4334
      %4336 = vmatmul.bf16.gmra.mxu0 %v4273
      %v4337 = vpop.f32.mrf.mxu0
      %v4338 = vadd.f32 0.0, %v4337
      %v4339 = vpop.f32.mrf.mxu0
      %v4340 = vadd.f32 0.0, %v4339
      %4341 = vmatmul.bf16.gmra.mxu0 %v4276
      %v4342 = vpop.f32.mrf.mxu0
      %v4343 = vadd.f32 0.0, %v4342
      %v4344 = vpop.f32.mrf.mxu0
      %v4345 = vadd.f32 0.0, %v4344
      %4346 = vmatmul.bf16.gmra.mxu0 %v4279
      %v4347 = vpop.f32.mrf.mxu0
      %v4348 = vadd.f32 0.0, %v4347
      %v4349 = vpop.f32.mrf.mxu0
      %v4350 = vadd.f32 0.0, %v4349
      %4351 = vmatmul.bf16.gmra.mxu0 %v4282
      %v4352 = vpop.f32.mrf.mxu0
      %v4353 = vadd.f32 0.0, %v4352
      %v4354 = vpop.f32.mrf.mxu0
      %v4355 = vadd.f32 0.0, %v4354
      %4356 = vmatmul.bf16.gmra.mxu0 %v4285
      %v4357 = vpop.f32.mrf.mxu0
      %v4358 = vadd.f32 0.0, %v4357
      %v4359 = vpop.f32.mrf.mxu0
      %v4360 = vadd.f32 0.0, %v4359
      %4361 = vmatmul.bf16.gmra.mxu0 %v4288
      %v4362 = vpop.f32.mrf.mxu0
      %v4363 = vadd.f32 0.0, %v4362
      %v4364 = vpop.f32.mrf.mxu0
      %v4365 = vadd.f32 0.0, %v4364
      %4366 = vmatmul.bf16.gmra.mxu0 %v4291
      %v4367 = vpop.f32.mrf.mxu0
      %v4368 = vadd.f32 0.0, %v4367
      %v4369 = vpop.f32.mrf.mxu0
      %v4370 = vadd.f32 0.0, %v4369
      %4371 = vmatmul.bf16.gmra.mxu0 %v4294
      %v4372 = vpop.f32.mrf.mxu0
      %v4373 = vadd.f32 0.0, %v4372
      %v4374 = vpop.f32.mrf.mxu0
      %v4375 = vadd.f32 0.0, %v4374
      %4376 = vmatmul.bf16.gmra.mxu0 %v4297
      %v4377 = vpop.f32.mrf.mxu0
      %v4378 = vadd.f32 0.0, %v4377
      %v4379 = vpop.f32.mrf.mxu0
      %v4380 = vadd.f32 0.0, %v4379
      %4381 = vmatmul.bf16.gmra.mxu0 %v4300
      %v4382 = vpop.f32.mrf.mxu0
      %v4383 = vadd.f32 0.0, %v4382
      %v4384 = vpop.f32.mrf.mxu0
      %v4385 = vadd.f32 0.0, %v4384
      %4386 = vmatmul.bf16.gmra.mxu0 %v4303
      %v4387 = vpop.f32.mrf.mxu0
      %v4388 = vadd.f32 0.0, %v4387
      %v4389 = vpop.f32.mrf.mxu0
      %v4390 = vadd.f32 0.0, %v4389
      %4391 = vmatmul.bf16.gmra.mxu0 %v4306
      %v4392 = vpop.f32.mrf.mxu0
      %v4393 = vadd.f32 0.0, %v4392
      %v4394 = vpop.f32.mrf.mxu0
      %v4395 = vadd.f32 0.0, %v4394
      %4396 = vmatmul.bf16.gmra.mxu0 %v4309
      %v4397 = vpop.f32.mrf.mxu0
      %v4398 = vadd.f32 0.0, %v4397
      %v4399 = vpop.f32.mrf.mxu0
      %v4400 = vadd.f32 0.0, %v4399
      %4401 = vmatmul.bf16.gmra.mxu0 %v4312
      %v4402 = vpop.f32.mrf.mxu0
      %v4403 = vadd.f32 0.0, %v4402
      %v4404 = vpop.f32.mrf.mxu0
      %v4405 = vadd.f32 0.0, %v4404
      %4406 = vdwg.mxu0
      %vm4407 = vcmask 31744
      %v4408 = vsel %vm4407, %v4328, 0.0
      %v4409 = vsel %vm4407, %v4330, 0.0
      %v4410 = vadd.f32 %v4408, %v4409
      %v4411 = vsel %vm4407, %v4333, 0.0
      %v4412 = vadd.f32 %v4410, %v4411
      %v4413 = vsel %vm4407, %v4335, 0.0
      %v4414 = vadd.f32 %v4412, %v4413
      %v4415 = vsel %vm4407, %v4338, 0.0
      %v4416 = vadd.f32 %v4414, %v4415
      %v4417 = vsel %vm4407, %v4340, 0.0
      %v4418 = vadd.f32 %v4416, %v4417
      %v4419 = vsel %vm4407, %v4343, 0.0
      %v4420 = vadd.f32 %v4418, %v4419
      %v4421 = vsel %vm4407, %v4345, 0.0
      %v4422 = vadd.f32 %v4420, %v4421
      %v4423 = vsel %vm4407, %v4348, 0.0
      %v4424 = vadd.f32 %v4422, %v4423
      %v4425 = vsel %vm4407, %v4350, 0.0
      %v4426 = vadd.f32 %v4424, %v4425
      %v4427 = vsel %vm4407, %v4353, 0.0
      %v4428 = vadd.f32 %v4426, %v4427
      %v4429 = vsel %vm4407, %v4355, 0.0
      %v4430 = vadd.f32 %v4428, %v4429
      %v4431 = vsel %vm4407, %v4358, 0.0
      %v4432 = vadd.f32 %v4430, %v4431
      %v4433 = vsel %vm4407, %v4360, 0.0
      %v4434 = vadd.f32 %v4432, %v4433
      %v4435 = vsel %vm4407, %v4363, 0.0
      %v4436 = vadd.f32 %v4434, %v4435
      %v4437 = vsel %vm4407, %v4365, 0.0
      %v4438 = vadd.f32 %v4436, %v4437
      %v4439 = vsel %vm4407, %v4368, 0.0
      %v4440 = vadd.f32 %v4438, %v4439
      %v4441 = vsel %vm4407, %v4370, 0.0
      %v4442 = vadd.f32 %v4440, %v4441
      %v4443 = vsel %vm4407, %v4373, 0.0
      %v4444 = vadd.f32 %v4442, %v4443
      %v4445 = vsel %vm4407, %v4375, 0.0
      %v4446 = vadd.f32 %v4444, %v4445
      %v4447 = vsel %vm4407, %v4378, 0.0
      %v4448 = vadd.f32 %v4446, %v4447
      %v4449 = vsel %vm4407, %v4380, 0.0
      %v4450 = vadd.f32 %v4448, %v4449
      %v4451 = vsel %vm4407, %v4383, 0.0
      %v4452 = vadd.f32 %v4450, %v4451
      %v4453 = vsel %vm4407, %v4385, 0.0
      %v4454 = vadd.f32 %v4452, %v4453
      %v4455 = vsel %vm4407, %v4388, 0.0
      %v4456 = vadd.f32 %v4454, %v4455
      %v4457 = vsel %vm4407, %v4390, 0.0
      %v4458 = vadd.f32 %v4456, %v4457
      %v4459 = vsel %vm4407, %v4393, 0.0
      %v4460 = vadd.f32 %v4458, %v4459
      %v4461 = vsel %vm4407, %v4395, 0.0
      %v4462 = vadd.f32 %v4460, %v4461
      %v4463 = vsel %vm4407, %v4398, 0.0
      %v4464 = vadd.f32 %v4462, %v4463
      %v4465 = vsel %vm4407, %v4400, 0.0
      %v4466 = vadd.f32 %v4464, %v4465
      %v4467 = vsel %vm4407, %v4403, 0.0
      %v4468 = vadd.f32 %v4466, %v4467
      %v4469 = vsel %vm4407, %v4405, 0.0
      %v4470 = vadd.f32 %v4468, %v4469
      %v4471 = vrot.slane %v4470, 4
      %v4472 = vadd.f32 %v4470, %v4471
      %v4473 = vrot.slane %v4472, 2
      %v4474 = vadd.f32 %v4472, %v4473
      %v4475 = vrot.slane %v4474, 1
      %v4476 = vadd.f32 %v4474, %v4475
      %v4477 = vrcp.pop 256.0
      %v4478 = vmul.f32 256.0, %v4477
      %v4479 = vsub.f32 1.0, %v4478
      %v4480 = vmul.f32 %v4477, %v4479
      %v4481 = vadd.f32 %v4477, %v4480
      %vm4482 = vweird.f32 %v4477
      %v4483 = vsel %vm4482, %v4477, %v4481
      %v4484 = vmul.f32 %v4476, %v4483
      %v4485 = vmul.f32 %v4328, %v4328
      %v4486 = vmul.f32 %v4330, %v4330
      %v4487 = vmul.f32 %v4333, %v4333
      %v4488 = vmul.f32 %v4335, %v4335
      %v4489 = vmul.f32 %v4338, %v4338
      %v4490 = vmul.f32 %v4340, %v4340
      %v4491 = vmul.f32 %v4343, %v4343
      %v4492 = vmul.f32 %v4345, %v4345
      %v4493 = vmul.f32 %v4348, %v4348
      %v4494 = vmul.f32 %v4350, %v4350
      %v4495 = vmul.f32 %v4353, %v4353
      %v4496 = vmul.f32 %v4355, %v4355
      %v4497 = vmul.f32 %v4358, %v4358
      %v4498 = vmul.f32 %v4360, %v4360
      %v4499 = vmul.f32 %v4363, %v4363
      %v4500 = vmul.f32 %v4365, %v4365
      %v4501 = vmul.f32 %v4368, %v4368
      %v4502 = vmul.f32 %v4370, %v4370
      %v4503 = vmul.f32 %v4373, %v4373
      %v4504 = vmul.f32 %v4375, %v4375
      %v4505 = vmul.f32 %v4378, %v4378
      %v4506 = vmul.f32 %v4380, %v4380
      %v4507 = vmul.f32 %v4383, %v4383
      %v4508 = vmul.f32 %v4385, %v4385
      %v4509 = vmul.f32 %v4388, %v4388
      %v4510 = vmul.f32 %v4390, %v4390
      %v4511 = vmul.f32 %v4393, %v4393
      %v4512 = vmul.f32 %v4395, %v4395
      %v4513 = vmul.f32 %v4398, %v4398
      %v4514 = vmul.f32 %v4400, %v4400
      %v4515 = vmul.f32 %v4403, %v4403
      %v4516 = vmul.f32 %v4405, %v4405
      %v4517 = vsel %vm4407, %v4485, 0.0
      %v4518 = vsel %vm4407, %v4486, 0.0
      %v4519 = vadd.f32 %v4517, %v4518
      %v4520 = vsel %vm4407, %v4487, 0.0
      %v4521 = vadd.f32 %v4519, %v4520
      %v4522 = vsel %vm4407, %v4488, 0.0
      %v4523 = vadd.f32 %v4521, %v4522
      %v4524 = vsel %vm4407, %v4489, 0.0
      %v4525 = vadd.f32 %v4523, %v4524
      %v4526 = vsel %vm4407, %v4490, 0.0
      %v4527 = vadd.f32 %v4525, %v4526
      %v4528 = vsel %vm4407, %v4491, 0.0
      %v4529 = vadd.f32 %v4527, %v4528
      %v4530 = vsel %vm4407, %v4492, 0.0
      %v4531 = vadd.f32 %v4529, %v4530
      %v4532 = vsel %vm4407, %v4493, 0.0
      %v4533 = vadd.f32 %v4531, %v4532
      %v4534 = vsel %vm4407, %v4494, 0.0
      %v4535 = vadd.f32 %v4533, %v4534
      %v4536 = vsel %vm4407, %v4495, 0.0
      %v4537 = vadd.f32 %v4535, %v4536
      %v4538 = vsel %vm4407, %v4496, 0.0
      %v4539 = vadd.f32 %v4537, %v4538
      %v4540 = vsel %vm4407, %v4497, 0.0
      %v4541 = vadd.f32 %v4539, %v4540
      %v4542 = vsel %vm4407, %v4498, 0.0
      %v4543 = vadd.f32 %v4541, %v4542
      %v4544 = vsel %vm4407, %v4499, 0.0
      %v4545 = vadd.f32 %v4543, %v4544
      %v4546 = vsel %vm4407, %v4500, 0.0
      %v4547 = vadd.f32 %v4545, %v4546
      %v4548 = vsel %vm4407, %v4501, 0.0
      %v4549 = vadd.f32 %v4547, %v4548
      %v4550 = vsel %vm4407, %v4502, 0.0
      %v4551 = vadd.f32 %v4549, %v4550
      %v4552 = vsel %vm4407, %v4503, 0.0
      %v4553 = vadd.f32 %v4551, %v4552
      %v4554 = vsel %vm4407, %v4504, 0.0
      %v4555 = vadd.f32 %v4553, %v4554
      %v4556 = vsel %vm4407, %v4505, 0.0
      %v4557 = vadd.f32 %v4555, %v4556
      %v4558 = vsel %vm4407, %v4506, 0.0
      %v4559 = vadd.f32 %v4557, %v4558
      %v4560 = vsel %vm4407, %v4507, 0.0
      %v4561 = vadd.f32 %v4559, %v4560
      %v4562 = vsel %vm4407, %v4508, 0.0
      %v4563 = vadd.f32 %v4561, %v4562
      %v4564 = vsel %vm4407, %v4509, 0.0
      %v4565 = vadd.f32 %v4563, %v4564
      %v4566 = vsel %vm4407, %v4510, 0.0
      %v4567 = vadd.f32 %v4565, %v4566
      %v4568 = vsel %vm4407, %v4511, 0.0
      %v4569 = vadd.f32 %v4567, %v4568
      %v4570 = vsel %vm4407, %v4512, 0.0
      %v4571 = vadd.f32 %v4569, %v4570
      %v4572 = vsel %vm4407, %v4513, 0.0
      %v4573 = vadd.f32 %v4571, %v4572
      %v4574 = vsel %vm4407, %v4514, 0.0
      %v4575 = vadd.f32 %v4573, %v4574
      %v4576 = vsel %vm4407, %v4515, 0.0
      %v4577 = vadd.f32 %v4575, %v4576
      %v4578 = vsel %vm4407, %v4516, 0.0
      %v4579 = vadd.f32 %v4577, %v4578
      %v4580 = vrot.slane %v4579, 4
      %v4581 = vadd.f32 %v4579, %v4580
      %v4582 = vrot.slane %v4581, 2
      %v4583 = vadd.f32 %v4581, %v4582
      %v4584 = vrot.slane %v4583, 1
      %v4585 = vadd.f32 %v4583, %v4584
      %v4586 = vmul.f32 %v4585, %v4483
      %v4587 = vmul.f32 %v4484, %v4484
      %v4588 = vsub.f32 %v4586, %v4587
      %v4589 = vmax.f32 %v4588, 0.0
      %v4590 = vsub.f32 %v4328, %v4484
      %v4591 = vsub.f32 %v4330, %v4484
      %v4592 = vsub.f32 %v4333, %v4484
      %v4593 = vsub.f32 %v4335, %v4484
      %v4594 = vsub.f32 %v4338, %v4484
      %v4595 = vsub.f32 %v4340, %v4484
      %v4596 = vsub.f32 %v4343, %v4484
      %v4597 = vsub.f32 %v4345, %v4484
      %v4598 = vsub.f32 %v4348, %v4484
      %v4599 = vsub.f32 %v4350, %v4484
      %v4600 = vsub.f32 %v4353, %v4484
      %v4601 = vsub.f32 %v4355, %v4484
      %v4602 = vsub.f32 %v4358, %v4484
      %v4603 = vsub.f32 %v4360, %v4484
      %v4604 = vsub.f32 %v4363, %v4484
      %v4605 = vsub.f32 %v4365, %v4484
      %v4606 = vsub.f32 %v4368, %v4484
      %v4607 = vsub.f32 %v4370, %v4484
      %v4608 = vsub.f32 %v4373, %v4484
      %v4609 = vsub.f32 %v4375, %v4484
      %v4610 = vsub.f32 %v4378, %v4484
      %v4611 = vsub.f32 %v4380, %v4484
      %v4612 = vsub.f32 %v4383, %v4484
      %v4613 = vsub.f32 %v4385, %v4484
      %v4614 = vsub.f32 %v4388, %v4484
      %v4615 = vsub.f32 %v4390, %v4484
      %v4616 = vsub.f32 %v4393, %v4484
      %v4617 = vsub.f32 %v4395, %v4484
      %v4618 = vsub.f32 %v4398, %v4484
      %v4619 = vsub.f32 %v4400, %v4484
      %v4620 = vsub.f32 %v4403, %v4484
      %v4621 = vsub.f32 %v4405, %v4484
      %v4622 = vadd.f32 %v4589, 1e-05
      %v4623 = vrsqrt.pop %v4622
      %v4624 = vmul.f32 %v4623, %v4622
      %v4625 = vmul.f32 %v4624, %v4623
      %v4626 = vmul.f32 0.5, %v4625
      %v4627 = vsub.f32 1.5, %v4626
      %v4628 = vmul.f32 %v4623, %v4627
      %vm4629 = vweird.f32 %v4622
      %vm4630 = vweird.f32 %v4623
      %vm4631 = vmor %vm4629, %vm4630
      %v4632 = vsel %vm4631, %v4623, %v4628
      %v4633 = vmul.f32 %v4590, %v4632
      %v4634 = vmul.f32 %v4591, %v4632
      %v4635 = vmul.f32 %v4592, %v4632
      %v4636 = vmul.f32 %v4593, %v4632
      %v4637 = vmul.f32 %v4594, %v4632
      %v4638 = vmul.f32 %v4595, %v4632
      %v4639 = vmul.f32 %v4596, %v4632
      %v4640 = vmul.f32 %v4597, %v4632
      %v4641 = vmul.f32 %v4598, %v4632
      %v4642 = vmul.f32 %v4599, %v4632
      %v4643 = vmul.f32 %v4600, %v4632
      %v4644 = vmul.f32 %v4601, %v4632
      %v4645 = vmul.f32 %v4602, %v4632
      %v4646 = vmul.f32 %v4603, %v4632
      %v4647 = vmul.f32 %v4604, %v4632
      %v4648 = vmul.f32 %v4605, %v4632
      %v4649 = vmul.f32 %v4606, %v4632
      %v4650 = vmul.f32 %v4607, %v4632
      %v4651 = vmul.f32 %v4608, %v4632
      %v4652 = vmul.f32 %v4609, %v4632
      %v4653 = vmul.f32 %v4610, %v4632
      %v4654 = vmul.f32 %v4611, %v4632
      %v4655 = vmul.f32 %v4612, %v4632
      %v4656 = vmul.f32 %v4613, %v4632
      %v4657 = vmul.f32 %v4614, %v4632
      %v4658 = vmul.f32 %v4615, %v4632
      %v4659 = vmul.f32 %v4616, %v4632
      %v4660 = vmul.f32 %v4617, %v4632
      %v4661 = vmul.f32 %v4618, %v4632
      %v4662 = vmul.f32 %v4619, %v4632
      %v4663 = vmul.f32 %v4620, %v4632
      %v4664 = vmul.f32 %v4621, %v4632
      %v4665 = vmax.f32 %v4633, 0.0
      %v4666 = vmax.f32 %v4634, 0.0
      %v4667 = vmax.f32 %v4635, 0.0
      %v4668 = vmax.f32 %v4636, 0.0
      %v4669 = vmax.f32 %v4637, 0.0
      %v4670 = vmax.f32 %v4638, 0.0
      %v4671 = vmax.f32 %v4639, 0.0
      %v4672 = vmax.f32 %v4640, 0.0
      %v4673 = vmax.f32 %v4641, 0.0
      %v4674 = vmax.f32 %v4642, 0.0
      %v4675 = vmax.f32 %v4643, 0.0
      %v4676 = vmax.f32 %v4644, 0.0
      %v4677 = vmax.f32 %v4645, 0.0
      %v4678 = vmax.f32 %v4646, 0.0
      %v4679 = vmax.f32 %v4647, 0.0
      %v4680 = vmax.f32 %v4648, 0.0
      %v4681 = vmax.f32 %v4649, 0.0
      %v4682 = vmax.f32 %v4650, 0.0
      %v4683 = vmax.f32 %v4651, 0.0
      %v4684 = vmax.f32 %v4652, 0.0
      %v4685 = vmax.f32 %v4653, 0.0
      %v4686 = vmax.f32 %v4654, 0.0
      %v4687 = vmax.f32 %v4655, 0.0
      %v4688 = vmax.f32 %v4656, 0.0
      %v4689 = vmax.f32 %v4657, 0.0
      %v4690 = vmax.f32 %v4658, 0.0
      %v4691 = vmax.f32 %v4659, 0.0
      %v4692 = vmax.f32 %v4660, 0.0
      %v4693 = vmax.f32 %v4661, 0.0
      %v4694 = vmax.f32 %v4662, 0.0
      %v4695 = vmax.f32 %v4663, 0.0
      %v4696 = vmax.f32 %v4664, 0.0
      %v4697 = vpack.c.bf16 %v4665, %v4665
      %v4698 = vpack.c.bf16 %v4666, %v4666
      %v4699 = vpack.c.bf16 %v4667, %v4667
      %v4700 = vpack.c.bf16 %v4668, %v4668
      %v4701 = vpack.c.bf16 %v4669, %v4669
      %v4702 = vpack.c.bf16 %v4670, %v4670
      %v4703 = vpack.c.bf16 %v4671, %v4671
      %v4704 = vpack.c.bf16 %v4672, %v4672
      %v4705 = vpack.c.bf16 %v4673, %v4673
      %v4706 = vpack.c.bf16 %v4674, %v4674
      %v4707 = vpack.c.bf16 %v4675, %v4675
      %v4708 = vpack.c.bf16 %v4676, %v4676
      %v4709 = vpack.c.bf16 %v4677, %v4677
      %v4710 = vpack.c.bf16 %v4678, %v4678
      %v4711 = vpack.c.bf16 %v4679, %v4679
      %v4712 = vpack.c.bf16 %v4680, %v4680
      %v4713 = vpack.c.bf16 %v4681, %v4681
      %v4714 = vpack.c.bf16 %v4682, %v4682
      %v4715 = vpack.c.bf16 %v4683, %v4683
      %v4716 = vpack.c.bf16 %v4684, %v4684
      %v4717 = vpack.c.bf16 %v4685, %v4685
      %v4718 = vpack.c.bf16 %v4686, %v4686
      %v4719 = vpack.c.bf16 %v4687, %v4687
      %v4720 = vpack.c.bf16 %v4688, %v4688
      %v4721 = vpack.c.bf16 %v4689, %v4689
      %v4722 = vpack.c.bf16 %v4690, %v4690
      %v4723 = vpack.c.bf16 %v4691, %v4691
      %v4724 = vpack.c.bf16 %v4692, %v4692
      %v4725 = vpack.c.bf16 %v4693, %v4693
      %v4726 = vpack.c.bf16 %v4694, %v4694
      %v4727 = vpack.c.bf16 %v4695, %v4695
      %v4728 = vpack.c.bf16 %v4696, %v4696
      %v4730 = vshrl.u32 %v4697, 16
      %v4732 = vrot.slane %v4730, 7
      %v4733 = vshll.u32 %v4697, 16
      %v4735 = vor.u32 %v4732, %v4733
      %v4736 = vrot.slane %v4732, 4
      %v4738 = vshrl.u32 %v4698, 16
      %v4740 = vrot.slane %v4738, 7
      %v4741 = vshll.u32 %v4698, 16
      %v4743 = vor.u32 %v4740, %v4741
      %v4744 = vsel %vm238, %v4736, %v4743
      %v4745 = vrot.slane %v4740, 4
      %v4747 = vshrl.u32 %v4699, 16
      %v4749 = vrot.slane %v4747, 7
      %v4750 = vshll.u32 %v4699, 16
      %v4752 = vor.u32 %v4749, %v4750
      %v4753 = vrot.slane %v4749, 4
      %v4755 = vshrl.u32 %v4700, 16
      %v4757 = vrot.slane %v4755, 7
      %v4758 = vshll.u32 %v4700, 16
      %v4760 = vor.u32 %v4757, %v4758
      %v4761 = vsel %vm238, %v4753, %v4760
      %v4762 = vrot.slane %v4757, 4
      %v4764 = vshrl.u32 %v4701, 16
      %v4766 = vrot.slane %v4764, 7
      %v4767 = vshll.u32 %v4701, 16
      %v4769 = vor.u32 %v4766, %v4767
      %v4770 = vrot.slane %v4766, 4
      %v4772 = vshrl.u32 %v4702, 16
      %v4774 = vrot.slane %v4772, 7
      %v4775 = vshll.u32 %v4702, 16
      %v4777 = vor.u32 %v4774, %v4775
      %v4778 = vsel %vm238, %v4770, %v4777
      %v4779 = vrot.slane %v4774, 4
      %v4781 = vshrl.u32 %v4703, 16
      %v4783 = vrot.slane %v4781, 7
      %v4784 = vshll.u32 %v4703, 16
      %v4786 = vor.u32 %v4783, %v4784
      %v4787 = vrot.slane %v4783, 4
      %v4789 = vshrl.u32 %v4704, 16
      %v4791 = vrot.slane %v4789, 7
      %v4792 = vshll.u32 %v4704, 16
      %v4794 = vor.u32 %v4791, %v4792
      %v4795 = vsel %vm238, %v4787, %v4794
      %v4796 = vrot.slane %v4791, 4
      %v4798 = vshrl.u32 %v4705, 16
      %v4800 = vrot.slane %v4798, 7
      %v4801 = vshll.u32 %v4705, 16
      %v4803 = vor.u32 %v4800, %v4801
      %v4804 = vrot.slane %v4800, 4
      %v4806 = vshrl.u32 %v4706, 16
      %v4808 = vrot.slane %v4806, 7
      %v4809 = vshll.u32 %v4706, 16
      %v4811 = vor.u32 %v4808, %v4809
      %v4812 = vsel %vm238, %v4804, %v4811
      %v4813 = vrot.slane %v4808, 4
      %v4815 = vshrl.u32 %v4707, 16
      %v4817 = vrot.slane %v4815, 7
      %v4818 = vshll.u32 %v4707, 16
      %v4820 = vor.u32 %v4817, %v4818
      %v4821 = vrot.slane %v4817, 4
      %v4823 = vshrl.u32 %v4708, 16
      %v4825 = vrot.slane %v4823, 7
      %v4826 = vshll.u32 %v4708, 16
      %v4828 = vor.u32 %v4825, %v4826
      %v4829 = vsel %vm238, %v4821, %v4828
      %v4830 = vrot.slane %v4825, 4
      %v4832 = vshrl.u32 %v4709, 16
      %v4834 = vrot.slane %v4832, 7
      %v4835 = vshll.u32 %v4709, 16
      %v4837 = vor.u32 %v4834, %v4835
      %v4838 = vrot.slane %v4834, 4
      %v4840 = vshrl.u32 %v4710, 16
      %v4842 = vrot.slane %v4840, 7
      %v4843 = vshll.u32 %v4710, 16
      %v4845 = vor.u32 %v4842, %v4843
      %v4846 = vsel %vm238, %v4838, %v4845
      %v4847 = vrot.slane %v4842, 4
      %v4849 = vshrl.u32 %v4711, 16
      %v4851 = vrot.slane %v4849, 7
      %v4852 = vshll.u32 %v4711, 16
      %v4854 = vor.u32 %v4851, %v4852
      %v4855 = vrot.slane %v4851, 4
      %v4857 = vshrl.u32 %v4712, 16
      %v4859 = vrot.slane %v4857, 7
      %v4860 = vshll.u32 %v4712, 16
      %v4862 = vor.u32 %v4859, %v4860
      %v4863 = vsel %vm238, %v4855, %v4862
      %v4864 = vrot.slane %v4859, 4
      %v4866 = vshrl.u32 %v4713, 16
      %v4868 = vrot.slane %v4866, 7
      %v4869 = vshll.u32 %v4713, 16
      %v4871 = vor.u32 %v4868, %v4869
      %v4872 = vrot.slane %v4868, 4
      %v4874 = vshrl.u32 %v4714, 16
      %v4876 = vrot.slane %v4874, 7
      %v4877 = vshll.u32 %v4714, 16
      %v4879 = vor.u32 %v4876, %v4877
      %v4880 = vsel %vm238, %v4872, %v4879
      %v4881 = vrot.slane %v4876, 4
      %v4883 = vshrl.u32 %v4715, 16
      %v4885 = vrot.slane %v4883, 7
      %v4886 = vshll.u32 %v4715, 16
      %v4888 = vor.u32 %v4885, %v4886
      %v4889 = vrot.slane %v4885, 4
      %v4891 = vshrl.u32 %v4716, 16
      %v4893 = vrot.slane %v4891, 7
      %v4894 = vshll.u32 %v4716, 16
      %v4896 = vor.u32 %v4893, %v4894
      %v4897 = vsel %vm238, %v4889, %v4896
      %v4898 = vrot.slane %v4893, 4
      %v4900 = vshrl.u32 %v4717, 16
      %v4902 = vrot.slane %v4900, 7
      %v4903 = vshll.u32 %v4717, 16
      %v4905 = vor.u32 %v4902, %v4903
      %v4906 = vrot.slane %v4902, 4
      %v4908 = vshrl.u32 %v4718, 16
      %v4910 = vrot.slane %v4908, 7
      %v4911 = vshll.u32 %v4718, 16
      %v4913 = vor.u32 %v4910, %v4911
      %v4914 = vsel %vm238, %v4906, %v4913
      %v4915 = vrot.slane %v4910, 4
      %v4917 = vshrl.u32 %v4719, 16
      %v4919 = vrot.slane %v4917, 7
      %v4920 = vshll.u32 %v4719, 16
      %v4922 = vor.u32 %v4919, %v4920
      %v4923 = vrot.slane %v4919, 4
      %v4925 = vshrl.u32 %v4720, 16
      %v4927 = vrot.slane %v4925, 7
      %v4928 = vshll.u32 %v4720, 16
      %v4930 = vor.u32 %v4927, %v4928
      %v4931 = vsel %vm238, %v4923, %v4930
      %v4932 = vrot.slane %v4927, 4
      %v4934 = vshrl.u32 %v4721, 16
      %v4936 = vrot.slane %v4934, 7
      %v4937 = vshll.u32 %v4721, 16
      %v4939 = vor.u32 %v4936, %v4937
      %v4940 = vrot.slane %v4936, 4
      %v4942 = vshrl.u32 %v4722, 16
      %v4944 = vrot.slane %v4942, 7
      %v4945 = vshll.u32 %v4722, 16
      %v4947 = vor.u32 %v4944, %v4945
      %v4948 = vsel %vm238, %v4940, %v4947
      %v4949 = vrot.slane %v4944, 4
      %v4951 = vshrl.u32 %v4723, 16
      %v4953 = vrot.slane %v4951, 7
      %v4954 = vshll.u32 %v4723, 16
      %v4956 = vor.u32 %v4953, %v4954
      %v4957 = vrot.slane %v4953, 4
      %v4959 = vshrl.u32 %v4724, 16
      %v4961 = vrot.slane %v4959, 7
      %v4962 = vshll.u32 %v4724, 16
      %v4964 = vor.u32 %v4961, %v4962
      %v4965 = vsel %vm238, %v4957, %v4964
      %v4966 = vrot.slane %v4961, 4
      %v4968 = vshrl.u32 %v4725, 16
      %v4970 = vrot.slane %v4968, 7
      %v4971 = vshll.u32 %v4725, 16
      %v4973 = vor.u32 %v4970, %v4971
      %v4974 = vrot.slane %v4970, 4
      %v4976 = vshrl.u32 %v4726, 16
      %v4978 = vrot.slane %v4976, 7
      %v4979 = vshll.u32 %v4726, 16
      %v4981 = vor.u32 %v4978, %v4979
      %v4982 = vsel %vm238, %v4974, %v4981
      %v4983 = vrot.slane %v4978, 4
      %v4985 = vshrl.u32 %v4727, 16
      %v4987 = vrot.slane %v4985, 7
      %v4988 = vshll.u32 %v4727, 16
      %v4990 = vor.u32 %v4987, %v4988
      %v4991 = vrot.slane %v4987, 4
      %v4993 = vshrl.u32 %v4728, 16
      %v4995 = vrot.slane %v4993, 7
      %v4996 = vshll.u32 %v4728, 16
      %v4998 = vor.u32 %v4995, %v4996
      %v4999 = vsel %vm238, %v4991, %v4998
      %v5000 = vrot.slane %v4995, 4
      %v5049 = vld [vmem:[%s559] sm:$0xf]
      %v5050 = vsel %vm562, %v4735, %v5049
      %5051 = vst [vmem:[%s559] sm:$0xf] %v5050
      %5052 = vst.msk [vmem:[%s559 + $0x4] sm:$0xf] %vm566, %v4744
      %v5053 = vld [vmem:[%s559 + $0x8] sm:$0x1]
      %v5054 = vsel %vm569, %v4745, %v5053
      %5055 = vst [vmem:[%s559 + $0x8] sm:$0x1] %v5054
      %v5056 = vld [vmem:[%s559 + $0xc] sm:$0xf]
      %v5057 = vsel %vm562, %v4752, %v5056
      %5058 = vst [vmem:[%s559 + $0xc] sm:$0xf] %v5057
      %5059 = vst.msk [vmem:[%s559 + $0x10] sm:$0xf] %vm566, %v4761
      %v5060 = vld [vmem:[%s559 + $0x14] sm:$0x1]
      %v5061 = vsel %vm569, %v4762, %v5060
      %5062 = vst [vmem:[%s559 + $0x14] sm:$0x1] %v5061
      %v5063 = vld [vmem:[%s559 + $0x18] sm:$0xf]
      %v5064 = vsel %vm562, %v4769, %v5063
      %5065 = vst [vmem:[%s559 + $0x18] sm:$0xf] %v5064
      %5066 = vst.msk [vmem:[%s559 + $0x1c] sm:$0xf] %vm566, %v4778
      %v5067 = vld [vmem:[%s559 + $0x20] sm:$0x1]
      %v5068 = vsel %vm569, %v4779, %v5067
      %5069 = vst [vmem:[%s559 + $0x20] sm:$0x1] %v5068
      %v5070 = vld [vmem:[%s559 + $0x24] sm:$0xf]
      %v5071 = vsel %vm562, %v4786, %v5070
      %5072 = vst [vmem:[%s559 + $0x24] sm:$0xf] %v5071
      %5073 = vst.msk [vmem:[%s559 + $0x28] sm:$0xf] %vm566, %v4795
      %v5074 = vld [vmem:[%s559 + $0x2c] sm:$0x1]
      %v5075 = vsel %vm569, %v4796, %v5074
      %5076 = vst [vmem:[%s559 + $0x2c] sm:$0x1] %v5075
      %v5077 = vld [vmem:[%s559 + $0x30] sm:$0xf]
      %v5078 = vsel %vm562, %v4803, %v5077
      %5079 = vst [vmem:[%s559 + $0x30] sm:$0xf] %v5078
      %5080 = vst.msk [vmem:[%s559 + $0x34] sm:$0xf] %vm566, %v4812
      %v5081 = vld [vmem:[%s559 + $0x38] sm:$0x1]
      %v5082 = vsel %vm569, %v4813, %v5081
      %5083 = vst [vmem:[%s559 + $0x38] sm:$0x1] %v5082
      %v5084 = vld [vmem:[%s559 + $0x3c] sm:$0xf]
      %v5085 = vsel %vm562, %v4820, %v5084
      %5086 = vst [vmem:[%s559 + $0x3c] sm:$0xf] %v5085
      %5087 = vst.msk [vmem:[%s559 + $0x40] sm:$0xf] %vm566, %v4829
      %v5088 = vld [vmem:[%s559 + $0x44] sm:$0x1]
      %v5089 = vsel %vm569, %v4830, %v5088
      %5090 = vst [vmem:[%s559 + $0x44] sm:$0x1] %v5089
      %v5091 = vld [vmem:[%s559 + $0x48] sm:$0xf]
      %v5092 = vsel %vm562, %v4837, %v5091
      %5093 = vst [vmem:[%s559 + $0x48] sm:$0xf] %v5092
      %5094 = vst.msk [vmem:[%s559 + $0x4c] sm:$0xf] %vm566, %v4846
      %v5095 = vld [vmem:[%s559 + $0x50] sm:$0x1]
      %v5096 = vsel %vm569, %v4847, %v5095
      %5097 = vst [vmem:[%s559 + $0x50] sm:$0x1] %v5096
      %v5098 = vld [vmem:[%s559 + $0x54] sm:$0xf]
      %v5099 = vsel %vm562, %v4854, %v5098
      %5100 = vst [vmem:[%s559 + $0x54] sm:$0xf] %v5099
      %5101 = vst.msk [vmem:[%s559 + $0x58] sm:$0xf] %vm566, %v4863
      %v5102 = vld [vmem:[%s559 + $0x5c] sm:$0x1]
      %v5103 = vsel %vm569, %v4864, %v5102
      %5104 = vst [vmem:[%s559 + $0x5c] sm:$0x1] %v5103
      %v5105 = vld [vmem:[%s559 + $0x60] sm:$0xf]
      %v5106 = vsel %vm562, %v4871, %v5105
      %5107 = vst [vmem:[%s559 + $0x60] sm:$0xf] %v5106
      %5108 = vst.msk [vmem:[%s559 + $0x64] sm:$0xf] %vm566, %v4880
      %v5109 = vld [vmem:[%s559 + $0x68] sm:$0x1]
      %v5110 = vsel %vm569, %v4881, %v5109
      %5111 = vst [vmem:[%s559 + $0x68] sm:$0x1] %v5110
      %v5112 = vld [vmem:[%s559 + $0x6c] sm:$0xf]
      %v5113 = vsel %vm562, %v4888, %v5112
      %5114 = vst [vmem:[%s559 + $0x6c] sm:$0xf] %v5113
      %5115 = vst.msk [vmem:[%s559 + $0x70] sm:$0xf] %vm566, %v4897
      %v5116 = vld [vmem:[%s559 + $0x74] sm:$0x1]
      %v5117 = vsel %vm569, %v4898, %v5116
      %5118 = vst [vmem:[%s559 + $0x74] sm:$0x1] %v5117
      %v5119 = vld [vmem:[%s559 + $0x78] sm:$0xf]
      %v5120 = vsel %vm562, %v4905, %v5119
      %5121 = vst [vmem:[%s559 + $0x78] sm:$0xf] %v5120
      %5122 = vst.msk [vmem:[%s559 + $0x7c] sm:$0xf] %vm566, %v4914
      %v5123 = vld [vmem:[%s559 + $0x80] sm:$0x1]
      %v5124 = vsel %vm569, %v4915, %v5123
      %5125 = vst [vmem:[%s559 + $0x80] sm:$0x1] %v5124
      %v5126 = vld [vmem:[%s559 + $0x84] sm:$0xf]
      %v5127 = vsel %vm562, %v4922, %v5126
      %5128 = vst [vmem:[%s559 + $0x84] sm:$0xf] %v5127
      %5129 = vst.msk [vmem:[%s559 + $0x88] sm:$0xf] %vm566, %v4931
      %v5130 = vld [vmem:[%s559 + $0x8c] sm:$0x1]
      %v5131 = vsel %vm569, %v4932, %v5130
      %5132 = vst [vmem:[%s559 + $0x8c] sm:$0x1] %v5131
      %v5133 = vld [vmem:[%s559 + $0x90] sm:$0xf]
      %v5134 = vsel %vm562, %v4939, %v5133
      %5135 = vst [vmem:[%s559 + $0x90] sm:$0xf] %v5134
      %5136 = vst.msk [vmem:[%s559 + $0x94] sm:$0xf] %vm566, %v4948
      %v5137 = vld [vmem:[%s559 + $0x98] sm:$0x1]
      %v5138 = vsel %vm569, %v4949, %v5137
      %5139 = vst [vmem:[%s559 + $0x98] sm:$0x1] %v5138
      %v5140 = vld [vmem:[%s559 + $0x9c] sm:$0xf]
      %v5141 = vsel %vm562, %v4956, %v5140
      %5142 = vst [vmem:[%s559 + $0x9c] sm:$0xf] %v5141
      %5143 = vst.msk [vmem:[%s559 + $0xa0] sm:$0xf] %vm566, %v4965
      %v5144 = vld [vmem:[%s559 + $0xa4] sm:$0x1]
      %v5145 = vsel %vm569, %v4966, %v5144
      %5146 = vst [vmem:[%s559 + $0xa4] sm:$0x1] %v5145
      %v5147 = vld [vmem:[%s559 + $0xa8] sm:$0xf]
      %v5148 = vsel %vm562, %v4973, %v5147
      %5149 = vst [vmem:[%s559 + $0xa8] sm:$0xf] %v5148
      %5150 = vst.msk [vmem:[%s559 + $0xac] sm:$0xf] %vm566, %v4982
      %v5151 = vld [vmem:[%s559 + $0xb0] sm:$0x1]
      %v5152 = vsel %vm569, %v4983, %v5151
      %5153 = vst [vmem:[%s559 + $0xb0] sm:$0x1] %v5152
      %v5154 = vld [vmem:[%s559 + $0xb4] sm:$0xf]
      %v5155 = vsel %vm562, %v4990, %v5154
      %5156 = vst [vmem:[%s559 + $0xb4] sm:$0xf] %v5155
      %5157 = vst.msk [vmem:[%s559 + $0xb8] sm:$0xf] %vm566, %v4999
      %v5158 = vld [vmem:[%s559 + $0xbc] sm:$0x1]
      %v5159 = vsel %vm569, %v5000, %v5158
      %5160 = vst [vmem:[%s559 + $0xbc] sm:$0x1] %v5159
      %v5161 = vld [vmem:[#allocation2] sm:$0xf]
      %v5162 = vsel %vm562, %v4752, %v5161
      %5163 = vst [vmem:[#allocation2] sm:$0xf] %v5162
      %5164 = vst.msk [vmem:[#allocation2 + $0x4] sm:$0xf] %vm566, %v4761
      %v5165 = vld [vmem:[#allocation2 + $0x8] sm:$0x1]
      %v5166 = vsel %vm569, %v4762, %v5165
      %5167 = vst [vmem:[#allocation2 + $0x8] sm:$0x1] %v5166
      %v5168 = vld [vmem:[%s685] sm:$0xf]
      %v5169 = vsel %vm562, %v4973, %v5168
      %5170 = vst [vmem:[%s685] sm:$0xf] %v5169
      %5171 = vst.msk [vmem:[%s685 + $0x4] sm:$0xf] %vm566, %v4982
      %v5172 = vld [vmem:[%s685 + $0x8] sm:$0x1]
      %v5173 = vsel %vm569, %v4983, %v5172
      %5174 = vst [vmem:[%s685 + $0x8] sm:$0x1] %v5173
      %v5175 = vld [vmem:[#allocation2] sm:$0x2]
      %v5176 = vld [vmem:[#allocation2 + $0xc] sm:$0x2]
      %v5177 = vld [vmem:[#allocation2 + $0x18] sm:$0x2]
      %v5178 = vld [vmem:[#allocation2 + $0x24] sm:$0x2]
      %v5179 = vld [vmem:[#allocation2 + $0x30] sm:$0x2]
      %v5180 = vld [vmem:[#allocation2 + $0x3c] sm:$0x2]
      %v5181 = vld [vmem:[#allocation2 + $0x48] sm:$0x2]
      %v5182 = vld [vmem:[#allocation2 + $0x54] sm:$0x2]
      %v5183 = vld [vmem:[#allocation2 + $0x60] sm:$0x2]
      %v5184 = vld [vmem:[#allocation2 + $0x6c] sm:$0x2]
      %v5185 = vld [vmem:[#allocation2 + $0x78] sm:$0x2]
      %v5186 = vld [vmem:[#allocation2 + $0x84] sm:$0x2]
      %v5187 = vld [vmem:[#allocation2 + $0x90] sm:$0x2]
      %v5188 = vld [vmem:[#allocation2 + $0x9c] sm:$0x2]
      %v5189 = vld [vmem:[#allocation2 + $0xa8] sm:$0x2]
      %v5190 = vld [vmem:[#allocation2 + $0xb4] sm:$0x2]
      %v5191 = vld [vmem:[#allocation2 + $0xc0] sm:$0x2]
      %v5192 = vld [vmem:[#allocation2 + $0xcc] sm:$0x2]
      %v5211 = vrot.slane %v5175, 5
      %v5212 = vrot.slane %v5211, 4
      %v5213 = vrot.slane %v5176, 5
      %v5214 = vrot.slane %v5213, 4
      %v5215 = vrot.slane %v5177, 5
      %v5216 = vrot.slane %v5215, 4
      %v5217 = vrot.slane %v5178, 5
      %v5218 = vrot.slane %v5217, 4
      %v5219 = vrot.slane %v5179, 5
      %v5220 = vrot.slane %v5219, 4
      %v5221 = vrot.slane %v5180, 5
      %v5222 = vrot.slane %v5221, 4
      %v5223 = vrot.slane %v5181, 5
      %v5224 = vrot.slane %v5223, 4
      %v5225 = vrot.slane %v5182, 5
      %v5226 = vrot.slane %v5225, 4
      %v5227 = vrot.slane %v5183, 5
      %v5228 = vrot.slane %v5227, 4
      %v5229 = vrot.slane %v5184, 5
      %v5230 = vrot.slane %v5229, 4
      %v5231 = vrot.slane %v5185, 5
      %v5232 = vrot.slane %v5231, 4
      %v5233 = vrot.slane %v5186, 5
      %v5234 = vrot.slane %v5233, 4
      %v5235 = vrot.slane %v5187, 5
      %v5236 = vrot.slane %v5235, 4
      %v5237 = vrot.slane %v5188, 5
      %v5238 = vrot.slane %v5237, 4
      %v5239 = vrot.slane %v5189, 5
      %v5240 = vrot.slane %v5239, 4
      %v5241 = vrot.slane %v5190, 5
      %v5242 = vrot.slane %v5241, 4
      %v5243 = vrot.slane %v5191, 5
      %v5244 = vrot.slane %v5243, 4
      %v5245 = vrot.slane %v5192, 5
      %v5246 = vrot.slane %v5245, 4
      %v5265 = vld [vmem:[#allocation2] sm:$0x1]
      %v5266 = vsel %vm569, %v5212, %v5265
      %5267 = vst [vmem:[#allocation2] sm:$0x1] %v5266
      %v5268 = vld [vmem:[#allocation2 + $0xc] sm:$0x1]
      %v5269 = vsel %vm569, %v5214, %v5268
      %5270 = vst [vmem:[#allocation2 + $0xc] sm:$0x1] %v5269
      %v5271 = vld [vmem:[#allocation2 + $0x18] sm:$0x1]
      %v5272 = vsel %vm569, %v5216, %v5271
      %5273 = vst [vmem:[#allocation2 + $0x18] sm:$0x1] %v5272
      %v5274 = vld [vmem:[#allocation2 + $0x24] sm:$0x1]
      %v5275 = vsel %vm569, %v5218, %v5274
      %5276 = vst [vmem:[#allocation2 + $0x24] sm:$0x1] %v5275
      %v5277 = vld [vmem:[#allocation2 + $0x30] sm:$0x1]
      %v5278 = vsel %vm569, %v5220, %v5277
      %5279 = vst [vmem:[#allocation2 + $0x30] sm:$0x1] %v5278
      %v5280 = vld [vmem:[#allocation2 + $0x3c] sm:$0x1]
      %v5281 = vsel %vm569, %v5222, %v5280
      %5282 = vst [vmem:[#allocation2 + $0x3c] sm:$0x1] %v5281
      %v5283 = vld [vmem:[#allocation2 + $0x48] sm:$0x1]
      %v5284 = vsel %vm569, %v5224, %v5283
      %5285 = vst [vmem:[#allocation2 + $0x48] sm:$0x1] %v5284
      %v5286 = vld [vmem:[#allocation2 + $0x54] sm:$0x1]
      %v5287 = vsel %vm569, %v5226, %v5286
      %5288 = vst [vmem:[#allocation2 + $0x54] sm:$0x1] %v5287
      %v5289 = vld [vmem:[#allocation2 + $0x60] sm:$0x1]
      %v5290 = vsel %vm569, %v5228, %v5289
      %5291 = vst [vmem:[#allocation2 + $0x60] sm:$0x1] %v5290
      %v5292 = vld [vmem:[#allocation2 + $0x6c] sm:$0x1]
      %v5293 = vsel %vm569, %v5230, %v5292
      %5294 = vst [vmem:[#allocation2 + $0x6c] sm:$0x1] %v5293
      %v5295 = vld [vmem:[#allocation2 + $0x78] sm:$0x1]
      %v5296 = vsel %vm569, %v5232, %v5295
      %5297 = vst [vmem:[#allocation2 + $0x78] sm:$0x1] %v5296
      %v5298 = vld [vmem:[#allocation2 + $0x84] sm:$0x1]
      %v5299 = vsel %vm569, %v5234, %v5298
      %5300 = vst [vmem:[#allocation2 + $0x84] sm:$0x1] %v5299
      %v5301 = vld [vmem:[#allocation2 + $0x90] sm:$0x1]
      %v5302 = vsel %vm569, %v5236, %v5301
      %5303 = vst [vmem:[#allocation2 + $0x90] sm:$0x1] %v5302
      %v5304 = vld [vmem:[#allocation2 + $0x9c] sm:$0x1]
      %v5305 = vsel %vm569, %v5238, %v5304
      %5306 = vst [vmem:[#allocation2 + $0x9c] sm:$0x1] %v5305
      %v5307 = vld [vmem:[#allocation2 + $0xa8] sm:$0x1]
      %v5308 = vsel %vm569, %v5240, %v5307
      %5309 = vst [vmem:[#allocation2 + $0xa8] sm:$0x1] %v5308
      %v5310 = vld [vmem:[#allocation2 + $0xb4] sm:$0x1]
      %v5311 = vsel %vm569, %v5242, %v5310
      %5312 = vst [vmem:[#allocation2 + $0xb4] sm:$0x1] %v5311
      %v5313 = vld [vmem:[#allocation2 + $0xc0] sm:$0x1]
      %v5314 = vsel %vm569, %v5244, %v5313
      %5315 = vst [vmem:[#allocation2 + $0xc0] sm:$0x1] %v5314
      %v5316 = vld [vmem:[#allocation2 + $0xcc] sm:$0x1]
      %v5317 = vsel %vm569, %v5246, %v5316
      %5318 = vst [vmem:[#allocation2 + $0xcc] sm:$0x1] %v5317
      %v5319 = vld [vmem:[#allocation2 + $0x4] sm:$0x8]
      %v5320 = vld [vmem:[#allocation2 + $0x10] sm:$0x8]
      %v5321 = vld [vmem:[#allocation2 + $0x1c] sm:$0x8]
      %v5322 = vld [vmem:[#allocation2 + $0x28] sm:$0x8]
      %v5323 = vld [vmem:[#allocation2 + $0x34] sm:$0x8]
      %v5324 = vld [vmem:[#allocation2 + $0x40] sm:$0x8]
      %v5325 = vld [vmem:[#allocation2 + $0x4c] sm:$0x8]
      %v5326 = vld [vmem:[#allocation2 + $0x58] sm:$0x8]
      %v5327 = vld [vmem:[#allocation2 + $0x64] sm:$0x8]
      %v5328 = vld [vmem:[#allocation2 + $0x70] sm:$0x8]
      %v5329 = vld [vmem:[#allocation2 + $0x7c] sm:$0x8]
      %v5330 = vld [vmem:[#allocation2 + $0x88] sm:$0x8]
      %v5331 = vld [vmem:[#allocation2 + $0x94] sm:$0x8]
      %v5332 = vld [vmem:[#allocation2 + $0xa0] sm:$0x8]
      %v5333 = vld [vmem:[#allocation2 + $0xac] sm:$0x8]
      %v5334 = vld [vmem:[#allocation2 + $0xb8] sm:$0x8]
      %v5335 = vld [vmem:[#allocation2 + $0xc4] sm:$0x8]
      %v5336 = vld [vmem:[#allocation2 + $0xd0] sm:$0x8]
      %v5355 = vrot.slane %v5319, 7
      %v5356 = vrot.slane %v5355, 4
      %v5357 = vrot.slane %v5320, 7
      %v5358 = vrot.slane %v5357, 4
      %v5359 = vrot.slane %v5321, 7
      %v5360 = vrot.slane %v5359, 4
      %v5361 = vrot.slane %v5322, 7
      %v5362 = vrot.slane %v5361, 4
      %v5363 = vrot.slane %v5323, 7
      %v5364 = vrot.slane %v5363, 4
      %v5365 = vrot.slane %v5324, 7
      %v5366 = vrot.slane %v5365, 4
      %v5367 = vrot.slane %v5325, 7
      %v5368 = vrot.slane %v5367, 4
      %v5369 = vrot.slane %v5326, 7
      %v5370 = vrot.slane %v5369, 4
      %v5371 = vrot.slane %v5327, 7
      %v5372 = vrot.slane %v5371, 4
      %v5373 = vrot.slane %v5328, 7
      %v5374 = vrot.slane %v5373, 4
      %v5375 = vrot.slane %v5329, 7
      %v5376 = vrot.slane %v5375, 4
      %v5377 = vrot.slane %v5330, 7
      %v5378 = vrot.slane %v5377, 4
      %v5379 = vrot.slane %v5331, 7
      %v5380 = vrot.slane %v5379, 4
      %v5381 = vrot.slane %v5332, 7
      %v5382 = vrot.slane %v5381, 4
      %v5383 = vrot.slane %v5333, 7
      %v5384 = vrot.slane %v5383, 4
      %v5385 = vrot.slane %v5334, 7
      %v5386 = vrot.slane %v5385, 4
      %v5387 = vrot.slane %v5335, 7
      %v5388 = vrot.slane %v5387, 4
      %v5389 = vrot.slane %v5336, 7
      %v5390 = vrot.slane %v5389, 4
      %v5409 = vld [vmem:[#allocation2 + $0x8] sm:$0x1]
      %v5410 = vsel %vm927, %v5356, %v5409
      %5411 = vst [vmem:[#allocation2 + $0x8] sm:$0x1] %v5410
      %v5412 = vld [vmem:[#allocation2 + $0x14] sm:$0x1]
      %v5413 = vsel %vm927, %v5358, %v5412
      %5414 = vst [vmem:[#allocation2 + $0x14] sm:$0x1] %v5413
      %v5415 = vld [vmem:[#allocation2 + $0x20] sm:$0x1]
      %v5416 = vsel %vm927, %v5360, %v5415
      %5417 = vst [vmem:[#allocation2 + $0x20] sm:$0x1] %v5416
      %v5418 = vld [vmem:[#allocation2 + $0x2c] sm:$0x1]
      %v5419 = vsel %vm927, %v5362, %v5418
      %5420 = vst [vmem:[#allocation2 + $0x2c] sm:$0x1] %v5419
      %v5421 = vld [vmem:[#allocation2 + $0x38] sm:$0x1]
      %v5422 = vsel %vm927, %v5364, %v5421
      %5423 = vst [vmem:[#allocation2 + $0x38] sm:$0x1] %v5422
      %v5424 = vld [vmem:[#allocation2 + $0x44] sm:$0x1]
      %v5425 = vsel %vm927, %v5366, %v5424
      %5426 = vst [vmem:[#allocation2 + $0x44] sm:$0x1] %v5425
      %v5427 = vld [vmem:[#allocation2 + $0x50] sm:$0x1]
      %v5428 = vsel %vm927, %v5368, %v5427
      %5429 = vst [vmem:[#allocation2 + $0x50] sm:$0x1] %v5428
      %v5430 = vld [vmem:[#allocation2 + $0x5c] sm:$0x1]
      %v5431 = vsel %vm927, %v5370, %v5430
      %5432 = vst [vmem:[#allocation2 + $0x5c] sm:$0x1] %v5431
      %v5433 = vld [vmem:[#allocation2 + $0x68] sm:$0x1]
      %v5434 = vsel %vm927, %v5372, %v5433
      %5435 = vst [vmem:[#allocation2 + $0x68] sm:$0x1] %v5434
      %v5436 = vld [vmem:[#allocation2 + $0x74] sm:$0x1]
      %v5437 = vsel %vm927, %v5374, %v5436
      %5438 = vst [vmem:[#allocation2 + $0x74] sm:$0x1] %v5437
      %v5439 = vld [vmem:[#allocation2 + $0x80] sm:$0x1]
      %v5440 = vsel %vm927, %v5376, %v5439
      %5441 = vst [vmem:[#allocation2 + $0x80] sm:$0x1] %v5440
      %v5442 = vld [vmem:[#allocation2 + $0x8c] sm:$0x1]
      %v5443 = vsel %vm927, %v5378, %v5442
      %5444 = vst [vmem:[#allocation2 + $0x8c] sm:$0x1] %v5443
      %v5445 = vld [vmem:[#allocation2 + $0x98] sm:$0x1]
      %v5446 = vsel %vm927, %v5380, %v5445
      %5447 = vst [vmem:[#allocation2 + $0x98] sm:$0x1] %v5446
      %v5448 = vld [vmem:[#allocation2 + $0xa4] sm:$0x1]
      %v5449 = vsel %vm927, %v5382, %v5448
      %5450 = vst [vmem:[#allocation2 + $0xa4] sm:$0x1] %v5449
      %v5451 = vld [vmem:[#allocation2 + $0xb0] sm:$0x1]
      %v5452 = vsel %vm927, %v5384, %v5451
      %5453 = vst [vmem:[#allocation2 + $0xb0] sm:$0x1] %v5452
      %v5454 = vld [vmem:[#allocation2 + $0xbc] sm:$0x1]
      %v5455 = vsel %vm927, %v5386, %v5454
      %5456 = vst [vmem:[#allocation2 + $0xbc] sm:$0x1] %v5455
      %v5457 = vld [vmem:[#allocation2 + $0xc8] sm:$0x1]
      %v5458 = vsel %vm927, %v5388, %v5457
      %5459 = vst [vmem:[#allocation2 + $0xc8] sm:$0x1] %v5458
      %v5460 = vld [vmem:[#allocation2 + $0xd4] sm:$0x1]
      %v5461 = vsel %vm927, %v5390, %v5460
      %5462 = vst [vmem:[#allocation2 + $0xd4] sm:$0x1] %v5461
      %v5463 = vld [vmem:[#allocation2] sm:$0xf]
      %v5464 = vld [vmem:[#allocation2 + $0x4] sm:$0xf]
      %v5465 = vld [vmem:[#allocation2 + $0xc] sm:$0xf]
      %v5466 = vld [vmem:[#allocation2 + $0x10] sm:$0xf]
      %v5467 = vld [vmem:[#allocation2 + $0x18] sm:$0xf]
      %v5468 = vld [vmem:[#allocation2 + $0x1c] sm:$0xf]
      %v5469 = vld [vmem:[#allocation2 + $0x24] sm:$0xf]
      %v5470 = vld [vmem:[#allocation2 + $0x28] sm:$0xf]
      %v5471 = vld [vmem:[#allocation2 + $0x30] sm:$0xf]
      %v5472 = vld [vmem:[#allocation2 + $0x34] sm:$0xf]
      %v5473 = vld [vmem:[#allocation2 + $0x3c] sm:$0xf]
      %v5474 = vld [vmem:[#allocation2 + $0x40] sm:$0xf]
      %v5475 = vld [vmem:[#allocation2 + $0x48] sm:$0xf]
      %v5476 = vld [vmem:[#allocation2 + $0x4c] sm:$0xf]
      %v5477 = vld [vmem:[#allocation2 + $0x54] sm:$0xf]
      %v5478 = vld [vmem:[#allocation2 + $0x58] sm:$0xf]
      %v5479 = vld [vmem:[#allocation2 + $0x60] sm:$0xf]
      %v5480 = vld [vmem:[#allocation2 + $0x64] sm:$0xf]
      %v5481 = vld [vmem:[#allocation2 + $0x6c] sm:$0xf]
      %v5482 = vld [vmem:[#allocation2 + $0x70] sm:$0xf]
      %v5483 = vld [vmem:[#allocation2 + $0x78] sm:$0xf]
      %v5484 = vld [vmem:[#allocation2 + $0x7c] sm:$0xf]
      %v5485 = vld [vmem:[#allocation2 + $0x84] sm:$0xf]
      %v5486 = vld [vmem:[#allocation2 + $0x88] sm:$0xf]
      %v5487 = vld [vmem:[#allocation2 + $0x90] sm:$0xf]
      %v5488 = vld [vmem:[#allocation2 + $0x94] sm:$0xf]
      %v5489 = vld [vmem:[#allocation2 + $0x9c] sm:$0xf]
      %v5490 = vld [vmem:[#allocation2 + $0xa0] sm:$0xf]
      %v5491 = vld [vmem:[#allocation2 + $0xa8] sm:$0xf]
      %v5492 = vld [vmem:[#allocation2 + $0xac] sm:$0xf]
      %v5493 = vld [vmem:[#allocation2 + $0xb4] sm:$0xf]
      %v5494 = vld [vmem:[#allocation2 + $0xb8] sm:$0xf]
      %5495 = vst.msk [vmem:[#allocation3] sm:$0xf] %vm566, %v5463
      %5496 = vst.msk [vmem:[#allocation3 + $0x4] sm:$0xf] %vm566, %v5464
      %5497 = vst.msk [vmem:[#allocation3 + $0x8] sm:$0xf] %vm566, %v5465
      %5498 = vst.msk [vmem:[#allocation3 + $0xc] sm:$0xf] %vm566, %v5466
      %5499 = vst.msk [vmem:[#allocation3 + $0x10] sm:$0xf] %vm566, %v5467
      %5500 = vst.msk [vmem:[#allocation3 + $0x14] sm:$0xf] %vm566, %v5468
      %5501 = vst.msk [vmem:[#allocation3 + $0x18] sm:$0xf] %vm566, %v5469
      %5502 = vst.msk [vmem:[#allocation3 + $0x1c] sm:$0xf] %vm566, %v5470
      %5503 = vst.msk [vmem:[#allocation3 + $0x20] sm:$0xf] %vm566, %v5471
      %5504 = vst.msk [vmem:[#allocation3 + $0x24] sm:$0xf] %vm566, %v5472
      %5505 = vst.msk [vmem:[#allocation3 + $0x28] sm:$0xf] %vm566, %v5473
      %5506 = vst.msk [vmem:[#allocation3 + $0x2c] sm:$0xf] %vm566, %v5474
      %5507 = vst.msk [vmem:[#allocation3 + $0x30] sm:$0xf] %vm566, %v5475
      %5508 = vst.msk [vmem:[#allocation3 + $0x34] sm:$0xf] %vm566, %v5476
      %5509 = vst.msk [vmem:[#allocation3 + $0x38] sm:$0xf] %vm566, %v5477
      %5510 = vst.msk [vmem:[#allocation3 + $0x3c] sm:$0xf] %vm566, %v5478
      %5511 = vst.msk [vmem:[#allocation3 + $0x40] sm:$0xf] %vm566, %v5479
      %5512 = vst.msk [vmem:[#allocation3 + $0x44] sm:$0xf] %vm566, %v5480
      %5513 = vst.msk [vmem:[#allocation3 + $0x48] sm:$0xf] %vm566, %v5481
      %5514 = vst.msk [vmem:[#allocation3 + $0x4c] sm:$0xf] %vm566, %v5482
      %5515 = vst.msk [vmem:[#allocation3 + $0x50] sm:$0xf] %vm566, %v5483
      %5516 = vst.msk [vmem:[#allocation3 + $0x54] sm:$0xf] %vm566, %v5484
      %5517 = vst.msk [vmem:[#allocation3 + $0x58] sm:$0xf] %vm566, %v5485
      %5518 = vst.msk [vmem:[#allocation3 + $0x5c] sm:$0xf] %vm566, %v5486
      %5519 = vst.msk [vmem:[#allocation3 + $0x60] sm:$0xf] %vm566, %v5487
      %5520 = vst.msk [vmem:[#allocation3 + $0x64] sm:$0xf] %vm566, %v5488
      %5521 = vst.msk [vmem:[#allocation3 + $0x68] sm:$0xf] %vm566, %v5489
      %5522 = vst.msk [vmem:[#allocation3 + $0x6c] sm:$0xf] %vm566, %v5490
      %5523 = vst.msk [vmem:[#allocation3 + $0x70] sm:$0xf] %vm566, %v5491
      %5524 = vst.msk [vmem:[#allocation3 + $0x74] sm:$0xf] %vm566, %v5492
      %5525 = vst.msk [vmem:[#allocation3 + $0x78] sm:$0xf] %vm566, %v5493
      %5526 = vst.msk [vmem:[#allocation3 + $0x7c] sm:$0xf] %vm566, %v5494
      %v5527 = vld [vmem:[#allocation2] sm:$0xf]
      %v5528 = vld [vmem:[#allocation2 + $0x4] sm:$0xf]
      %v5529 = vld [vmem:[#allocation2 + $0x8] sm:$0x1]
      %v5530 = vld [vmem:[#allocation2 + $0xc] sm:$0xf]
      %v5531 = vld [vmem:[#allocation2 + $0x10] sm:$0xf]
      %v5532 = vld [vmem:[#allocation2 + $0x14] sm:$0x1]
      %v5533 = vld [vmem:[#allocation2 + $0x18] sm:$0xf]
      %v5534 = vld [vmem:[#allocation2 + $0x1c] sm:$0xf]
      %v5535 = vld [vmem:[#allocation2 + $0x20] sm:$0x1]
      %v5536 = vld [vmem:[#allocation2 + $0x24] sm:$0xf]
      %v5537 = vld [vmem:[#allocation2 + $0x28] sm:$0xf]
      %v5538 = vld [vmem:[#allocation2 + $0x2c] sm:$0x1]
      %v5539 = vld [vmem:[#allocation2 + $0x30] sm:$0xf]
      %v5540 = vld [vmem:[#allocation2 + $0x34] sm:$0xf]
      %v5541 = vld [vmem:[#allocation2 + $0x38] sm:$0x1]
      %v5542 = vld [vmem:[#allocation2 + $0x3c] sm:$0xf]
      %v5543 = vld [vmem:[#allocation2 + $0x40] sm:$0xf]
      %v5544 = vld [vmem:[#allocation2 + $0x44] sm:$0x1]
      %v5545 = vld [vmem:[#allocation2 + $0x48] sm:$0xf]
      %v5546 = vld [vmem:[#allocation2 + $0x4c] sm:$0xf]
      %v5547 = vld [vmem:[#allocation2 + $0x50] sm:$0x1]
      %v5548 = vld [vmem:[#allocation2 + $0x54] sm:$0xf]
      %v5549 = vld [vmem:[#allocation2 + $0x58] sm:$0xf]
      %v5550 = vld [vmem:[#allocation2 + $0x5c] sm:$0x1]
      %v5551 = vld [vmem:[#allocation2 + $0x60] sm:$0xf]
      %v5552 = vld [vmem:[#allocation2 + $0x64] sm:$0xf]
      %v5553 = vld [vmem:[#allocation2 + $0x68] sm:$0x1]
      %v5554 = vld [vmem:[#allocation2 + $0x6c] sm:$0xf]
      %v5555 = vld [vmem:[#allocation2 + $0x70] sm:$0xf]
      %v5556 = vld [vmem:[#allocation2 + $0x74] sm:$0x1]
      %v5557 = vld [vmem:[#allocation2 + $0x78] sm:$0xf]
      %v5558 = vld [vmem:[#allocation2 + $0x7c] sm:$0xf]
      %v5559 = vld [vmem:[#allocation2 + $0x80] sm:$0x1]
      %v5560 = vld [vmem:[#allocation2 + $0x84] sm:$0xf]
      %v5561 = vld [vmem:[#allocation2 + $0x88] sm:$0xf]
      %v5562 = vld [vmem:[#allocation2 + $0x8c] sm:$0x1]
      %v5563 = vld [vmem:[#allocation2 + $0x90] sm:$0xf]
      %v5564 = vld [vmem:[#allocation2 + $0x94] sm:$0xf]
      %v5565 = vld [vmem:[#allocation2 + $0x98] sm:$0x1]
      %v5566 = vld [vmem:[#allocation2 + $0x9c] sm:$0xf]
      %v5567 = vld [vmem:[#allocation2 + $0xa0] sm:$0xf]
      %v5568 = vld [vmem:[#allocation2 + $0xa4] sm:$0x1]
      %v5569 = vld [vmem:[#allocation2 + $0xa8] sm:$0xf]
      %v5570 = vld [vmem:[#allocation2 + $0xac] sm:$0xf]
      %v5571 = vld [vmem:[#allocation2 + $0xb0] sm:$0x1]
      %v5572 = vld [vmem:[#allocation2 + $0xb4] sm:$0xf]
      %v5573 = vld [vmem:[#allocation2 + $0xb8] sm:$0xf]
      %v5574 = vld [vmem:[#allocation2 + $0xbc] sm:$0x1]
      %v5576 = vshrl.u32 %v5527, 16
      %v5578 = vrot.slane %v5576, 4
      %v5579 = vshll.u32 %v5527, 16
      %v5581 = vrot.slane %v5579, 5
      %v5582 = vor.u32 %v5578, %v5581
      %v5583 = vrot.slane %v5582, 4
      %v5585 = vshll.u32 %v5528, 16
      %v5587 = vrot.slane %v5585, 5
      %v5588 = vsel %vm1096, %v5583, %v5587
      %v5589 = vshrl.u32 %v5528, 16
      %v5591 = vrot.slane %v5589, 4
      %v5592 = vor.u32 %v5591, %v5587
      %v5593 = vrot.slane %v5592, 4
      %v5595 = vshll.u32 %v5529, 16
      %v5597 = vrot.slane %v5595, 5
      %v5598 = vsel %vm1096, %v5593, %v5597
      %v5600 = vshrl.u32 %v5530, 16
      %v5602 = vrot.slane %v5600, 4
      %v5603 = vshll.u32 %v5530, 16
      %v5605 = vrot.slane %v5603, 5
      %v5606 = vor.u32 %v5602, %v5605
      %v5607 = vrot.slane %v5606, 4
      %v5609 = vshll.u32 %v5531, 16
      %v5611 = vrot.slane %v5609, 5
      %v5612 = vsel %vm1096, %v5607, %v5611
      %v5613 = vshrl.u32 %v5531, 16
      %v5615 = vrot.slane %v5613, 4
      %v5616 = vor.u32 %v5615, %v5611
      %v5617 = vrot.slane %v5616, 4
      %v5619 = vshll.u32 %v5532, 16
      %v5621 = vrot.slane %v5619, 5
      %v5622 = vsel %vm1096, %v5617, %v5621
      %v5624 = vshrl.u32 %v5533, 16
      %v5626 = vrot.slane %v5624, 4
      %v5627 = vshll.u32 %v5533, 16
      %v5629 = vrot.slane %v5627, 5
      %v5630 = vor.u32 %v5626, %v5629
      %v5631 = vrot.slane %v5630, 4
      %v5633 = vshll.u32 %v5534, 16
      %v5635 = vrot.slane %v5633, 5
      %v5636 = vsel %vm1096, %v5631, %v5635
      %v5637 = vshrl.u32 %v5534, 16
      %v5639 = vrot.slane %v5637, 4
      %v5640 = vor.u32 %v5639, %v5635
      %v5641 = vrot.slane %v5640, 4
      %v5643 = vshll.u32 %v5535, 16
      %v5645 = vrot.slane %v5643, 5
      %v5646 = vsel %vm1096, %v5641, %v5645
      %v5648 = vshrl.u32 %v5536, 16
      %v5650 = vrot.slane %v5648, 4
      %v5651 = vshll.u32 %v5536, 16
      %v5653 = vrot.slane %v5651, 5
      %v5654 = vor.u32 %v5650, %v5653
      %v5655 = vrot.slane %v5654, 4
      %v5657 = vshll.u32 %v5537, 16
      %v5659 = vrot.slane %v5657, 5
      %v5660 = vsel %vm1096, %v5655, %v5659
      %v5661 = vshrl.u32 %v5537, 16
      %v5663 = vrot.slane %v5661, 4
      %v5664 = vor.u32 %v5663, %v5659
      %v5665 = vrot.slane %v5664, 4
      %v5667 = vshll.u32 %v5538, 16
      %v5669 = vrot.slane %v5667, 5
      %v5670 = vsel %vm1096, %v5665, %v5669
      %v5672 = vshrl.u32 %v5539, 16
      %v5674 = vrot.slane %v5672, 4
      %v5675 = vshll.u32 %v5539, 16
      %v5677 = vrot.slane %v5675, 5
      %v5678 = vor.u32 %v5674, %v5677
      %v5679 = vrot.slane %v5678, 4
      %v5681 = vshll.u32 %v5540, 16
      %v5683 = vrot.slane %v5681, 5
      %v5684 = vsel %vm1096, %v5679, %v5683
      %v5685 = vshrl.u32 %v5540, 16
      %v5687 = vrot.slane %v5685, 4
      %v5688 = vor.u32 %v5687, %v5683
      %v5689 = vrot.slane %v5688, 4
      %v5691 = vshll.u32 %v5541, 16
      %v5693 = vrot.slane %v5691, 5
      %v5694 = vsel %vm1096, %v5689, %v5693
      %v5696 = vshrl.u32 %v5542, 16
      %v5698 = vrot.slane %v5696, 4
      %v5699 = vshll.u32 %v5542, 16
      %v5701 = vrot.slane %v5699, 5
      %v5702 = vor.u32 %v5698, %v5701
      %v5703 = vrot.slane %v5702, 4
      %v5705 = vshll.u32 %v5543, 16
      %v5707 = vrot.slane %v5705, 5
      %v5708 = vsel %vm1096, %v5703, %v5707
      %v5709 = vshrl.u32 %v5543, 16
      %v5711 = vrot.slane %v5709, 4
      %v5712 = vor.u32 %v5711, %v5707
      %v5713 = vrot.slane %v5712, 4
      %v5715 = vshll.u32 %v5544, 16
      %v5717 = vrot.slane %v5715, 5
      %v5718 = vsel %vm1096, %v5713, %v5717
      %v5720 = vshrl.u32 %v5545, 16
      %v5722 = vrot.slane %v5720, 4
      %v5723 = vshll.u32 %v5545, 16
      %v5725 = vrot.slane %v5723, 5
      %v5726 = vor.u32 %v5722, %v5725
      %v5727 = vrot.slane %v5726, 4
      %v5729 = vshll.u32 %v5546, 16
      %v5731 = vrot.slane %v5729, 5
      %v5732 = vsel %vm1096, %v5727, %v5731
      %v5733 = vshrl.u32 %v5546, 16
      %v5735 = vrot.slane %v5733, 4
      %v5736 = vor.u32 %v5735, %v5731
      %v5737 = vrot.slane %v5736, 4
      %v5739 = vshll.u32 %v5547, 16
      %v5741 = vrot.slane %v5739, 5
      %v5742 = vsel %vm1096, %v5737, %v5741
      %v5744 = vshrl.u32 %v5548, 16
      %v5746 = vrot.slane %v5744, 4
      %v5747 = vshll.u32 %v5548, 16
      %v5749 = vrot.slane %v5747, 5
      %v5750 = vor.u32 %v5746, %v5749
      %v5751 = vrot.slane %v5750, 4
      %v5753 = vshll.u32 %v5549, 16
      %v5755 = vrot.slane %v5753, 5
      %v5756 = vsel %vm1096, %v5751, %v5755
      %v5757 = vshrl.u32 %v5549, 16
      %v5759 = vrot.slane %v5757, 4
      %v5760 = vor.u32 %v5759, %v5755
      %v5761 = vrot.slane %v5760, 4
      %v5763 = vshll.u32 %v5550, 16
      %v5765 = vrot.slane %v5763, 5
      %v5766 = vsel %vm1096, %v5761, %v5765
      %v5768 = vshrl.u32 %v5551, 16
      %v5770 = vrot.slane %v5768, 4
      %v5771 = vshll.u32 %v5551, 16
      %v5773 = vrot.slane %v5771, 5
      %v5774 = vor.u32 %v5770, %v5773
      %v5775 = vrot.slane %v5774, 4
      %v5777 = vshll.u32 %v5552, 16
      %v5779 = vrot.slane %v5777, 5
      %v5780 = vsel %vm1096, %v5775, %v5779
      %v5781 = vshrl.u32 %v5552, 16
      %v5783 = vrot.slane %v5781, 4
      %v5784 = vor.u32 %v5783, %v5779
      %v5785 = vrot.slane %v5784, 4
      %v5787 = vshll.u32 %v5553, 16
      %v5789 = vrot.slane %v5787, 5
      %v5790 = vsel %vm1096, %v5785, %v5789
      %v5792 = vshrl.u32 %v5554, 16
      %v5794 = vrot.slane %v5792, 4
      %v5795 = vshll.u32 %v5554, 16
      %v5797 = vrot.slane %v5795, 5
      %v5798 = vor.u32 %v5794, %v5797
      %v5799 = vrot.slane %v5798, 4
      %v5801 = vshll.u32 %v5555, 16
      %v5803 = vrot.slane %v5801, 5
      %v5804 = vsel %vm1096, %v5799, %v5803
      %v5805 = vshrl.u32 %v5555, 16
      %v5807 = vrot.slane %v5805, 4
      %v5808 = vor.u32 %v5807, %v5803
      %v5809 = vrot.slane %v5808, 4
      %v5811 = vshll.u32 %v5556, 16
      %v5813 = vrot.slane %v5811, 5
      %v5814 = vsel %vm1096, %v5809, %v5813
      %v5816 = vshrl.u32 %v5557, 16
      %v5818 = vrot.slane %v5816, 4
      %v5819 = vshll.u32 %v5557, 16
      %v5821 = vrot.slane %v5819, 5
      %v5822 = vor.u32 %v5818, %v5821
      %v5823 = vrot.slane %v5822, 4
      %v5825 = vshll.u32 %v5558, 16
      %v5827 = vrot.slane %v5825, 5
      %v5828 = vsel %vm1096, %v5823, %v5827
      %v5829 = vshrl.u32 %v5558, 16
      %v5831 = vrot.slane %v5829, 4
      %v5832 = vor.u32 %v5831, %v5827
      %v5833 = vrot.slane %v5832, 4
      %v5835 = vshll.u32 %v5559, 16
      %v5837 = vrot.slane %v5835, 5
      %v5838 = vsel %vm1096, %v5833, %v5837
      %v5840 = vshrl.u32 %v5560, 16
      %v5842 = vrot.slane %v5840, 4
      %v5843 = vshll.u32 %v5560, 16
      %v5845 = vrot.slane %v5843, 5
      %v5846 = vor.u32 %v5842, %v5845
      %v5847 = vrot.slane %v5846, 4
      %v5849 = vshll.u32 %v5561, 16
      %v5851 = vrot.slane %v5849, 5
      %v5852 = vsel %vm1096, %v5847, %v5851
      %v5853 = vshrl.u32 %v5561, 16
      %v5855 = vrot.slane %v5853, 4
      %v5856 = vor.u32 %v5855, %v5851
      %v5857 = vrot.slane %v5856, 4
      %v5859 = vshll.u32 %v5562, 16
      %v5861 = vrot.slane %v5859, 5
      %v5862 = vsel %vm1096, %v5857, %v5861
      %v5864 = vshrl.u32 %v5563, 16
      %v5866 = vrot.slane %v5864, 4
      %v5867 = vshll.u32 %v5563, 16
      %v5869 = vrot.slane %v5867, 5
      %v5870 = vor.u32 %v5866, %v5869
      %v5871 = vrot.slane %v5870, 4
      %v5873 = vshll.u32 %v5564, 16
      %v5875 = vrot.slane %v5873, 5
      %v5876 = vsel %vm1096, %v5871, %v5875
      %v5877 = vshrl.u32 %v5564, 16
      %v5879 = vrot.slane %v5877, 4
      %v5880 = vor.u32 %v5879, %v5875
      %v5881 = vrot.slane %v5880, 4
      %v5883 = vshll.u32 %v5565, 16
      %v5885 = vrot.slane %v5883, 5
      %v5886 = vsel %vm1096, %v5881, %v5885
      %v5888 = vshrl.u32 %v5566, 16
      %v5890 = vrot.slane %v5888, 4
      %v5891 = vshll.u32 %v5566, 16
      %v5893 = vrot.slane %v5891, 5
      %v5894 = vor.u32 %v5890, %v5893
      %v5895 = vrot.slane %v5894, 4
      %v5897 = vshll.u32 %v5567, 16
      %v5899 = vrot.slane %v5897, 5
      %v5900 = vsel %vm1096, %v5895, %v5899
      %v5901 = vshrl.u32 %v5567, 16
      %v5903 = vrot.slane %v5901, 4
      %v5904 = vor.u32 %v5903, %v5899
      %v5905 = vrot.slane %v5904, 4
      %v5907 = vshll.u32 %v5568, 16
      %v5909 = vrot.slane %v5907, 5
      %v5910 = vsel %vm1096, %v5905, %v5909
      %v5912 = vshrl.u32 %v5569, 16
      %v5914 = vrot.slane %v5912, 4
      %v5915 = vshll.u32 %v5569, 16
      %v5917 = vrot.slane %v5915, 5
      %v5918 = vor.u32 %v5914, %v5917
      %v5919 = vrot.slane %v5918, 4
      %v5921 = vshll.u32 %v5570, 16
      %v5923 = vrot.slane %v5921, 5
      %v5924 = vsel %vm1096, %v5919, %v5923
      %v5925 = vshrl.u32 %v5570, 16
      %v5927 = vrot.slane %v5925, 4
      %v5928 = vor.u32 %v5927, %v5923
      %v5929 = vrot.slane %v5928, 4
      %v5931 = vshll.u32 %v5571, 16
      %v5933 = vrot.slane %v5931, 5
      %v5934 = vsel %vm1096, %v5929, %v5933
      %v5936 = vshrl.u32 %v5572, 16
      %v5938 = vrot.slane %v5936, 4
      %v5939 = vshll.u32 %v5572, 16
      %v5941 = vrot.slane %v5939, 5
      %v5942 = vor.u32 %v5938, %v5941
      %v5943 = vrot.slane %v5942, 4
      %v5945 = vshll.u32 %v5573, 16
      %v5947 = vrot.slane %v5945, 5
      %v5948 = vsel %vm1096, %v5943, %v5947
      %v5949 = vshrl.u32 %v5573, 16
      %v5951 = vrot.slane %v5949, 4
      %v5952 = vor.u32 %v5951, %v5947
      %v5953 = vrot.slane %v5952, 4
      %v5955 = vshll.u32 %v5574, 16
      %v5957 = vrot.slane %v5955, 5
      %v5958 = vsel %vm1096, %v5953, %v5957
      %5959 = vrot.lane.b32.xlu0 %v5588, 4
      %v5960 = vpop.permute.xlu0 %5959
      %5961 = vrot.lane.b32.xlu0 %v5598, 4
      %v5962 = vpop.permute.xlu0 %5961
      %5963 = vrot.lane.b32.xlu0 %v5612, 4
      %v5964 = vpop.permute.xlu0 %5963
      %5965 = vrot.lane.b32.xlu0 %v5622, 4
      %v5966 = vpop.permute.xlu0 %5965
      %5967 = vrot.lane.b32.xlu0 %v5636, 4
      %v5968 = vpop.permute.xlu0 %5967
      %5969 = vrot.lane.b32.xlu0 %v5646, 4
      %v5970 = vpop.permute.xlu0 %5969
      %5971 = vrot.lane.b32.xlu0 %v5660, 4
      %v5972 = vpop.permute.xlu0 %5971
      %5973 = vrot.lane.b32.xlu0 %v5670, 4
      %v5974 = vpop.permute.xlu0 %5973
      %5975 = vrot.lane.b32.xlu0 %v5684, 4
      %v5976 = vpop.permute.xlu0 %5975
      %5977 = vrot.lane.b32.xlu0 %v5694, 4
      %v5978 = vpop.permute.xlu0 %5977
      %5979 = vrot.lane.b32.xlu0 %v5708, 4
      %v5980 = vpop.permute.xlu0 %5979
      %5981 = vrot.lane.b32.xlu0 %v5718, 4
      %v5982 = vpop.permute.xlu0 %5981
      %5983 = vrot.lane.b32.xlu0 %v5732, 4
      %v5984 = vpop.permute.xlu0 %5983
      %5985 = vrot.lane.b32.xlu0 %v5742, 4
      %v5986 = vpop.permute.xlu0 %5985
      %5987 = vrot.lane.b32.xlu0 %v5756, 4
      %v5988 = vpop.permute.xlu0 %5987
      %5989 = vrot.lane.b32.xlu0 %v5766, 4
      %v5990 = vpop.permute.xlu0 %5989
      %5991 = vrot.lane.b32.xlu0 %v5780, 4
      %v5992 = vpop.permute.xlu0 %5991
      %5993 = vrot.lane.b32.xlu0 %v5790, 4
      %v5994 = vpop.permute.xlu0 %5993
      %5995 = vrot.lane.b32.xlu0 %v5804, 4
      %v5996 = vpop.permute.xlu0 %5995
      %5997 = vrot.lane.b32.xlu0 %v5814, 4
      %v5998 = vpop.permute.xlu0 %5997
      %5999 = vrot.lane.b32.xlu0 %v5828, 4
      %v6000 = vpop.permute.xlu0 %5999
      %6001 = vrot.lane.b32.xlu0 %v5838, 4
      %v6002 = vpop.permute.xlu0 %6001
      %6003 = vrot.lane.b32.xlu0 %v5852, 4
      %v6004 = vpop.permute.xlu0 %6003
      %6005 = vrot.lane.b32.xlu0 %v5862, 4
      %v6006 = vpop.permute.xlu0 %6005
      %6007 = vrot.lane.b32.xlu0 %v5876, 4
      %v6008 = vpop.permute.xlu0 %6007
      %6009 = vrot.lane.b32.xlu0 %v5886, 4
      %v6010 = vpop.permute.xlu0 %6009
      %6011 = vrot.lane.b32.xlu0 %v5900, 4
      %v6012 = vpop.permute.xlu0 %6011
      %6013 = vrot.lane.b32.xlu0 %v5910, 4
      %v6014 = vpop.permute.xlu0 %6013
      %6015 = vrot.lane.b32.xlu0 %v5924, 4
      %v6016 = vpop.permute.xlu0 %6015
      %6017 = vrot.lane.b32.xlu0 %v5934, 4
      %v6018 = vpop.permute.xlu0 %6017
      %6019 = vrot.lane.b32.xlu0 %v5948, 4
      %v6020 = vpop.permute.xlu0 %6019
      %6021 = vrot.lane.b32.xlu0 %v5958, 4
      %v6022 = vpop.permute.xlu0 %6021
      %6055 = vst.msk [vmem:[#allocation3] sm:$0xf] %vm1577, %v5960
      %6056 = vst.msk [vmem:[#allocation3 + $0x4] sm:$0xf] %vm1577, %v5962
      %6057 = vst.msk [vmem:[#allocation3 + $0x8] sm:$0xf] %vm1577, %v5964
      %6058 = vst.msk [vmem:[#allocation3 + $0xc] sm:$0xf] %vm1577, %v5966
      %6059 = vst.msk [vmem:[#allocation3 + $0x10] sm:$0xf] %vm1577, %v5968
      %6060 = vst.msk [vmem:[#allocation3 + $0x14] sm:$0xf] %vm1577, %v5970
      %6061 = vst.msk [vmem:[#allocation3 + $0x18] sm:$0xf] %vm1577, %v5972
      %6062 = vst.msk [vmem:[#allocation3 + $0x1c] sm:$0xf] %vm1577, %v5974
      %6063 = vst.msk [vmem:[#allocation3 + $0x20] sm:$0xf] %vm1577, %v5976
      %6064 = vst.msk [vmem:[#allocation3 + $0x24] sm:$0xf] %vm1577, %v5978
      %6065 = vst.msk [vmem:[#allocation3 + $0x28] sm:$0xf] %vm1577, %v5980
      %6066 = vst.msk [vmem:[#allocation3 + $0x2c] sm:$0xf] %vm1577, %v5982
      %6067 = vst.msk [vmem:[#allocation3 + $0x30] sm:$0xf] %vm1577, %v5984
      %6068 = vst.msk [vmem:[#allocation3 + $0x34] sm:$0xf] %vm1577, %v5986
      %6069 = vst.msk [vmem:[#allocation3 + $0x38] sm:$0xf] %vm1577, %v5988
      %6070 = vst.msk [vmem:[#allocation3 + $0x3c] sm:$0xf] %vm1577, %v5990
      %6071 = vst.msk [vmem:[#allocation3 + $0x40] sm:$0xf] %vm1577, %v5992
      %6072 = vst.msk [vmem:[#allocation3 + $0x44] sm:$0xf] %vm1577, %v5994
      %6073 = vst.msk [vmem:[#allocation3 + $0x48] sm:$0xf] %vm1577, %v5996
      %6074 = vst.msk [vmem:[#allocation3 + $0x4c] sm:$0xf] %vm1577, %v5998
      %6075 = vst.msk [vmem:[#allocation3 + $0x50] sm:$0xf] %vm1577, %v6000
      %6076 = vst.msk [vmem:[#allocation3 + $0x54] sm:$0xf] %vm1577, %v6002
      %6077 = vst.msk [vmem:[#allocation3 + $0x58] sm:$0xf] %vm1577, %v6004
      %6078 = vst.msk [vmem:[#allocation3 + $0x5c] sm:$0xf] %vm1577, %v6006
      %6079 = vst.msk [vmem:[#allocation3 + $0x60] sm:$0xf] %vm1577, %v6008
      %6080 = vst.msk [vmem:[#allocation3 + $0x64] sm:$0xf] %vm1577, %v6010
      %6081 = vst.msk [vmem:[#allocation3 + $0x68] sm:$0xf] %vm1577, %v6012
      %6082 = vst.msk [vmem:[#allocation3 + $0x6c] sm:$0xf] %vm1577, %v6014
      %6083 = vst.msk [vmem:[#allocation3 + $0x70] sm:$0xf] %vm1577, %v6016
      %6084 = vst.msk [vmem:[#allocation3 + $0x74] sm:$0xf] %vm1577, %v6018
      %6085 = vst.msk [vmem:[#allocation3 + $0x78] sm:$0xf] %vm1577, %v6020
      %6086 = vst.msk [vmem:[#allocation3 + $0x7c] sm:$0xf] %vm1577, %v6022
      %v6087 = vld [vmem:[#allocation2] sm:$0xe]
      %v6088 = vld [vmem:[#allocation2 + $0x4] sm:$0xf]
      %v6089 = vld [vmem:[#allocation2 + $0x8] sm:$0x1]
      %v6090 = vld [vmem:[#allocation2 + $0xc] sm:$0xe]
      %v6091 = vld [vmem:[#allocation2 + $0x10] sm:$0xf]
      %v6092 = vld [vmem:[#allocation2 + $0x14] sm:$0x1]
      %v6093 = vld [vmem:[#allocation2 + $0x18] sm:$0xe]
      %v6094 = vld [vmem:[#allocation2 + $0x1c] sm:$0xf]
      %v6095 = vld [vmem:[#allocation2 + $0x20] sm:$0x1]
      %v6096 = vld [vmem:[#allocation2 + $0x24] sm:$0xe]
      %v6097 = vld [vmem:[#allocation2 + $0x28] sm:$0xf]
      %v6098 = vld [vmem:[#allocation2 + $0x2c] sm:$0x1]
      %v6099 = vld [vmem:[#allocation2 + $0x30] sm:$0xe]
      %v6100 = vld [vmem:[#allocation2 + $0x34] sm:$0xf]
      %v6101 = vld [vmem:[#allocation2 + $0x38] sm:$0x1]
      %v6102 = vld [vmem:[#allocation2 + $0x3c] sm:$0xe]
      %v6103 = vld [vmem:[#allocation2 + $0x40] sm:$0xf]
      %v6104 = vld [vmem:[#allocation2 + $0x44] sm:$0x1]
      %v6105 = vld [vmem:[#allocation2 + $0x48] sm:$0xe]
      %v6106 = vld [vmem:[#allocation2 + $0x4c] sm:$0xf]
      %v6107 = vld [vmem:[#allocation2 + $0x50] sm:$0x1]
      %v6108 = vld [vmem:[#allocation2 + $0x54] sm:$0xe]
      %v6109 = vld [vmem:[#allocation2 + $0x58] sm:$0xf]
      %v6110 = vld [vmem:[#allocation2 + $0x5c] sm:$0x1]
      %v6111 = vld [vmem:[#allocation2 + $0x60] sm:$0xe]
      %v6112 = vld [vmem:[#allocation2 + $0x64] sm:$0xf]
      %v6113 = vld [vmem:[#allocation2 + $0x68] sm:$0x1]
      %v6114 = vld [vmem:[#allocation2 + $0x6c] sm:$0xe]
      %v6115 = vld [vmem:[#allocation2 + $0x70] sm:$0xf]
      %v6116 = vld [vmem:[#allocation2 + $0x74] sm:$0x1]
      %v6117 = vld [vmem:[#allocation2 + $0x78] sm:$0xe]
      %v6118 = vld [vmem:[#allocation2 + $0x7c] sm:$0xf]
      %v6119 = vld [vmem:[#allocation2 + $0x80] sm:$0x1]
      %v6120 = vld [vmem:[#allocation2 + $0x84] sm:$0xe]
      %v6121 = vld [vmem:[#allocation2 + $0x88] sm:$0xf]
      %v6122 = vld [vmem:[#allocation2 + $0x8c] sm:$0x1]
      %v6123 = vld [vmem:[#allocation2 + $0x90] sm:$0xe]
      %v6124 = vld [vmem:[#allocation2 + $0x94] sm:$0xf]
      %v6125 = vld [vmem:[#allocation2 + $0x98] sm:$0x1]
      %v6126 = vld [vmem:[#allocation2 + $0x9c] sm:$0xe]
      %v6127 = vld [vmem:[#allocation2 + $0xa0] sm:$0xf]
      %v6128 = vld [vmem:[#allocation2 + $0xa4] sm:$0x1]
      %v6129 = vld [vmem:[#allocation2 + $0xa8] sm:$0xe]
      %v6130 = vld [vmem:[#allocation2 + $0xac] sm:$0xf]
      %v6131 = vld [vmem:[#allocation2 + $0xb0] sm:$0x1]
      %v6132 = vld [vmem:[#allocation2 + $0xb4] sm:$0xe]
      %v6133 = vld [vmem:[#allocation2 + $0xb8] sm:$0xf]
      %v6134 = vld [vmem:[#allocation2 + $0xbc] sm:$0x1]
      %v6183 = vrot.slane %v6087, 5
      %v6184 = vrot.slane %v6183, 4
      %v6185 = vrot.slane %v6088, 5
      %v6186 = vsel %vm1708, %v6184, %v6185
      %v6187 = vrot.slane %v6185, 4
      %v6188 = vrot.slane %v6089, 5
      %v6189 = vsel %vm1708, %v6187, %v6188
      %v6190 = vrot.slane %v6090, 5
      %v6191 = vrot.slane %v6190, 4
      %v6192 = vrot.slane %v6091, 5
      %v6193 = vsel %vm1708, %v6191, %v6192
      %v6194 = vrot.slane %v6192, 4
      %v6195 = vrot.slane %v6092, 5
      %v6196 = vsel %vm1708, %v6194, %v6195
      %v6197 = vrot.slane %v6093, 5
      %v6198 = vrot.slane %v6197, 4
      %v6199 = vrot.slane %v6094, 5
      %v6200 = vsel %vm1708, %v6198, %v6199
      %v6201 = vrot.slane %v6199, 4
      %v6202 = vrot.slane %v6095, 5
      %v6203 = vsel %vm1708, %v6201, %v6202
      %v6204 = vrot.slane %v6096, 5
      %v6205 = vrot.slane %v6204, 4
      %v6206 = vrot.slane %v6097, 5
      %v6207 = vsel %vm1708, %v6205, %v6206
      %v6208 = vrot.slane %v6206, 4
      %v6209 = vrot.slane %v6098, 5
      %v6210 = vsel %vm1708, %v6208, %v6209
      %v6211 = vrot.slane %v6099, 5
      %v6212 = vrot.slane %v6211, 4
      %v6213 = vrot.slane %v6100, 5
      %v6214 = vsel %vm1708, %v6212, %v6213
      %v6215 = vrot.slane %v6213, 4
      %v6216 = vrot.slane %v6101, 5
      %v6217 = vsel %vm1708, %v6215, %v6216
      %v6218 = vrot.slane %v6102, 5
      %v6219 = vrot.slane %v6218, 4
      %v6220 = vrot.slane %v6103, 5
      %v6221 = vsel %vm1708, %v6219, %v6220
      %v6222 = vrot.slane %v6220, 4
      %v6223 = vrot.slane %v6104, 5
      %v6224 = vsel %vm1708, %v6222, %v6223
      %v6225 = vrot.slane %v6105, 5
      %v6226 = vrot.slane %v6225, 4
      %v6227 = vrot.slane %v6106, 5
      %v6228 = vsel %vm1708, %v6226, %v6227
      %v6229 = vrot.slane %v6227, 4
      %v6230 = vrot.slane %v6107, 5
      %v6231 = vsel %vm1708, %v6229, %v6230
      %v6232 = vrot.slane %v6108, 5
      %v6233 = vrot.slane %v6232, 4
      %v6234 = vrot.slane %v6109, 5
      %v6235 = vsel %vm1708, %v6233, %v6234
      %v6236 = vrot.slane %v6234, 4
      %v6237 = vrot.slane %v6110, 5
      %v6238 = vsel %vm1708, %v6236, %v6237
      %v6239 = vrot.slane %v6111, 5
      %v6240 = vrot.slane %v6239, 4
      %v6241 = vrot.slane %v6112, 5
      %v6242 = vsel %vm1708, %v6240, %v6241
      %v6243 = vrot.slane %v6241, 4
      %v6244 = vrot.slane %v6113, 5
      %v6245 = vsel %vm1708, %v6243, %v6244
      %v6246 = vrot.slane %v6114, 5
      %v6247 = vrot.slane %v6246, 4
      %v6248 = vrot.slane %v6115, 5
      %v6249 = vsel %vm1708, %v6247, %v6248
      %v6250 = vrot.slane %v6248, 4
      %v6251 = vrot.slane %v6116, 5
      %v6252 = vsel %vm1708, %v6250, %v6251
      %v6253 = vrot.slane %v6117, 5
      %v6254 = vrot.slane %v6253, 4
      %v6255 = vrot.slane %v6118, 5
      %v6256 = vsel %vm1708, %v6254, %v6255
      %v6257 = vrot.slane %v6255, 4
      %v6258 = vrot.slane %v6119, 5
      %v6259 = vsel %vm1708, %v6257, %v6258
      %v6260 = vrot.slane %v6120, 5
      %v6261 = vrot.slane %v6260, 4
      %v6262 = vrot.slane %v6121, 5
      %v6263 = vsel %vm1708, %v6261, %v6262
      %v6264 = vrot.slane %v6262, 4
      %v6265 = vrot.slane %v6122, 5
      %v6266 = vsel %vm1708, %v6264, %v6265
      %v6267 = vrot.slane %v6123, 5
      %v6268 = vrot.slane %v6267, 4
      %v6269 = vrot.slane %v6124, 5
      %v6270 = vsel %vm1708, %v6268, %v6269
      %v6271 = vrot.slane %v6269, 4
      %v6272 = vrot.slane %v6125, 5
      %v6273 = vsel %vm1708, %v6271, %v6272
      %v6274 = vrot.slane %v6126, 5
      %v6275 = vrot.slane %v6274, 4
      %v6276 = vrot.slane %v6127, 5
      %v6277 = vsel %vm1708, %v6275, %v6276
      %v6278 = vrot.slane %v6276, 4
      %v6279 = vrot.slane %v6128, 5
      %v6280 = vsel %vm1708, %v6278, %v6279
      %v6281 = vrot.slane %v6129, 5
      %v6282 = vrot.slane %v6281, 4
      %v6283 = vrot.slane %v6130, 5
      %v6284 = vsel %vm1708, %v6282, %v6283
      %v6285 = vrot.slane %v6283, 4
      %v6286 = vrot.slane %v6131, 5
      %v6287 = vsel %vm1708, %v6285, %v6286
      %v6288 = vrot.slane %v6132, 5
      %v6289 = vrot.slane %v6288, 4
      %v6290 = vrot.slane %v6133, 5
      %v6291 = vsel %vm1708, %v6289, %v6290
      %v6292 = vrot.slane %v6290, 4
      %v6293 = vrot.slane %v6134, 5
      %v6294 = vsel %vm1708, %v6292, %v6293
      %6295 = vrot.lane.b32.xlu0 %v6186, 8
      %v6296 = vpop.permute.xlu0 %6295
      %6297 = vrot.lane.b32.xlu0 %v6189, 8
      %v6298 = vpop.permute.xlu0 %6297
      %6299 = vrot.lane.b32.xlu0 %v6193, 8
      %v6300 = vpop.permute.xlu0 %6299
      %6301 = vrot.lane.b32.xlu0 %v6196, 8
      %v6302 = vpop.permute.xlu0 %6301
      %6303 = vrot.lane.b32.xlu0 %v6200, 8
      %v6304 = vpop.permute.xlu0 %6303
      %6305 = vrot.lane.b32.xlu0 %v6203, 8
      %v6306 = vpop.permute.xlu0 %6305
      %6307 = vrot.lane.b32.xlu0 %v6207, 8
      %v6308 = vpop.permute.xlu0 %6307
      %6309 = vrot.lane.b32.xlu0 %v6210, 8
      %v6310 = vpop.permute.xlu0 %6309
      %6311 = vrot.lane.b32.xlu0 %v6214, 8
      %v6312 = vpop.permute.xlu0 %6311
      %6313 = vrot.lane.b32.xlu0 %v6217, 8
      %v6314 = vpop.permute.xlu0 %6313
      %6315 = vrot.lane.b32.xlu0 %v6221, 8
      %v6316 = vpop.permute.xlu0 %6315
      %6317 = vrot.lane.b32.xlu0 %v6224, 8
      %v6318 = vpop.permute.xlu0 %6317
      %6319 = vrot.lane.b32.xlu0 %v6228, 8
      %v6320 = vpop.permute.xlu0 %6319
      %6321 = vrot.lane.b32.xlu0 %v6231, 8
      %v6322 = vpop.permute.xlu0 %6321
      %6323 = vrot.lane.b32.xlu0 %v6235, 8
      %v6324 = vpop.permute.xlu0 %6323
      %6325 = vrot.lane.b32.xlu0 %v6238, 8
      %v6326 = vpop.permute.xlu0 %6325
      %6327 = vrot.lane.b32.xlu0 %v6242, 8
      %v6328 = vpop.permute.xlu0 %6327
      %6329 = vrot.lane.b32.xlu0 %v6245, 8
      %v6330 = vpop.permute.xlu0 %6329
      %6331 = vrot.lane.b32.xlu0 %v6249, 8
      %v6332 = vpop.permute.xlu0 %6331
      %6333 = vrot.lane.b32.xlu0 %v6252, 8
      %v6334 = vpop.permute.xlu0 %6333
      %6335 = vrot.lane.b32.xlu0 %v6256, 8
      %v6336 = vpop.permute.xlu0 %6335
      %6337 = vrot.lane.b32.xlu0 %v6259, 8
      %v6338 = vpop.permute.xlu0 %6337
      %6339 = vrot.lane.b32.xlu0 %v6263, 8
      %v6340 = vpop.permute.xlu0 %6339
      %6341 = vrot.lane.b32.xlu0 %v6266, 8
      %v6342 = vpop.permute.xlu0 %6341
      %6343 = vrot.lane.b32.xlu0 %v6270, 8
      %v6344 = vpop.permute.xlu0 %6343
      %6345 = vrot.lane.b32.xlu0 %v6273, 8
      %v6346 = vpop.permute.xlu0 %6345
      %6347 = vrot.lane.b32.xlu0 %v6277, 8
      %v6348 = vpop.permute.xlu0 %6347
      %6349 = vrot.lane.b32.xlu0 %v6280, 8
      %v6350 = vpop.permute.xlu0 %6349
      %6351 = vrot.lane.b32.xlu0 %v6284, 8
      %v6352 = vpop.permute.xlu0 %6351
      %6353 = vrot.lane.b32.xlu0 %v6287, 8
      %v6354 = vpop.permute.xlu0 %6353
      %6355 = vrot.lane.b32.xlu0 %v6291, 8
      %v6356 = vpop.permute.xlu0 %6355
      %6357 = vrot.lane.b32.xlu0 %v6294, 8
      %v6358 = vpop.permute.xlu0 %6357
      %6391 = vst.msk [vmem:[#allocation3] sm:$0xf] %vm1917, %v6296
      %6392 = vst.msk [vmem:[#allocation3 + $0x4] sm:$0xf] %vm1917, %v6298
      %6393 = vst.msk [vmem:[#allocation3 + $0x8] sm:$0xf] %vm1917, %v6300
      %6394 = vst.msk [vmem:[#allocation3 + $0xc] sm:$0xf] %vm1917, %v6302
      %6395 = vst.msk [vmem:[#allocation3 + $0x10] sm:$0xf] %vm1917, %v6304
      %6396 = vst.msk [vmem:[#allocation3 + $0x14] sm:$0xf] %vm1917, %v6306
      %6397 = vst.msk [vmem:[#allocation3 + $0x18] sm:$0xf] %vm1917, %v6308
      %6398 = vst.msk [vmem:[#allocation3 + $0x1c] sm:$0xf] %vm1917, %v6310
      %6399 = vst.msk [vmem:[#allocation3 + $0x20] sm:$0xf] %vm1917, %v6312
      %6400 = vst.msk [vmem:[#allocation3 + $0x24] sm:$0xf] %vm1917, %v6314
      %6401 = vst.msk [vmem:[#allocation3 + $0x28] sm:$0xf] %vm1917, %v6316
      %6402 = vst.msk [vmem:[#allocation3 + $0x2c] sm:$0xf] %vm1917, %v6318
      %6403 = vst.msk [vmem:[#allocation3 + $0x30] sm:$0xf] %vm1917, %v6320
      %6404 = vst.msk [vmem:[#allocation3 + $0x34] sm:$0xf] %vm1917, %v6322
      %6405 = vst.msk [vmem:[#allocation3 + $0x38] sm:$0xf] %vm1917, %v6324
      %6406 = vst.msk [vmem:[#allocation3 + $0x3c] sm:$0xf] %vm1917, %v6326
      %6407 = vst.msk [vmem:[#allocation3 + $0x40] sm:$0xf] %vm1917, %v6328
      %6408 = vst.msk [vmem:[#allocation3 + $0x44] sm:$0xf] %vm1917, %v6330
      %6409 = vst.msk [vmem:[#allocation3 + $0x48] sm:$0xf] %vm1917, %v6332
      %6410 = vst.msk [vmem:[#allocation3 + $0x4c] sm:$0xf] %vm1917, %v6334
      %6411 = vst.msk [vmem:[#allocation3 + $0x50] sm:$0xf] %vm1917, %v6336
      %6412 = vst.msk [vmem:[#allocation3 + $0x54] sm:$0xf] %vm1917, %v6338
      %6413 = vst.msk [vmem:[#allocation3 + $0x58] sm:$0xf] %vm1917, %v6340
      %6414 = vst.msk [vmem:[#allocation3 + $0x5c] sm:$0xf] %vm1917, %v6342
      %6415 = vst.msk [vmem:[#allocation3 + $0x60] sm:$0xf] %vm1917, %v6344
      %6416 = vst.msk [vmem:[#allocation3 + $0x64] sm:$0xf] %vm1917, %v6346
      %6417 = vst.msk [vmem:[#allocation3 + $0x68] sm:$0xf] %vm1917, %v6348
      %6418 = vst.msk [vmem:[#allocation3 + $0x6c] sm:$0xf] %vm1917, %v6350
      %6419 = vst.msk [vmem:[#allocation3 + $0x70] sm:$0xf] %vm1917, %v6352
      %6420 = vst.msk [vmem:[#allocation3 + $0x74] sm:$0xf] %vm1917, %v6354
      %6421 = vst.msk [vmem:[#allocation3 + $0x78] sm:$0xf] %vm1917, %v6356
      %6422 = vst.msk [vmem:[#allocation3 + $0x7c] sm:$0xf] %vm1917, %v6358
      %v6423 = vld [vmem:[%s559] sm:$0xf]
      %v6424 = vld [vmem:[%s559 + $0x4] sm:$0xf]
      %v6425 = vld [vmem:[%s559 + $0xc] sm:$0xf]
      %v6426 = vld [vmem:[%s559 + $0x10] sm:$0xf]
      %v6427 = vld [vmem:[%s559 + $0x18] sm:$0xf]
      %v6428 = vld [vmem:[%s559 + $0x1c] sm:$0xf]
      %v6429 = vld [vmem:[%s559 + $0x24] sm:$0xf]
      %v6430 = vld [vmem:[%s559 + $0x28] sm:$0xf]
      %v6431 = vld [vmem:[%s559 + $0x30] sm:$0xf]
      %v6432 = vld [vmem:[%s559 + $0x34] sm:$0xf]
      %v6433 = vld [vmem:[%s559 + $0x3c] sm:$0xf]
      %v6434 = vld [vmem:[%s559 + $0x40] sm:$0xf]
      %v6435 = vld [vmem:[%s559 + $0x48] sm:$0xf]
      %v6436 = vld [vmem:[%s559 + $0x4c] sm:$0xf]
      %v6437 = vld [vmem:[%s559 + $0x54] sm:$0xf]
      %v6438 = vld [vmem:[%s559 + $0x58] sm:$0xf]
      %v6439 = vld [vmem:[%s559 + $0x60] sm:$0xf]
      %v6440 = vld [vmem:[%s559 + $0x64] sm:$0xf]
      %v6441 = vld [vmem:[%s559 + $0x6c] sm:$0xf]
      %v6442 = vld [vmem:[%s559 + $0x70] sm:$0xf]
      %v6443 = vld [vmem:[%s559 + $0x78] sm:$0xf]
      %v6444 = vld [vmem:[%s559 + $0x7c] sm:$0xf]
      %v6445 = vld [vmem:[%s559 + $0x84] sm:$0xf]
      %v6446 = vld [vmem:[%s559 + $0x88] sm:$0xf]
      %v6447 = vld [vmem:[%s559 + $0x90] sm:$0xf]
      %v6448 = vld [vmem:[%s559 + $0x94] sm:$0xf]
      %v6449 = vld [vmem:[%s559 + $0x9c] sm:$0xf]
      %v6450 = vld [vmem:[%s559 + $0xa0] sm:$0xf]
      %v6451 = vld [vmem:[%s559 + $0xa8] sm:$0xf]
      %v6452 = vld [vmem:[%s559 + $0xac] sm:$0xf]
      %v6453 = vld [vmem:[%s559 + $0xb4] sm:$0xf]
      %v6454 = vld [vmem:[%s559 + $0xb8] sm:$0xf]
      %6487 = vrot.lane.b32.xlu0 %v6423, 12
      %v6488 = vpop.permute.xlu0 %6487
      %6489 = vrot.lane.b32.xlu0 %v6424, 12
      %v6490 = vpop.permute.xlu0 %6489
      %6491 = vrot.lane.b32.xlu0 %v6425, 12
      %v6492 = vpop.permute.xlu0 %6491
      %6493 = vrot.lane.b32.xlu0 %v6426, 12
      %v6494 = vpop.permute.xlu0 %6493
      %6495 = vrot.lane.b32.xlu0 %v6427, 12
      %v6496 = vpop.permute.xlu0 %6495
      %6497 = vrot.lane.b32.xlu0 %v6428, 12
      %v6498 = vpop.permute.xlu0 %6497
      %6499 = vrot.lane.b32.xlu0 %v6429, 12
      %v6500 = vpop.permute.xlu0 %6499
      %6501 = vrot.lane.b32.xlu0 %v6430, 12
      %v6502 = vpop.permute.xlu0 %6501
      %6503 = vrot.lane.b32.xlu0 %v6431, 12
      %v6504 = vpop.permute.xlu0 %6503
      %6505 = vrot.lane.b32.xlu0 %v6432, 12
      %v6506 = vpop.permute.xlu0 %6505
      %6507 = vrot.lane.b32.xlu0 %v6433, 12
      %v6508 = vpop.permute.xlu0 %6507
      %6509 = vrot.lane.b32.xlu0 %v6434, 12
      %v6510 = vpop.permute.xlu0 %6509
      %6511 = vrot.lane.b32.xlu0 %v6435, 12
      %v6512 = vpop.permute.xlu0 %6511
      %6513 = vrot.lane.b32.xlu0 %v6436, 12
      %v6514 = vpop.permute.xlu0 %6513
      %6515 = vrot.lane.b32.xlu0 %v6437, 12
      %v6516 = vpop.permute.xlu0 %6515
      %6517 = vrot.lane.b32.xlu0 %v6438, 12
      %v6518 = vpop.permute.xlu0 %6517
      %6519 = vrot.lane.b32.xlu0 %v6439, 12
      %v6520 = vpop.permute.xlu0 %6519
      %6521 = vrot.lane.b32.xlu0 %v6440, 12
      %v6522 = vpop.permute.xlu0 %6521
      %6523 = vrot.lane.b32.xlu0 %v6441, 12
      %v6524 = vpop.permute.xlu0 %6523
      %6525 = vrot.lane.b32.xlu0 %v6442, 12
      %v6526 = vpop.permute.xlu0 %6525
      %6527 = vrot.lane.b32.xlu0 %v6443, 12
      %v6528 = vpop.permute.xlu0 %6527
      %6529 = vrot.lane.b32.xlu0 %v6444, 12
      %v6530 = vpop.permute.xlu0 %6529
      %6531 = vrot.lane.b32.xlu0 %v6445, 12
      %v6532 = vpop.permute.xlu0 %6531
      %6533 = vrot.lane.b32.xlu0 %v6446, 12
      %v6534 = vpop.permute.xlu0 %6533
      %6535 = vrot.lane.b32.xlu0 %v6447, 12
      %v6536 = vpop.permute.xlu0 %6535
      %6537 = vrot.lane.b32.xlu0 %v6448, 12
      %v6538 = vpop.permute.xlu0 %6537
      %6539 = vrot.lane.b32.xlu0 %v6449, 12
      %v6540 = vpop.permute.xlu0 %6539
      %6541 = vrot.lane.b32.xlu0 %v6450, 12
      %v6542 = vpop.permute.xlu0 %6541
      %6543 = vrot.lane.b32.xlu0 %v6451, 12
      %v6544 = vpop.permute.xlu0 %6543
      %6545 = vrot.lane.b32.xlu0 %v6452, 12
      %v6546 = vpop.permute.xlu0 %6545
      %6547 = vrot.lane.b32.xlu0 %v6453, 12
      %v6548 = vpop.permute.xlu0 %6547
      %6549 = vrot.lane.b32.xlu0 %v6454, 12
      %v6550 = vpop.permute.xlu0 %6549
      %6583 = vst.msk [vmem:[#allocation3] sm:$0xf] %vm2110, %v6488
      %6584 = vst.msk [vmem:[#allocation3 + $0x4] sm:$0xf] %vm2110, %v6490
      %6585 = vst.msk [vmem:[#allocation3 + $0x8] sm:$0xf] %vm2110, %v6492
      %6586 = vst.msk [vmem:[#allocation3 + $0xc] sm:$0xf] %vm2110, %v6494
      %6587 = vst.msk [vmem:[#allocation3 + $0x10] sm:$0xf] %vm2110, %v6496
      %6588 = vst.msk [vmem:[#allocation3 + $0x14] sm:$0xf] %vm2110, %v6498
      %6589 = vst.msk [vmem:[#allocation3 + $0x18] sm:$0xf] %vm2110, %v6500
      %6590 = vst.msk [vmem:[#allocation3 + $0x1c] sm:$0xf] %vm2110, %v6502
      %6591 = vst.msk [vmem:[#allocation3 + $0x20] sm:$0xf] %vm2110, %v6504
      %6592 = vst.msk [vmem:[#allocation3 + $0x24] sm:$0xf] %vm2110, %v6506
      %6593 = vst.msk [vmem:[#allocation3 + $0x28] sm:$0xf] %vm2110, %v6508
      %6594 = vst.msk [vmem:[#allocation3 + $0x2c] sm:$0xf] %vm2110, %v6510
      %6595 = vst.msk [vmem:[#allocation3 + $0x30] sm:$0xf] %vm2110, %v6512
      %6596 = vst.msk [vmem:[#allocation3 + $0x34] sm:$0xf] %vm2110, %v6514
      %6597 = vst.msk [vmem:[#allocation3 + $0x38] sm:$0xf] %vm2110, %v6516
      %6598 = vst.msk [vmem:[#allocation3 + $0x3c] sm:$0xf] %vm2110, %v6518
      %6599 = vst.msk [vmem:[#allocation3 + $0x40] sm:$0xf] %vm2110, %v6520
      %6600 = vst.msk [vmem:[#allocation3 + $0x44] sm:$0xf] %vm2110, %v6522
      %6601 = vst.msk [vmem:[#allocation3 + $0x48] sm:$0xf] %vm2110, %v6524
      %6602 = vst.msk [vmem:[#allocation3 + $0x4c] sm:$0xf] %vm2110, %v6526
      %6603 = vst.msk [vmem:[#allocation3 + $0x50] sm:$0xf] %vm2110, %v6528
      %6604 = vst.msk [vmem:[#allocation3 + $0x54] sm:$0xf] %vm2110, %v6530
      %6605 = vst.msk [vmem:[#allocation3 + $0x58] sm:$0xf] %vm2110, %v6532
      %6606 = vst.msk [vmem:[#allocation3 + $0x5c] sm:$0xf] %vm2110, %v6534
      %6607 = vst.msk [vmem:[#allocation3 + $0x60] sm:$0xf] %vm2110, %v6536
      %6608 = vst.msk [vmem:[#allocation3 + $0x64] sm:$0xf] %vm2110, %v6538
      %6609 = vst.msk [vmem:[#allocation3 + $0x68] sm:$0xf] %vm2110, %v6540
      %6610 = vst.msk [vmem:[#allocation3 + $0x6c] sm:$0xf] %vm2110, %v6542
      %6611 = vst.msk [vmem:[#allocation3 + $0x70] sm:$0xf] %vm2110, %v6544
      %6612 = vst.msk [vmem:[#allocation3 + $0x74] sm:$0xf] %vm2110, %v6546
      %6613 = vst.msk [vmem:[#allocation3 + $0x78] sm:$0xf] %vm2110, %v6548
      %6614 = vst.msk [vmem:[#allocation3 + $0x7c] sm:$0xf] %vm2110, %v6550
      %v6615 = vld [vmem:[%s559] sm:$0xf]
      %v6616 = vld [vmem:[%s559 + $0x4] sm:$0xf]
      %v6617 = vld [vmem:[%s559 + $0x8] sm:$0x1]
      %v6618 = vld [vmem:[%s559 + $0xc] sm:$0xf]
      %v6619 = vld [vmem:[%s559 + $0x10] sm:$0xf]
      %v6620 = vld [vmem:[%s559 + $0x14] sm:$0x1]
      %v6621 = vld [vmem:[%s559 + $0x18] sm:$0xf]
      %v6622 = vld [vmem:[%s559 + $0x1c] sm:$0xf]
      %v6623 = vld [vmem:[%s559 + $0x20] sm:$0x1]
      %v6624 = vld [vmem:[%s559 + $0x24] sm:$0xf]
      %v6625 = vld [vmem:[%s559 + $0x28] sm:$0xf]
      %v6626 = vld [vmem:[%s559 + $0x2c] sm:$0x1]
      %v6627 = vld [vmem:[%s559 + $0x30] sm:$0xf]
      %v6628 = vld [vmem:[%s559 + $0x34] sm:$0xf]
      %v6629 = vld [vmem:[%s559 + $0x38] sm:$0x1]
      %v6630 = vld [vmem:[%s559 + $0x3c] sm:$0xf]
      %v6631 = vld [vmem:[%s559 + $0x40] sm:$0xf]
      %v6632 = vld [vmem:[%s559 + $0x44] sm:$0x1]
      %v6633 = vld [vmem:[%s559 + $0x48] sm:$0xf]
      %v6634 = vld [vmem:[%s559 + $0x4c] sm:$0xf]
      %v6635 = vld [vmem:[%s559 + $0x50] sm:$0x1]
      %v6636 = vld [vmem:[%s559 + $0x54] sm:$0xf]
      %v6637 = vld [vmem:[%s559 + $0x58] sm:$0xf]
      %v6638 = vld [vmem:[%s559 + $0x5c] sm:$0x1]
      %v6639 = vld [vmem:[%s559 + $0x60] sm:$0xf]
      %v6640 = vld [vmem:[%s559 + $0x64] sm:$0xf]
      %v6641 = vld [vmem:[%s559 + $0x68] sm:$0x1]
      %v6642 = vld [vmem:[%s559 + $0x6c] sm:$0xf]
      %v6643 = vld [vmem:[%s559 + $0x70] sm:$0xf]
      %v6644 = vld [vmem:[%s559 + $0x74] sm:$0x1]
      %v6645 = vld [vmem:[%s559 + $0x78] sm:$0xf]
      %v6646 = vld [vmem:[%s559 + $0x7c] sm:$0xf]
      %v6647 = vld [vmem:[%s559 + $0x80] sm:$0x1]
      %v6648 = vld [vmem:[%s559 + $0x84] sm:$0xf]
      %v6649 = vld [vmem:[%s559 + $0x88] sm:$0xf]
      %v6650 = vld [vmem:[%s559 + $0x8c] sm:$0x1]
      %v6651 = vld [vmem:[%s559 + $0x90] sm:$0xf]
      %v6652 = vld [vmem:[%s559 + $0x94] sm:$0xf]
      %v6653 = vld [vmem:[%s559 + $0x98] sm:$0x1]
      %v6654 = vld [vmem:[%s559 + $0x9c] sm:$0xf]
      %v6655 = vld [vmem:[%s559 + $0xa0] sm:$0xf]
      %v6656 = vld [vmem:[%s559 + $0xa4] sm:$0x1]
      %v6657 = vld [vmem:[%s559 + $0xa8] sm:$0xf]
      %v6658 = vld [vmem:[%s559 + $0xac] sm:$0xf]
      %v6659 = vld [vmem:[%s559 + $0xb0] sm:$0x1]
      %v6660 = vld [vmem:[%s559 + $0xb4] sm:$0xf]
      %v6661 = vld [vmem:[%s559 + $0xb8] sm:$0xf]
      %v6662 = vld [vmem:[%s559 + $0xbc] sm:$0x1]
      %v6664 = vshrl.u32 %v6615, 16
      %v6666 = vrot.slane %v6664, 4
      %v6667 = vshll.u32 %v6615, 16
      %v6669 = vrot.slane %v6667, 5
      %v6670 = vor.u32 %v6666, %v6669
      %v6671 = vrot.slane %v6670, 4
      %v6673 = vshll.u32 %v6616, 16
      %v6675 = vrot.slane %v6673, 5
      %v6676 = vsel %vm1096, %v6671, %v6675
      %v6677 = vshrl.u32 %v6616, 16
      %v6679 = vrot.slane %v6677, 4
      %v6680 = vor.u32 %v6679, %v6675
      %v6681 = vrot.slane %v6680, 4
      %v6683 = vshll.u32 %v6617, 16
      %v6685 = vrot.slane %v6683, 5
      %v6686 = vsel %vm1096, %v6681, %v6685
      %v6688 = vshrl.u32 %v6618, 16
      %v6690 = vrot.slane %v6688, 4
      %v6691 = vshll.u32 %v6618, 16
      %v6693 = vrot.slane %v6691, 5
      %v6694 = vor.u32 %v6690, %v6693
      %v6695 = vrot.slane %v6694, 4
      %v6697 = vshll.u32 %v6619, 16
      %v6699 = vrot.slane %v6697, 5
      %v6700 = vsel %vm1096, %v6695, %v6699
      %v6701 = vshrl.u32 %v6619, 16
      %v6703 = vrot.slane %v6701, 4
      %v6704 = vor.u32 %v6703, %v6699
      %v6705 = vrot.slane %v6704, 4
      %v6707 = vshll.u32 %v6620, 16
      %v6709 = vrot.slane %v6707, 5
      %v6710 = vsel %vm1096, %v6705, %v6709
      %v6712 = vshrl.u32 %v6621, 16
      %v6714 = vrot.slane %v6712, 4
      %v6715 = vshll.u32 %v6621, 16
      %v6717 = vrot.slane %v6715, 5
      %v6718 = vor.u32 %v6714, %v6717
      %v6719 = vrot.slane %v6718, 4
      %v6721 = vshll.u32 %v6622, 16
      %v6723 = vrot.slane %v6721, 5
      %v6724 = vsel %vm1096, %v6719, %v6723
      %v6725 = vshrl.u32 %v6622, 16
      %v6727 = vrot.slane %v6725, 4
      %v6728 = vor.u32 %v6727, %v6723
      %v6729 = vrot.slane %v6728, 4
      %v6731 = vshll.u32 %v6623, 16
      %v6733 = vrot.slane %v6731, 5
      %v6734 = vsel %vm1096, %v6729, %v6733
      %v6736 = vshrl.u32 %v6624, 16
      %v6738 = vrot.slane %v6736, 4
      %v6739 = vshll.u32 %v6624, 16
      %v6741 = vrot.slane %v6739, 5
      %v6742 = vor.u32 %v6738, %v6741
      %v6743 = vrot.slane %v6742, 4
      %v6745 = vshll.u32 %v6625, 16
      %v6747 = vrot.slane %v6745, 5
      %v6748 = vsel %vm1096, %v6743, %v6747
      %v6749 = vshrl.u32 %v6625, 16
      %v6751 = vrot.slane %v6749, 4
      %v6752 = vor.u32 %v6751, %v6747
      %v6753 = vrot.slane %v6752, 4
      %v6755 = vshll.u32 %v6626, 16
      %v6757 = vrot.slane %v6755, 5
      %v6758 = vsel %vm1096, %v6753, %v6757
      %v6760 = vshrl.u32 %v6627, 16
      %v6762 = vrot.slane %v6760, 4
      %v6763 = vshll.u32 %v6627, 16
      %v6765 = vrot.slane %v6763, 5
      %v6766 = vor.u32 %v6762, %v6765
      %v6767 = vrot.slane %v6766, 4
      %v6769 = vshll.u32 %v6628, 16
      %v6771 = vrot.slane %v6769, 5
      %v6772 = vsel %vm1096, %v6767, %v6771
      %v6773 = vshrl.u32 %v6628, 16
      %v6775 = vrot.slane %v6773, 4
      %v6776 = vor.u32 %v6775, %v6771
      %v6777 = vrot.slane %v6776, 4
      %v6779 = vshll.u32 %v6629, 16
      %v6781 = vrot.slane %v6779, 5
      %v6782 = vsel %vm1096, %v6777, %v6781
      %v6784 = vshrl.u32 %v6630, 16
      %v6786 = vrot.slane %v6784, 4
      %v6787 = vshll.u32 %v6630, 16
      %v6789 = vrot.slane %v6787, 5
      %v6790 = vor.u32 %v6786, %v6789
      %v6791 = vrot.slane %v6790, 4
      %v6793 = vshll.u32 %v6631, 16
      %v6795 = vrot.slane %v6793, 5
      %v6796 = vsel %vm1096, %v6791, %v6795
      %v6797 = vshrl.u32 %v6631, 16
      %v6799 = vrot.slane %v6797, 4
      %v6800 = vor.u32 %v6799, %v6795
      %v6801 = vrot.slane %v6800, 4
      %v6803 = vshll.u32 %v6632, 16
      %v6805 = vrot.slane %v6803, 5
      %v6806 = vsel %vm1096, %v6801, %v6805
      %v6808 = vshrl.u32 %v6633, 16
      %v6810 = vrot.slane %v6808, 4
      %v6811 = vshll.u32 %v6633, 16
      %v6813 = vrot.slane %v6811, 5
      %v6814 = vor.u32 %v6810, %v6813
      %v6815 = vrot.slane %v6814, 4
      %v6817 = vshll.u32 %v6634, 16
      %v6819 = vrot.slane %v6817, 5
      %v6820 = vsel %vm1096, %v6815, %v6819
      %v6821 = vshrl.u32 %v6634, 16
      %v6823 = vrot.slane %v6821, 4
      %v6824 = vor.u32 %v6823, %v6819
      %v6825 = vrot.slane %v6824, 4
      %v6827 = vshll.u32 %v6635, 16
      %v6829 = vrot.slane %v6827, 5
      %v6830 = vsel %vm1096, %v6825, %v6829
      %v6832 = vshrl.u32 %v6636, 16
      %v6834 = vrot.slane %v6832, 4
      %v6835 = vshll.u32 %v6636, 16
      %v6837 = vrot.slane %v6835, 5
      %v6838 = vor.u32 %v6834, %v6837
      %v6839 = vrot.slane %v6838, 4
      %v6841 = vshll.u32 %v6637, 16
      %v6843 = vrot.slane %v6841, 5
      %v6844 = vsel %vm1096, %v6839, %v6843
      %v6845 = vshrl.u32 %v6637, 16
      %v6847 = vrot.slane %v6845, 4
      %v6848 = vor.u32 %v6847, %v6843
      %v6849 = vrot.slane %v6848, 4
      %v6851 = vshll.u32 %v6638, 16
      %v6853 = vrot.slane %v6851, 5
      %v6854 = vsel %vm1096, %v6849, %v6853
      %v6856 = vshrl.u32 %v6639, 16
      %v6858 = vrot.slane %v6856, 4
      %v6859 = vshll.u32 %v6639, 16
      %v6861 = vrot.slane %v6859, 5
      %v6862 = vor.u32 %v6858, %v6861
      %v6863 = vrot.slane %v6862, 4
      %v6865 = vshll.u32 %v6640, 16
      %v6867 = vrot.slane %v6865, 5
      %v6868 = vsel %vm1096, %v6863, %v6867
      %v6869 = vshrl.u32 %v6640, 16
      %v6871 = vrot.slane %v6869, 4
      %v6872 = vor.u32 %v6871, %v6867
      %v6873 = vrot.slane %v6872, 4
      %v6875 = vshll.u32 %v6641, 16
      %v6877 = vrot.slane %v6875, 5
      %v6878 = vsel %vm1096, %v6873, %v6877
      %v6880 = vshrl.u32 %v6642, 16
      %v6882 = vrot.slane %v6880, 4
      %v6883 = vshll.u32 %v6642, 16
      %v6885 = vrot.slane %v6883, 5
      %v6886 = vor.u32 %v6882, %v6885
      %v6887 = vrot.slane %v6886, 4
      %v6889 = vshll.u32 %v6643, 16
      %v6891 = vrot.slane %v6889, 5
      %v6892 = vsel %vm1096, %v6887, %v6891
      %v6893 = vshrl.u32 %v6643, 16
      %v6895 = vrot.slane %v6893, 4
      %v6896 = vor.u32 %v6895, %v6891
      %v6897 = vrot.slane %v6896, 4
      %v6899 = vshll.u32 %v6644, 16
      %v6901 = vrot.slane %v6899, 5
      %v6902 = vsel %vm1096, %v6897, %v6901
      %v6904 = vshrl.u32 %v6645, 16
      %v6906 = vrot.slane %v6904, 4
      %v6907 = vshll.u32 %v6645, 16
      %v6909 = vrot.slane %v6907, 5
      %v6910 = vor.u32 %v6906, %v6909
      %v6911 = vrot.slane %v6910, 4
      %v6913 = vshll.u32 %v6646, 16
      %v6915 = vrot.slane %v6913, 5
      %v6916 = vsel %vm1096, %v6911, %v6915
      %v6917 = vshrl.u32 %v6646, 16
      %v6919 = vrot.slane %v6917, 4
      %v6920 = vor.u32 %v6919, %v6915
      %v6921 = vrot.slane %v6920, 4
      %v6923 = vshll.u32 %v6647, 16
      %v6925 = vrot.slane %v6923, 5
      %v6926 = vsel %vm1096, %v6921, %v6925
      %v6928 = vshrl.u32 %v6648, 16
      %v6930 = vrot.slane %v6928, 4
      %v6931 = vshll.u32 %v6648, 16
      %v6933 = vrot.slane %v6931, 5
      %v6934 = vor.u32 %v6930, %v6933
      %v6935 = vrot.slane %v6934, 4
      %v6937 = vshll.u32 %v6649, 16
      %v6939 = vrot.slane %v6937, 5
      %v6940 = vsel %vm1096, %v6935, %v6939
      %v6941 = vshrl.u32 %v6649, 16
      %v6943 = vrot.slane %v6941, 4
      %v6944 = vor.u32 %v6943, %v6939
      %v6945 = vrot.slane %v6944, 4
      %v6947 = vshll.u32 %v6650, 16
      %v6949 = vrot.slane %v6947, 5
      %v6950 = vsel %vm1096, %v6945, %v6949
      %v6952 = vshrl.u32 %v6651, 16
      %v6954 = vrot.slane %v6952, 4
      %v6955 = vshll.u32 %v6651, 16
      %v6957 = vrot.slane %v6955, 5
      %v6958 = vor.u32 %v6954, %v6957
      %v6959 = vrot.slane %v6958, 4
      %v6961 = vshll.u32 %v6652, 16
      %v6963 = vrot.slane %v6961, 5
      %v6964 = vsel %vm1096, %v6959, %v6963
      %v6965 = vshrl.u32 %v6652, 16
      %v6967 = vrot.slane %v6965, 4
      %v6968 = vor.u32 %v6967, %v6963
      %v6969 = vrot.slane %v6968, 4
      %v6971 = vshll.u32 %v6653, 16
      %v6973 = vrot.slane %v6971, 5
      %v6974 = vsel %vm1096, %v6969, %v6973
      %v6976 = vshrl.u32 %v6654, 16
      %v6978 = vrot.slane %v6976, 4
      %v6979 = vshll.u32 %v6654, 16
      %v6981 = vrot.slane %v6979, 5
      %v6982 = vor.u32 %v6978, %v6981
      %v6983 = vrot.slane %v6982, 4
      %v6985 = vshll.u32 %v6655, 16
      %v6987 = vrot.slane %v6985, 5
      %v6988 = vsel %vm1096, %v6983, %v6987
      %v6989 = vshrl.u32 %v6655, 16
      %v6991 = vrot.slane %v6989, 4
      %v6992 = vor.u32 %v6991, %v6987
      %v6993 = vrot.slane %v6992, 4
      %v6995 = vshll.u32 %v6656, 16
      %v6997 = vrot.slane %v6995, 5
      %v6998 = vsel %vm1096, %v6993, %v6997
      %v7000 = vshrl.u32 %v6657, 16
      %v7002 = vrot.slane %v7000, 4
      %v7003 = vshll.u32 %v6657, 16
      %v7005 = vrot.slane %v7003, 5
      %v7006 = vor.u32 %v7002, %v7005
      %v7007 = vrot.slane %v7006, 4
      %v7009 = vshll.u32 %v6658, 16
      %v7011 = vrot.slane %v7009, 5
      %v7012 = vsel %vm1096, %v7007, %v7011
      %v7013 = vshrl.u32 %v6658, 16
      %v7015 = vrot.slane %v7013, 4
      %v7016 = vor.u32 %v7015, %v7011
      %v7017 = vrot.slane %v7016, 4
      %v7019 = vshll.u32 %v6659, 16
      %v7021 = vrot.slane %v7019, 5
      %v7022 = vsel %vm1096, %v7017, %v7021
      %v7024 = vshrl.u32 %v6660, 16
      %v7026 = vrot.slane %v7024, 4
      %v7027 = vshll.u32 %v6660, 16
      %v7029 = vrot.slane %v7027, 5
      %v7030 = vor.u32 %v7026, %v7029
      %v7031 = vrot.slane %v7030, 4
      %v7033 = vshll.u32 %v6661, 16
      %v7035 = vrot.slane %v7033, 5
      %v7036 = vsel %vm1096, %v7031, %v7035
      %v7037 = vshrl.u32 %v6661, 16
      %v7039 = vrot.slane %v7037, 4
      %v7040 = vor.u32 %v7039, %v7035
      %v7041 = vrot.slane %v7040, 4
      %v7043 = vshll.u32 %v6662, 16
      %v7045 = vrot.slane %v7043, 5
      %v7046 = vsel %vm1096, %v7041, %v7045
      %7047 = vrot.lane.b32.xlu0 %v6676, 16
      %v7048 = vpop.permute.xlu0 %7047
      %7049 = vrot.lane.b32.xlu0 %v6686, 16
      %v7050 = vpop.permute.xlu0 %7049
      %7051 = vrot.lane.b32.xlu0 %v6700, 16
      %v7052 = vpop.permute.xlu0 %7051
      %7053 = vrot.lane.b32.xlu0 %v6710, 16
      %v7054 = vpop.permute.xlu0 %7053
      %7055 = vrot.lane.b32.xlu0 %v6724, 16
      %v7056 = vpop.permute.xlu0 %7055
      %7057 = vrot.lane.b32.xlu0 %v6734, 16
      %v7058 = vpop.permute.xlu0 %7057
      %7059 = vrot.lane.b32.xlu0 %v6748, 16
      %v7060 = vpop.permute.xlu0 %7059
      %7061 = vrot.lane.b32.xlu0 %v6758, 16
      %v7062 = vpop.permute.xlu0 %7061
      %7063 = vrot.lane.b32.xlu0 %v6772, 16
      %v7064 = vpop.permute.xlu0 %7063
      %7065 = vrot.lane.b32.xlu0 %v6782, 16
      %v7066 = vpop.permute.xlu0 %7065
      %7067 = vrot.lane.b32.xlu0 %v6796, 16
      %v7068 = vpop.permute.xlu0 %7067
      %7069 = vrot.lane.b32.xlu0 %v6806, 16
      %v7070 = vpop.permute.xlu0 %7069
      %7071 = vrot.lane.b32.xlu0 %v6820, 16
      %v7072 = vpop.permute.xlu0 %7071
      %7073 = vrot.lane.b32.xlu0 %v6830, 16
      %v7074 = vpop.permute.xlu0 %7073
      %7075 = vrot.lane.b32.xlu0 %v6844, 16
      %v7076 = vpop.permute.xlu0 %7075
      %7077 = vrot.lane.b32.xlu0 %v6854, 16
      %v7078 = vpop.permute.xlu0 %7077
      %7079 = vrot.lane.b32.xlu0 %v6868, 16
      %v7080 = vpop.permute.xlu0 %7079
      %7081 = vrot.lane.b32.xlu0 %v6878, 16
      %v7082 = vpop.permute.xlu0 %7081
      %7083 = vrot.lane.b32.xlu0 %v6892, 16
      %v7084 = vpop.permute.xlu0 %7083
      %7085 = vrot.lane.b32.xlu0 %v6902, 16
      %v7086 = vpop.permute.xlu0 %7085
      %7087 = vrot.lane.b32.xlu0 %v6916, 16
      %v7088 = vpop.permute.xlu0 %7087
      %7089 = vrot.lane.b32.xlu0 %v6926, 16
      %v7090 = vpop.permute.xlu0 %7089
      %7091 = vrot.lane.b32.xlu0 %v6940, 16
      %v7092 = vpop.permute.xlu0 %7091
      %7093 = vrot.lane.b32.xlu0 %v6950, 16
      %v7094 = vpop.permute.xlu0 %7093
      %7095 = vrot.lane.b32.xlu0 %v6964, 16
      %v7096 = vpop.permute.xlu0 %7095
      %7097 = vrot.lane.b32.xlu0 %v6974, 16
      %v7098 = vpop.permute.xlu0 %7097
      %7099 = vrot.lane.b32.xlu0 %v6988, 16
      %v7100 = vpop.permute.xlu0 %7099
      %7101 = vrot.lane.b32.xlu0 %v6998, 16
      %v7102 = vpop.permute.xlu0 %7101
      %7103 = vrot.lane.b32.xlu0 %v7012, 16
      %v7104 = vpop.permute.xlu0 %7103
      %7105 = vrot.lane.b32.xlu0 %v7022, 16
      %v7106 = vpop.permute.xlu0 %7105
      %7107 = vrot.lane.b32.xlu0 %v7036, 16
      %v7108 = vpop.permute.xlu0 %7107
      %7109 = vrot.lane.b32.xlu0 %v7046, 16
      %v7110 = vpop.permute.xlu0 %7109
      %7143 = vst.msk [vmem:[#allocation3] sm:$0xf] %vm2671, %v7048
      %7144 = vst.msk [vmem:[#allocation3 + $0x4] sm:$0xf] %vm2671, %v7050
      %7145 = vst.msk [vmem:[#allocation3 + $0x8] sm:$0xf] %vm2671, %v7052
      %7146 = vst.msk [vmem:[#allocation3 + $0xc] sm:$0xf] %vm2671, %v7054
      %7147 = vst.msk [vmem:[#allocation3 + $0x10] sm:$0xf] %vm2671, %v7056
      %7148 = vst.msk [vmem:[#allocation3 + $0x14] sm:$0xf] %vm2671, %v7058
      %7149 = vst.msk [vmem:[#allocation3 + $0x18] sm:$0xf] %vm2671, %v7060
      %7150 = vst.msk [vmem:[#allocation3 + $0x1c] sm:$0xf] %vm2671, %v7062
      %7151 = vst.msk [vmem:[#allocation3 + $0x20] sm:$0xf] %vm2671, %v7064
      %7152 = vst.msk [vmem:[#allocation3 + $0x24] sm:$0xf] %vm2671, %v7066
      %7153 = vst.msk [vmem:[#allocation3 + $0x28] sm:$0xf] %vm2671, %v7068
      %7154 = vst.msk [vmem:[#allocation3 + $0x2c] sm:$0xf] %vm2671, %v7070
      %7155 = vst.msk [vmem:[#allocation3 + $0x30] sm:$0xf] %vm2671, %v7072
      %7156 = vst.msk [vmem:[#allocation3 + $0x34] sm:$0xf] %vm2671, %v7074
      %7157 = vst.msk [vmem:[#allocation3 + $0x38] sm:$0xf] %vm2671, %v7076
      %7158 = vst.msk [vmem:[#allocation3 + $0x3c] sm:$0xf] %vm2671, %v7078
      %7159 = vst.msk [vmem:[#allocation3 + $0x40] sm:$0xf] %vm2671, %v7080
      %7160 = vst.msk [vmem:[#allocation3 + $0x44] sm:$0xf] %vm2671, %v7082
      %7161 = vst.msk [vmem:[#allocation3 + $0x48] sm:$0xf] %vm2671, %v7084
      %7162 = vst.msk [vmem:[#allocation3 + $0x4c] sm:$0xf] %vm2671, %v7086
      %7163 = vst.msk [vmem:[#allocation3 + $0x50] sm:$0xf] %vm2671, %v7088
      %7164 = vst.msk [vmem:[#allocation3 + $0x54] sm:$0xf] %vm2671, %v7090
      %7165 = vst.msk [vmem:[#allocation3 + $0x58] sm:$0xf] %vm2671, %v7092
      %7166 = vst.msk [vmem:[#allocation3 + $0x5c] sm:$0xf] %vm2671, %v7094
      %7167 = vst.msk [vmem:[#allocation3 + $0x60] sm:$0xf] %vm2671, %v7096
      %7168 = vst.msk [vmem:[#allocation3 + $0x64] sm:$0xf] %vm2671, %v7098
      %7169 = vst.msk [vmem:[#allocation3 + $0x68] sm:$0xf] %vm2671, %v7100
      %7170 = vst.msk [vmem:[#allocation3 + $0x6c] sm:$0xf] %vm2671, %v7102
      %7171 = vst.msk [vmem:[#allocation3 + $0x70] sm:$0xf] %vm2671, %v7104
      %7172 = vst.msk [vmem:[#allocation3 + $0x74] sm:$0xf] %vm2671, %v7106
      %7173 = vst.msk [vmem:[#allocation3 + $0x78] sm:$0xf] %vm2671, %v7108
      %7174 = vst.msk [vmem:[#allocation3 + $0x7c] sm:$0xf] %vm2671, %v7110
      %v7175 = vld [vmem:[%s559] sm:$0xe]
      %v7176 = vld [vmem:[%s559 + $0x4] sm:$0xf]
      %v7177 = vld [vmem:[%s559 + $0x8] sm:$0x1]
      %v7178 = vld [vmem:[%s559 + $0xc] sm:$0xe]
      %v7179 = vld [vmem:[%s559 + $0x10] sm:$0xf]
      %v7180 = vld [vmem:[%s559 + $0x14] sm:$0x1]
      %v7181 = vld [vmem:[%s559 + $0x18] sm:$0xe]
      %v7182 = vld [vmem:[%s559 + $0x1c] sm:$0xf]
      %v7183 = vld [vmem:[%s559 + $0x20] sm:$0x1]
      %v7184 = vld [vmem:[%s559 + $0x24] sm:$0xe]
      %v7185 = vld [vmem:[%s559 + $0x28] sm:$0xf]
      %v7186 = vld [vmem:[%s559 + $0x2c] sm:$0x1]
      %v7187 = vld [vmem:[%s559 + $0x30] sm:$0xe]
      %v7188 = vld [vmem:[%s559 + $0x34] sm:$0xf]
      %v7189 = vld [vmem:[%s559 + $0x38] sm:$0x1]
      %v7190 = vld [vmem:[%s559 + $0x3c] sm:$0xe]
      %v7191 = vld [vmem:[%s559 + $0x40] sm:$0xf]
      %v7192 = vld [vmem:[%s559 + $0x44] sm:$0x1]
      %v7193 = vld [vmem:[%s559 + $0x48] sm:$0xe]
      %v7194 = vld [vmem:[%s559 + $0x4c] sm:$0xf]
      %v7195 = vld [vmem:[%s559 + $0x50] sm:$0x1]
      %v7196 = vld [vmem:[%s559 + $0x54] sm:$0xe]
      %v7197 = vld [vmem:[%s559 + $0x58] sm:$0xf]
      %v7198 = vld [vmem:[%s559 + $0x5c] sm:$0x1]
      %v7199 = vld [vmem:[%s559 + $0x60] sm:$0xe]
      %v7200 = vld [vmem:[%s559 + $0x64] sm:$0xf]
      %v7201 = vld [vmem:[%s559 + $0x68] sm:$0x1]
      %v7202 = vld [vmem:[%s559 + $0x6c] sm:$0xe]
      %v7203 = vld [vmem:[%s559 + $0x70] sm:$0xf]
      %v7204 = vld [vmem:[%s559 + $0x74] sm:$0x1]
      %v7205 = vld [vmem:[%s559 + $0x78] sm:$0xe]
      %v7206 = vld [vmem:[%s559 + $0x7c] sm:$0xf]
      %v7207 = vld [vmem:[%s559 + $0x80] sm:$0x1]
      %v7208 = vld [vmem:[%s559 + $0x84] sm:$0xe]
      %v7209 = vld [vmem:[%s559 + $0x88] sm:$0xf]
      %v7210 = vld [vmem:[%s559 + $0x8c] sm:$0x1]
      %v7211 = vld [vmem:[%s559 + $0x90] sm:$0xe]
      %v7212 = vld [vmem:[%s559 + $0x94] sm:$0xf]
      %v7213 = vld [vmem:[%s559 + $0x98] sm:$0x1]
      %v7214 = vld [vmem:[%s559 + $0x9c] sm:$0xe]
      %v7215 = vld [vmem:[%s559 + $0xa0] sm:$0xf]
      %v7216 = vld [vmem:[%s559 + $0xa4] sm:$0x1]
      %v7217 = vld [vmem:[%s559 + $0xa8] sm:$0xe]
      %v7218 = vld [vmem:[%s559 + $0xac] sm:$0xf]
      %v7219 = vld [vmem:[%s559 + $0xb0] sm:$0x1]
      %v7220 = vld [vmem:[%s559 + $0xb4] sm:$0xe]
      %v7221 = vld [vmem:[%s559 + $0xb8] sm:$0xf]
      %v7222 = vld [vmem:[%s559 + $0xbc] sm:$0x1]
      %v7271 = vrot.slane %v7175, 5
      %v7272 = vrot.slane %v7271, 4
      %v7273 = vrot.slane %v7176, 5
      %v7274 = vsel %vm1708, %v7272, %v7273
      %v7275 = vrot.slane %v7273, 4
      %v7276 = vrot.slane %v7177, 5
      %v7277 = vsel %vm1708, %v7275, %v7276
      %v7278 = vrot.slane %v7178, 5
      %v7279 = vrot.slane %v7278, 4
      %v7280 = vrot.slane %v7179, 5
      %v7281 = vsel %vm1708, %v7279, %v7280
      %v7282 = vrot.slane %v7280, 4
      %v7283 = vrot.slane %v7180, 5
      %v7284 = vsel %vm1708, %v7282, %v7283
      %v7285 = vrot.slane %v7181, 5
      %v7286 = vrot.slane %v7285, 4
      %v7287 = vrot.slane %v7182, 5
      %v7288 = vsel %vm1708, %v7286, %v7287
      %v7289 = vrot.slane %v7287, 4
      %v7290 = vrot.slane %v7183, 5
      %v7291 = vsel %vm1708, %v7289, %v7290
      %v7292 = vrot.slane %v7184, 5
      %v7293 = vrot.slane %v7292, 4
      %v7294 = vrot.slane %v7185, 5
      %v7295 = vsel %vm1708, %v7293, %v7294
      %v7296 = vrot.slane %v7294, 4
      %v7297 = vrot.slane %v7186, 5
      %v7298 = vsel %vm1708, %v7296, %v7297
      %v7299 = vrot.slane %v7187, 5
      %v7300 = vrot.slane %v7299, 4
      %v7301 = vrot.slane %v7188, 5
      %v7302 = vsel %vm1708, %v7300, %v7301
      %v7303 = vrot.slane %v7301, 4
      %v7304 = vrot.slane %v7189, 5
      %v7305 = vsel %vm1708, %v7303, %v7304
      %v7306 = vrot.slane %v7190, 5
      %v7307 = vrot.slane %v7306, 4
      %v7308 = vrot.slane %v7191, 5
      %v7309 = vsel %vm1708, %v7307, %v7308
      %v7310 = vrot.slane %v7308, 4
      %v7311 = vrot.slane %v7192, 5
      %v7312 = vsel %vm1708, %v7310, %v7311
      %v7313 = vrot.slane %v7193, 5
      %v7314 = vrot.slane %v7313, 4
      %v7315 = vrot.slane %v7194, 5
      %v7316 = vsel %vm1708, %v7314, %v7315
      %v7317 = vrot.slane %v7315, 4
      %v7318 = vrot.slane %v7195, 5
      %v7319 = vsel %vm1708, %v7317, %v7318
      %v7320 = vrot.slane %v7196, 5
      %v7321 = vrot.slane %v7320, 4
      %v7322 = vrot.slane %v7197, 5
      %v7323 = vsel %vm1708, %v7321, %v7322
      %v7324 = vrot.slane %v7322, 4
      %v7325 = vrot.slane %v7198, 5
      %v7326 = vsel %vm1708, %v7324, %v7325
      %v7327 = vrot.slane %v7199, 5
      %v7328 = vrot.slane %v7327, 4
      %v7329 = vrot.slane %v7200, 5
      %v7330 = vsel %vm1708, %v7328, %v7329
      %v7331 = vrot.slane %v7329, 4
      %v7332 = vrot.slane %v7201, 5
      %v7333 = vsel %vm1708, %v7331, %v7332
      %v7334 = vrot.slane %v7202, 5
      %v7335 = vrot.slane %v7334, 4
      %v7336 = vrot.slane %v7203, 5
      %v7337 = vsel %vm1708, %v7335, %v7336
      %v7338 = vrot.slane %v7336, 4
      %v7339 = vrot.slane %v7204, 5
      %v7340 = vsel %vm1708, %v7338, %v7339
      %v7341 = vrot.slane %v7205, 5
      %v7342 = vrot.slane %v7341, 4
      %v7343 = vrot.slane %v7206, 5
      %v7344 = vsel %vm1708, %v7342, %v7343
      %v7345 = vrot.slane %v7343, 4
      %v7346 = vrot.slane %v7207, 5
      %v7347 = vsel %vm1708, %v7345, %v7346
      %v7348 = vrot.slane %v7208, 5
      %v7349 = vrot.slane %v7348, 4
      %v7350 = vrot.slane %v7209, 5
      %v7351 = vsel %vm1708, %v7349, %v7350
      %v7352 = vrot.slane %v7350, 4
      %v7353 = vrot.slane %v7210, 5
      %v7354 = vsel %vm1708, %v7352, %v7353
      %v7355 = vrot.slane %v7211, 5
      %v7356 = vrot.slane %v7355, 4
      %v7357 = vrot.slane %v7212, 5
      %v7358 = vsel %vm1708, %v7356, %v7357
      %v7359 = vrot.slane %v7357, 4
      %v7360 = vrot.slane %v7213, 5
      %v7361 = vsel %vm1708, %v7359, %v7360
      %v7362 = vrot.slane %v7214, 5
      %v7363 = vrot.slane %v7362, 4
      %v7364 = vrot.slane %v7215, 5
      %v7365 = vsel %vm1708, %v7363, %v7364
      %v7366 = vrot.slane %v7364, 4
      %v7367 = vrot.slane %v7216, 5
      %v7368 = vsel %vm1708, %v7366, %v7367
      %v7369 = vrot.slane %v7217, 5
      %v7370 = vrot.slane %v7369, 4
      %v7371 = vrot.slane %v7218, 5
      %v7372 = vsel %vm1708, %v7370, %v7371
      %v7373 = vrot.slane %v7371, 4
      %v7374 = vrot.slane %v7219, 5
      %v7375 = vsel %vm1708, %v7373, %v7374
      %v7376 = vrot.slane %v7220, 5
      %v7377 = vrot.slane %v7376, 4
      %v7378 = vrot.slane %v7221, 5
      %v7379 = vsel %vm1708, %v7377, %v7378
      %v7380 = vrot.slane %v7378, 4
      %v7381 = vrot.slane %v7222, 5
      %v7382 = vsel %vm1708, %v7380, %v7381
      %7383 = vrot.lane.b32.xlu0 %v7274, 20
      %v7384 = vpop.permute.xlu0 %7383
      %7385 = vrot.lane.b32.xlu0 %v7277, 20
      %v7386 = vpop.permute.xlu0 %7385
      %7387 = vrot.lane.b32.xlu0 %v7281, 20
      %v7388 = vpop.permute.xlu0 %7387
      %7389 = vrot.lane.b32.xlu0 %v7284, 20
      %v7390 = vpop.permute.xlu0 %7389
      %7391 = vrot.lane.b32.xlu0 %v7288, 20
      %v7392 = vpop.permute.xlu0 %7391
      %7393 = vrot.lane.b32.xlu0 %v7291, 20
      %v7394 = vpop.permute.xlu0 %7393
      %7395 = vrot.lane.b32.xlu0 %v7295, 20
      %v7396 = vpop.permute.xlu0 %7395
      %7397 = vrot.lane.b32.xlu0 %v7298, 20
      %v7398 = vpop.permute.xlu0 %7397
      %7399 = vrot.lane.b32.xlu0 %v7302, 20
      %v7400 = vpop.permute.xlu0 %7399
      %7401 = vrot.lane.b32.xlu0 %v7305, 20
      %v7402 = vpop.permute.xlu0 %7401
      %7403 = vrot.lane.b32.xlu0 %v7309, 20
      %v7404 = vpop.permute.xlu0 %7403
      %7405 = vrot.lane.b32.xlu0 %v7312, 20
      %v7406 = vpop.permute.xlu0 %7405
      %7407 = vrot.lane.b32.xlu0 %v7316, 20
      %v7408 = vpop.permute.xlu0 %7407
      %7409 = vrot.lane.b32.xlu0 %v7319, 20
      %v7410 = vpop.permute.xlu0 %7409
      %7411 = vrot.lane.b32.xlu0 %v7323, 20
      %v7412 = vpop.permute.xlu0 %7411
      %7413 = vrot.lane.b32.xlu0 %v7326, 20
      %v7414 = vpop.permute.xlu0 %7413
      %7415 = vrot.lane.b32.xlu0 %v7330, 20
      %v7416 = vpop.permute.xlu0 %7415
      %7417 = vrot.lane.b32.xlu0 %v7333, 20
      %v7418 = vpop.permute.xlu0 %7417
      %7419 = vrot.lane.b32.xlu0 %v7337, 20
      %v7420 = vpop.permute.xlu0 %7419
      %7421 = vrot.lane.b32.xlu0 %v7340, 20
      %v7422 = vpop.permute.xlu0 %7421
      %7423 = vrot.lane.b32.xlu0 %v7344, 20
      %v7424 = vpop.permute.xlu0 %7423
      %7425 = vrot.lane.b32.xlu0 %v7347, 20
      %v7426 = vpop.permute.xlu0 %7425
      %7427 = vrot.lane.b32.xlu0 %v7351, 20
      %v7428 = vpop.permute.xlu0 %7427
      %7429 = vrot.lane.b32.xlu0 %v7354, 20
      %v7430 = vpop.permute.xlu0 %7429
      %7431 = vrot.lane.b32.xlu0 %v7358, 20
      %v7432 = vpop.permute.xlu0 %7431
      %7433 = vrot.lane.b32.xlu0 %v7361, 20
      %v7434 = vpop.permute.xlu0 %7433
      %7435 = vrot.lane.b32.xlu0 %v7365, 20
      %v7436 = vpop.permute.xlu0 %7435
      %7437 = vrot.lane.b32.xlu0 %v7368, 20
      %v7438 = vpop.permute.xlu0 %7437
      %7439 = vrot.lane.b32.xlu0 %v7372, 20
      %v7440 = vpop.permute.xlu0 %7439
      %7441 = vrot.lane.b32.xlu0 %v7375, 20
      %v7442 = vpop.permute.xlu0 %7441
      %7443 = vrot.lane.b32.xlu0 %v7379, 20
      %v7444 = vpop.permute.xlu0 %7443
      %7445 = vrot.lane.b32.xlu0 %v7382, 20
      %v7446 = vpop.permute.xlu0 %7445
      %7479 = vst.msk [vmem:[#allocation3] sm:$0xf] %vm3008, %v7384
      %7480 = vst.msk [vmem:[#allocation3 + $0x4] sm:$0xf] %vm3008, %v7386
      %7481 = vst.msk [vmem:[#allocation3 + $0x8] sm:$0xf] %vm3008, %v7388
      %7482 = vst.msk [vmem:[#allocation3 + $0xc] sm:$0xf] %vm3008, %v7390
      %7483 = vst.msk [vmem:[#allocation3 + $0x10] sm:$0xf] %vm3008, %v7392
      %7484 = vst.msk [vmem:[#allocation3 + $0x14] sm:$0xf] %vm3008, %v7394
      %7485 = vst.msk [vmem:[#allocation3 + $0x18] sm:$0xf] %vm3008, %v7396
      %7486 = vst.msk [vmem:[#allocation3 + $0x1c] sm:$0xf] %vm3008, %v7398
      %7487 = vst.msk [vmem:[#allocation3 + $0x20] sm:$0xf] %vm3008, %v7400
      %7488 = vst.msk [vmem:[#allocation3 + $0x24] sm:$0xf] %vm3008, %v7402
      %7489 = vst.msk [vmem:[#allocation3 + $0x28] sm:$0xf] %vm3008, %v7404
      %7490 = vst.msk [vmem:[#allocation3 + $0x2c] sm:$0xf] %vm3008, %v7406
      %7491 = vst.msk [vmem:[#allocation3 + $0x30] sm:$0xf] %vm3008, %v7408
      %7492 = vst.msk [vmem:[#allocation3 + $0x34] sm:$0xf] %vm3008, %v7410
      %7493 = vst.msk [vmem:[#allocation3 + $0x38] sm:$0xf] %vm3008, %v7412
      %7494 = vst.msk [vmem:[#allocation3 + $0x3c] sm:$0xf] %vm3008, %v7414
      %7495 = vst.msk [vmem:[#allocation3 + $0x40] sm:$0xf] %vm3008, %v7416
      %7496 = vst.msk [vmem:[#allocation3 + $0x44] sm:$0xf] %vm3008, %v7418
      %7497 = vst.msk [vmem:[#allocation3 + $0x48] sm:$0xf] %vm3008, %v7420
      %7498 = vst.msk [vmem:[#allocation3 + $0x4c] sm:$0xf] %vm3008, %v7422
      %7499 = vst.msk [vmem:[#allocation3 + $0x50] sm:$0xf] %vm3008, %v7424
      %7500 = vst.msk [vmem:[#allocation3 + $0x54] sm:$0xf] %vm3008, %v7426
      %7501 = vst.msk [vmem:[#allocation3 + $0x58] sm:$0xf] %vm3008, %v7428
      %7502 = vst.msk [vmem:[#allocation3 + $0x5c] sm:$0xf] %vm3008, %v7430
      %7503 = vst.msk [vmem:[#allocation3 + $0x60] sm:$0xf] %vm3008, %v7432
      %7504 = vst.msk [vmem:[#allocation3 + $0x64] sm:$0xf] %vm3008, %v7434
      %7505 = vst.msk [vmem:[#allocation3 + $0x68] sm:$0xf] %vm3008, %v7436
      %7506 = vst.msk [vmem:[#allocation3 + $0x6c] sm:$0xf] %vm3008, %v7438
      %7507 = vst.msk [vmem:[#allocation3 + $0x70] sm:$0xf] %vm3008, %v7440
      %7508 = vst.msk [vmem:[#allocation3 + $0x74] sm:$0xf] %vm3008, %v7442
      %7509 = vst.msk [vmem:[#allocation3 + $0x78] sm:$0xf] %vm3008, %v7444
      %7510 = vst.msk [vmem:[#allocation3 + $0x7c] sm:$0xf] %vm3008, %v7446
      %v7511 = vld [vmem:[%s3041] sm:$0xf]
      %v7512 = vld [vmem:[%s3041 + $0x4] sm:$0xf]
      %v7513 = vld [vmem:[%s3041 + $0xc] sm:$0xf]
      %v7514 = vld [vmem:[%s3041 + $0x10] sm:$0xf]
      %v7515 = vld [vmem:[%s3041 + $0x18] sm:$0xf]
      %v7516 = vld [vmem:[%s3041 + $0x1c] sm:$0xf]
      %v7517 = vld [vmem:[%s3041 + $0x24] sm:$0xf]
      %v7518 = vld [vmem:[%s3041 + $0x28] sm:$0xf]
      %v7519 = vld [vmem:[%s3041 + $0x30] sm:$0xf]
      %v7520 = vld [vmem:[%s3041 + $0x34] sm:$0xf]
      %v7521 = vld [vmem:[%s3041 + $0x3c] sm:$0xf]
      %v7522 = vld [vmem:[%s3041 + $0x40] sm:$0xf]
      %v7523 = vld [vmem:[%s3041 + $0x48] sm:$0xf]
      %v7524 = vld [vmem:[%s3041 + $0x4c] sm:$0xf]
      %v7525 = vld [vmem:[%s3041 + $0x54] sm:$0xf]
      %v7526 = vld [vmem:[%s3041 + $0x58] sm:$0xf]
      %v7527 = vld [vmem:[%s3041 + $0x60] sm:$0xf]
      %v7528 = vld [vmem:[%s3041 + $0x64] sm:$0xf]
      %v7529 = vld [vmem:[%s3041 + $0x6c] sm:$0xf]
      %v7530 = vld [vmem:[%s3041 + $0x70] sm:$0xf]
      %v7531 = vld [vmem:[%s3041 + $0x78] sm:$0xf]
      %v7532 = vld [vmem:[%s3041 + $0x7c] sm:$0xf]
      %v7533 = vld [vmem:[%s3041 + $0x84] sm:$0xf]
      %v7534 = vld [vmem:[%s3041 + $0x88] sm:$0xf]
      %v7535 = vld [vmem:[%s3041 + $0x90] sm:$0xf]
      %v7536 = vld [vmem:[%s3041 + $0x94] sm:$0xf]
      %v7537 = vld [vmem:[%s3041 + $0x9c] sm:$0xf]
      %v7538 = vld [vmem:[%s3041 + $0xa0] sm:$0xf]
      %v7539 = vld [vmem:[%s3041 + $0xa8] sm:$0xf]
      %v7540 = vld [vmem:[%s3041 + $0xac] sm:$0xf]
      %v7541 = vld [vmem:[%s3041 + $0xb4] sm:$0xf]
      %v7542 = vld [vmem:[%s3041 + $0xb8] sm:$0xf]
      %7575 = vrot.lane.b32.xlu0 %v7511, 24
      %v7576 = vpop.permute.xlu0 %7575
      %7577 = vrot.lane.b32.xlu0 %v7512, 24
      %v7578 = vpop.permute.xlu0 %7577
      %7579 = vrot.lane.b32.xlu0 %v7513, 24
      %v7580 = vpop.permute.xlu0 %7579
      %7581 = vrot.lane.b32.xlu0 %v7514, 24
      %v7582 = vpop.permute.xlu0 %7581
      %7583 = vrot.lane.b32.xlu0 %v7515, 24
      %v7584 = vpop.permute.xlu0 %7583
      %7585 = vrot.lane.b32.xlu0 %v7516, 24
      %v7586 = vpop.permute.xlu0 %7585
      %7587 = vrot.lane.b32.xlu0 %v7517, 24
      %v7588 = vpop.permute.xlu0 %7587
      %7589 = vrot.lane.b32.xlu0 %v7518, 24
      %v7590 = vpop.permute.xlu0 %7589
      %7591 = vrot.lane.b32.xlu0 %v7519, 24
      %v7592 = vpop.permute.xlu0 %7591
      %7593 = vrot.lane.b32.xlu0 %v7520, 24
      %v7594 = vpop.permute.xlu0 %7593
      %7595 = vrot.lane.b32.xlu0 %v7521, 24
      %v7596 = vpop.permute.xlu0 %7595
      %7597 = vrot.lane.b32.xlu0 %v7522, 24
      %v7598 = vpop.permute.xlu0 %7597
      %7599 = vrot.lane.b32.xlu0 %v7523, 24
      %v7600 = vpop.permute.xlu0 %7599
      %7601 = vrot.lane.b32.xlu0 %v7524, 24
      %v7602 = vpop.permute.xlu0 %7601
      %7603 = vrot.lane.b32.xlu0 %v7525, 24
      %v7604 = vpop.permute.xlu0 %7603
      %7605 = vrot.lane.b32.xlu0 %v7526, 24
      %v7606 = vpop.permute.xlu0 %7605
      %7607 = vrot.lane.b32.xlu0 %v7527, 24
      %v7608 = vpop.permute.xlu0 %7607
      %7609 = vrot.lane.b32.xlu0 %v7528, 24
      %v7610 = vpop.permute.xlu0 %7609
      %7611 = vrot.lane.b32.xlu0 %v7529, 24
      %v7612 = vpop.permute.xlu0 %7611
      %7613 = vrot.lane.b32.xlu0 %v7530, 24
      %v7614 = vpop.permute.xlu0 %7613
      %7615 = vrot.lane.b32.xlu0 %v7531, 24
      %v7616 = vpop.permute.xlu0 %7615
      %7617 = vrot.lane.b32.xlu0 %v7532, 24
      %v7618 = vpop.permute.xlu0 %7617
      %7619 = vrot.lane.b32.xlu0 %v7533, 24
      %v7620 = vpop.permute.xlu0 %7619
      %7621 = vrot.lane.b32.xlu0 %v7534, 24
      %v7622 = vpop.permute.xlu0 %7621
      %7623 = vrot.lane.b32.xlu0 %v7535, 24
      %v7624 = vpop.permute.xlu0 %7623
      %7625 = vrot.lane.b32.xlu0 %v7536, 24
      %v7626 = vpop.permute.xlu0 %7625
      %7627 = vrot.lane.b32.xlu0 %v7537, 24
      %v7628 = vpop.permute.xlu0 %7627
      %7629 = vrot.lane.b32.xlu0 %v7538, 24
      %v7630 = vpop.permute.xlu0 %7629
      %7631 = vrot.lane.b32.xlu0 %v7539, 24
      %v7632 = vpop.permute.xlu0 %7631
      %7633 = vrot.lane.b32.xlu0 %v7540, 24
      %v7634 = vpop.permute.xlu0 %7633
      %7635 = vrot.lane.b32.xlu0 %v7541, 24
      %v7636 = vpop.permute.xlu0 %7635
      %7637 = vrot.lane.b32.xlu0 %v7542, 24
      %v7638 = vpop.permute.xlu0 %7637
      %7671 = vst.msk [vmem:[#allocation3] sm:$0xf] %vm3202, %v7576
      %7672 = vst.msk [vmem:[#allocation3 + $0x4] sm:$0xf] %vm3202, %v7578
      %7673 = vst.msk [vmem:[#allocation3 + $0x8] sm:$0xf] %vm3202, %v7580
      %7674 = vst.msk [vmem:[#allocation3 + $0xc] sm:$0xf] %vm3202, %v7582
      %7675 = vst.msk [vmem:[#allocation3 + $0x10] sm:$0xf] %vm3202, %v7584
      %7676 = vst.msk [vmem:[#allocation3 + $0x14] sm:$0xf] %vm3202, %v7586
      %7677 = vst.msk [vmem:[#allocation3 + $0x18] sm:$0xf] %vm3202, %v7588
      %7678 = vst.msk [vmem:[#allocation3 + $0x1c] sm:$0xf] %vm3202, %v7590
      %7679 = vst.msk [vmem:[#allocation3 + $0x20] sm:$0xf] %vm3202, %v7592
      %7680 = vst.msk [vmem:[#allocation3 + $0x24] sm:$0xf] %vm3202, %v7594
      %7681 = vst.msk [vmem:[#allocation3 + $0x28] sm:$0xf] %vm3202, %v7596
      %7682 = vst.msk [vmem:[#allocation3 + $0x2c] sm:$0xf] %vm3202, %v7598
      %7683 = vst.msk [vmem:[#allocation3 + $0x30] sm:$0xf] %vm3202, %v7600
      %7684 = vst.msk [vmem:[#allocation3 + $0x34] sm:$0xf] %vm3202, %v7602
      %7685 = vst.msk [vmem:[#allocation3 + $0x38] sm:$0xf] %vm3202, %v7604
      %7686 = vst.msk [vmem:[#allocation3 + $0x3c] sm:$0xf] %vm3202, %v7606
      %7687 = vst.msk [vmem:[#allocation3 + $0x40] sm:$0xf] %vm3202, %v7608
      %7688 = vst.msk [vmem:[#allocation3 + $0x44] sm:$0xf] %vm3202, %v7610
      %7689 = vst.msk [vmem:[#allocation3 + $0x48] sm:$0xf] %vm3202, %v7612
      %7690 = vst.msk [vmem:[#allocation3 + $0x4c] sm:$0xf] %vm3202, %v7614
      %7691 = vst.msk [vmem:[#allocation3 + $0x50] sm:$0xf] %vm3202, %v7616
      %7692 = vst.msk [vmem:[#allocation3 + $0x54] sm:$0xf] %vm3202, %v7618
      %7693 = vst.msk [vmem:[#allocation3 + $0x58] sm:$0xf] %vm3202, %v7620
      %7694 = vst.msk [vmem:[#allocation3 + $0x5c] sm:$0xf] %vm3202, %v7622
      %7695 = vst.msk [vmem:[#allocation3 + $0x60] sm:$0xf] %vm3202, %v7624
      %7696 = vst.msk [vmem:[#allocation3 + $0x64] sm:$0xf] %vm3202, %v7626
      %7697 = vst.msk [vmem:[#allocation3 + $0x68] sm:$0xf] %vm3202, %v7628
      %7698 = vst.msk [vmem:[#allocation3 + $0x6c] sm:$0xf] %vm3202, %v7630
      %7699 = vst.msk [vmem:[#allocation3 + $0x70] sm:$0xf] %vm3202, %v7632
      %7700 = vst.msk [vmem:[#allocation3 + $0x74] sm:$0xf] %vm3202, %v7634
      %7701 = vst.msk [vmem:[#allocation3 + $0x78] sm:$0xf] %vm3202, %v7636
      %7702 = vst.msk [vmem:[#allocation3 + $0x7c] sm:$0xf] %vm3202, %v7638
      %v7703 = vld [vmem:[%s3041] sm:$0xf]
      %v7704 = vld [vmem:[%s3041 + $0x4] sm:$0xf]
      %v7705 = vld [vmem:[%s3041 + $0x8] sm:$0x1]
      %v7706 = vld [vmem:[%s3041 + $0xc] sm:$0xf]
      %v7707 = vld [vmem:[%s3041 + $0x10] sm:$0xf]
      %v7708 = vld [vmem:[%s3041 + $0x14] sm:$0x1]
      %v7709 = vld [vmem:[%s3041 + $0x18] sm:$0xf]
      %v7710 = vld [vmem:[%s3041 + $0x1c] sm:$0xf]
      %v7711 = vld [vmem:[%s3041 + $0x20] sm:$0x1]
      %v7712 = vld [vmem:[%s3041 + $0x24] sm:$0xf]
      %v7713 = vld [vmem:[%s3041 + $0x28] sm:$0xf]
      %v7714 = vld [vmem:[%s3041 + $0x2c] sm:$0x1]
      %v7715 = vld [vmem:[%s3041 + $0x30] sm:$0xf]
      %v7716 = vld [vmem:[%s3041 + $0x34] sm:$0xf]
      %v7717 = vld [vmem:[%s3041 + $0x38] sm:$0x1]
      %v7718 = vld [vmem:[%s3041 + $0x3c] sm:$0xf]
      %v7719 = vld [vmem:[%s3041 + $0x40] sm:$0xf]
      %v7720 = vld [vmem:[%s3041 + $0x44] sm:$0x1]
      %v7721 = vld [vmem:[%s3041 + $0x48] sm:$0xf]
      %v7722 = vld [vmem:[%s3041 + $0x4c] sm:$0xf]
      %v7723 = vld [vmem:[%s3041 + $0x50] sm:$0x1]
      %v7724 = vld [vmem:[%s3041 + $0x54] sm:$0xf]
      %v7725 = vld [vmem:[%s3041 + $0x58] sm:$0xf]
      %v7726 = vld [vmem:[%s3041 + $0x5c] sm:$0x1]
      %v7727 = vld [vmem:[%s3041 + $0x60] sm:$0xf]
      %v7728 = vld [vmem:[%s3041 + $0x64] sm:$0xf]
      %v7729 = vld [vmem:[%s3041 + $0x68] sm:$0x1]
      %v7730 = vld [vmem:[%s3041 + $0x6c] sm:$0xf]
      %v7731 = vld [vmem:[%s3041 + $0x70] sm:$0xf]
      %v7732 = vld [vmem:[%s3041 + $0x74] sm:$0x1]
      %v7733 = vld [vmem:[%s3041 + $0x78] sm:$0xf]
      %v7734 = vld [vmem:[%s3041 + $0x7c] sm:$0xf]
      %v7735 = vld [vmem:[%s3041 + $0x80] sm:$0x1]
      %v7736 = vld [vmem:[%s3041 + $0x84] sm:$0xf]
      %v7737 = vld [vmem:[%s3041 + $0x88] sm:$0xf]
      %v7738 = vld [vmem:[%s3041 + $0x8c] sm:$0x1]
      %v7739 = vld [vmem:[%s3041 + $0x90] sm:$0xf]
      %v7740 = vld [vmem:[%s3041 + $0x94] sm:$0xf]
      %v7741 = vld [vmem:[%s3041 + $0x98] sm:$0x1]
      %v7742 = vld [vmem:[%s3041 + $0x9c] sm:$0xf]
      %v7743 = vld [vmem:[%s3041 + $0xa0] sm:$0xf]
      %v7744 = vld [vmem:[%s3041 + $0xa4] sm:$0x1]
      %v7745 = vld [vmem:[%s3041 + $0xa8] sm:$0xf]
      %v7746 = vld [vmem:[%s3041 + $0xac] sm:$0xf]
      %v7747 = vld [vmem:[%s3041 + $0xb0] sm:$0x1]
      %v7748 = vld [vmem:[%s3041 + $0xb4] sm:$0xf]
      %v7749 = vld [vmem:[%s3041 + $0xb8] sm:$0xf]
      %v7750 = vld [vmem:[%s3041 + $0xbc] sm:$0x1]
      %v7752 = vshrl.u32 %v7703, 16
      %v7754 = vrot.slane %v7752, 4
      %v7755 = vshll.u32 %v7703, 16
      %v7757 = vrot.slane %v7755, 5
      %v7758 = vor.u32 %v7754, %v7757
      %v7759 = vrot.slane %v7758, 4
      %v7761 = vshll.u32 %v7704, 16
      %v7763 = vrot.slane %v7761, 5
      %v7764 = vsel %vm1096, %v7759, %v7763
      %v7765 = vshrl.u32 %v7704, 16
      %v7767 = vrot.slane %v7765, 4
      %v7768 = vor.u32 %v7767, %v7763
      %v7769 = vrot.slane %v7768, 4
      %v7771 = vshll.u32 %v7705, 16
      %v7773 = vrot.slane %v7771, 5
      %v7774 = vsel %vm1096, %v7769, %v7773
      %v7776 = vshrl.u32 %v7706, 16
      %v7778 = vrot.slane %v7776, 4
      %v7779 = vshll.u32 %v7706, 16
      %v7781 = vrot.slane %v7779, 5
      %v7782 = vor.u32 %v7778, %v7781
      %v7783 = vrot.slane %v7782, 4
      %v7785 = vshll.u32 %v7707, 16
      %v7787 = vrot.slane %v7785, 5
      %v7788 = vsel %vm1096, %v7783, %v7787
      %v7789 = vshrl.u32 %v7707, 16
      %v7791 = vrot.slane %v7789, 4
      %v7792 = vor.u32 %v7791, %v7787
      %v7793 = vrot.slane %v7792, 4
      %v7795 = vshll.u32 %v7708, 16
      %v7797 = vrot.slane %v7795, 5
      %v7798 = vsel %vm1096, %v7793, %v7797
      %v7800 = vshrl.u32 %v7709, 16
      %v7802 = vrot.slane %v7800, 4
      %v7803 = vshll.u32 %v7709, 16
      %v7805 = vrot.slane %v7803, 5
      %v7806 = vor.u32 %v7802, %v7805
      %v7807 = vrot.slane %v7806, 4
      %v7809 = vshll.u32 %v7710, 16
      %v7811 = vrot.slane %v7809, 5
      %v7812 = vsel %vm1096, %v7807, %v7811
      %v7813 = vshrl.u32 %v7710, 16
      %v7815 = vrot.slane %v7813, 4
      %v7816 = vor.u32 %v7815, %v7811
      %v7817 = vrot.slane %v7816, 4
      %v7819 = vshll.u32 %v7711, 16
      %v7821 = vrot.slane %v7819, 5
      %v7822 = vsel %vm1096, %v7817, %v7821
      %v7824 = vshrl.u32 %v7712, 16
      %v7826 = vrot.slane %v7824, 4
      %v7827 = vshll.u32 %v7712, 16
      %v7829 = vrot.slane %v7827, 5
      %v7830 = vor.u32 %v7826, %v7829
      %v7831 = vrot.slane %v7830, 4
      %v7833 = vshll.u32 %v7713, 16
      %v7835 = vrot.slane %v7833, 5
      %v7836 = vsel %vm1096, %v7831, %v7835
      %v7837 = vshrl.u32 %v7713, 16
      %v7839 = vrot.slane %v7837, 4
      %v7840 = vor.u32 %v7839, %v7835
      %v7841 = vrot.slane %v7840, 4
      %v7843 = vshll.u32 %v7714, 16
      %v7845 = vrot.slane %v7843, 5
      %v7846 = vsel %vm1096, %v7841, %v7845
      %v7848 = vshrl.u32 %v7715, 16
      %v7850 = vrot.slane %v7848, 4
      %v7851 = vshll.u32 %v7715, 16
      %v7853 = vrot.slane %v7851, 5
      %v7854 = vor.u32 %v7850, %v7853
      %v7855 = vrot.slane %v7854, 4
      %v7857 = vshll.u32 %v7716, 16
      %v7859 = vrot.slane %v7857, 5
      %v7860 = vsel %vm1096, %v7855, %v7859
      %v7861 = vshrl.u32 %v7716, 16
      %v7863 = vrot.slane %v7861, 4
      %v7864 = vor.u32 %v7863, %v7859
      %v7865 = vrot.slane %v7864, 4
      %v7867 = vshll.u32 %v7717, 16
      %v7869 = vrot.slane %v7867, 5
      %v7870 = vsel %vm1096, %v7865, %v7869
      %v7872 = vshrl.u32 %v7718, 16
      %v7874 = vrot.slane %v7872, 4
      %v7875 = vshll.u32 %v7718, 16
      %v7877 = vrot.slane %v7875, 5
      %v7878 = vor.u32 %v7874, %v7877
      %v7879 = vrot.slane %v7878, 4
      %v7881 = vshll.u32 %v7719, 16
      %v7883 = vrot.slane %v7881, 5
      %v7884 = vsel %vm1096, %v7879, %v7883
      %v7885 = vshrl.u32 %v7719, 16
      %v7887 = vrot.slane %v7885, 4
      %v7888 = vor.u32 %v7887, %v7883
      %v7889 = vrot.slane %v7888, 4
      %v7891 = vshll.u32 %v7720, 16
      %v7893 = vrot.slane %v7891, 5
      %v7894 = vsel %vm1096, %v7889, %v7893
      %v7896 = vshrl.u32 %v7721, 16
      %v7898 = vrot.slane %v7896, 4
      %v7899 = vshll.u32 %v7721, 16
      %v7901 = vrot.slane %v7899, 5
      %v7902 = vor.u32 %v7898, %v7901
      %v7903 = vrot.slane %v7902, 4
      %v7905 = vshll.u32 %v7722, 16
      %v7907 = vrot.slane %v7905, 5
      %v7908 = vsel %vm1096, %v7903, %v7907
      %v7909 = vshrl.u32 %v7722, 16
      %v7911 = vrot.slane %v7909, 4
      %v7912 = vor.u32 %v7911, %v7907
      %v7913 = vrot.slane %v7912, 4
      %v7915 = vshll.u32 %v7723, 16
      %v7917 = vrot.slane %v7915, 5
      %v7918 = vsel %vm1096, %v7913, %v7917
      %v7920 = vshrl.u32 %v7724, 16
      %v7922 = vrot.slane %v7920, 4
      %v7923 = vshll.u32 %v7724, 16
      %v7925 = vrot.slane %v7923, 5
      %v7926 = vor.u32 %v7922, %v7925
      %v7927 = vrot.slane %v7926, 4
      %v7929 = vshll.u32 %v7725, 16
      %v7931 = vrot.slane %v7929, 5
      %v7932 = vsel %vm1096, %v7927, %v7931
      %v7933 = vshrl.u32 %v7725, 16
      %v7935 = vrot.slane %v7933, 4
      %v7936 = vor.u32 %v7935, %v7931
      %v7937 = vrot.slane %v7936, 4
      %v7939 = vshll.u32 %v7726, 16
      %v7941 = vrot.slane %v7939, 5
      %v7942 = vsel %vm1096, %v7937, %v7941
      %v7944 = vshrl.u32 %v7727, 16
      %v7946 = vrot.slane %v7944, 4
      %v7947 = vshll.u32 %v7727, 16
      %v7949 = vrot.slane %v7947, 5
      %v7950 = vor.u32 %v7946, %v7949
      %v7951 = vrot.slane %v7950, 4
      %v7953 = vshll.u32 %v7728, 16
      %v7955 = vrot.slane %v7953, 5
      %v7956 = vsel %vm1096, %v7951, %v7955
      %v7957 = vshrl.u32 %v7728, 16
      %v7959 = vrot.slane %v7957, 4
      %v7960 = vor.u32 %v7959, %v7955
      %v7961 = vrot.slane %v7960, 4
      %v7963 = vshll.u32 %v7729, 16
      %v7965 = vrot.slane %v7963, 5
      %v7966 = vsel %vm1096, %v7961, %v7965
      %v7968 = vshrl.u32 %v7730, 16
      %v7970 = vrot.slane %v7968, 4
      %v7971 = vshll.u32 %v7730, 16
      %v7973 = vrot.slane %v7971, 5
      %v7974 = vor.u32 %v7970, %v7973
      %v7975 = vrot.slane %v7974, 4
      %v7977 = vshll.u32 %v7731, 16
      %v7979 = vrot.slane %v7977, 5
      %v7980 = vsel %vm1096, %v7975, %v7979
      %v7981 = vshrl.u32 %v7731, 16
      %v7983 = vrot.slane %v7981, 4
      %v7984 = vor.u32 %v7983, %v7979
      %v7985 = vrot.slane %v7984, 4
      %v7987 = vshll.u32 %v7732, 16
      %v7989 = vrot.slane %v7987, 5
      %v7990 = vsel %vm1096, %v7985, %v7989
      %v7992 = vshrl.u32 %v7733, 16
      %v7994 = vrot.slane %v7992, 4
      %v7995 = vshll.u32 %v7733, 16
      %v7997 = vrot.slane %v7995, 5
      %v7998 = vor.u32 %v7994, %v7997
      %v7999 = vrot.slane %v7998, 4
      %v8001 = vshll.u32 %v7734, 16
      %v8003 = vrot.slane %v8001, 5
      %v8004 = vsel %vm1096, %v7999, %v8003
      %v8005 = vshrl.u32 %v7734, 16
      %v8007 = vrot.slane %v8005, 4
      %v8008 = vor.u32 %v8007, %v8003
      %v8009 = vrot.slane %v8008, 4
      %v8011 = vshll.u32 %v7735, 16
      %v8013 = vrot.slane %v8011, 5
      %v8014 = vsel %vm1096, %v8009, %v8013
      %v8016 = vshrl.u32 %v7736, 16
      %v8018 = vrot.slane %v8016, 4
      %v8019 = vshll.u32 %v7736, 16
      %v8021 = vrot.slane %v8019, 5
      %v8022 = vor.u32 %v8018, %v8021
      %v8023 = vrot.slane %v8022, 4
      %v8025 = vshll.u32 %v7737, 16
      %v8027 = vrot.slane %v8025, 5
      %v8028 = vsel %vm1096, %v8023, %v8027
      %v8029 = vshrl.u32 %v7737, 16
      %v8031 = vrot.slane %v8029, 4
      %v8032 = vor.u32 %v8031, %v8027
      %v8033 = vrot.slane %v8032, 4
      %v8035 = vshll.u32 %v7738, 16
      %v8037 = vrot.slane %v8035, 5
      %v8038 = vsel %vm1096, %v8033, %v8037
      %v8040 = vshrl.u32 %v7739, 16
      %v8042 = vrot.slane %v8040, 4
      %v8043 = vshll.u32 %v7739, 16
      %v8045 = vrot.slane %v8043, 5
      %v8046 = vor.u32 %v8042, %v8045
      %v8047 = vrot.slane %v8046, 4
      %v8049 = vshll.u32 %v7740, 16
      %v8051 = vrot.slane %v8049, 5
      %v8052 = vsel %vm1096, %v8047, %v8051
      %v8053 = vshrl.u32 %v7740, 16
      %v8055 = vrot.slane %v8053, 4
      %v8056 = vor.u32 %v8055, %v8051
      %v8057 = vrot.slane %v8056, 4
      %v8059 = vshll.u32 %v7741, 16
      %v8061 = vrot.slane %v8059, 5
      %v8062 = vsel %vm1096, %v8057, %v8061
      %v8064 = vshrl.u32 %v7742, 16
      %v8066 = vrot.slane %v8064, 4
      %v8067 = vshll.u32 %v7742, 16
      %v8069 = vrot.slane %v8067, 5
      %v8070 = vor.u32 %v8066, %v8069
      %v8071 = vrot.slane %v8070, 4
      %v8073 = vshll.u32 %v7743, 16
      %v8075 = vrot.slane %v8073, 5
      %v8076 = vsel %vm1096, %v8071, %v8075
      %v8077 = vshrl.u32 %v7743, 16
      %v8079 = vrot.slane %v8077, 4
      %v8080 = vor.u32 %v8079, %v8075
      %v8081 = vrot.slane %v8080, 4
      %v8083 = vshll.u32 %v7744, 16
      %v8085 = vrot.slane %v8083, 5
      %v8086 = vsel %vm1096, %v8081, %v8085
      %v8088 = vshrl.u32 %v7745, 16
      %v8090 = vrot.slane %v8088, 4
      %v8091 = vshll.u32 %v7745, 16
      %v8093 = vrot.slane %v8091, 5
      %v8094 = vor.u32 %v8090, %v8093
      %v8095 = vrot.slane %v8094, 4
      %v8097 = vshll.u32 %v7746, 16
      %v8099 = vrot.slane %v8097, 5
      %v8100 = vsel %vm1096, %v8095, %v8099
      %v8101 = vshrl.u32 %v7746, 16
      %v8103 = vrot.slane %v8101, 4
      %v8104 = vor.u32 %v8103, %v8099
      %v8105 = vrot.slane %v8104, 4
      %v8107 = vshll.u32 %v7747, 16
      %v8109 = vrot.slane %v8107, 5
      %v8110 = vsel %vm1096, %v8105, %v8109
      %v8112 = vshrl.u32 %v7748, 16
      %v8114 = vrot.slane %v8112, 4
      %v8115 = vshll.u32 %v7748, 16
      %v8117 = vrot.slane %v8115, 5
      %v8118 = vor.u32 %v8114, %v8117
      %v8119 = vrot.slane %v8118, 4
      %v8121 = vshll.u32 %v7749, 16
      %v8123 = vrot.slane %v8121, 5
      %v8124 = vsel %vm1096, %v8119, %v8123
      %v8125 = vshrl.u32 %v7749, 16
      %v8127 = vrot.slane %v8125, 4
      %v8128 = vor.u32 %v8127, %v8123
      %v8129 = vrot.slane %v8128, 4
      %v8131 = vshll.u32 %v7750, 16
      %v8133 = vrot.slane %v8131, 5
      %v8134 = vsel %vm1096, %v8129, %v8133
      %8135 = vrot.lane.b32.xlu0 %v7764, 28
      %v8136 = vpop.permute.xlu0 %8135
      %8137 = vrot.lane.b32.xlu0 %v7774, 28
      %v8138 = vpop.permute.xlu0 %8137
      %8139 = vrot.lane.b32.xlu0 %v7788, 28
      %v8140 = vpop.permute.xlu0 %8139
      %8141 = vrot.lane.b32.xlu0 %v7798, 28
      %v8142 = vpop.permute.xlu0 %8141
      %8143 = vrot.lane.b32.xlu0 %v7812, 28
      %v8144 = vpop.permute.xlu0 %8143
      %8145 = vrot.lane.b32.xlu0 %v7822, 28
      %v8146 = vpop.permute.xlu0 %8145
      %8147 = vrot.lane.b32.xlu0 %v7836, 28
      %v8148 = vpop.permute.xlu0 %8147
      %8149 = vrot.lane.b32.xlu0 %v7846, 28
      %v8150 = vpop.permute.xlu0 %8149
      %8151 = vrot.lane.b32.xlu0 %v7860, 28
      %v8152 = vpop.permute.xlu0 %8151
      %8153 = vrot.lane.b32.xlu0 %v7870, 28
      %v8154 = vpop.permute.xlu0 %8153
      %8155 = vrot.lane.b32.xlu0 %v7884, 28
      %v8156 = vpop.permute.xlu0 %8155
      %8157 = vrot.lane.b32.xlu0 %v7894, 28
      %v8158 = vpop.permute.xlu0 %8157
      %8159 = vrot.lane.b32.xlu0 %v7908, 28
      %v8160 = vpop.permute.xlu0 %8159
      %8161 = vrot.lane.b32.xlu0 %v7918, 28
      %v8162 = vpop.permute.xlu0 %8161
      %8163 = vrot.lane.b32.xlu0 %v7932, 28
      %v8164 = vpop.permute.xlu0 %8163
      %8165 = vrot.lane.b32.xlu0 %v7942, 28
      %v8166 = vpop.permute.xlu0 %8165
      %8167 = vrot.lane.b32.xlu0 %v7956, 28
      %v8168 = vpop.permute.xlu0 %8167
      %8169 = vrot.lane.b32.xlu0 %v7966, 28
      %v8170 = vpop.permute.xlu0 %8169
      %8171 = vrot.lane.b32.xlu0 %v7980, 28
      %v8172 = vpop.permute.xlu0 %8171
      %8173 = vrot.lane.b32.xlu0 %v7990, 28
      %v8174 = vpop.permute.xlu0 %8173
      %8175 = vrot.lane.b32.xlu0 %v8004, 28
      %v8176 = vpop.permute.xlu0 %8175
      %8177 = vrot.lane.b32.xlu0 %v8014, 28
      %v8178 = vpop.permute.xlu0 %8177
      %8179 = vrot.lane.b32.xlu0 %v8028, 28
      %v8180 = vpop.permute.xlu0 %8179
      %8181 = vrot.lane.b32.xlu0 %v8038, 28
      %v8182 = vpop.permute.xlu0 %8181
      %8183 = vrot.lane.b32.xlu0 %v8052, 28
      %v8184 = vpop.permute.xlu0 %8183
      %8185 = vrot.lane.b32.xlu0 %v8062, 28
      %v8186 = vpop.permute.xlu0 %8185
      %8187 = vrot.lane.b32.xlu0 %v8076, 28
      %v8188 = vpop.permute.xlu0 %8187
      %8189 = vrot.lane.b32.xlu0 %v8086, 28
      %v8190 = vpop.permute.xlu0 %8189
      %8191 = vrot.lane.b32.xlu0 %v8100, 28
      %v8192 = vpop.permute.xlu0 %8191
      %8193 = vrot.lane.b32.xlu0 %v8110, 28
      %v8194 = vpop.permute.xlu0 %8193
      %8195 = vrot.lane.b32.xlu0 %v8124, 28
      %v8196 = vpop.permute.xlu0 %8195
      %8197 = vrot.lane.b32.xlu0 %v8134, 28
      %v8198 = vpop.permute.xlu0 %8197
      %8231 = vst.msk [vmem:[#allocation3] sm:$0xf] %vm3763, %v8136
      %8232 = vst.msk [vmem:[#allocation3 + $0x4] sm:$0xf] %vm3763, %v8138
      %8233 = vst.msk [vmem:[#allocation3 + $0x8] sm:$0xf] %vm3763, %v8140
      %8234 = vst.msk [vmem:[#allocation3 + $0xc] sm:$0xf] %vm3763, %v8142
      %8235 = vst.msk [vmem:[#allocation3 + $0x10] sm:$0xf] %vm3763, %v8144
      %8236 = vst.msk [vmem:[#allocation3 + $0x14] sm:$0xf] %vm3763, %v8146
      %8237 = vst.msk [vmem:[#allocation3 + $0x18] sm:$0xf] %vm3763, %v8148
      %8238 = vst.msk [vmem:[#allocation3 + $0x1c] sm:$0xf] %vm3763, %v8150
      %8239 = vst.msk [vmem:[#allocation3 + $0x20] sm:$0xf] %vm3763, %v8152
      %8240 = vst.msk [vmem:[#allocation3 + $0x24] sm:$0xf] %vm3763, %v8154
      %8241 = vst.msk [vmem:[#allocation3 + $0x28] sm:$0xf] %vm3763, %v8156
      %8242 = vst.msk [vmem:[#allocation3 + $0x2c] sm:$0xf] %vm3763, %v8158
      %8243 = vst.msk [vmem:[#allocation3 + $0x30] sm:$0xf] %vm3763, %v8160
      %8244 = vst.msk [vmem:[#allocation3 + $0x34] sm:$0xf] %vm3763, %v8162
      %8245 = vst.msk [vmem:[#allocation3 + $0x38] sm:$0xf] %vm3763, %v8164
      %8246 = vst.msk [vmem:[#allocation3 + $0x3c] sm:$0xf] %vm3763, %v8166
      %8247 = vst.msk [vmem:[#allocation3 + $0x40] sm:$0xf] %vm3763, %v8168
      %8248 = vst.msk [vmem:[#allocation3 + $0x44] sm:$0xf] %vm3763, %v8170
      %8249 = vst.msk [vmem:[#allocation3 + $0x48] sm:$0xf] %vm3763, %v8172
      %8250 = vst.msk [vmem:[#allocation3 + $0x4c] sm:$0xf] %vm3763, %v8174
      %8251 = vst.msk [vmem:[#allocation3 + $0x50] sm:$0xf] %vm3763, %v8176
      %8252 = vst.msk [vmem:[#allocation3 + $0x54] sm:$0xf] %vm3763, %v8178
      %8253 = vst.msk [vmem:[#allocation3 + $0x58] sm:$0xf] %vm3763, %v8180
      %8254 = vst.msk [vmem:[#allocation3 + $0x5c] sm:$0xf] %vm3763, %v8182
      %8255 = vst.msk [vmem:[#allocation3 + $0x60] sm:$0xf] %vm3763, %v8184
      %8256 = vst.msk [vmem:[#allocation3 + $0x64] sm:$0xf] %vm3763, %v8186
      %8257 = vst.msk [vmem:[#allocation3 + $0x68] sm:$0xf] %vm3763, %v8188
      %8258 = vst.msk [vmem:[#allocation3 + $0x6c] sm:$0xf] %vm3763, %v8190
      %8259 = vst.msk [vmem:[#allocation3 + $0x70] sm:$0xf] %vm3763, %v8192
      %8260 = vst.msk [vmem:[#allocation3 + $0x74] sm:$0xf] %vm3763, %v8194
      %8261 = vst.msk [vmem:[#allocation3 + $0x78] sm:$0xf] %vm3763, %v8196
      %8262 = vst.msk [vmem:[#allocation3 + $0x7c] sm:$0xf] %vm3763, %v8198
      %v8263 = vld [vmem:[%s3041] sm:$0xe]
      %v8264 = vld [vmem:[%s3041 + $0x4] sm:$0xf]
      %v8265 = vld [vmem:[%s3041 + $0x8] sm:$0x1]
      %v8266 = vld [vmem:[%s3041 + $0xc] sm:$0xe]
      %v8267 = vld [vmem:[%s3041 + $0x10] sm:$0xf]
      %v8268 = vld [vmem:[%s3041 + $0x14] sm:$0x1]
      %v8269 = vld [vmem:[%s3041 + $0x18] sm:$0xe]
      %v8270 = vld [vmem:[%s3041 + $0x1c] sm:$0xf]
      %v8271 = vld [vmem:[%s3041 + $0x20] sm:$0x1]
      %v8272 = vld [vmem:[%s3041 + $0x24] sm:$0xe]
      %v8273 = vld [vmem:[%s3041 + $0x28] sm:$0xf]
      %v8274 = vld [vmem:[%s3041 + $0x2c] sm:$0x1]
      %v8275 = vld [vmem:[%s3041 + $0x30] sm:$0xe]
      %v8276 = vld [vmem:[%s3041 + $0x34] sm:$0xf]
      %v8277 = vld [vmem:[%s3041 + $0x38] sm:$0x1]
      %v8278 = vld [vmem:[%s3041 + $0x3c] sm:$0xe]
      %v8279 = vld [vmem:[%s3041 + $0x40] sm:$0xf]
      %v8280 = vld [vmem:[%s3041 + $0x44] sm:$0x1]
      %v8281 = vld [vmem:[%s3041 + $0x48] sm:$0xe]
      %v8282 = vld [vmem:[%s3041 + $0x4c] sm:$0xf]
      %v8283 = vld [vmem:[%s3041 + $0x50] sm:$0x1]
      %v8284 = vld [vmem:[%s3041 + $0x54] sm:$0xe]
      %v8285 = vld [vmem:[%s3041 + $0x58] sm:$0xf]
      %v8286 = vld [vmem:[%s3041 + $0x5c] sm:$0x1]
      %v8287 = vld [vmem:[%s3041 + $0x60] sm:$0xe]
      %v8288 = vld [vmem:[%s3041 + $0x64] sm:$0xf]
      %v8289 = vld [vmem:[%s3041 + $0x68] sm:$0x1]
      %v8290 = vld [vmem:[%s3041 + $0x6c] sm:$0xe]
      %v8291 = vld [vmem:[%s3041 + $0x70] sm:$0xf]
      %v8292 = vld [vmem:[%s3041 + $0x74] sm:$0x1]
      %v8293 = vld [vmem:[%s3041 + $0x78] sm:$0xe]
      %v8294 = vld [vmem:[%s3041 + $0x7c] sm:$0xf]
      %v8295 = vld [vmem:[%s3041 + $0x80] sm:$0x1]
      %v8296 = vld [vmem:[%s3041 + $0x84] sm:$0xe]
      %v8297 = vld [vmem:[%s3041 + $0x88] sm:$0xf]
      %v8298 = vld [vmem:[%s3041 + $0x8c] sm:$0x1]
      %v8299 = vld [vmem:[%s3041 + $0x90] sm:$0xe]
      %v8300 = vld [vmem:[%s3041 + $0x94] sm:$0xf]
      %v8301 = vld [vmem:[%s3041 + $0x98] sm:$0x1]
      %v8302 = vld [vmem:[%s3041 + $0x9c] sm:$0xe]
      %v8303 = vld [vmem:[%s3041 + $0xa0] sm:$0xf]
      %v8304 = vld [vmem:[%s3041 + $0xa4] sm:$0x1]
      %v8305 = vld [vmem:[%s3041 + $0xa8] sm:$0xe]
      %v8306 = vld [vmem:[%s3041 + $0xac] sm:$0xf]
      %v8307 = vld [vmem:[%s3041 + $0xb0] sm:$0x1]
      %v8308 = vld [vmem:[%s3041 + $0xb4] sm:$0xe]
      %v8309 = vld [vmem:[%s3041 + $0xb8] sm:$0xf]
      %v8310 = vld [vmem:[%s3041 + $0xbc] sm:$0x1]
      %v8359 = vrot.slane %v8263, 5
      %v8360 = vrot.slane %v8359, 4
      %v8361 = vrot.slane %v8264, 5
      %v8362 = vsel %vm1708, %v8360, %v8361
      %v8363 = vrot.slane %v8361, 4
      %v8364 = vrot.slane %v8265, 5
      %v8365 = vsel %vm1708, %v8363, %v8364
      %v8366 = vrot.slane %v8266, 5
      %v8367 = vrot.slane %v8366, 4
      %v8368 = vrot.slane %v8267, 5
      %v8369 = vsel %vm1708, %v8367, %v8368
      %v8370 = vrot.slane %v8368, 4
      %v8371 = vrot.slane %v8268, 5
      %v8372 = vsel %vm1708, %v8370, %v8371
      %v8373 = vrot.slane %v8269, 5
      %v8374 = vrot.slane %v8373, 4
      %v8375 = vrot.slane %v8270, 5
      %v8376 = vsel %vm1708, %v8374, %v8375
      %v8377 = vrot.slane %v8375, 4
      %v8378 = vrot.slane %v8271, 5
      %v8379 = vsel %vm1708, %v8377, %v8378
      %v8380 = vrot.slane %v8272, 5
      %v8381 = vrot.slane %v8380, 4
      %v8382 = vrot.slane %v8273, 5
      %v8383 = vsel %vm1708, %v8381, %v8382
      %v8384 = vrot.slane %v8382, 4
      %v8385 = vrot.slane %v8274, 5
      %v8386 = vsel %vm1708, %v8384, %v8385
      %v8387 = vrot.slane %v8275, 5
      %v8388 = vrot.slane %v8387, 4
      %v8389 = vrot.slane %v8276, 5
      %v8390 = vsel %vm1708, %v8388, %v8389
      %v8391 = vrot.slane %v8389, 4
      %v8392 = vrot.slane %v8277, 5
      %v8393 = vsel %vm1708, %v8391, %v8392
      %v8394 = vrot.slane %v8278, 5
      %v8395 = vrot.slane %v8394, 4
      %v8396 = vrot.slane %v8279, 5
      %v8397 = vsel %vm1708, %v8395, %v8396
      %v8398 = vrot.slane %v8396, 4
      %v8399 = vrot.slane %v8280, 5
      %v8400 = vsel %vm1708, %v8398, %v8399
      %v8401 = vrot.slane %v8281, 5
      %v8402 = vrot.slane %v8401, 4
      %v8403 = vrot.slane %v8282, 5
      %v8404 = vsel %vm1708, %v8402, %v8403
      %v8405 = vrot.slane %v8403, 4
      %v8406 = vrot.slane %v8283, 5
      %v8407 = vsel %vm1708, %v8405, %v8406
      %v8408 = vrot.slane %v8284, 5
      %v8409 = vrot.slane %v8408, 4
      %v8410 = vrot.slane %v8285, 5
      %v8411 = vsel %vm1708, %v8409, %v8410
      %v8412 = vrot.slane %v8410, 4
      %v8413 = vrot.slane %v8286, 5
      %v8414 = vsel %vm1708, %v8412, %v8413
      %v8415 = vrot.slane %v8287, 5
      %v8416 = vrot.slane %v8415, 4
      %v8417 = vrot.slane %v8288, 5
      %v8418 = vsel %vm1708, %v8416, %v8417
      %v8419 = vrot.slane %v8417, 4
      %v8420 = vrot.slane %v8289, 5
      %v8421 = vsel %vm1708, %v8419, %v8420
      %v8422 = vrot.slane %v8290, 5
      %v8423 = vrot.slane %v8422, 4
      %v8424 = vrot.slane %v8291, 5
      %v8425 = vsel %vm1708, %v8423, %v8424
      %v8426 = vrot.slane %v8424, 4
      %v8427 = vrot.slane %v8292, 5
      %v8428 = vsel %vm1708, %v8426, %v8427
      %v8429 = vrot.slane %v8293, 5
      %v8430 = vrot.slane %v8429, 4
      %v8431 = vrot.slane %v8294, 5
      %v8432 = vsel %vm1708, %v8430, %v8431
      %v8433 = vrot.slane %v8431, 4
      %v8434 = vrot.slane %v8295, 5
      %v8435 = vsel %vm1708, %v8433, %v8434
      %v8436 = vrot.slane %v8296, 5
      %v8437 = vrot.slane %v8436, 4
      %v8438 = vrot.slane %v8297, 5
      %v8439 = vsel %vm1708, %v8437, %v8438
      %v8440 = vrot.slane %v8438, 4
      %v8441 = vrot.slane %v8298, 5
      %v8442 = vsel %vm1708, %v8440, %v8441
      %v8443 = vrot.slane %v8299, 5
      %v8444 = vrot.slane %v8443, 4
      %v8445 = vrot.slane %v8300, 5
      %v8446 = vsel %vm1708, %v8444, %v8445
      %v8447 = vrot.slane %v8445, 4
      %v8448 = vrot.slane %v8301, 5
      %v8449 = vsel %vm1708, %v8447, %v8448
      %v8450 = vrot.slane %v8302, 5
      %v8451 = vrot.slane %v8450, 4
      %v8452 = vrot.slane %v8303, 5
      %v8453 = vsel %vm1708, %v8451, %v8452
      %v8454 = vrot.slane %v8452, 4
      %v8455 = vrot.slane %v8304, 5
      %v8456 = vsel %vm1708, %v8454, %v8455
      %v8457 = vrot.slane %v8305, 5
      %v8458 = vrot.slane %v8457, 4
      %v8459 = vrot.slane %v8306, 5
      %v8460 = vsel %vm1708, %v8458, %v8459
      %v8461 = vrot.slane %v8459, 4
      %v8462 = vrot.slane %v8307, 5
      %v8463 = vsel %vm1708, %v8461, %v8462
      %v8464 = vrot.slane %v8308, 5
      %v8465 = vrot.slane %v8464, 4
      %v8466 = vrot.slane %v8309, 5
      %v8467 = vsel %vm1708, %v8465, %v8466
      %v8468 = vrot.slane %v8466, 4
      %v8469 = vrot.slane %v8310, 5
      %v8470 = vsel %vm1708, %v8468, %v8469
      %8471 = vrot.lane.b32.xlu0 %v8362, 32
      %v8472 = vpop.permute.xlu0 %8471
      %8473 = vrot.lane.b32.xlu0 %v8365, 32
      %v8474 = vpop.permute.xlu0 %8473
      %8475 = vrot.lane.b32.xlu0 %v8369, 32
      %v8476 = vpop.permute.xlu0 %8475
      %8477 = vrot.lane.b32.xlu0 %v8372, 32
      %v8478 = vpop.permute.xlu0 %8477
      %8479 = vrot.lane.b32.xlu0 %v8376, 32
      %v8480 = vpop.permute.xlu0 %8479
      %8481 = vrot.lane.b32.xlu0 %v8379, 32
      %v8482 = vpop.permute.xlu0 %8481
      %8483 = vrot.lane.b32.xlu0 %v8383, 32
      %v8484 = vpop.permute.xlu0 %8483
      %8485 = vrot.lane.b32.xlu0 %v8386, 32
      %v8486 = vpop.permute.xlu0 %8485
      %8487 = vrot.lane.b32.xlu0 %v8390, 32
      %v8488 = vpop.permute.xlu0 %8487
      %8489 = vrot.lane.b32.xlu0 %v8393, 32
      %v8490 = vpop.permute.xlu0 %8489
      %8491 = vrot.lane.b32.xlu0 %v8397, 32
      %v8492 = vpop.permute.xlu0 %8491
      %8493 = vrot.lane.b32.xlu0 %v8400, 32
      %v8494 = vpop.permute.xlu0 %8493
      %8495 = vrot.lane.b32.xlu0 %v8404, 32
      %v8496 = vpop.permute.xlu0 %8495
      %8497 = vrot.lane.b32.xlu0 %v8407, 32
      %v8498 = vpop.permute.xlu0 %8497
      %8499 = vrot.lane.b32.xlu0 %v8411, 32
      %v8500 = vpop.permute.xlu0 %8499
      %8501 = vrot.lane.b32.xlu0 %v8414, 32
      %v8502 = vpop.permute.xlu0 %8501
      %8503 = vrot.lane.b32.xlu0 %v8418, 32
      %v8504 = vpop.permute.xlu0 %8503
      %8505 = vrot.lane.b32.xlu0 %v8421, 32
      %v8506 = vpop.permute.xlu0 %8505
      %8507 = vrot.lane.b32.xlu0 %v8425, 32
      %v8508 = vpop.permute.xlu0 %8507
      %8509 = vrot.lane.b32.xlu0 %v8428, 32
      %v8510 = vpop.permute.xlu0 %8509
      %8511 = vrot.lane.b32.xlu0 %v8432, 32
      %v8512 = vpop.permute.xlu0 %8511
      %8513 = vrot.lane.b32.xlu0 %v8435, 32
      %v8514 = vpop.permute.xlu0 %8513
      %8515 = vrot.lane.b32.xlu0 %v8439, 32
      %v8516 = vpop.permute.xlu0 %8515
      %8517 = vrot.lane.b32.xlu0 %v8442, 32
      %v8518 = vpop.permute.xlu0 %8517
      %8519 = vrot.lane.b32.xlu0 %v8446, 32
      %v8520 = vpop.permute.xlu0 %8519
      %8521 = vrot.lane.b32.xlu0 %v8449, 32
      %v8522 = vpop.permute.xlu0 %8521
      %8523 = vrot.lane.b32.xlu0 %v8453, 32
      %v8524 = vpop.permute.xlu0 %8523
      %8525 = vrot.lane.b32.xlu0 %v8456, 32
      %v8526 = vpop.permute.xlu0 %8525
      %8527 = vrot.lane.b32.xlu0 %v8460, 32
      %v8528 = vpop.permute.xlu0 %8527
      %8529 = vrot.lane.b32.xlu0 %v8463, 32
      %v8530 = vpop.permute.xlu0 %8529
      %8531 = vrot.lane.b32.xlu0 %v8467, 32
      %v8532 = vpop.permute.xlu0 %8531
      %8533 = vrot.lane.b32.xlu0 %v8470, 32
      %v8534 = vpop.permute.xlu0 %8533
      %8567 = vst.msk [vmem:[#allocation3] sm:$0xf] %vm4100, %v8472
      %8568 = vst.msk [vmem:[#allocation3 + $0x4] sm:$0xf] %vm4100, %v8474
      %8569 = vst.msk [vmem:[#allocation3 + $0x8] sm:$0xf] %vm4100, %v8476
      %8570 = vst.msk [vmem:[#allocation3 + $0xc] sm:$0xf] %vm4100, %v8478
      %8571 = vst.msk [vmem:[#allocation3 + $0x10] sm:$0xf] %vm4100, %v8480
      %8572 = vst.msk [vmem:[#allocation3 + $0x14] sm:$0xf] %vm4100, %v8482
      %8573 = vst.msk [vmem:[#allocation3 + $0x18] sm:$0xf] %vm4100, %v8484
      %8574 = vst.msk [vmem:[#allocation3 + $0x1c] sm:$0xf] %vm4100, %v8486
      %8575 = vst.msk [vmem:[#allocation3 + $0x20] sm:$0xf] %vm4100, %v8488
      %8576 = vst.msk [vmem:[#allocation3 + $0x24] sm:$0xf] %vm4100, %v8490
      %8577 = vst.msk [vmem:[#allocation3 + $0x28] sm:$0xf] %vm4100, %v8492
      %8578 = vst.msk [vmem:[#allocation3 + $0x2c] sm:$0xf] %vm4100, %v8494
      %8579 = vst.msk [vmem:[#allocation3 + $0x30] sm:$0xf] %vm4100, %v8496
      %8580 = vst.msk [vmem:[#allocation3 + $0x34] sm:$0xf] %vm4100, %v8498
      %8581 = vst.msk [vmem:[#allocation3 + $0x38] sm:$0xf] %vm4100, %v8500
      %8582 = vst.msk [vmem:[#allocation3 + $0x3c] sm:$0xf] %vm4100, %v8502
      %8583 = vst.msk [vmem:[#allocation3 + $0x40] sm:$0xf] %vm4100, %v8504
      %8584 = vst.msk [vmem:[#allocation3 + $0x44] sm:$0xf] %vm4100, %v8506
      %8585 = vst.msk [vmem:[#allocation3 + $0x48] sm:$0xf] %vm4100, %v8508
      %8586 = vst.msk [vmem:[#allocation3 + $0x4c] sm:$0xf] %vm4100, %v8510
      %8587 = vst.msk [vmem:[#allocation3 + $0x50] sm:$0xf] %vm4100, %v8512
      %8588 = vst.msk [vmem:[#allocation3 + $0x54] sm:$0xf] %vm4100, %v8514
      %8589 = vst.msk [vmem:[#allocation3 + $0x58] sm:$0xf] %vm4100, %v8516
      %8590 = vst.msk [vmem:[#allocation3 + $0x5c] sm:$0xf] %vm4100, %v8518
      %8591 = vst.msk [vmem:[#allocation3 + $0x60] sm:$0xf] %vm4100, %v8520
      %8592 = vst.msk [vmem:[#allocation3 + $0x64] sm:$0xf] %vm4100, %v8522
      %8593 = vst.msk [vmem:[#allocation3 + $0x68] sm:$0xf] %vm4100, %v8524
      %8594 = vst.msk [vmem:[#allocation3 + $0x6c] sm:$0xf] %vm4100, %v8526
      %8595 = vst.msk [vmem:[#allocation3 + $0x70] sm:$0xf] %vm4100, %v8528
      %8596 = vst.msk [vmem:[#allocation3 + $0x74] sm:$0xf] %vm4100, %v8530
      %8597 = vst.msk [vmem:[#allocation3 + $0x78] sm:$0xf] %vm4100, %v8532
      %8598 = vst.msk [vmem:[#allocation3 + $0x7c] sm:$0xf] %vm4100, %v8534
      %v8599 = vld [vmem:[#allocation3] sm:$0xf]
      %v8600 = vld [vmem:[#allocation3 + $0x4] sm:$0xf]
      %v8601 = vld [vmem:[#allocation3 + $0x8] sm:$0xf]
      %v8602 = vld [vmem:[#allocation3 + $0xc] sm:$0xf]
      %v8603 = vld [vmem:[#allocation3 + $0x10] sm:$0xf]
      %v8604 = vld [vmem:[#allocation3 + $0x14] sm:$0xf]
      %v8605 = vld [vmem:[#allocation3 + $0x18] sm:$0xf]
      %v8606 = vld [vmem:[#allocation3 + $0x1c] sm:$0xf]
      %v8607 = vld [vmem:[#allocation3 + $0x20] sm:$0xf]
      %v8608 = vld [vmem:[#allocation3 + $0x24] sm:$0xf]
      %v8609 = vld [vmem:[#allocation3 + $0x28] sm:$0xf]
      %v8610 = vld [vmem:[#allocation3 + $0x2c] sm:$0xf]
      %v8611 = vld [vmem:[#allocation3 + $0x30] sm:$0xf]
      %v8612 = vld [vmem:[#allocation3 + $0x34] sm:$0xf]
      %v8613 = vld [vmem:[#allocation3 + $0x38] sm:$0xf]
      %v8614 = vld [vmem:[#allocation3 + $0x3c] sm:$0xf]
      %v8615 = vld [vmem:[#allocation3 + $0x40] sm:$0xf]
      %v8616 = vld [vmem:[#allocation3 + $0x44] sm:$0xf]
      %v8617 = vld [vmem:[#allocation3 + $0x48] sm:$0xf]
      %v8618 = vld [vmem:[#allocation3 + $0x4c] sm:$0xf]
      %v8619 = vld [vmem:[#allocation3 + $0x50] sm:$0xf]
      %v8620 = vld [vmem:[#allocation3 + $0x54] sm:$0xf]
      %v8621 = vld [vmem:[#allocation3 + $0x58] sm:$0xf]
      %v8622 = vld [vmem:[#allocation3 + $0x5c] sm:$0xf]
      %v8623 = vld [vmem:[#allocation3 + $0x60] sm:$0xf]
      %v8624 = vld [vmem:[#allocation3 + $0x64] sm:$0xf]
      %v8625 = vld [vmem:[#allocation3 + $0x68] sm:$0xf]
      %v8626 = vld [vmem:[#allocation3 + $0x6c] sm:$0xf]
      %v8627 = vld [vmem:[#allocation3 + $0x70] sm:$0xf]
      %v8628 = vld [vmem:[#allocation3 + $0x74] sm:$0xf]
      %v8629 = vld [vmem:[#allocation3 + $0x78] sm:$0xf]
      %v8630 = vld [vmem:[#allocation3 + $0x7c] sm:$0xf]
      %v8631 = vld [vmem:[%s2] sm:$0xf]
      %v8632 = vld [vmem:[%s2 + $0x4] sm:$0xf]
      %v8633 = vld [vmem:[%s2 + $0x8] sm:$0xf]
      %v8634 = vld [vmem:[%s2 + $0xc] sm:$0xf]
      %v8635 = vld [vmem:[%s2 + $0x10] sm:$0x3]
      %v8668 = vunpack.c.l.b16 %v8599
      %v8669 = vunpack.c.l.b16 %v8600
      %v8670 = vunpack.c.l.b16 %v8601
      %v8671 = vunpack.c.l.b16 %v8602
      %v8672 = vunpack.c.l.b16 %v8603
      %v8673 = vunpack.c.l.b16 %v8604
      %v8674 = vunpack.c.l.b16 %v8605
      %v8675 = vunpack.c.l.b16 %v8606
      %v8676 = vunpack.c.l.b16 %v8607
      %v8677 = vunpack.c.l.b16 %v8608
      %v8678 = vunpack.c.l.b16 %v8609
      %v8679 = vunpack.c.l.b16 %v8610
      %v8680 = vunpack.c.l.b16 %v8611
      %v8681 = vunpack.c.l.b16 %v8612
      %v8682 = vunpack.c.l.b16 %v8613
      %v8683 = vunpack.c.l.b16 %v8614
      %v8684 = vunpack.c.l.b16 %v8615
      %v8685 = vunpack.c.l.b16 %v8616
      %v8686 = vunpack.c.l.b16 %v8617
      %v8687 = vunpack.c.l.b16 %v8618
      %v8688 = vunpack.c.l.b16 %v8619
      %v8689 = vunpack.c.l.b16 %v8620
      %v8690 = vunpack.c.l.b16 %v8621
      %v8691 = vunpack.c.l.b16 %v8622
      %v8692 = vunpack.c.l.b16 %v8623
      %v8693 = vunpack.c.l.b16 %v8624
      %v8694 = vunpack.c.l.b16 %v8625
      %v8695 = vunpack.c.l.b16 %v8626
      %v8696 = vunpack.c.l.b16 %v8627
      %v8697 = vunpack.c.l.b16 %v8628
      %v8698 = vunpack.c.l.b16 %v8629
      %v8699 = vunpack.c.l.b16 %v8630
      %v8700 = vpack.c.b16 %v8669, %v8668
      %v8701 = vpack.c.b16 %v8671, %v8670
      %v8702 = vpack.c.b16 %v8673, %v8672
      %v8703 = vpack.c.b16 %v8675, %v8674
      %v8704 = vpack.c.b16 %v8677, %v8676
      %v8705 = vpack.c.b16 %v8679, %v8678
      %v8706 = vpack.c.b16 %v8681, %v8680
      %v8707 = vpack.c.b16 %v8683, %v8682
      %v8708 = vpack.c.b16 %v8685, %v8684
      %v8709 = vpack.c.b16 %v8687, %v8686
      %v8710 = vpack.c.b16 %v8689, %v8688
      %v8711 = vpack.c.b16 %v8691, %v8690
      %v8712 = vpack.c.b16 %v8693, %v8692
      %v8713 = vpack.c.b16 %v8695, %v8694
      %v8714 = vpack.c.b16 %v8697, %v8696
      %v8715 = vpack.c.b16 %v8699, %v8698
      %v8721 = vunpack.c.l.b16 %v8631
      %v8722 = vunpack.c.l.b16 %v8632
      %v8723 = vunpack.c.l.b16 %v8633
      %v8724 = vunpack.c.l.b16 %v8634
      %v8725 = vunpack.c.l.b16 %v8635
      %v8726 = vpack.c.b16 %v8722, %v8721
      %v8727 = vpack.c.b16 %v8724, %v8723
      %v8728 = vpack.c.b16 %v8725, %v8725
      %v8732 = vsel %vm4265, %v8700, 0
      %v8735 = vsel %vm4265, %v8701, 0
      %v8738 = vsel %vm4265, %v8702, 0
      %v8741 = vsel %vm4265, %v8703, 0
      %v8744 = vsel %vm4265, %v8704, 0
      %v8747 = vsel %vm4265, %v8705, 0
      %v8750 = vsel %vm4265, %v8706, 0
      %v8753 = vsel %vm4265, %v8707, 0
      %v8756 = vsel %vm4265, %v8708, 0
      %v8759 = vsel %vm4265, %v8709, 0
      %v8762 = vsel %vm4265, %v8710, 0
      %v8765 = vsel %vm4265, %v8711, 0
      %v8768 = vsel %vm4265, %v8712, 0
      %v8771 = vsel %vm4265, %v8713, 0
      %v8774 = vsel %vm4265, %v8714, 0
      %v8777 = vsel %vm4265, %v8715, 0
      %v8780 = vsel %vm4314, %v8728, 0
      %8782 = vmatpush.bf16.msra.mxu0 0
      %8783 = vmatpush.bf16.msra.mxu0 0
      %8784 = vmatpush.bf16.msra.mxu0 0
      %8785 = vmatpush.bf16.msra.mxu0 0
      %8786 = vmatpush.bf16.msra.mxu0 0
      %8787 = vmatpush.bf16.msra.mxu0 %v8780
      %8788 = vmatpush.bf16.msra.mxu0 %v8727
      %8789 = vmatpush.bf16.msra.mxu0 %v8726
      %8790 = vmatmul.bf16.gmra.mxu0 %v8732
      %v8791 = vpop.f32.mrf.mxu0
      %v8792 = vadd.f32 0.0, %v8791
      %v8793 = vpop.f32.mrf.mxu0
      %v8794 = vadd.f32 0.0, %v8793
      %8795 = vmatmul.bf16.gmra.mxu0 %v8735
      %v8796 = vpop.f32.mrf.mxu0
      %v8797 = vadd.f32 0.0, %v8796
      %v8798 = vpop.f32.mrf.mxu0
      %v8799 = vadd.f32 0.0, %v8798
      %8800 = vmatmul.bf16.gmra.mxu0 %v8738
      %v8801 = vpop.f32.mrf.mxu0
      %v8802 = vadd.f32 0.0, %v8801
      %v8803 = vpop.f32.mrf.mxu0
      %v8804 = vadd.f32 0.0, %v8803
      %8805 = vmatmul.bf16.gmra.mxu0 %v8741
      %v8806 = vpop.f32.mrf.mxu0
      %v8807 = vadd.f32 0.0, %v8806
      %v8808 = vpop.f32.mrf.mxu0
      %v8809 = vadd.f32 0.0, %v8808
      %8810 = vmatmul.bf16.gmra.mxu0 %v8744
      %v8811 = vpop.f32.mrf.mxu0
      %v8812 = vadd.f32 0.0, %v8811
      %v8813 = vpop.f32.mrf.mxu0
      %v8814 = vadd.f32 0.0, %v8813
      %8815 = vmatmul.bf16.gmra.mxu0 %v8747
      %v8816 = vpop.f32.mrf.mxu0
      %v8817 = vadd.f32 0.0, %v8816
      %v8818 = vpop.f32.mrf.mxu0
      %v8819 = vadd.f32 0.0, %v8818
      %8820 = vmatmul.bf16.gmra.mxu0 %v8750
      %v8821 = vpop.f32.mrf.mxu0
      %v8822 = vadd.f32 0.0, %v8821
      %v8823 = vpop.f32.mrf.mxu0
      %v8824 = vadd.f32 0.0, %v8823
      %8825 = vmatmul.bf16.gmra.mxu0 %v8753
      %v8826 = vpop.f32.mrf.mxu0
      %v8827 = vadd.f32 0.0, %v8826
      %v8828 = vpop.f32.mrf.mxu0
      %v8829 = vadd.f32 0.0, %v8828
      %8830 = vmatmul.bf16.gmra.mxu0 %v8756
      %v8831 = vpop.f32.mrf.mxu0
      %v8832 = vadd.f32 0.0, %v8831
      %v8833 = vpop.f32.mrf.mxu0
      %v8834 = vadd.f32 0.0, %v8833
      %8835 = vmatmul.bf16.gmra.mxu0 %v8759
      %v8836 = vpop.f32.mrf.mxu0
      %v8837 = vadd.f32 0.0, %v8836
      %v8838 = vpop.f32.mrf.mxu0
      %v8839 = vadd.f32 0.0, %v8838
      %8840 = vmatmul.bf16.gmra.mxu0 %v8762
      %v8841 = vpop.f32.mrf.mxu0
      %v8842 = vadd.f32 0.0, %v8841
      %v8843 = vpop.f32.mrf.mxu0
      %v8844 = vadd.f32 0.0, %v8843
      %8845 = vmatmul.bf16.gmra.mxu0 %v8765
      %v8846 = vpop.f32.mrf.mxu0
      %v8847 = vadd.f32 0.0, %v8846
      %v8848 = vpop.f32.mrf.mxu0
      %v8849 = vadd.f32 0.0, %v8848
      %8850 = vmatmul.bf16.gmra.mxu0 %v8768
      %v8851 = vpop.f32.mrf.mxu0
      %v8852 = vadd.f32 0.0, %v8851
      %v8853 = vpop.f32.mrf.mxu0
      %v8854 = vadd.f32 0.0, %v8853
      %8855 = vmatmul.bf16.gmra.mxu0 %v8771
      %v8856 = vpop.f32.mrf.mxu0
      %v8857 = vadd.f32 0.0, %v8856
      %v8858 = vpop.f32.mrf.mxu0
      %v8859 = vadd.f32 0.0, %v8858
      %8860 = vmatmul.bf16.gmra.mxu0 %v8774
      %v8861 = vpop.f32.mrf.mxu0
      %v8862 = vadd.f32 0.0, %v8861
      %v8863 = vpop.f32.mrf.mxu0
      %v8864 = vadd.f32 0.0, %v8863
      %8865 = vmatmul.bf16.gmra.mxu0 %v8777
      %v8866 = vpop.f32.mrf.mxu0
      %v8867 = vadd.f32 0.0, %v8866
      %v8868 = vpop.f32.mrf.mxu0
      %v8869 = vadd.f32 0.0, %v8868
      %8870 = vdwg.mxu0
      %v8871 = vsel %vm4407, %v8792, 0.0
      %v8872 = vsel %vm4407, %v8794, 0.0
      %v8873 = vadd.f32 %v8871, %v8872
      %v8874 = vsel %vm4407, %v8797, 0.0
      %v8875 = vadd.f32 %v8873, %v8874
      %v8876 = vsel %vm4407, %v8799, 0.0
      %v8877 = vadd.f32 %v8875, %v8876
      %v8878 = vsel %vm4407, %v8802, 0.0
      %v8879 = vadd.f32 %v8877, %v8878
      %v8880 = vsel %vm4407, %v8804, 0.0
      %v8881 = vadd.f32 %v8879, %v8880
      %v8882 = vsel %vm4407, %v8807, 0.0
      %v8883 = vadd.f32 %v8881, %v8882
      %v8884 = vsel %vm4407, %v8809, 0.0
      %v8885 = vadd.f32 %v8883, %v8884
      %v8886 = vsel %vm4407, %v8812, 0.0
      %v8887 = vadd.f32 %v8885, %v8886
      %v8888 = vsel %vm4407, %v8814, 0.0
      %v8889 = vadd.f32 %v8887, %v8888
      %v8890 = vsel %vm4407, %v8817, 0.0
      %v8891 = vadd.f32 %v8889, %v8890
      %v8892 = vsel %vm4407, %v8819, 0.0
      %v8893 = vadd.f32 %v8891, %v8892
      %v8894 = vsel %vm4407, %v8822, 0.0
      %v8895 = vadd.f32 %v8893, %v8894
      %v8896 = vsel %vm4407, %v8824, 0.0
      %v8897 = vadd.f32 %v8895, %v8896
      %v8898 = vsel %vm4407, %v8827, 0.0
      %v8899 = vadd.f32 %v8897, %v8898
      %v8900 = vsel %vm4407, %v8829, 0.0
      %v8901 = vadd.f32 %v8899, %v8900
      %v8902 = vsel %vm4407, %v8832, 0.0
      %v8903 = vadd.f32 %v8901, %v8902
      %v8904 = vsel %vm4407, %v8834, 0.0
      %v8905 = vadd.f32 %v8903, %v8904
      %v8906 = vsel %vm4407, %v8837, 0.0
      %v8907 = vadd.f32 %v8905, %v8906
      %v8908 = vsel %vm4407, %v8839, 0.0
      %v8909 = vadd.f32 %v8907, %v8908
      %v8910 = vsel %vm4407, %v8842, 0.0
      %v8911 = vadd.f32 %v8909, %v8910
      %v8912 = vsel %vm4407, %v8844, 0.0
      %v8913 = vadd.f32 %v8911, %v8912
      %v8914 = vsel %vm4407, %v8847, 0.0
      %v8915 = vadd.f32 %v8913, %v8914
      %v8916 = vsel %vm4407, %v8849, 0.0
      %v8917 = vadd.f32 %v8915, %v8916
      %v8918 = vsel %vm4407, %v8852, 0.0
      %v8919 = vadd.f32 %v8917, %v8918
      %v8920 = vsel %vm4407, %v8854, 0.0
      %v8921 = vadd.f32 %v8919, %v8920
      %v8922 = vsel %vm4407, %v8857, 0.0
      %v8923 = vadd.f32 %v8921, %v8922
      %v8924 = vsel %vm4407, %v8859, 0.0
      %v8925 = vadd.f32 %v8923, %v8924
      %v8926 = vsel %vm4407, %v8862, 0.0
      %v8927 = vadd.f32 %v8925, %v8926
      %v8928 = vsel %vm4407, %v8864, 0.0
      %v8929 = vadd.f32 %v8927, %v8928
      %v8930 = vsel %vm4407, %v8867, 0.0
      %v8931 = vadd.f32 %v8929, %v8930
      %v8932 = vsel %vm4407, %v8869, 0.0
      %v8933 = vadd.f32 %v8931, %v8932
      %v8934 = vrot.slane %v8933, 4
      %v8935 = vadd.f32 %v8933, %v8934
      %v8936 = vrot.slane %v8935, 2
      %v8937 = vadd.f32 %v8935, %v8936
      %v8938 = vrot.slane %v8937, 1
      %v8939 = vadd.f32 %v8937, %v8938
      %v8940 = vmul.f32 %v8939, %v4483
      %v8941 = vmul.f32 %v8792, %v8792
      %v8942 = vmul.f32 %v8794, %v8794
      %v8943 = vmul.f32 %v8797, %v8797
      %v8944 = vmul.f32 %v8799, %v8799
      %v8945 = vmul.f32 %v8802, %v8802
      %v8946 = vmul.f32 %v8804, %v8804
      %v8947 = vmul.f32 %v8807, %v8807
      %v8948 = vmul.f32 %v8809, %v8809
      %v8949 = vmul.f32 %v8812, %v8812
      %v8950 = vmul.f32 %v8814, %v8814
      %v8951 = vmul.f32 %v8817, %v8817
      %v8952 = vmul.f32 %v8819, %v8819
      %v8953 = vmul.f32 %v8822, %v8822
      %v8954 = vmul.f32 %v8824, %v8824
      %v8955 = vmul.f32 %v8827, %v8827
      %v8956 = vmul.f32 %v8829, %v8829
      %v8957 = vmul.f32 %v8832, %v8832
      %v8958 = vmul.f32 %v8834, %v8834
      %v8959 = vmul.f32 %v8837, %v8837
      %v8960 = vmul.f32 %v8839, %v8839
      %v8961 = vmul.f32 %v8842, %v8842
      %v8962 = vmul.f32 %v8844, %v8844
      %v8963 = vmul.f32 %v8847, %v8847
      %v8964 = vmul.f32 %v8849, %v8849
      %v8965 = vmul.f32 %v8852, %v8852
      %v8966 = vmul.f32 %v8854, %v8854
      %v8967 = vmul.f32 %v8857, %v8857
      %v8968 = vmul.f32 %v8859, %v8859
      %v8969 = vmul.f32 %v8862, %v8862
      %v8970 = vmul.f32 %v8864, %v8864
      %v8971 = vmul.f32 %v8867, %v8867
      %v8972 = vmul.f32 %v8869, %v8869
      %v8973 = vsel %vm4407, %v8941, 0.0
      %v8974 = vsel %vm4407, %v8942, 0.0
      %v8975 = vadd.f32 %v8973, %v8974
      %v8976 = vsel %vm4407, %v8943, 0.0
      %v8977 = vadd.f32 %v8975, %v8976
      %v8978 = vsel %vm4407, %v8944, 0.0
      %v8979 = vadd.f32 %v8977, %v8978
      %v8980 = vsel %vm4407, %v8945, 0.0
      %v8981 = vadd.f32 %v8979, %v8980
      %v8982 = vsel %vm4407, %v8946, 0.0
      %v8983 = vadd.f32 %v8981, %v8982
      %v8984 = vsel %vm4407, %v8947, 0.0
      %v8985 = vadd.f32 %v8983, %v8984
      %v8986 = vsel %vm4407, %v8948, 0.0
      %v8987 = vadd.f32 %v8985, %v8986
      %v8988 = vsel %vm4407, %v8949, 0.0
      %v8989 = vadd.f32 %v8987, %v8988
      %v8990 = vsel %vm4407, %v8950, 0.0
      %v8991 = vadd.f32 %v8989, %v8990
      %v8992 = vsel %vm4407, %v8951, 0.0
      %v8993 = vadd.f32 %v8991, %v8992
      %v8994 = vsel %vm4407, %v8952, 0.0
      %v8995 = vadd.f32 %v8993, %v8994
      %v8996 = vsel %vm4407, %v8953, 0.0
      %v8997 = vadd.f32 %v8995, %v8996
      %v8998 = vsel %vm4407, %v8954, 0.0
      %v8999 = vadd.f32 %v8997, %v8998
      %v9000 = vsel %vm4407, %v8955, 0.0
      %v9001 = vadd.f32 %v8999, %v9000
      %v9002 = vsel %vm4407, %v8956, 0.0
      %v9003 = vadd.f32 %v9001, %v9002
      %v9004 = vsel %vm4407, %v8957, 0.0
      %v9005 = vadd.f32 %v9003, %v9004
      %v9006 = vsel %vm4407, %v8958, 0.0
      %v9007 = vadd.f32 %v9005, %v9006
      %v9008 = vsel %vm4407, %v8959, 0.0
      %v9009 = vadd.f32 %v9007, %v9008
      %v9010 = vsel %vm4407, %v8960, 0.0
      %v9011 = vadd.f32 %v9009, %v9010
      %v9012 = vsel %vm4407, %v8961, 0.0
      %v9013 = vadd.f32 %v9011, %v9012
      %v9014 = vsel %vm4407, %v8962, 0.0
      %v9015 = vadd.f32 %v9013, %v9014
      %v9016 = vsel %vm4407, %v8963, 0.0
      %v9017 = vadd.f32 %v9015, %v9016
      %v9018 = vsel %vm4407, %v8964, 0.0
      %v9019 = vadd.f32 %v9017, %v9018
      %v9020 = vsel %vm4407, %v8965, 0.0
      %v9021 = vadd.f32 %v9019, %v9020
      %v9022 = vsel %vm4407, %v8966, 0.0
      %v9023 = vadd.f32 %v9021, %v9022
      %v9024 = vsel %vm4407, %v8967, 0.0
      %v9025 = vadd.f32 %v9023, %v9024
      %v9026 = vsel %vm4407, %v8968, 0.0
      %v9027 = vadd.f32 %v9025, %v9026
      %v9028 = vsel %vm4407, %v8969, 0.0
      %v9029 = vadd.f32 %v9027, %v9028
      %v9030 = vsel %vm4407, %v8970, 0.0
      %v9031 = vadd.f32 %v9029, %v9030
      %v9032 = vsel %vm4407, %v8971, 0.0
      %v9033 = vadd.f32 %v9031, %v9032
      %v9034 = vsel %vm4407, %v8972, 0.0
      %v9035 = vadd.f32 %v9033, %v9034
      %v9036 = vrot.slane %v9035, 4
      %v9037 = vadd.f32 %v9035, %v9036
      %v9038 = vrot.slane %v9037, 2
      %v9039 = vadd.f32 %v9037, %v9038
      %v9040 = vrot.slane %v9039, 1
      %v9041 = vadd.f32 %v9039, %v9040
      %v9042 = vmul.f32 %v9041, %v4483
      %v9043 = vmul.f32 %v8940, %v8940
      %v9044 = vsub.f32 %v9042, %v9043
      %v9045 = vmax.f32 %v9044, 0.0
      %v9046 = vsub.f32 %v8792, %v8940
      %v9047 = vsub.f32 %v8794, %v8940
      %v9048 = vsub.f32 %v8797, %v8940
      %v9049 = vsub.f32 %v8799, %v8940
      %v9050 = vsub.f32 %v8802, %v8940
      %v9051 = vsub.f32 %v8804, %v8940
      %v9052 = vsub.f32 %v8807, %v8940
      %v9053 = vsub.f32 %v8809, %v8940
      %v9054 = vsub.f32 %v8812, %v8940
      %v9055 = vsub.f32 %v8814, %v8940
      %v9056 = vsub.f32 %v8817, %v8940
      %v9057 = vsub.f32 %v8819, %v8940
      %v9058 = vsub.f32 %v8822, %v8940
      %v9059 = vsub.f32 %v8824, %v8940
      %v9060 = vsub.f32 %v8827, %v8940
      %v9061 = vsub.f32 %v8829, %v8940
      %v9062 = vsub.f32 %v8832, %v8940
      %v9063 = vsub.f32 %v8834, %v8940
      %v9064 = vsub.f32 %v8837, %v8940
      %v9065 = vsub.f32 %v8839, %v8940
      %v9066 = vsub.f32 %v8842, %v8940
      %v9067 = vsub.f32 %v8844, %v8940
      %v9068 = vsub.f32 %v8847, %v8940
      %v9069 = vsub.f32 %v8849, %v8940
      %v9070 = vsub.f32 %v8852, %v8940
      %v9071 = vsub.f32 %v8854, %v8940
      %v9072 = vsub.f32 %v8857, %v8940
      %v9073 = vsub.f32 %v8859, %v8940
      %v9074 = vsub.f32 %v8862, %v8940
      %v9075 = vsub.f32 %v8864, %v8940
      %v9076 = vsub.f32 %v8867, %v8940
      %v9077 = vsub.f32 %v8869, %v8940
      %v9078 = vadd.f32 %v9045, 1e-05
      %v9079 = vrsqrt.pop %v9078
      %v9080 = vmul.f32 %v9079, %v9078
      %v9081 = vmul.f32 %v9080, %v9079
      %v9082 = vmul.f32 0.5, %v9081
      %v9083 = vsub.f32 1.5, %v9082
      %v9084 = vmul.f32 %v9079, %v9083
      %vm9085 = vweird.f32 %v9078
      %vm9086 = vweird.f32 %v9079
      %vm9087 = vmor %vm9085, %vm9086
      %v9088 = vsel %vm9087, %v9079, %v9084
      %v9089 = vmul.f32 %v9046, %v9088
      %v9090 = vmul.f32 %v9047, %v9088
      %v9091 = vmul.f32 %v9048, %v9088
      %v9092 = vmul.f32 %v9049, %v9088
      %v9093 = vmul.f32 %v9050, %v9088
      %v9094 = vmul.f32 %v9051, %v9088
      %v9095 = vmul.f32 %v9052, %v9088
      %v9096 = vmul.f32 %v9053, %v9088
      %v9097 = vmul.f32 %v9054, %v9088
      %v9098 = vmul.f32 %v9055, %v9088
      %v9099 = vmul.f32 %v9056, %v9088
      %v9100 = vmul.f32 %v9057, %v9088
      %v9101 = vmul.f32 %v9058, %v9088
      %v9102 = vmul.f32 %v9059, %v9088
      %v9103 = vmul.f32 %v9060, %v9088
      %v9104 = vmul.f32 %v9061, %v9088
      %v9105 = vmul.f32 %v9062, %v9088
      %v9106 = vmul.f32 %v9063, %v9088
      %v9107 = vmul.f32 %v9064, %v9088
      %v9108 = vmul.f32 %v9065, %v9088
      %v9109 = vmul.f32 %v9066, %v9088
      %v9110 = vmul.f32 %v9067, %v9088
      %v9111 = vmul.f32 %v9068, %v9088
      %v9112 = vmul.f32 %v9069, %v9088
      %v9113 = vmul.f32 %v9070, %v9088
      %v9114 = vmul.f32 %v9071, %v9088
      %v9115 = vmul.f32 %v9072, %v9088
      %v9116 = vmul.f32 %v9073, %v9088
      %v9117 = vmul.f32 %v9074, %v9088
      %v9118 = vmul.f32 %v9075, %v9088
      %v9119 = vmul.f32 %v9076, %v9088
      %v9120 = vmul.f32 %v9077, %v9088
      %v9121 = vadd.f32 %v172, %v9089
      %v9122 = vadd.f32 %v173, %v9090
      %v9123 = vadd.f32 %v174, %v9091
      %v9124 = vadd.f32 %v175, %v9092
      %v9125 = vadd.f32 %v176, %v9093
      %v9126 = vadd.f32 %v177, %v9094
      %v9127 = vadd.f32 %v178, %v9095
      %v9128 = vadd.f32 %v179, %v9096
      %v9129 = vadd.f32 %v180, %v9097
      %v9130 = vadd.f32 %v181, %v9098
      %v9131 = vadd.f32 %v182, %v9099
      %v9132 = vadd.f32 %v183, %v9100
      %v9133 = vadd.f32 %v184, %v9101
      %v9134 = vadd.f32 %v185, %v9102
      %v9135 = vadd.f32 %v186, %v9103
      %v9136 = vadd.f32 %v187, %v9104
      %v9137 = vadd.f32 %v188, %v9105
      %v9138 = vadd.f32 %v189, %v9106
      %v9139 = vadd.f32 %v190, %v9107
      %v9140 = vadd.f32 %v191, %v9108
      %v9141 = vadd.f32 %v192, %v9109
      %v9142 = vadd.f32 %v193, %v9110
      %v9143 = vadd.f32 %v194, %v9111
      %v9144 = vadd.f32 %v195, %v9112
      %v9145 = vadd.f32 %v196, %v9113
      %v9146 = vadd.f32 %v197, %v9114
      %v9147 = vadd.f32 %v198, %v9115
      %v9148 = vadd.f32 %v199, %v9116
      %v9149 = vadd.f32 %v200, %v9117
      %v9150 = vadd.f32 %v201, %v9118
      %v9151 = vadd.f32 %v202, %v9119
      %v9152 = vadd.f32 %v203, %v9120
      %9153 = vst.msk [vmem:[%s170] sm:$0xff] %vm4407, %v9121
      %9154 = vst.msk [vmem:[%s170 + $0x8] sm:$0xff] %vm4407, %v9122
      %9155 = vst.msk [vmem:[%s170 + $0x10] sm:$0xff] %vm4407, %v9123
      %9156 = vst.msk [vmem:[%s170 + $0x18] sm:$0xff] %vm4407, %v9124
      %9157 = vst.msk [vmem:[%s170 + $0x20] sm:$0xff] %vm4407, %v9125
      %9158 = vst.msk [vmem:[%s170 + $0x28] sm:$0xff] %vm4407, %v9126
      %9159 = vst.msk [vmem:[%s170 + $0x30] sm:$0xff] %vm4407, %v9127
      %9160 = vst.msk [vmem:[%s170 + $0x38] sm:$0xff] %vm4407, %v9128
      %9161 = vst.msk [vmem:[%s170 + $0x40] sm:$0xff] %vm4407, %v9129
      %9162 = vst.msk [vmem:[%s170 + $0x48] sm:$0xff] %vm4407, %v9130
      %9163 = vst.msk [vmem:[%s170 + $0x50] sm:$0xff] %vm4407, %v9131
      %9164 = vst.msk [vmem:[%s170 + $0x58] sm:$0xff] %vm4407, %v9132
      %9165 = vst.msk [vmem:[%s170 + $0x60] sm:$0xff] %vm4407, %v9133
      %9166 = vst.msk [vmem:[%s170 + $0x68] sm:$0xff] %vm4407, %v9134
      %9167 = vst.msk [vmem:[%s170 + $0x70] sm:$0xff] %vm4407, %v9135
      %9168 = vst.msk [vmem:[%s170 + $0x78] sm:$0xff] %vm4407, %v9136
      %9169 = vst.msk [vmem:[%s170 + $0x80] sm:$0xff] %vm4407, %v9137
      %9170 = vst.msk [vmem:[%s170 + $0x88] sm:$0xff] %vm4407, %v9138
      %9171 = vst.msk [vmem:[%s170 + $0x90] sm:$0xff] %vm4407, %v9139
      %9172 = vst.msk [vmem:[%s170 + $0x98] sm:$0xff] %vm4407, %v9140
      %9173 = vst.msk [vmem:[%s170 + $0xa0] sm:$0xff] %vm4407, %v9141
      %9174 = vst.msk [vmem:[%s170 + $0xa8] sm:$0xff] %vm4407, %v9142
      %9175 = vst.msk [vmem:[%s170 + $0xb0] sm:$0xff] %vm4407, %v9143
      %9176 = vst.msk [vmem:[%s170 + $0xb8] sm:$0xff] %vm4407, %v9144
      %9177 = vst.msk [vmem:[%s170 + $0xc0] sm:$0xff] %vm4407, %v9145
      %9178 = vst.msk [vmem:[%s170 + $0xc8] sm:$0xff] %vm4407, %v9146
      %9179 = vst.msk [vmem:[%s170 + $0xd0] sm:$0xff] %vm4407, %v9147
      %9180 = vst.msk [vmem:[%s170 + $0xd8] sm:$0xff] %vm4407, %v9148
      %9181 = vst.msk [vmem:[%s170 + $0xe0] sm:$0xff] %vm4407, %v9149
      %9182 = vst.msk [vmem:[%s170 + $0xe8] sm:$0xff] %vm4407, %v9150
      %9183 = vst.msk [vmem:[%s170 + $0xf0] sm:$0xff] %vm4407, %v9151
      %9184 = vst.msk [vmem:[%s170 + $0xf8] sm:$0xff] %vm4407, %v9152
      %p9185 = scmp.lt.s32.totalorder %s14, 1
      %s9186 = scalar_select %p9185, %s14, 1
      %s9187 = smul.addr %s9186, 32
      %s9188 = smul.addr %s9187, 8
      %s9189 = scalar_lea.vmem %s3, %s9188
      // Predicated region
      $region33: #{tpu_custom_call.1} parent=31 // pred_check
        %p9190 = pneg %p100
      $region34: #{tpu_custom_call.1} parent=31 // pred_check_branch
        %9192 = sbr.rel (%p9190) target = $region36
      $region35: #{tpu_custom_call.1} parent=31 // pred_region
        _
      $region36: #{tpu_custom_call.1} parent=31 // pred_fallthru
        _
    $region32: #{tpu_custom_call.1} parent=5 // pred_fallthru
      _
    %p9193 = scmp.le.s32.totalorder 2, %s9
    // Predicated region
    $region37: #{tpu_custom_call.1} parent=5 // pred_check
      %p9194 = pneg %p9193
    $region38: #{tpu_custom_call.1} parent=5 // pred_check_branch
      %9196 = sbr.rel (%p9194) target = $region40
    $region39: #{tpu_custom_call.1} parent=5 // pred_region
      %s9197 = ssub.s32 %s9, 2
      // Predicated region
      $region41: #{tpu_custom_call.1} parent=39 // pred_check
        %p9198 = pneg %p106
      $region42: #{tpu_custom_call.1} parent=39 // pred_check_branch
        %9200 = sbr.rel (%p9198) target = $region44
      $region43: #{tpu_custom_call.1} parent=39 // pred_region
        %p9201 = scmp.lt.s32.totalorder %s15, 1
        %s9202 = scalar_select %p9201, %s15, 1
        %s9203 = smul.addr %s9202, 32
        %s9204 = smul.addr %s9203, 8
        %s9205 = scalar_lea.vmem %s3, %s9204
      $region44: #{tpu_custom_call.1} parent=39 // pred_fallthru
        _
    $region40: #{tpu_custom_call.1} parent=5 // pred_fallthru
      _
  $region6: #{tpu_custom_call.1} parent=0 // loop_footer
    %s13 = sadd.s32 1, %s9
  $region7: #{tpu_custom_call.1} parent=0 // loop_footer_branch
    %8 = sbr.rel target = $region3
  $region8: #{tpu_custom_call.1} parent=0 // loop_exit
    _

</llo_original>
